<compile_context>
chip_gen: v7x
topology: tpu7x:2x2x1
jax: 0.10.0
libtpu: 0.0.40
codegen_flags: <defaults>
</compile_context>

<pallas_src>
import functools

import jax
import jax.numpy as jnp
from jax.experimental import pallas as pl
from jax.experimental.pallas import tpu as pltpu

BN_EPS = 1e-5


# ----------------------------- Pallas kernels ------------------------------

def _round_up(x, m):
    return ((x + m - 1) // m) * m


def _matmul_kernel(a_ref, b_ref, t_ref, o_ref, acc_ref, *, relu):
    """Tiled (tm,tk)@(tk,tn), f32 VMEM accumulator; epilogue: + shift [+ ReLU]."""
    @pl.when(pl.program_id(2) == 0)
    def _():
        acc_ref[...] = jnp.zeros_like(acc_ref)

    acc_ref[...] += jnp.dot(a_ref[...], b_ref[...],
                            preferred_element_type=jnp.float32)

    @pl.when(pl.program_id(2) == pl.num_programs(2) - 1)
    def _():
        out = acc_ref[...] + t_ref[...]
        if relu:
            out = jnp.maximum(out, 0.0)
        o_ref[...] = out.astype(o_ref.dtype)


def _matmul_res_kernel(a_ref, b_ref, t_ref, r_ref, o_ref, acc_ref, *, relu):
    """Same as _matmul_kernel but fuses the residual add into the epilogue."""
    @pl.when(pl.program_id(2) == 0)
    def _():
        acc_ref[...] = jnp.zeros_like(acc_ref)

    acc_ref[...] += jnp.dot(a_ref[...], b_ref[...],
                            preferred_element_type=jnp.float32)

    @pl.when(pl.program_id(2) == pl.num_programs(2) - 1)
    def _():
        out = acc_ref[...] + t_ref[...] + r_ref[...].astype(jnp.float32)
        if relu:
            out = jnp.maximum(out, 0.0)
        o_ref[...] = out.astype(o_ref.dtype)


def matmul_fused(a, b, shift, residual=None, relu=False, out_dtype=jnp.bfloat16):
    """Fused (M,K)@(K,N) + shift [+ residual] [+ ReLU] on the MXU.

    bf16 inputs, f32 accumulation in VMEM scratch.  Inputs are zero-padded to
    MXU / lane aligned tiles (output lane dim padded to >=128 so stores are
    lane-dense); the result is sliced back to (M, N).
    """
    M, K = a.shape
    Kb, N = b.shape
    assert Kb == K

    # --- tile selection (lane-dense outputs, MXU-aligned K, K reduction last) ---
    Mp = _round_up(M, 8)
    tm = Mp if Mp <= 256 else 256
    Mp = _round_up(Mp, tm)
    Np = _round_up(N, 128)
    tn = 256 if Np % 256 == 0 else 128
    Kp = _round_up(K, 128)
    tk = next(t for t in (512, 256, 128) if Kp % t == 0)

    a_p = jnp.pad(a.astype(jnp.bfloat16), ((0, Mp - M), (0, Kp - K)))
    b_p = jnp.pad(b.astype(jnp.bfloat16), ((0, Kp - K), (0, Np - N)))
    t_p = jnp.pad(shift.astype(jnp.float32).reshape(1, N), ((0, 0), (0, Np - N)))

    inputs = [a_p, b_p, t_p]
    in_specs = [
        pl.BlockSpec((tm, tk), lambda i, j, k: (i, k)),
        pl.BlockSpec((tk, tn), lambda i, j, k: (k, j)),
        pl.BlockSpec((1, tn), lambda i, j, k: (0, j)),
    ]
    if residual is not None:
        r_p = jnp.pad(residual.astype(jnp.bfloat16), ((0, Mp - M), (0, Np - N)))
        inputs.append(r_p)
        in_specs.append(pl.BlockSpec((tm, tn), lambda i, j, k: (i, j)))
        kernel = functools.partial(_matmul_res_kernel, relu=relu)
    else:
        kernel = functools.partial(_matmul_kernel, relu=relu)

    out = pl.pallas_call(
        kernel,
        out_shape=jax.ShapeDtypeStruct((Mp, Np), out_dtype),
        grid=(Mp // tm, Np // tn, Kp // tk),
        in_specs=in_specs,
        out_specs=pl.BlockSpec((tm, tn), lambda i, j, k: (i, j)),
        scratch_shapes=[pltpu.VMEM((tm, tn), jnp.float32)],
        compiler_params=pltpu.CompilerParams(
            dimension_semantics=("parallel", "parallel", "arbitrary")),
    )(*inputs)
    return out[:M, :N]


def _avgpool_kernel(x_ref, o_ref):
    o_ref[...] = jnp.mean(x_ref[...].astype(jnp.float32), axis=1)


def global_avg_pool(x):
    """x: (N, H*W, C) -> (N, C) f32  (AdaptiveAvgPool2d((1,1)) + flatten), tiled over C."""
    N, L, C = x.shape
    tc = 128 if C % 128 == 0 else C
    return pl.pallas_call(
        _avgpool_kernel,
        out_shape=jax.ShapeDtypeStruct((N, C), jnp.float32),
        grid=(C // tc,),
        in_specs=[pl.BlockSpec((N, L, tc), lambda j: (0, 0, j))],
        out_specs=pl.BlockSpec((N, tc), lambda j: (0, j)),
        compiler_params=pltpu.CompilerParams(dimension_semantics=("parallel",)),
    )(x)


# ----------------------------- JAX glue (layout) ---------------------------

def _extract_patches(x, kh, kw, stride, padding):
    """im2col: x (N,H,W,C) -> (N*Ho*Wo, kh*kw*C) in (i, j, c) column order."""
    # TODO(synk): replace with an implicit-GEMM index_map (no materialized kh*kw
    #             duplicated patches in HBM) to further cut conv input traffic.
    if padding:
        x = jnp.pad(x, ((0, 0), (padding, padding), (padding, padding), (0, 0)))
    n, hp, wp, c = x.shape
    ho = (hp - kh) // stride + 1
    wo = (wp - kw) // stride + 1
    if kh == 1 and kw == 1:
        patches = x[:, ::stride, ::stride, :]
        return patches.reshape(n * ho * wo, c), ho, wo
    cols = []
    for i in range(kh):
        for j in range(kw):
            cols.append(x[:, i:i + stride * (ho - 1) + 1:stride,
                          j:j + stride * (wo - 1) + 1:stride, :])
    patches = jnp.concatenate(cols, axis=-1)
    return patches.reshape(n * ho * wo, kh * kw * c), ho, wo


def conv_apply(x, conv_p, stride, padding, relu, residual=None):
    """Conv2d(bias=False) + folded BatchNorm [+ residual add] [+ ReLU], one kernel."""
    w = conv_p['w']                       # (kh, kw, cin, cout) bf16, BN scale folded
    shift = conv_p['shift']               # (cout,) f32
    kh, kw, cin, cout = w.shape
    n = x.shape[0]
    patches, ho, wo = _extract_patches(x, kh, kw, stride, padding)
    res2d = None if residual is None else residual.reshape(n * ho * wo, cout)
    y = matmul_fused(patches, w.reshape(kh * kw * cin, cout), shift,
                     residual=res2d, relu=relu, out_dtype=jnp.bfloat16)
    return y.reshape(n, ho, wo, cout)


def max_pool_3x3_s2_p1(x):
    """3x3/2 max pool as an elementwise maximum tree (no 9x stacked HBM tensor)."""
    # TODO(synk): could be a dedicated tiled Pallas kernel; left as an XLA max tree
    #             since it is purely memory-bound and reads the input ~once.
    n, h, w, c = x.shape
    neg = jnp.finfo(x.dtype).min
    xp = jnp.pad(x, ((0, 0), (1, 1), (1, 1), (0, 0)), constant_values=neg)
    ho = (h + 2 - 3) // 2 + 1
    wo = (w + 2 - 3) // 2 + 1
    out = None
    for i in range(3):
        for j in range(3):
            tap = xp[:, i:i + 2 * (ho - 1) + 1:2, j:j + 2 * (wo - 1) + 1:2, :]
            out = tap if out is None else jnp.maximum(out, tap)
    return out


# --------------------------- parameter construction -------------------------

def _kaiming_normal(key, kh, kw, cin, cout):
    fan_out = kh * kw * cout                      # mode='fan_out', relu gain
    std = (2.0 / fan_out) ** 0.5
    return jax.random.normal(key, (kh, kw, cin, cout), jnp.float32) * std


def _bn_params(c):
    # (gamma, beta, running_mean, running_var) exactly as the module initializes.
    return (jnp.ones((c,), jnp.float32), jnp.zeros((c,), jnp.float32),
            jnp.zeros((c,), jnp.float32), jnp.ones((c,), jnp.float32))


def init_resnet(key, block='basic', layers=(1, 1, 1, 1), num_classes=10,
                in_channels=3):
    """Raw (PyTorch-equivalent) parameters + static architecture config."""
    keys = iter(jax.random.split(key, 512))
    expansion = 1 if block == 'basic' else 4
    raw = {'conv1': _kaiming_normal(next(keys), 7, 7, in_channels, 64),
           'bn1': _bn_params(64), 'stages': []}
    cfg = {'block': block, 'stages': []}
    inplanes = 64
    for stage_idx, (planes, nblocks) in enumerate(zip((64, 128, 256, 512), layers)):
        stage_stride = 1 if stage_idx == 0 else 2
        blocks_p, blocks_c = [], []
        for b in range(nblocks):
            s = stage_stride if b == 0 else 1
            blk = {}
            if block == 'basic':
                blk['conv1'] = _kaiming_normal(next(keys), 3, 3, inplanes, planes)
                blk['bn1'] = _bn_params(planes)
                blk['conv2'] = _kaiming_normal(next(keys), 3, 3, planes, planes)
                blk['bn2'] = _bn_params(planes)
                out_ch = planes
            else:  # bottleneck, groups=1, base_width=64 -> width == planes
                width = planes
                blk['conv1'] = _kaiming_normal(next(keys), 1, 1, inplanes, width)
                blk['bn1'] = _bn_params(width)
                blk['conv2'] = _kaiming_normal(next(keys), 3, 3, width, width)
                blk['bn2'] = _bn_params(width)
                blk['conv3'] = _kaiming_normal(next(keys), 1, 1, width, planes * 4)
                blk['bn3'] = _bn_params(planes * 4)
                out_ch = planes * 4
            has_down = (s != 1 or inplanes != out_ch)
            if has_down:
                blk['down_conv'] = _kaiming_normal(next(keys), 1, 1, inplanes, out_ch)
                blk['down_bn'] = _bn_params(out_ch)
            blocks_p.append(blk)
            blocks_c.append({'stride': s, 'has_down': has_down})
            inplanes = out_ch
        raw['stages'].append(blocks_p)
        cfg['stages'].append(blocks_c)
    feat = 512 * expansion
    wkey, bkey = jax.random.split(next(keys))
    bound = 1.0 / (feat ** 0.5)                   # torch nn.Linear default init
    raw['fc_w'] = jax.random.uniform(wkey, (feat, num_classes), jnp.float32,
                                     -bound, bound)
    raw['fc_b'] = jax.random.uniform(bkey, (num_classes,), jnp.float32,
                                     -bound, bound)
    return raw, cfg


def prepare_params(raw):
    """One-time: fold BN (eval mode) scale into conv weights, cast weights to bf16."""
    def fold(w, bn):
        gamma, beta, mean, var = bn
        scale = gamma / jnp.sqrt(var + BN_EPS)
        shift = beta - mean * scale
        return {'w': (w * scale[None, None, None, :]).astype(jnp.bfloat16),
                'shift': shift.astype(jnp.float32)}

    params = {'conv1': fold(raw['conv1'], raw['bn1']), 'stages': []}
    for blocks_p in raw['stages']:
        new_blocks = []
        for blk in blocks_p:
            nb = {'conv1': fold(blk['conv1'], blk['bn1']),
                  'conv2': fold(blk['conv2'], blk['bn2'])}
            if 'conv3' in blk:
                nb['conv3'] = fold(blk['conv3'], blk['bn3'])
            if 'down_conv' in blk:
                nb['down'] = fold(blk['down_conv'], blk['down_bn'])
            new_blocks.append(nb)
        params['stages'].append(new_blocks)
    params['fc'] = {'w': raw['fc_w'].astype(jnp.bfloat16),
                    'b': raw['fc_b'].astype(jnp.float32)}
    return params


# --------------------------------- forward ---------------------------------

def _basic_block_forward(x, p, c):
    s = c['stride']
    out = conv_apply(x, p['conv1'], stride=s, padding=1, relu=True)
    identity = (conv_apply(x, p['down'], stride=s, padding=0, relu=False)
                if c['has_down'] else x)
    # conv2 + BN + residual add + ReLU fused into a single kernel epilogue.
    return conv_apply(out, p['conv2'], stride=1, padding=1, relu=True,
                      residual=identity)


def _bottleneck_forward(x, p, c):
    s = c['stride']
    out = conv_apply(x, p['conv1'], stride=1, padding=0, relu=True)
    out = conv_apply(out, p['conv2'], stride=s, padding=1, relu=True)
    identity = (conv_apply(x, p['down'], stride=s, padding=0, relu=False)
                if c['has_down'] else x)
    return conv_apply(out, p['conv3'], stride=1, padding=0, relu=True,
                      residual=identity)


def resnet_forward(params, x_nchw, *, config):
    x = jnp.transpose(x_nchw, (0, 2, 3, 1)).astype(jnp.bfloat16)  # NCHW -> NHWC
    x = conv_apply(x, params['conv1'], stride=2, padding=3, relu=True)
    x = max_pool_3x3_s2_p1(x)
    block_fn = (_basic_block_forward if config['block'] == 'basic'
                else _bottleneck_forward)
    for stage_p, stage_c in zip(params['stages'], config['stages']):
        for blk_p, blk_c in zip(stage_p, stage_c):
            x = block_fn(x, blk_p, blk_c)
    n, h, w, c = x.shape
    feats = global_avg_pool(x.reshape(n, h * w, c))               # (N, C) f32
    logits = matmul_fused(feats, params['fc']['w'], params['fc']['b'],
                          relu=False, out_dtype=jnp.float32)
    return logits


# ----------------------------------- main -----------------------------------

if __name__ == "__main__":
    key = jax.random.PRNGKey(0)
    pkey, xkey = jax.random.split(key)
    # Small ResNet (BasicBlock, layers=[1,1,1,1], 10 classes) on a 32x32 RGB input.
    raw, cfg = init_resnet(pkey, block='basic', layers=(1, 1, 1, 1),
                           num_classes=10, in_channels=3)
    params = prepare_params(raw)
    x = jax.random.normal(xkey, (2, 3, 32, 32), jnp.float32)      # NCHW like PyTorch
    fwd = jax.jit(functools.partial(resnet_forward, config=cfg))
    logits = fwd(params, x)
    jax.block_until_ready(logits)
    assert logits.shape == (2, 10) and logits.dtype == jnp.float32
    print("KERNEL_OK")
</pallas_src>

<mosaic_0001>
module attributes {stable_mosaic.version = 11 : i64} {
  func.func @_matmul_kernel(%arg0: i32, %arg1: i32, %arg2: i32, %arg3: memref<256x256xbf16, #tpu.memory_space<vmem>>, %arg4: memref<256x128xbf16, #tpu.memory_space<vmem>>, %arg5: memref<1x128xf32, #tpu.memory_space<vmem>>, %arg6: memref<256x128xbf16, #tpu.memory_space<vmem>>, %arg7: memref<256x128xf32, #tpu.memory_space<vmem>>) attributes {dimension_semantics = [#tpu.dimension_semantics<parallel>, #tpu.dimension_semantics<parallel>, #tpu.dimension_semantics<arbitrary>], iteration_bounds = array<i64: 2, 1, 1>, scalar_prefetch = 0 : i64, scratch_operands = 1 : i64, tpu.core_type = #tpu.core_type<tc>, window_params = [{transform_indices = @transform_0, window_bounds = array<i64: 256, 256>}, {transform_indices = @transform_1, window_bounds = array<i64: 256, 128>}, {transform_indices = @transform_2, window_bounds = array<i64: 1, 128>}, {transform_indices = @transform_3, window_bounds = array<i64: 256, 128>}]} {
    %c0_i32 = arith.constant 0 : i32
    %0 = arith.cmpi eq, %arg2, %c0_i32 : i32
    %1 = arith.extui %0 : i1 to i32
    %c0_i32_0 = arith.constant 0 : i32
    %2 = arith.cmpi ne, %1, %c0_i32_0 : i32
    scf.if %2 {
      %cst_10 = arith.constant 0.000000e+00 : f32
      %12 = vector.broadcast %cst_10 : f32 to vector<256x128xf32>
      %c0_11 = arith.constant 0 : index
      %c0_12 = arith.constant 0 : index
      %13 = vector.load %arg7[%c0_11, %c0_12] : memref<256x128xf32, #tpu.memory_space<vmem>>, vector<256x128xf32>
      tpu.vector_store %arg7[%c0_11, %c0_12], %12 {strides = array<i32>} : memref<256x128xf32, #tpu.memory_space<vmem>>, vector<256x128xf32>,
    } else {
    }
    %c0 = arith.constant 0 : index
    %c0_1 = arith.constant 0 : index
    %3 = vector.load %arg7[%c0, %c0_1] : memref<256x128xf32, #tpu.memory_space<vmem>>, vector<256x128xf32>
    %c0_2 = arith.constant 0 : index
    %c0_3 = arith.constant 0 : index
    %4 = vector.load %arg3[%c0_2, %c0_3] : memref<256x256xbf16, #tpu.memory_space<vmem>>, vector<256x256xbf16>
    %c0_4 = arith.constant 0 : index
    %c0_5 = arith.constant 0 : index
    %5 = vector.load %arg4[%c0_4, %c0_5] : memref<256x128xbf16, #tpu.memory_space<vmem>>, vector<256x128xbf16>
    %cst = arith.constant dense<0.000000e+00> : vector<256x128xf32>
    %6 = tpu.matmul %4, %5, %cst {dimension_numbers = #tpu.dot_dimension_numbers<[1], [0], [0], [1], [0, 0, 1, 1], [], []>} : vector<256x256xbf16>, vector<256x128xbf16>, vector<256x128xf32> -> vector<256x128xf32>
    %7 = arith.addf %3, %6 : vector<256x128xf32>
    %c0_6 = arith.constant 0 : index
    %c0_7 = arith.constant 0 : index
    %8 = vector.load %arg7[%c0_6, %c0_7] : memref<256x128xf32, #tpu.memory_space<vmem>>, vector<256x128xf32>
    tpu.vector_store %arg7[%c0_6, %c0_7], %7 {strides = array<i32>} : memref<256x128xf32, #tpu.memory_space<vmem>>, vector<256x128xf32>,
    %c0_i32_8 = arith.constant 0 : i32
    %9 = arith.cmpi eq, %arg2, %c0_i32_8 : i32
    %10 = arith.extui %9 : i1 to i32
    %c0_i32_9 = arith.constant 0 : i32
    %11 = arith.cmpi ne, %10, %c0_i32_9 : i32
    scf.if %11 {
      %c0_10 = arith.constant 0 : index
      %c0_11 = arith.constant 0 : index
      %12 = vector.load %arg7[%c0_10, %c0_11] : memref<256x128xf32, #tpu.memory_space<vmem>>, vector<256x128xf32>
      %c0_12 = arith.constant 0 : index
      %c0_13 = arith.constant 0 : index
      %13 = vector.load %arg5[%c0_12, %c0_13] : memref<1x128xf32, #tpu.memory_space<vmem>>, vector<1x128xf32>
      %14 = vector.broadcast %13 : vector<1x128xf32> to vector<256x128xf32>
      %15 = arith.addf %12, %14 : vector<256x128xf32>
      %cst_14 = arith.constant 0.000000e+00 : f32
      %16 = vector.broadcast %cst_14 : f32 to vector<256x128xf32>
      %17 = arith.maximumf %15, %16 : vector<256x128xf32>
      %18 = arith.truncf %17 : vector<256x128xf32> to vector<256x128xbf16>
      %c0_15 = arith.constant 0 : index
      %c0_16 = arith.constant 0 : index
      %19 = vector.load %arg6[%c0_15, %c0_16] : memref<256x128xbf16, #tpu.memory_space<vmem>>, vector<256x128xbf16>
      tpu.vector_store %arg6[%c0_15, %c0_16], %18 {strides = array<i32>} : memref<256x128xbf16, #tpu.memory_space<vmem>>, vector<256x128xbf16>,
    } else {
    }
    return
  }
  func.func @transform_0(%arg0: i32, %arg1: i32, %arg2: i32) -> (i32, i32) {
    %c0_i32 = arith.constant 0 : i32
    return %arg0, %arg2 : i32, i32
  }
  func.func @transform_1(%arg0: i32, %arg1: i32, %arg2: i32) -> (i32, i32) {
    %c0_i32 = arith.constant 0 : i32
    return %arg2, %arg1 : i32, i32
  }
  func.func @transform_2(%arg0: i32, %arg1: i32, %arg2: i32) -> (i32, i32) {
    %c0_i32 = arith.constant 0 : i32
    %c0_i32_0 = arith.constant 0 : i32
    return %c0_i32, %arg1 : i32, i32
  }
  func.func @transform_3(%arg0: i32, %arg1: i32, %arg2: i32) -> (i32, i32) {
    %c0_i32 = arith.constant 0 : i32
    return %arg0, %arg1 : i32, i32
  }
}

module attributes {stable_mosaic.version = 11 : i64} {
  func.func @_matmul_kernel(%arg0: i32, %arg1: i32, %arg2: i32, %arg3: memref<128x128xbf16, #tpu.memory_space<vmem>>, %arg4: memref<128x128xbf16, #tpu.memory_space<vmem>>, %arg5: memref<1x128xf32, #tpu.memory_space<vmem>>, %arg6: memref<128x128xbf16, #tpu.memory_space<vmem>>, %arg7: memref<128x128xf32, #tpu.memory_space<vmem>>) attributes {dimension_semantics = [#tpu.dimension_semantics<parallel>, #tpu.dimension_semantics<parallel>, #tpu.dimension_semantics<arbitrary>], iteration_bounds = array<i64: 1, 1, 5>, scalar_prefetch = 0 : i64, scratch_operands = 1 : i64, tpu.core_type = #tpu.core_type<tc>, window_params = [{transform_indices = @transform_0, window_bounds = array<i64: 128, 128>}, {transform_indices = @transform_1, window_bounds = array<i64: 128, 128>}, {transform_indices = @transform_2, window_bounds = array<i64: 1, 128>}, {transform_indices = @transform_3, window_bounds = array<i64: 128, 128>}]} {
    %c0_i32 = arith.constant 0 : i32
    %0 = arith.cmpi eq, %arg2, %c0_i32 : i32
    %1 = arith.extui %0 : i1 to i32
    %c0_i32_0 = arith.constant 0 : i32
    %2 = arith.cmpi ne, %1, %c0_i32_0 : i32
    scf.if %2 {
      %cst_9 = arith.constant 0.000000e+00 : f32
      %12 = vector.broadcast %cst_9 : f32 to vector<128x128xf32>
      %c0_10 = arith.constant 0 : index
      %c0_11 = arith.constant 0 : index
      %13 = vector.load %arg7[%c0_10, %c0_11] : memref<128x128xf32, #tpu.memory_space<vmem>>, vector<128x128xf32>
      tpu.vector_store %arg7[%c0_10, %c0_11], %12 {strides = array<i32>} : memref<128x128xf32, #tpu.memory_space<vmem>>, vector<128x128xf32>,
    } else {
    }
    %c0 = arith.constant 0 : index
    %c0_1 = arith.constant 0 : index
    %3 = vector.load %arg7[%c0, %c0_1] : memref<128x128xf32, #tpu.memory_space<vmem>>, vector<128x128xf32>
    %c0_2 = arith.constant 0 : index
    %c0_3 = arith.constant 0 : index
    %4 = vector.load %arg3[%c0_2, %c0_3] : memref<128x128xbf16, #tpu.memory_space<vmem>>, vector<128x128xbf16>
    %c0_4 = arith.constant 0 : index
    %c0_5 = arith.constant 0 : index
    %5 = vector.load %arg4[%c0_4, %c0_5] : memref<128x128xbf16, #tpu.memory_space<vmem>>, vector<128x128xbf16>
    %cst = arith.constant dense<0.000000e+00> : vector<128x128xf32>
    %6 = tpu.matmul %4, %5, %cst {dimension_numbers = #tpu.dot_dimension_numbers<[1], [0], [0], [1], [0, 0, 1, 1], [], []>} : vector<128x128xbf16>, vector<128x128xbf16>, vector<128x128xf32> -> vector<128x128xf32>
    %7 = arith.addf %3, %6 : vector<128x128xf32>
    %c0_6 = arith.constant 0 : index
    %c0_7 = arith.constant 0 : index
    %8 = vector.load %arg7[%c0_6, %c0_7] : memref<128x128xf32, #tpu.memory_space<vmem>>, vector<128x128xf32>
    tpu.vector_store %arg7[%c0_6, %c0_7], %7 {strides = array<i32>} : memref<128x128xf32, #tpu.memory_space<vmem>>, vector<128x128xf32>,
    %c4_i32 = arith.constant 4 : i32
    %9 = arith.cmpi eq, %arg2, %c4_i32 : i32
    %10 = arith.extui %9 : i1 to i32
    %c0_i32_8 = arith.constant 0 : i32
    %11 = arith.cmpi ne, %10, %c0_i32_8 : i32
    scf.if %11 {
      %c0_9 = arith.constant 0 : index
      %c0_10 = arith.constant 0 : index
      %12 = vector.load %arg7[%c0_9, %c0_10] : memref<128x128xf32, #tpu.memory_space<vmem>>, vector<128x128xf32>
      %c0_11 = arith.constant 0 : index
      %c0_12 = arith.constant 0 : index
      %13 = vector.load %arg5[%c0_11, %c0_12] : memref<1x128xf32, #tpu.memory_space<vmem>>, vector<1x128xf32>
      %14 = vector.broadcast %13 : vector<1x128xf32> to vector<128x128xf32>
      %15 = arith.addf %12, %14 : vector<128x128xf32>
      %cst_13 = arith.constant 0.000000e+00 : f32
      %16 = vector.broadcast %cst_13 : f32 to vector<128x128xf32>
      %17 = arith.maximumf %15, %16 : vector<128x128xf32>
      %18 = arith.truncf %17 : vector<128x128xf32> to vector<128x128xbf16>
      %c0_14 = arith.constant 0 : index
      %c0_15 = arith.constant 0 : index
      %19 = vector.load %arg6[%c0_14, %c0_15] : memref<128x128xbf16, #tpu.memory_space<vmem>>, vector<128x128xbf16>
      tpu.vector_store %arg6[%c0_14, %c0_15], %18 {strides = array<i32>} : memref<128x128xbf16, #tpu.memory_space<vmem>>, vector<128x128xbf16>,
    } else {
    }
    return
  }
  func.func @transform_0(%arg0: i32, %arg1: i32, %arg2: i32) -> (i32, i32) {
    %c0_i32 = arith.constant 0 : i32
    return %arg0, %arg2 : i32, i32
  }
  func.func @transform_1(%arg0: i32, %arg1: i32, %arg2: i32) -> (i32, i32) {
    %c0_i32 = arith.constant 0 : i32
    return %arg2, %arg1 : i32, i32
  }
  func.func @transform_2(%arg0: i32, %arg1: i32, %arg2: i32) -> (i32, i32) {
    %c0_i32 = arith.constant 0 : i32
    %c0_i32_0 = arith.constant 0 : i32
    return %c0_i32, %arg1 : i32, i32
  }
  func.func @transform_3(%arg0: i32, %arg1: i32, %arg2: i32) -> (i32, i32) {
    %c0_i32 = arith.constant 0 : i32
    return %arg0, %arg1 : i32, i32
  }
}

module attributes {stable_mosaic.version = 11 : i64} {
  func.func @_matmul_res_kernel(%arg0: i32, %arg1: i32, %arg2: i32, %arg3: memref<128x128xbf16, #tpu.memory_space<vmem>>, %arg4: memref<128x128xbf16, #tpu.memory_space<vmem>>, %arg5: memref<1x128xf32, #tpu.memory_space<vmem>>, %arg6: memref<128x128xbf16, #tpu.memory_space<vmem>>, %arg7: memref<128x128xbf16, #tpu.memory_space<vmem>>, %arg8: memref<128x128xf32, #tpu.memory_space<vmem>>) attributes {dimension_semantics = [#tpu.dimension_semantics<parallel>, #tpu.dimension_semantics<parallel>, #tpu.dimension_semantics<arbitrary>], iteration_bounds = array<i64: 1, 1, 5>, scalar_prefetch = 0 : i64, scratch_operands = 1 : i64, tpu.core_type = #tpu.core_type<tc>, window_params = [{transform_indices = @transform_0, window_bounds = array<i64: 128, 128>}, {transform_indices = @transform_1, window_bounds = array<i64: 128, 128>}, {transform_indices = @transform_2, window_bounds = array<i64: 1, 128>}, {transform_indices = @transform_3, window_bounds = array<i64: 128, 128>}, {transform_indices = @transform_4, window_bounds = array<i64: 128, 128>}]} {
    %c0_i32 = arith.constant 0 : i32
    %0 = arith.cmpi eq, %arg2, %c0_i32 : i32
    %1 = arith.extui %0 : i1 to i32
    %c0_i32_0 = arith.constant 0 : i32
    %2 = arith.cmpi ne, %1, %c0_i32_0 : i32
    scf.if %2 {
      %cst_9 = arith.constant 0.000000e+00 : f32
      %12 = vector.broadcast %cst_9 : f32 to vector<128x128xf32>
      %c0_10 = arith.constant 0 : index
      %c0_11 = arith.constant 0 : index
      %13 = vector.load %arg8[%c0_10, %c0_11] : memref<128x128xf32, #tpu.memory_space<vmem>>, vector<128x128xf32>
      tpu.vector_store %arg8[%c0_10, %c0_11], %12 {strides = array<i32>} : memref<128x128xf32, #tpu.memory_space<vmem>>, vector<128x128xf32>,
    } else {
    }
    %c0 = arith.constant 0 : index
    %c0_1 = arith.constant 0 : index
    %3 = vector.load %arg8[%c0, %c0_1] : memref<128x128xf32, #tpu.memory_space<vmem>>, vector<128x128xf32>
    %c0_2 = arith.constant 0 : index
    %c0_3 = arith.constant 0 : index
    %4 = vector.load %arg3[%c0_2, %c0_3] : memref<128x128xbf16, #tpu.memory_space<vmem>>, vector<128x128xbf16>
    %c0_4 = arith.constant 0 : index
    %c0_5 = arith.constant 0 : index
    %5 = vector.load %arg4[%c0_4, %c0_5] : memref<128x128xbf16, #tpu.memory_space<vmem>>, vector<128x128xbf16>
    %cst = arith.constant dense<0.000000e+00> : vector<128x128xf32>
    %6 = tpu.matmul %4, %5, %cst {dimension_numbers = #tpu.dot_dimension_numbers<[1], [0], [0], [1], [0, 0, 1, 1], [], []>} : vector<128x128xbf16>, vector<128x128xbf16>, vector<128x128xf32> -> vector<128x128xf32>
    %7 = arith.addf %3, %6 : vector<128x128xf32>
    %c0_6 = arith.constant 0 : index
    %c0_7 = arith.constant 0 : index
    %8 = vector.load %arg8[%c0_6, %c0_7] : memref<128x128xf32, #tpu.memory_space<vmem>>, vector<128x128xf32>
    tpu.vector_store %arg8[%c0_6, %c0_7], %7 {strides = array<i32>} : memref<128x128xf32, #tpu.memory_space<vmem>>, vector<128x128xf32>,
    %c4_i32 = arith.constant 4 : i32
    %9 = arith.cmpi eq, %arg2, %c4_i32 : i32
    %10 = arith.extui %9 : i1 to i32
    %c0_i32_8 = arith.constant 0 : i32
    %11 = arith.cmpi ne, %10, %c0_i32_8 : i32
    scf.if %11 {
      %c0_9 = arith.constant 0 : index
      %c0_10 = arith.constant 0 : index
      %12 = vector.load %arg8[%c0_9, %c0_10] : memref<128x128xf32, #tpu.memory_space<vmem>>, vector<128x128xf32>
      %c0_11 = arith.constant 0 : index
      %c0_12 = arith.constant 0 : index
      %13 = vector.load %arg5[%c0_11, %c0_12] : memref<1x128xf32, #tpu.memory_space<vmem>>, vector<1x128xf32>
      %14 = vector.broadcast %13 : vector<1x128xf32> to vector<128x128xf32>
      %15 = arith.addf %12, %14 : vector<128x128xf32>
      %c0_13 = arith.constant 0 : index
      %c0_14 = arith.constant 0 : index
      %16 = vector.load %arg6[%c0_13, %c0_14] : memref<128x128xbf16, #tpu.memory_space<vmem>>, vector<128x128xbf16>
      %17 = arith.extf %16 : vector<128x128xbf16> to vector<128x128xf32>
      %18 = arith.addf %15, %17 : vector<128x128xf32>
      %cst_15 = arith.constant 0.000000e+00 : f32
      %19 = vector.broadcast %cst_15 : f32 to vector<128x128xf32>
      %20 = arith.maximumf %18, %19 : vector<128x128xf32>
      %21 = arith.truncf %20 : vector<128x128xf32> to vector<128x128xbf16>
      %c0_16 = arith.constant 0 : index
      %c0_17 = arith.constant 0 : index
      %22 = vector.load %arg7[%c0_16, %c0_17] : memref<128x128xbf16, #tpu.memory_space<vmem>>, vector<128x128xbf16>
      tpu.vector_store %arg7[%c0_16, %c0_17], %21 {strides = array<i32>} : memref<128x128xbf16, #tpu.memory_space<vmem>>, vector<128x128xbf16>,
    } else {
    }
    return
  }
  func.func @transform_0(%arg0: i32, %arg1: i32, %arg2: i32) -> (i32, i32) {
    %c0_i32 = arith.constant 0 : i32
    return %arg0, %arg2 : i32, i32
  }
  func.func @transform_1(%arg0: i32, %arg1: i32, %arg2: i32) -> (i32, i32) {
    %c0_i32 = arith.constant 0 : i32
    return %arg2, %arg1 : i32, i32
  }
  func.func @transform_2(%arg0: i32, %arg1: i32, %arg2: i32) -> (i32, i32) {
    %c0_i32 = arith.constant 0 : i32
    %c0_i32_0 = arith.constant 0 : i32
    return %c0_i32, %arg1 : i32, i32
  }
  func.func @transform_3(%arg0: i32, %arg1: i32, %arg2: i32) -> (i32, i32) {
    %c0_i32 = arith.constant 0 : i32
    return %arg0, %arg1 : i32, i32
  }
  func.func @transform_4(%arg0: i32, %arg1: i32, %arg2: i32) -> (i32, i32) {
    %c0_i32 = arith.constant 0 : i32
    return %arg0, %arg1 : i32, i32
  }
}

module attributes {stable_mosaic.version = 11 : i64} {
  func.func @_matmul_kernel(%arg0: i32, %arg1: i32, %arg2: i32, %arg3: memref<32x128xbf16, #tpu.memory_space<vmem>>, %arg4: memref<128x128xbf16, #tpu.memory_space<vmem>>, %arg5: memref<1x128xf32, #tpu.memory_space<vmem>>, %arg6: memref<32x128xbf16, #tpu.memory_space<vmem>>, %arg7: memref<32x128xf32, #tpu.memory_space<vmem>>) attributes {dimension_semantics = [#tpu.dimension_semantics<parallel>, #tpu.dimension_semantics<parallel>, #tpu.dimension_semantics<arbitrary>], iteration_bounds = array<i64: 1, 1, 5>, scalar_prefetch = 0 : i64, scratch_operands = 1 : i64, tpu.core_type = #tpu.core_type<tc>, window_params = [{transform_indices = @transform_0, window_bounds = array<i64: 32, 128>}, {transform_indices = @transform_1, window_bounds = array<i64: 128, 128>}, {transform_indices = @transform_2, window_bounds = array<i64: 1, 128>}, {transform_indices = @transform_3, window_bounds = array<i64: 32, 128>}]} {
    %c0_i32 = arith.constant 0 : i32
    %0 = arith.cmpi eq, %arg2, %c0_i32 : i32
    %1 = arith.extui %0 : i1 to i32
    %c0_i32_0 = arith.constant 0 : i32
    %2 = arith.cmpi ne, %1, %c0_i32_0 : i32
    scf.if %2 {
      %cst_9 = arith.constant 0.000000e+00 : f32
      %12 = vector.broadcast %cst_9 : f32 to vector<32x128xf32>
      %c0_10 = arith.constant 0 : index
      %c0_11 = arith.constant 0 : index
      %13 = vector.load %arg7[%c0_10, %c0_11] : memref<32x128xf32, #tpu.memory_space<vmem>>, vector<32x128xf32>
      tpu.vector_store %arg7[%c0_10, %c0_11], %12 {strides = array<i32>} : memref<32x128xf32, #tpu.memory_space<vmem>>, vector<32x128xf32>,
    } else {
    }
    %c0 = arith.constant 0 : index
    %c0_1 = arith.constant 0 : index
    %3 = vector.load %arg7[%c0, %c0_1] : memref<32x128xf32, #tpu.memory_space<vmem>>, vector<32x128xf32>
    %c0_2 = arith.constant 0 : index
    %c0_3 = arith.constant 0 : index
    %4 = vector.load %arg3[%c0_2, %c0_3] : memref<32x128xbf16, #tpu.memory_space<vmem>>, vector<32x128xbf16>
    %c0_4 = arith.constant 0 : index
    %c0_5 = arith.constant 0 : index
    %5 = vector.load %arg4[%c0_4, %c0_5] : memref<128x128xbf16, #tpu.memory_space<vmem>>, vector<128x128xbf16>
    %cst = arith.constant dense<0.000000e+00> : vector<32x128xf32>
    %6 = tpu.matmul %4, %5, %cst {dimension_numbers = #tpu.dot_dimension_numbers<[1], [0], [0], [1], [0, 0, 1, 1], [], []>} : vector<32x128xbf16>, vector<128x128xbf16>, vector<32x128xf32> -> vector<32x128xf32>
    %7 = arith.addf %3, %6 : vector<32x128xf32>
    %c0_6 = arith.constant 0 : index
    %c0_7 = arith.constant 0 : index
    %8 = vector.load %arg7[%c0_6, %c0_7] : memref<32x128xf32, #tpu.memory_space<vmem>>, vector<32x128xf32>
    tpu.vector_store %arg7[%c0_6, %c0_7], %7 {strides = array<i32>} : memref<32x128xf32, #tpu.memory_space<vmem>>, vector<32x128xf32>,
    %c4_i32 = arith.constant 4 : i32
    %9 = arith.cmpi eq, %arg2, %c4_i32 : i32
    %10 = arith.extui %9 : i1 to i32
    %c0_i32_8 = arith.constant 0 : i32
    %11 = arith.cmpi ne, %10, %c0_i32_8 : i32
    scf.if %11 {
      %c0_9 = arith.constant 0 : index
      %c0_10 = arith.constant 0 : index
      %12 = vector.load %arg7[%c0_9, %c0_10] : memref<32x128xf32, #tpu.memory_space<vmem>>, vector<32x128xf32>
      %c0_11 = arith.constant 0 : index
      %c0_12 = arith.constant 0 : index
      %13 = vector.load %arg5[%c0_11, %c0_12] : memref<1x128xf32, #tpu.memory_space<vmem>>, vector<1x128xf32>
      %14 = vector.broadcast %13 : vector<1x128xf32> to vector<32x128xf32>
      %15 = arith.addf %12, %14 : vector<32x128xf32>
      %cst_13 = arith.constant 0.000000e+00 : f32
      %16 = vector.broadcast %cst_13 : f32 to vector<32x128xf32>
      %17 = arith.maximumf %15, %16 : vector<32x128xf32>
      %18 = arith.truncf %17 : vector<32x128xf32> to vector<32x128xbf16>
      %c0_14 = arith.constant 0 : index
      %c0_15 = arith.constant 0 : index
      %19 = vector.load %arg6[%c0_14, %c0_15] : memref<32x128xbf16, #tpu.memory_space<vmem>>, vector<32x128xbf16>
      tpu.vector_store %arg6[%c0_14, %c0_15], %18 {strides = array<i32>} : memref<32x128xbf16, #tpu.memory_space<vmem>>, vector<32x128xbf16>,
    } else {
    }
    return
  }
  func.func @transform_0(%arg0: i32, %arg1: i32, %arg2: i32) -> (i32, i32) {
    %c0_i32 = arith.constant 0 : i32
    return %arg0, %arg2 : i32, i32
  }
  func.func @transform_1(%arg0: i32, %arg1: i32, %arg2: i32) -> (i32, i32) {
    %c0_i32 = arith.constant 0 : i32
    return %arg2, %arg1 : i32, i32
  }
  func.func @transform_2(%arg0: i32, %arg1: i32, %arg2: i32) -> (i32, i32) {
    %c0_i32 = arith.constant 0 : i32
    %c0_i32_0 = arith.constant 0 : i32
    return %c0_i32, %arg1 : i32, i32
  }
  func.func @transform_3(%arg0: i32, %arg1: i32, %arg2: i32) -> (i32, i32) {
    %c0_i32 = arith.constant 0 : i32
    return %arg0, %arg1 : i32, i32
  }
}

module attributes {stable_mosaic.version = 11 : i64} {
  func.func @_matmul_kernel(%arg0: i32, %arg1: i32, %arg2: i32, %arg3: memref<32x128xbf16, #tpu.memory_space<vmem>>, %arg4: memref<128x128xbf16, #tpu.memory_space<vmem>>, %arg5: memref<1x128xf32, #tpu.memory_space<vmem>>, %arg6: memref<32x128xbf16, #tpu.memory_space<vmem>>, %arg7: memref<32x128xf32, #tpu.memory_space<vmem>>) attributes {dimension_semantics = [#tpu.dimension_semantics<parallel>, #tpu.dimension_semantics<parallel>, #tpu.dimension_semantics<arbitrary>], iteration_bounds = array<i64: 1, 1, 1>, scalar_prefetch = 0 : i64, scratch_operands = 1 : i64, tpu.core_type = #tpu.core_type<tc>, window_params = [{transform_indices = @transform_0, window_bounds = array<i64: 32, 128>}, {transform_indices = @transform_1, window_bounds = array<i64: 128, 128>}, {transform_indices = @transform_2, window_bounds = array<i64: 1, 128>}, {transform_indices = @transform_3, window_bounds = array<i64: 32, 128>}]} {
    %c0_i32 = arith.constant 0 : i32
    %0 = arith.cmpi eq, %arg2, %c0_i32 : i32
    %1 = arith.extui %0 : i1 to i32
    %c0_i32_0 = arith.constant 0 : i32
    %2 = arith.cmpi ne, %1, %c0_i32_0 : i32
    scf.if %2 {
      %cst_10 = arith.constant 0.000000e+00 : f32
      %12 = vector.broadcast %cst_10 : f32 to vector<32x128xf32>
      %c0_11 = arith.constant 0 : index
      %c0_12 = arith.constant 0 : index
      %13 = vector.load %arg7[%c0_11, %c0_12] : memref<32x128xf32, #tpu.memory_space<vmem>>, vector<32x128xf32>
      tpu.vector_store %arg7[%c0_11, %c0_12], %12 {strides = array<i32>} : memref<32x128xf32, #tpu.memory_space<vmem>>, vector<32x128xf32>,
    } else {
    }
    %c0 = arith.constant 0 : index
    %c0_1 = arith.constant 0 : index
    %3 = vector.load %arg7[%c0, %c0_1] : memref<32x128xf32, #tpu.memory_space<vmem>>, vector<32x128xf32>
    %c0_2 = arith.constant 0 : index
    %c0_3 = arith.constant 0 : index
    %4 = vector.load %arg3[%c0_2, %c0_3] : memref<32x128xbf16, #tpu.memory_space<vmem>>, vector<32x128xbf16>
    %c0_4 = arith.constant 0 : index
    %c0_5 = arith.constant 0 : index
    %5 = vector.load %arg4[%c0_4, %c0_5] : memref<128x128xbf16, #tpu.memory_space<vmem>>, vector<128x128xbf16>
    %cst = arith.constant dense<0.000000e+00> : vector<32x128xf32>
    %6 = tpu.matmul %4, %5, %cst {dimension_numbers = #tpu.dot_dimension_numbers<[1], [0], [0], [1], [0, 0, 1, 1], [], []>} : vector<32x128xbf16>, vector<128x128xbf16>, vector<32x128xf32> -> vector<32x128xf32>
    %7 = arith.addf %3, %6 : vector<32x128xf32>
    %c0_6 = arith.constant 0 : index
    %c0_7 = arith.constant 0 : index
    %8 = vector.load %arg7[%c0_6, %c0_7] : memref<32x128xf32, #tpu.memory_space<vmem>>, vector<32x128xf32>
    tpu.vector_store %arg7[%c0_6, %c0_7], %7 {strides = array<i32>} : memref<32x128xf32, #tpu.memory_space<vmem>>, vector<32x128xf32>,
    %c0_i32_8 = arith.constant 0 : i32
    %9 = arith.cmpi eq, %arg2, %c0_i32_8 : i32
    %10 = arith.extui %9 : i1 to i32
    %c0_i32_9 = arith.constant 0 : i32
    %11 = arith.cmpi ne, %10, %c0_i32_9 : i32
    scf.if %11 {
      %c0_10 = arith.constant 0 : index
      %c0_11 = arith.constant 0 : index
      %12 = vector.load %arg7[%c0_10, %c0_11] : memref<32x128xf32, #tpu.memory_space<vmem>>, vector<32x128xf32>
      %c0_12 = arith.constant 0 : index
      %c0_13 = arith.constant 0 : index
      %13 = vector.load %arg5[%c0_12, %c0_13] : memref<1x128xf32, #tpu.memory_space<vmem>>, vector<1x128xf32>
      %14 = vector.broadcast %13 : vector<1x128xf32> to vector<32x128xf32>
      %15 = arith.addf %12, %14 : vector<32x128xf32>
      %16 = arith.truncf %15 : vector<32x128xf32> to vector<32x128xbf16>
      %c0_14 = arith.constant 0 : index
      %c0_15 = arith.constant 0 : index
      %17 = vector.load %arg6[%c0_14, %c0_15] : memref<32x128xbf16, #tpu.memory_space<vmem>>, vector<32x128xbf16>
      tpu.vector_store %arg6[%c0_14, %c0_15], %16 {strides = array<i32>} : memref<32x128xbf16, #tpu.memory_space<vmem>>, vector<32x128xbf16>,
    } else {
    }
    return
  }
  func.func @transform_0(%arg0: i32, %arg1: i32, %arg2: i32) -> (i32, i32) {
    %c0_i32 = arith.constant 0 : i32
    return %arg0, %arg2 : i32, i32
  }
  func.func @transform_1(%arg0: i32, %arg1: i32, %arg2: i32) -> (i32, i32) {
    %c0_i32 = arith.constant 0 : i32
    return %arg2, %arg1 : i32, i32
  }
  func.func @transform_2(%arg0: i32, %arg1: i32, %arg2: i32) -> (i32, i32) {
    %c0_i32 = arith.constant 0 : i32
    %c0_i32_0 = arith.constant 0 : i32
    return %c0_i32, %arg1 : i32, i32
  }
  func.func @transform_3(%arg0: i32, %arg1: i32, %arg2: i32) -> (i32, i32) {
    %c0_i32 = arith.constant 0 : i32
    return %arg0, %arg1 : i32, i32
  }
}

module attributes {stable_mosaic.version = 11 : i64} {
  func.func @_matmul_res_kernel(%arg0: i32, %arg1: i32, %arg2: i32, %arg3: memref<32x128xbf16, #tpu.memory_space<vmem>>, %arg4: memref<128x128xbf16, #tpu.memory_space<vmem>>, %arg5: memref<1x128xf32, #tpu.memory_space<vmem>>, %arg6: memref<32x128xbf16, #tpu.memory_space<vmem>>, %arg7: memref<32x128xbf16, #tpu.memory_space<vmem>>, %arg8: memref<32x128xf32, #tpu.memory_space<vmem>>) attributes {dimension_semantics = [#tpu.dimension_semantics<parallel>, #tpu.dimension_semantics<parallel>, #tpu.dimension_semantics<arbitrary>], iteration_bounds = array<i64: 1, 1, 9>, scalar_prefetch = 0 : i64, scratch_operands = 1 : i64, tpu.core_type = #tpu.core_type<tc>, window_params = [{transform_indices = @transform_0, window_bounds = array<i64: 32, 128>}, {transform_indices = @transform_1, window_bounds = array<i64: 128, 128>}, {transform_indices = @transform_2, window_bounds = array<i64: 1, 128>}, {transform_indices = @transform_3, window_bounds = array<i64: 32, 128>}, {transform_indices = @transform_4, window_bounds = array<i64: 32, 128>}]} {
    %c0_i32 = arith.constant 0 : i32
    %0 = arith.cmpi eq, %arg2, %c0_i32 : i32
    %1 = arith.extui %0 : i1 to i32
    %c0_i32_0 = arith.constant 0 : i32
    %2 = arith.cmpi ne, %1, %c0_i32_0 : i32
    scf.if %2 {
      %cst_9 = arith.constant 0.000000e+00 : f32
      %12 = vector.broadcast %cst_9 : f32 to vector<32x128xf32>
      %c0_10 = arith.constant 0 : index
      %c0_11 = arith.constant 0 : index
      %13 = vector.load %arg8[%c0_10, %c0_11] : memref<32x128xf32, #tpu.memory_space<vmem>>, vector<32x128xf32>
      tpu.vector_store %arg8[%c0_10, %c0_11], %12 {strides = array<i32>} : memref<32x128xf32, #tpu.memory_space<vmem>>, vector<32x128xf32>,
    } else {
    }
    %c0 = arith.constant 0 : index
    %c0_1 = arith.constant 0 : index
    %3 = vector.load %arg8[%c0, %c0_1] : memref<32x128xf32, #tpu.memory_space<vmem>>, vector<32x128xf32>
    %c0_2 = arith.constant 0 : index
    %c0_3 = arith.constant 0 : index
    %4 = vector.load %arg3[%c0_2, %c0_3] : memref<32x128xbf16, #tpu.memory_space<vmem>>, vector<32x128xbf16>
    %c0_4 = arith.constant 0 : index
    %c0_5 = arith.constant 0 : index
    %5 = vector.load %arg4[%c0_4, %c0_5] : memref<128x128xbf16, #tpu.memory_space<vmem>>, vector<128x128xbf16>
    %cst = arith.constant dense<0.000000e+00> : vector<32x128xf32>
    %6 = tpu.matmul %4, %5, %cst {dimension_numbers = #tpu.dot_dimension_numbers<[1], [0], [0], [1], [0, 0, 1, 1], [], []>} : vector<32x128xbf16>, vector<128x128xbf16>, vector<32x128xf32> -> vector<32x128xf32>
    %7 = arith.addf %3, %6 : vector<32x128xf32>
    %c0_6 = arith.constant 0 : index
    %c0_7 = arith.constant 0 : index
    %8 = vector.load %arg8[%c0_6, %c0_7] : memref<32x128xf32, #tpu.memory_space<vmem>>, vector<32x128xf32>
    tpu.vector_store %arg8[%c0_6, %c0_7], %7 {strides = array<i32>} : memref<32x128xf32, #tpu.memory_space<vmem>>, vector<32x128xf32>,
    %c8_i32 = arith.constant 8 : i32
    %9 = arith.cmpi eq, %arg2, %c8_i32 : i32
    %10 = arith.extui %9 : i1 to i32
    %c0_i32_8 = arith.constant 0 : i32
    %11 = arith.cmpi ne, %10, %c0_i32_8 : i32
    scf.if %11 {
      %c0_9 = arith.constant 0 : index
      %c0_10 = arith.constant 0 : index
      %12 = vector.load %arg8[%c0_9, %c0_10] : memref<32x128xf32, #tpu.memory_space<vmem>>, vector<32x128xf32>
      %c0_11 = arith.constant 0 : index
      %c0_12 = arith.constant 0 : index
      %13 = vector.load %arg5[%c0_11, %c0_12] : memref<1x128xf32, #tpu.memory_space<vmem>>, vector<1x128xf32>
      %14 = vector.broadcast %13 : vector<1x128xf32> to vector<32x128xf32>
      %15 = arith.addf %12, %14 : vector<32x128xf32>
      %c0_13 = arith.constant 0 : index
      %c0_14 = arith.constant 0 : index
      %16 = vector.load %arg6[%c0_13, %c0_14] : memref<32x128xbf16, #tpu.memory_space<vmem>>, vector<32x128xbf16>
      %17 = arith.extf %16 : vector<32x128xbf16> to vector<32x128xf32>
      %18 = arith.addf %15, %17 : vector<32x128xf32>
      %cst_15 = arith.constant 0.000000e+00 : f32
      %19 = vector.broadcast %cst_15 : f32 to vector<32x128xf32>
      %20 = arith.maximumf %18, %19 : vector<32x128xf32>
      %21 = arith.truncf %20 : vector<32x128xf32> to vector<32x128xbf16>
      %c0_16 = arith.constant 0 : index
      %c0_17 = arith.constant 0 : index
      %22 = vector.load %arg7[%c0_16, %c0_17] : memref<32x128xbf16, #tpu.memory_space<vmem>>, vector<32x128xbf16>
      tpu.vector_store %arg7[%c0_16, %c0_17], %21 {strides = array<i32>} : memref<32x128xbf16, #tpu.memory_space<vmem>>, vector<32x128xbf16>,
    } else {
    }
    return
  }
  func.func @transform_0(%arg0: i32, %arg1: i32, %arg2: i32) -> (i32, i32) {
    %c0_i32 = arith.constant 0 : i32
    return %arg0, %arg2 : i32, i32
  }
  func.func @transform_1(%arg0: i32, %arg1: i32, %arg2: i32) -> (i32, i32) {
    %c0_i32 = arith.constant 0 : i32
    return %arg2, %arg1 : i32, i32
  }
  func.func @transform_2(%arg0: i32, %arg1: i32, %arg2: i32) -> (i32, i32) {
    %c0_i32 = arith.constant 0 : i32
    %c0_i32_0 = arith.constant 0 : i32
    return %c0_i32, %arg1 : i32, i32
  }
  func.func @transform_3(%arg0: i32, %arg1: i32, %arg2: i32) -> (i32, i32) {
    %c0_i32 = arith.constant 0 : i32
    return %arg0, %arg1 : i32, i32
  }
  func.func @transform_4(%arg0: i32, %arg1: i32, %arg2: i32) -> (i32, i32) {
    %c0_i32 = arith.constant 0 : i32
    return %arg0, %arg1 : i32, i32
  }
}

module attributes {stable_mosaic.version = 11 : i64} {
  func.func @_matmul_kernel(%arg0: i32, %arg1: i32, %arg2: i32, %arg3: memref<8x128xbf16, #tpu.memory_space<vmem>>, %arg4: memref<128x256xbf16, #tpu.memory_space<vmem>>, %arg5: memref<1x256xf32, #tpu.memory_space<vmem>>, %arg6: memref<8x256xbf16, #tpu.memory_space<vmem>>, %arg7: memref<8x256xf32, #tpu.memory_space<vmem>>) attributes {dimension_semantics = [#tpu.dimension_semantics<parallel>, #tpu.dimension_semantics<parallel>, #tpu.dimension_semantics<arbitrary>], iteration_bounds = array<i64: 1, 1, 9>, scalar_prefetch = 0 : i64, scratch_operands = 1 : i64, tpu.core_type = #tpu.core_type<tc>, window_params = [{transform_indices = @transform_0, window_bounds = array<i64: 8, 128>}, {transform_indices = @transform_1, window_bounds = array<i64: 128, 256>}, {transform_indices = @transform_2, window_bounds = array<i64: 1, 256>}, {transform_indices = @transform_3, window_bounds = array<i64: 8, 256>}]} {
    %c0_i32 = arith.constant 0 : i32
    %0 = arith.cmpi eq, %arg2, %c0_i32 : i32
    %1 = arith.extui %0 : i1 to i32
    %c0_i32_0 = arith.constant 0 : i32
    %2 = arith.cmpi ne, %1, %c0_i32_0 : i32
    scf.if %2 {
      %cst_9 = arith.constant 0.000000e+00 : f32
      %12 = vector.broadcast %cst_9 : f32 to vector<8x256xf32>
      %c0_10 = arith.constant 0 : index
      %c0_11 = arith.constant 0 : index
      %13 = vector.load %arg7[%c0_10, %c0_11] : memref<8x256xf32, #tpu.memory_space<vmem>>, vector<8x256xf32>
      tpu.vector_store %arg7[%c0_10, %c0_11], %12 {strides = array<i32>} : memref<8x256xf32, #tpu.memory_space<vmem>>, vector<8x256xf32>,
    } else {
    }
    %c0 = arith.constant 0 : index
    %c0_1 = arith.constant 0 : index
    %3 = vector.load %arg7[%c0, %c0_1] : memref<8x256xf32, #tpu.memory_space<vmem>>, vector<8x256xf32>
    %c0_2 = arith.constant 0 : index
    %c0_3 = arith.constant 0 : index
    %4 = vector.load %arg3[%c0_2, %c0_3] : memref<8x128xbf16, #tpu.memory_space<vmem>>, vector<8x128xbf16>
    %c0_4 = arith.constant 0 : index
    %c0_5 = arith.constant 0 : index
    %5 = vector.load %arg4[%c0_4, %c0_5] : memref<128x256xbf16, #tpu.memory_space<vmem>>, vector<128x256xbf16>
    %cst = arith.constant dense<0.000000e+00> : vector<8x256xf32>
    %6 = tpu.matmul %4, %5, %cst {dimension_numbers = #tpu.dot_dimension_numbers<[1], [0], [0], [1], [0, 0, 1, 1], [], []>} : vector<8x128xbf16>, vector<128x256xbf16>, vector<8x256xf32> -> vector<8x256xf32>
    %7 = arith.addf %3, %6 : vector<8x256xf32>
    %c0_6 = arith.constant 0 : index
    %c0_7 = arith.constant 0 : index
    %8 = vector.load %arg7[%c0_6, %c0_7] : memref<8x256xf32, #tpu.memory_space<vmem>>, vector<8x256xf32>
    tpu.vector_store %arg7[%c0_6, %c0_7], %7 {strides = array<i32>} : memref<8x256xf32, #tpu.memory_space<vmem>>, vector<8x256xf32>,
    %c8_i32 = arith.constant 8 : i32
    %9 = arith.cmpi eq, %arg2, %c8_i32 : i32
    %10 = arith.extui %9 : i1 to i32
    %c0_i32_8 = arith.constant 0 : i32
    %11 = arith.cmpi ne, %10, %c0_i32_8 : i32
    scf.if %11 {
      %c0_9 = arith.constant 0 : index
      %c0_10 = arith.constant 0 : index
      %12 = vector.load %arg7[%c0_9, %c0_10] : memref<8x256xf32, #tpu.memory_space<vmem>>, vector<8x256xf32>
      %c0_11 = arith.constant 0 : index
      %c0_12 = arith.constant 0 : index
      %13 = vector.load %arg5[%c0_11, %c0_12] : memref<1x256xf32, #tpu.memory_space<vmem>>, vector<1x256xf32>
      %14 = vector.broadcast %13 : vector<1x256xf32> to vector<8x256xf32>
      %15 = arith.addf %12, %14 : vector<8x256xf32>
      %cst_13 = arith.constant 0.000000e+00 : f32
      %16 = vector.broadcast %cst_13 : f32 to vector<8x256xf32>
      %17 = arith.maximumf %15, %16 : vector<8x256xf32>
      %18 = arith.truncf %17 : vector<8x256xf32> to vector<8x256xbf16>
      %c0_14 = arith.constant 0 : index
      %c0_15 = arith.constant 0 : index
      %19 = vector.load %arg6[%c0_14, %c0_15] : memref<8x256xbf16, #tpu.memory_space<vmem>>, vector<8x256xbf16>
      tpu.vector_store %arg6[%c0_14, %c0_15], %18 {strides = array<i32>} : memref<8x256xbf16, #tpu.memory_space<vmem>>, vector<8x256xbf16>,
    } else {
    }
    return
  }
  func.func @transform_0(%arg0: i32, %arg1: i32, %arg2: i32) -> (i32, i32) {
    %c0_i32 = arith.constant 0 : i32
    return %arg0, %arg2 : i32, i32
  }
  func.func @transform_1(%arg0: i32, %arg1: i32, %arg2: i32) -> (i32, i32) {
    %c0_i32 = arith.constant 0 : i32
    return %arg2, %arg1 : i32, i32
  }
  func.func @transform_2(%arg0: i32, %arg1: i32, %arg2: i32) -> (i32, i32) {
    %c0_i32 = arith.constant 0 : i32
    %c0_i32_0 = arith.constant 0 : i32
    return %c0_i32, %arg1 : i32, i32
  }
  func.func @transform_3(%arg0: i32, %arg1: i32, %arg2: i32) -> (i32, i32) {
    %c0_i32 = arith.constant 0 : i32
    return %arg0, %arg1 : i32, i32
  }
}

module attributes {stable_mosaic.version = 11 : i64} {
  func.func @_matmul_kernel(%arg0: i32, %arg1: i32, %arg2: i32, %arg3: memref<8x128xbf16, #tpu.memory_space<vmem>>, %arg4: memref<128x256xbf16, #tpu.memory_space<vmem>>, %arg5: memref<1x256xf32, #tpu.memory_space<vmem>>, %arg6: memref<8x256xbf16, #tpu.memory_space<vmem>>, %arg7: memref<8x256xf32, #tpu.memory_space<vmem>>) attributes {dimension_semantics = [#tpu.dimension_semantics<parallel>, #tpu.dimension_semantics<parallel>, #tpu.dimension_semantics<arbitrary>], iteration_bounds = array<i64: 1, 1, 1>, scalar_prefetch = 0 : i64, scratch_operands = 1 : i64, tpu.core_type = #tpu.core_type<tc>, window_params = [{transform_indices = @transform_0, window_bounds = array<i64: 8, 128>}, {transform_indices = @transform_1, window_bounds = array<i64: 128, 256>}, {transform_indices = @transform_2, window_bounds = array<i64: 1, 256>}, {transform_indices = @transform_3, window_bounds = array<i64: 8, 256>}]} {
    %c0_i32 = arith.constant 0 : i32
    %0 = arith.cmpi eq, %arg2, %c0_i32 : i32
    %1 = arith.extui %0 : i1 to i32
    %c0_i32_0 = arith.constant 0 : i32
    %2 = arith.cmpi ne, %1, %c0_i32_0 : i32
    scf.if %2 {
      %cst_10 = arith.constant 0.000000e+00 : f32
      %12 = vector.broadcast %cst_10 : f32 to vector<8x256xf32>
      %c0_11 = arith.constant 0 : index
      %c0_12 = arith.constant 0 : index
      %13 = vector.load %arg7[%c0_11, %c0_12] : memref<8x256xf32, #tpu.memory_space<vmem>>, vector<8x256xf32>
      tpu.vector_store %arg7[%c0_11, %c0_12], %12 {strides = array<i32>} : memref<8x256xf32, #tpu.memory_space<vmem>>, vector<8x256xf32>,
    } else {
    }
    %c0 = arith.constant 0 : index
    %c0_1 = arith.constant 0 : index
    %3 = vector.load %arg7[%c0, %c0_1] : memref<8x256xf32, #tpu.memory_space<vmem>>, vector<8x256xf32>
    %c0_2 = arith.constant 0 : index
    %c0_3 = arith.constant 0 : index
    %4 = vector.load %arg3[%c0_2, %c0_3] : memref<8x128xbf16, #tpu.memory_space<vmem>>, vector<8x128xbf16>
    %c0_4 = arith.constant 0 : index
    %c0_5 = arith.constant 0 : index
    %5 = vector.load %arg4[%c0_4, %c0_5] : memref<128x256xbf16, #tpu.memory_space<vmem>>, vector<128x256xbf16>
    %cst = arith.constant dense<0.000000e+00> : vector<8x256xf32>
    %6 = tpu.matmul %4, %5, %cst {dimension_numbers = #tpu.dot_dimension_numbers<[1], [0], [0], [1], [0, 0, 1, 1], [], []>} : vector<8x128xbf16>, vector<128x256xbf16>, vector<8x256xf32> -> vector<8x256xf32>
    %7 = arith.addf %3, %6 : vector<8x256xf32>
    %c0_6 = arith.constant 0 : index
    %c0_7 = arith.constant 0 : index
    %8 = vector.load %arg7[%c0_6, %c0_7] : memref<8x256xf32, #tpu.memory_space<vmem>>, vector<8x256xf32>
    tpu.vector_store %arg7[%c0_6, %c0_7], %7 {strides = array<i32>} : memref<8x256xf32, #tpu.memory_space<vmem>>, vector<8x256xf32>,
    %c0_i32_8 = arith.constant 0 : i32
    %9 = arith.cmpi eq, %arg2, %c0_i32_8 : i32
    %10 = arith.extui %9 : i1 to i32
    %c0_i32_9 = arith.constant 0 : i32
    %11 = arith.cmpi ne, %10, %c0_i32_9 : i32
    scf.if %11 {
      %c0_10 = arith.constant 0 : index
      %c0_11 = arith.constant 0 : index
      %12 = vector.load %arg7[%c0_10, %c0_11] : memref<8x256xf32, #tpu.memory_space<vmem>>, vector<8x256xf32>
      %c0_12 = arith.constant 0 : index
      %c0_13 = arith.constant 0 : index
      %13 = vector.load %arg5[%c0_12, %c0_13] : memref<1x256xf32, #tpu.memory_space<vmem>>, vector<1x256xf32>
      %14 = vector.broadcast %13 : vector<1x256xf32> to vector<8x256xf32>
      %15 = arith.addf %12, %14 : vector<8x256xf32>
      %16 = arith.truncf %15 : vector<8x256xf32> to vector<8x256xbf16>
      %c0_14 = arith.constant 0 : index
      %c0_15 = arith.constant 0 : index
      %17 = vector.load %arg6[%c0_14, %c0_15] : memref<8x256xbf16, #tpu.memory_space<vmem>>, vector<8x256xbf16>
      tpu.vector_store %arg6[%c0_14, %c0_15], %16 {strides = array<i32>} : memref<8x256xbf16, #tpu.memory_space<vmem>>, vector<8x256xbf16>,
    } else {
    }
    return
  }
  func.func @transform_0(%arg0: i32, %arg1: i32, %arg2: i32) -> (i32, i32) {
    %c0_i32 = arith.constant 0 : i32
    return %arg0, %arg2 : i32, i32
  }
  func.func @transform_1(%arg0: i32, %arg1: i32, %arg2: i32) -> (i32, i32) {
    %c0_i32 = arith.constant 0 : i32
    return %arg2, %arg1 : i32, i32
  }
  func.func @transform_2(%arg0: i32, %arg1: i32, %arg2: i32) -> (i32, i32) {
    %c0_i32 = arith.constant 0 : i32
    %c0_i32_0 = arith.constant 0 : i32
    return %c0_i32, %arg1 : i32, i32
  }
  func.func @transform_3(%arg0: i32, %arg1: i32, %arg2: i32) -> (i32, i32) {
    %c0_i32 = arith.constant 0 : i32
    return %arg0, %arg1 : i32, i32
  }
}

module attributes {stable_mosaic.version = 11 : i64} {
  func.func @_matmul_res_kernel(%arg0: i32, %arg1: i32, %arg2: i32, %arg3: memref<8x256xbf16, #tpu.memory_space<vmem>>, %arg4: memref<256x256xbf16, #tpu.memory_space<vmem>>, %arg5: memref<1x256xf32, #tpu.memory_space<vmem>>, %arg6: memref<8x256xbf16, #tpu.memory_space<vmem>>, %arg7: memref<8x256xbf16, #tpu.memory_space<vmem>>, %arg8: memref<8x256xf32, #tpu.memory_space<vmem>>) attributes {dimension_semantics = [#tpu.dimension_semantics<parallel>, #tpu.dimension_semantics<parallel>, #tpu.dimension_semantics<arbitrary>], iteration_bounds = array<i64: 1, 1, 9>, scalar_prefetch = 0 : i64, scratch_operands = 1 : i64, tpu.core_type = #tpu.core_type<tc>, window_params = [{transform_indices = @transform_0, window_bounds = array<i64: 8, 256>}, {transform_indices = @transform_1, window_bounds = array<i64: 256, 256>}, {transform_indices = @transform_2, window_bounds = array<i64: 1, 256>}, {transform_indices = @transform_3, window_bounds = array<i64: 8, 256>}, {transform_indices = @transform_4, window_bounds = array<i64: 8, 256>}]} {
    %c0_i32 = arith.constant 0 : i32
    %0 = arith.cmpi eq, %arg2, %c0_i32 : i32
    %1 = arith.extui %0 : i1 to i32
    %c0_i32_0 = arith.constant 0 : i32
    %2 = arith.cmpi ne, %1, %c0_i32_0 : i32
    scf.if %2 {
      %cst_9 = arith.constant 0.000000e+00 : f32
      %12 = vector.broadcast %cst_9 : f32 to vector<8x256xf32>
      %c0_10 = arith.constant 0 : index
      %c0_11 = arith.constant 0 : index
      %13 = vector.load %arg8[%c0_10, %c0_11] : memref<8x256xf32, #tpu.memory_space<vmem>>, vector<8x256xf32>
      tpu.vector_store %arg8[%c0_10, %c0_11], %12 {strides = array<i32>} : memref<8x256xf32, #tpu.memory_space<vmem>>, vector<8x256xf32>,
    } else {
    }
    %c0 = arith.constant 0 : index
    %c0_1 = arith.constant 0 : index
    %3 = vector.load %arg8[%c0, %c0_1] : memref<8x256xf32, #tpu.memory_space<vmem>>, vector<8x256xf32>
    %c0_2 = arith.constant 0 : index
    %c0_3 = arith.constant 0 : index
    %4 = vector.load %arg3[%c0_2, %c0_3] : memref<8x256xbf16, #tpu.memory_space<vmem>>, vector<8x256xbf16>
    %c0_4 = arith.constant 0 : index
    %c0_5 = arith.constant 0 : index
    %5 = vector.load %arg4[%c0_4, %c0_5] : memref<256x256xbf16, #tpu.memory_space<vmem>>, vector<256x256xbf16>
    %cst = arith.constant dense<0.000000e+00> : vector<8x256xf32>
    %6 = tpu.matmul %4, %5, %cst {dimension_numbers = #tpu.dot_dimension_numbers<[1], [0], [0], [1], [0, 0, 1, 1], [], []>} : vector<8x256xbf16>, vector<256x256xbf16>, vector<8x256xf32> -> vector<8x256xf32>
    %7 = arith.addf %3, %6 : vector<8x256xf32>
    %c0_6 = arith.constant 0 : index
    %c0_7 = arith.constant 0 : index
    %8 = vector.load %arg8[%c0_6, %c0_7] : memref<8x256xf32, #tpu.memory_space<vmem>>, vector<8x256xf32>
    tpu.vector_store %arg8[%c0_6, %c0_7], %7 {strides = array<i32>} : memref<8x256xf32, #tpu.memory_space<vmem>>, vector<8x256xf32>,
    %c8_i32 = arith.constant 8 : i32
    %9 = arith.cmpi eq, %arg2, %c8_i32 : i32
    %10 = arith.extui %9 : i1 to i32
    %c0_i32_8 = arith.constant 0 : i32
    %11 = arith.cmpi ne, %10, %c0_i32_8 : i32
    scf.if %11 {
      %c0_9 = arith.constant 0 : index
      %c0_10 = arith.constant 0 : index
      %12 = vector.load %arg8[%c0_9, %c0_10] : memref<8x256xf32, #tpu.memory_space<vmem>>, vector<8x256xf32>
      %c0_11 = arith.constant 0 : index
      %c0_12 = arith.constant 0 : index
      %13 = vector.load %arg5[%c0_11, %c0_12] : memref<1x256xf32, #tpu.memory_space<vmem>>, vector<1x256xf32>
      %14 = vector.broadcast %13 : vector<1x256xf32> to vector<8x256xf32>
      %15 = arith.addf %12, %14 : vector<8x256xf32>
      %c0_13 = arith.constant 0 : index
      %c0_14 = arith.constant 0 : index
      %16 = vector.load %arg6[%c0_13, %c0_14] : memref<8x256xbf16, #tpu.memory_space<vmem>>, vector<8x256xbf16>
      %17 = arith.extf %16 : vector<8x256xbf16> to vector<8x256xf32>
      %18 = arith.addf %15, %17 : vector<8x256xf32>
      %cst_15 = arith.constant 0.000000e+00 : f32
      %19 = vector.broadcast %cst_15 : f32 to vector<8x256xf32>
      %20 = arith.maximumf %18, %19 : vector<8x256xf32>
      %21 = arith.truncf %20 : vector<8x256xf32> to vector<8x256xbf16>
      %c0_16 = arith.constant 0 : index
      %c0_17 = arith.constant 0 : index
      %22 = vector.load %arg7[%c0_16, %c0_17] : memref<8x256xbf16, #tpu.memory_space<vmem>>, vector<8x256xbf16>
      tpu.vector_store %arg7[%c0_16, %c0_17], %21 {strides = array<i32>} : memref<8x256xbf16, #tpu.memory_space<vmem>>, vector<8x256xbf16>,
    } else {
    }
    return
  }
  func.func @transform_0(%arg0: i32, %arg1: i32, %arg2: i32) -> (i32, i32) {
    %c0_i32 = arith.constant 0 : i32
    return %arg0, %arg2 : i32, i32
  }
  func.func @transform_1(%arg0: i32, %arg1: i32, %arg2: i32) -> (i32, i32) {
    %c0_i32 = arith.constant 0 : i32
    return %arg2, %arg1 : i32, i32
  }
  func.func @transform_2(%arg0: i32, %arg1: i32, %arg2: i32) -> (i32, i32) {
    %c0_i32 = arith.constant 0 : i32
    %c0_i32_0 = arith.constant 0 : i32
    return %c0_i32, %arg1 : i32, i32
  }
  func.func @transform_3(%arg0: i32, %arg1: i32, %arg2: i32) -> (i32, i32) {
    %c0_i32 = arith.constant 0 : i32
    return %arg0, %arg1 : i32, i32
  }
  func.func @transform_4(%arg0: i32, %arg1: i32, %arg2: i32) -> (i32, i32) {
    %c0_i32 = arith.constant 0 : i32
    return %arg0, %arg1 : i32, i32
  }
}

module attributes {stable_mosaic.version = 11 : i64} {
  func.func @_matmul_kernel(%arg0: i32, %arg1: i32, %arg2: i32, %arg3: memref<8x256xbf16, #tpu.memory_space<vmem>>, %arg4: memref<256x256xbf16, #tpu.memory_space<vmem>>, %arg5: memref<1x256xf32, #tpu.memory_space<vmem>>, %arg6: memref<8x256xbf16, #tpu.memory_space<vmem>>, %arg7: memref<8x256xf32, #tpu.memory_space<vmem>>) attributes {dimension_semantics = [#tpu.dimension_semantics<parallel>, #tpu.dimension_semantics<parallel>, #tpu.dimension_semantics<arbitrary>], iteration_bounds = array<i64: 1, 2, 9>, scalar_prefetch = 0 : i64, scratch_operands = 1 : i64, tpu.core_type = #tpu.core_type<tc>, window_params = [{transform_indices = @transform_0, window_bounds = array<i64: 8, 256>}, {transform_indices = @transform_1, window_bounds = array<i64: 256, 256>}, {transform_indices = @transform_2, window_bounds = array<i64: 1, 256>}, {transform_indices = @transform_3, window_bounds = array<i64: 8, 256>}]} {
    %c0_i32 = arith.constant 0 : i32
    %0 = arith.cmpi eq, %arg2, %c0_i32 : i32
    %1 = arith.extui %0 : i1 to i32
    %c0_i32_0 = arith.constant 0 : i32
    %2 = arith.cmpi ne, %1, %c0_i32_0 : i32
    scf.if %2 {
      %cst_9 = arith.constant 0.000000e+00 : f32
      %12 = vector.broadcast %cst_9 : f32 to vector<8x256xf32>
      %c0_10 = arith.constant 0 : index
      %c0_11 = arith.constant 0 : index
      %13 = vector.load %arg7[%c0_10, %c0_11] : memref<8x256xf32, #tpu.memory_space<vmem>>, vector<8x256xf32>
      tpu.vector_store %arg7[%c0_10, %c0_11], %12 {strides = array<i32>} : memref<8x256xf32, #tpu.memory_space<vmem>>, vector<8x256xf32>,
    } else {
    }
    %c0 = arith.constant 0 : index
    %c0_1 = arith.constant 0 : index
    %3 = vector.load %arg7[%c0, %c0_1] : memref<8x256xf32, #tpu.memory_space<vmem>>, vector<8x256xf32>
    %c0_2 = arith.constant 0 : index
    %c0_3 = arith.constant 0 : index
    %4 = vector.load %arg3[%c0_2, %c0_3] : memref<8x256xbf16, #tpu.memory_space<vmem>>, vector<8x256xbf16>
    %c0_4 = arith.constant 0 : index
    %c0_5 = arith.constant 0 : index
    %5 = vector.load %arg4[%c0_4, %c0_5] : memref<256x256xbf16, #tpu.memory_space<vmem>>, vector<256x256xbf16>
    %cst = arith.constant dense<0.000000e+00> : vector<8x256xf32>
    %6 = tpu.matmul %4, %5, %cst {dimension_numbers = #tpu.dot_dimension_numbers<[1], [0], [0], [1], [0, 0, 1, 1], [], []>} : vector<8x256xbf16>, vector<256x256xbf16>, vector<8x256xf32> -> vector<8x256xf32>
    %7 = arith.addf %3, %6 : vector<8x256xf32>
    %c0_6 = arith.constant 0 : index
    %c0_7 = arith.constant 0 : index
    %8 = vector.load %arg7[%c0_6, %c0_7] : memref<8x256xf32, #tpu.memory_space<vmem>>, vector<8x256xf32>
    tpu.vector_store %arg7[%c0_6, %c0_7], %7 {strides = array<i32>} : memref<8x256xf32, #tpu.memory_space<vmem>>, vector<8x256xf32>,
    %c8_i32 = arith.constant 8 : i32
    %9 = arith.cmpi eq, %arg2, %c8_i32 : i32
    %10 = arith.extui %9 : i1 to i32
    %c0_i32_8 = arith.constant 0 : i32
    %11 = arith.cmpi ne, %10, %c0_i32_8 : i32
    scf.if %11 {
      %c0_9 = arith.constant 0 : index
      %c0_10 = arith.constant 0 : index
      %12 = vector.load %arg7[%c0_9, %c0_10] : memref<8x256xf32, #tpu.memory_space<vmem>>, vector<8x256xf32>
      %c0_11 = arith.constant 0 : index
      %c0_12 = arith.constant 0 : index
      %13 = vector.load %arg5[%c0_11, %c0_12] : memref<1x256xf32, #tpu.memory_space<vmem>>, vector<1x256xf32>
      %14 = vector.broadcast %13 : vector<1x256xf32> to vector<8x256xf32>
      %15 = arith.addf %12, %14 : vector<8x256xf32>
      %cst_13 = arith.constant 0.000000e+00 : f32
      %16 = vector.broadcast %cst_13 : f32 to vector<8x256xf32>
      %17 = arith.maximumf %15, %16 : vector<8x256xf32>
      %18 = arith.truncf %17 : vector<8x256xf32> to vector<8x256xbf16>
      %c0_14 = arith.constant 0 : index
      %c0_15 = arith.constant 0 : index
      %19 = vector.load %arg6[%c0_14, %c0_15] : memref<8x256xbf16, #tpu.memory_space<vmem>>, vector<8x256xbf16>
      tpu.vector_store %arg6[%c0_14, %c0_15], %18 {strides = array<i32>} : memref<8x256xbf16, #tpu.memory_space<vmem>>, vector<8x256xbf16>,
    } else {
    }
    return
  }
  func.func @transform_0(%arg0: i32, %arg1: i32, %arg2: i32) -> (i32, i32) {
    %c0_i32 = arith.constant 0 : i32
    return %arg0, %arg2 : i32, i32
  }
  func.func @transform_1(%arg0: i32, %arg1: i32, %arg2: i32) -> (i32, i32) {
    %c0_i32 = arith.constant 0 : i32
    return %arg2, %arg1 : i32, i32
  }
  func.func @transform_2(%arg0: i32, %arg1: i32, %arg2: i32) -> (i32, i32) {
    %c0_i32 = arith.constant 0 : i32
    %c0_i32_0 = arith.constant 0 : i32
    return %c0_i32, %arg1 : i32, i32
  }
  func.func @transform_3(%arg0: i32, %arg1: i32, %arg2: i32) -> (i32, i32) {
    %c0_i32 = arith.constant 0 : i32
    return %arg0, %arg1 : i32, i32
  }
}

module attributes {stable_mosaic.version = 11 : i64} {
  func.func @_matmul_res_kernel(%arg0: i32, %arg1: i32, %arg2: i32, %arg3: memref<8x512xbf16, #tpu.memory_space<vmem>>, %arg4: memref<512x256xbf16, #tpu.memory_space<vmem>>, %arg5: memref<1x256xf32, #tpu.memory_space<vmem>>, %arg6: memref<8x256xbf16, #tpu.memory_space<vmem>>, %arg7: memref<8x256xbf16, #tpu.memory_space<vmem>>, %arg8: memref<8x256xf32, #tpu.memory_space<vmem>>) attributes {dimension_semantics = [#tpu.dimension_semantics<parallel>, #tpu.dimension_semantics<parallel>, #tpu.dimension_semantics<arbitrary>], iteration_bounds = array<i64: 1, 2, 9>, scalar_prefetch = 0 : i64, scratch_operands = 1 : i64, tpu.core_type = #tpu.core_type<tc>, window_params = [{transform_indices = @transform_0, window_bounds = array<i64: 8, 512>}, {transform_indices = @transform_1, window_bounds = array<i64: 512, 256>}, {transform_indices = @transform_2, window_bounds = array<i64: 1, 256>}, {transform_indices = @transform_3, window_bounds = array<i64: 8, 256>}, {transform_indices = @transform_4, window_bounds = array<i64: 8, 256>}]} {
    %c0_i32 = arith.constant 0 : i32
    %0 = arith.cmpi eq, %arg2, %c0_i32 : i32
    %1 = arith.extui %0 : i1 to i32
    %c0_i32_0 = arith.constant 0 : i32
    %2 = arith.cmpi ne, %1, %c0_i32_0 : i32
    scf.if %2 {
      %cst_9 = arith.constant 0.000000e+00 : f32
      %12 = vector.broadcast %cst_9 : f32 to vector<8x256xf32>
      %c0_10 = arith.constant 0 : index
      %c0_11 = arith.constant 0 : index
      %13 = vector.load %arg8[%c0_10, %c0_11] : memref<8x256xf32, #tpu.memory_space<vmem>>, vector<8x256xf32>
      tpu.vector_store %arg8[%c0_10, %c0_11], %12 {strides = array<i32>} : memref<8x256xf32, #tpu.memory_space<vmem>>, vector<8x256xf32>,
    } else {
    }
    %c0 = arith.constant 0 : index
    %c0_1 = arith.constant 0 : index
    %3 = vector.load %arg8[%c0, %c0_1] : memref<8x256xf32, #tpu.memory_space<vmem>>, vector<8x256xf32>
    %c0_2 = arith.constant 0 : index
    %c0_3 = arith.constant 0 : index
    %4 = vector.load %arg3[%c0_2, %c0_3] : memref<8x512xbf16, #tpu.memory_space<vmem>>, vector<8x512xbf16>
    %c0_4 = arith.constant 0 : index
    %c0_5 = arith.constant 0 : index
    %5 = vector.load %arg4[%c0_4, %c0_5] : memref<512x256xbf16, #tpu.memory_space<vmem>>, vector<512x256xbf16>
    %cst = arith.constant dense<0.000000e+00> : vector<8x256xf32>
    %6 = tpu.matmul %4, %5, %cst {dimension_numbers = #tpu.dot_dimension_numbers<[1], [0], [0], [1], [0, 0, 1, 1], [], []>} : vector<8x512xbf16>, vector<512x256xbf16>, vector<8x256xf32> -> vector<8x256xf32>
    %7 = arith.addf %3, %6 : vector<8x256xf32>
    %c0_6 = arith.constant 0 : index
    %c0_7 = arith.constant 0 : index
    %8 = vector.load %arg8[%c0_6, %c0_7] : memref<8x256xf32, #tpu.memory_space<vmem>>, vector<8x256xf32>
    tpu.vector_store %arg8[%c0_6, %c0_7], %7 {strides = array<i32>} : memref<8x256xf32, #tpu.memory_space<vmem>>, vector<8x256xf32>,
    %c8_i32 = arith.constant 8 : i32
    %9 = arith.cmpi eq, %arg2, %c8_i32 : i32
    %10 = arith.extui %9 : i1 to i32
    %c0_i32_8 = arith.constant 0 : i32
    %11 = arith.cmpi ne, %10, %c0_i32_8 : i32
    scf.if %11 {
      %c0_9 = arith.constant 0 : index
      %c0_10 = arith.constant 0 : index
      %12 = vector.load %arg8[%c0_9, %c0_10] : memref<8x256xf32, #tpu.memory_space<vmem>>, vector<8x256xf32>
      %c0_11 = arith.constant 0 : index
      %c0_12 = arith.constant 0 : index
      %13 = vector.load %arg5[%c0_11, %c0_12] : memref<1x256xf32, #tpu.memory_space<vmem>>, vector<1x256xf32>
      %14 = vector.broadcast %13 : vector<1x256xf32> to vector<8x256xf32>
      %15 = arith.addf %12, %14 : vector<8x256xf32>
      %c0_13 = arith.constant 0 : index
      %c0_14 = arith.constant 0 : index
      %16 = vector.load %arg6[%c0_13, %c0_14] : memref<8x256xbf16, #tpu.memory_space<vmem>>, vector<8x256xbf16>
      %17 = arith.extf %16 : vector<8x256xbf16> to vector<8x256xf32>
      %18 = arith.addf %15, %17 : vector<8x256xf32>
      %cst_15 = arith.constant 0.000000e+00 : f32
      %19 = vector.broadcast %cst_15 : f32 to vector<8x256xf32>
      %20 = arith.maximumf %18, %19 : vector<8x256xf32>
      %21 = arith.truncf %20 : vector<8x256xf32> to vector<8x256xbf16>
      %c0_16 = arith.constant 0 : index
      %c0_17 = arith.constant 0 : index
      %22 = vector.load %arg7[%c0_16, %c0_17] : memref<8x256xbf16, #tpu.memory_space<vmem>>, vector<8x256xbf16>
      tpu.vector_store %arg7[%c0_16, %c0_17], %21 {strides = array<i32>} : memref<8x256xbf16, #tpu.memory_space<vmem>>, vector<8x256xbf16>,
    } else {
    }
    return
  }
  func.func @transform_0(%arg0: i32, %arg1: i32, %arg2: i32) -> (i32, i32) {
    %c0_i32 = arith.constant 0 : i32
    return %arg0, %arg2 : i32, i32
  }
  func.func @transform_1(%arg0: i32, %arg1: i32, %arg2: i32) -> (i32, i32) {
    %c0_i32 = arith.constant 0 : i32
    return %arg2, %arg1 : i32, i32
  }
  func.func @transform_2(%arg0: i32, %arg1: i32, %arg2: i32) -> (i32, i32) {
    %c0_i32 = arith.constant 0 : i32
    %c0_i32_0 = arith.constant 0 : i32
    return %c0_i32, %arg1 : i32, i32
  }
  func.func @transform_3(%arg0: i32, %arg1: i32, %arg2: i32) -> (i32, i32) {
    %c0_i32 = arith.constant 0 : i32
    return %arg0, %arg1 : i32, i32
  }
  func.func @transform_4(%arg0: i32, %arg1: i32, %arg2: i32) -> (i32, i32) {
    %c0_i32 = arith.constant 0 : i32
    return %arg0, %arg1 : i32, i32
  }
}

module attributes {stable_mosaic.version = 11 : i64} {
  func.func @_matmul_kernel(%arg0: i32, %arg1: i32, %arg2: i32, %arg3: memref<8x256xbf16, #tpu.memory_space<vmem>>, %arg4: memref<256x256xbf16, #tpu.memory_space<vmem>>, %arg5: memref<1x256xf32, #tpu.memory_space<vmem>>, %arg6: memref<8x256xbf16, #tpu.memory_space<vmem>>, %arg7: memref<8x256xf32, #tpu.memory_space<vmem>>) attributes {dimension_semantics = [#tpu.dimension_semantics<parallel>, #tpu.dimension_semantics<parallel>, #tpu.dimension_semantics<arbitrary>], iteration_bounds = array<i64: 1, 2, 1>, scalar_prefetch = 0 : i64, scratch_operands = 1 : i64, tpu.core_type = #tpu.core_type<tc>, window_params = [{transform_indices = @transform_0, window_bounds = array<i64: 8, 256>}, {transform_indices = @transform_1, window_bounds = array<i64: 256, 256>}, {transform_indices = @transform_2, window_bounds = array<i64: 1, 256>}, {transform_indices = @transform_3, window_bounds = array<i64: 8, 256>}]} {
    %c0_i32 = arith.constant 0 : i32
    %0 = arith.cmpi eq, %arg2, %c0_i32 : i32
    %1 = arith.extui %0 : i1 to i32
    %c0_i32_0 = arith.constant 0 : i32
    %2 = arith.cmpi ne, %1, %c0_i32_0 : i32
    scf.if %2 {
      %cst_10 = arith.constant 0.000000e+00 : f32
      %12 = vector.broadcast %cst_10 : f32 to vector<8x256xf32>
      %c0_11 = arith.constant 0 : index
      %c0_12 = arith.constant 0 : index
      %13 = vector.load %arg7[%c0_11, %c0_12] : memref<8x256xf32, #tpu.memory_space<vmem>>, vector<8x256xf32>
      tpu.vector_store %arg7[%c0_11, %c0_12], %12 {strides = array<i32>} : memref<8x256xf32, #tpu.memory_space<vmem>>, vector<8x256xf32>,
    } else {
    }
    %c0 = arith.constant 0 : index
    %c0_1 = arith.constant 0 : index
    %3 = vector.load %arg7[%c0, %c0_1] : memref<8x256xf32, #tpu.memory_space<vmem>>, vector<8x256xf32>
    %c0_2 = arith.constant 0 : index
    %c0_3 = arith.constant 0 : index
    %4 = vector.load %arg3[%c0_2, %c0_3] : memref<8x256xbf16, #tpu.memory_space<vmem>>, vector<8x256xbf16>
    %c0_4 = arith.constant 0 : index
    %c0_5 = arith.constant 0 : index
    %5 = vector.load %arg4[%c0_4, %c0_5] : memref<256x256xbf16, #tpu.memory_space<vmem>>, vector<256x256xbf16>
    %cst = arith.constant dense<0.000000e+00> : vector<8x256xf32>
    %6 = tpu.matmul %4, %5, %cst {dimension_numbers = #tpu.dot_dimension_numbers<[1], [0], [0], [1], [0, 0, 1, 1], [], []>} : vector<8x256xbf16>, vector<256x256xbf16>, vector<8x256xf32> -> vector<8x256xf32>
    %7 = arith.addf %3, %6 : vector<8x256xf32>
    %c0_6 = arith.constant 0 : index
    %c0_7 = arith.constant 0 : index
    %8 = vector.load %arg7[%c0_6, %c0_7] : memref<8x256xf32, #tpu.memory_space<vmem>>, vector<8x256xf32>
    tpu.vector_store %arg7[%c0_6, %c0_7], %7 {strides = array<i32>} : memref<8x256xf32, #tpu.memory_space<vmem>>, vector<8x256xf32>,
    %c0_i32_8 = arith.constant 0 : i32
    %9 = arith.cmpi eq, %arg2, %c0_i32_8 : i32
    %10 = arith.extui %9 : i1 to i32
    %c0_i32_9 = arith.constant 0 : i32
    %11 = arith.cmpi ne, %10, %c0_i32_9 : i32
    scf.if %11 {
      %c0_10 = arith.constant 0 : index
      %c0_11 = arith.constant 0 : index
      %12 = vector.load %arg7[%c0_10, %c0_11] : memref<8x256xf32, #tpu.memory_space<vmem>>, vector<8x256xf32>
      %c0_12 = arith.constant 0 : index
      %c0_13 = arith.constant 0 : index
      %13 = vector.load %arg5[%c0_12, %c0_13] : memref<1x256xf32, #tpu.memory_space<vmem>>, vector<1x256xf32>
      %14 = vector.broadcast %13 : vector<1x256xf32> to vector<8x256xf32>
      %15 = arith.addf %12, %14 : vector<8x256xf32>
      %16 = arith.truncf %15 : vector<8x256xf32> to vector<8x256xbf16>
      %c0_14 = arith.constant 0 : index
      %c0_15 = arith.constant 0 : index
      %17 = vector.load %arg6[%c0_14, %c0_15] : memref<8x256xbf16, #tpu.memory_space<vmem>>, vector<8x256xbf16>
      tpu.vector_store %arg6[%c0_14, %c0_15], %16 {strides = array<i32>} : memref<8x256xbf16, #tpu.memory_space<vmem>>, vector<8x256xbf16>,
    } else {
    }
    return
  }
  func.func @transform_0(%arg0: i32, %arg1: i32, %arg2: i32) -> (i32, i32) {
    %c0_i32 = arith.constant 0 : i32
    return %arg0, %arg2 : i32, i32
  }
  func.func @transform_1(%arg0: i32, %arg1: i32, %arg2: i32) -> (i32, i32) {
    %c0_i32 = arith.constant 0 : i32
    return %arg2, %arg1 : i32, i32
  }
  func.func @transform_2(%arg0: i32, %arg1: i32, %arg2: i32) -> (i32, i32) {
    %c0_i32 = arith.constant 0 : i32
    %c0_i32_0 = arith.constant 0 : i32
    return %c0_i32, %arg1 : i32, i32
  }
  func.func @transform_3(%arg0: i32, %arg1: i32, %arg2: i32) -> (i32, i32) {
    %c0_i32 = arith.constant 0 : i32
    return %arg0, %arg1 : i32, i32
  }
}

module attributes {stable_mosaic.version = 11 : i64} {
  func.func @_avgpool_kernel(%arg0: i32, %arg1: memref<2x1x128xbf16, #tpu.memory_space<vmem>>, %arg2: memref<2x128xf32, #tpu.memory_space<vmem>>) attributes {dimension_semantics = [#tpu.dimension_semantics<parallel>], iteration_bounds = array<i64: 4>, scalar_prefetch = 0 : i64, scratch_operands = 0 : i64, tpu.core_type = #tpu.core_type<tc>, window_params = [{transform_indices = @transform_0, window_bounds = array<i64: 2, 1, 128>}, {transform_indices = @transform_1, window_bounds = array<i64: 2, 128>}]} {
    %c0 = arith.constant 0 : index
    %c0_0 = arith.constant 0 : index
    %c0_1 = arith.constant 0 : index
    %0 = vector.load %arg1[%c0, %c0_0, %c0_1] : memref<2x1x128xbf16, #tpu.memory_space<vmem>>, vector<2x1x128xbf16>
    %1 = arith.extf %0 : vector<2x1x128xbf16> to vector<2x1x128xf32>
    %cst = arith.constant dense<0.000000e+00> : vector<2x128xf32>
    %2 = vector.multi_reduction <add>, %1, %cst [1] : vector<2x1x128xf32> to vector<2x128xf32>
    %cst_2 = arith.constant 1.000000e+00 : f32
    %3 = vector.broadcast %cst_2 : f32 to vector<2x128xf32>
    %4 = arith.divf %2, %3 : vector<2x128xf32>
    %c0_3 = arith.constant 0 : index
    %c0_4 = arith.constant 0 : index
    %5 = vector.load %arg2[%c0_3, %c0_4] : memref<2x128xf32, #tpu.memory_space<vmem>>, vector<2x128xf32>
    tpu.vector_store %arg2[%c0_3, %c0_4], %4 {strides = array<i32>} : memref<2x128xf32, #tpu.memory_space<vmem>>, vector<2x128xf32>,
    return
  }
  func.func @transform_0(%arg0: i32) -> (i32, i32, i32) {
    %c0_i32 = arith.constant 0 : i32
    %c0_i32_0 = arith.constant 0 : i32
    %c0_i32_1 = arith.constant 0 : i32
    return %c0_i32, %c0_i32_0, %arg0 : i32, i32, i32
  }
  func.func @transform_1(%arg0: i32) -> (i32, i32) {
    %c0_i32 = arith.constant 0 : i32
    %c0_i32_0 = arith.constant 0 : i32
    return %c0_i32, %arg0 : i32, i32
  }
}

module attributes {stable_mosaic.version = 11 : i64} {
  func.func @_matmul_kernel(%arg0: i32, %arg1: i32, %arg2: i32, %arg3: memref<8x512xbf16, #tpu.memory_space<vmem>>, %arg4: memref<512x128xbf16, #tpu.memory_space<vmem>>, %arg5: memref<1x128xf32, #tpu.memory_space<vmem>>, %arg6: memref<8x128xf32, #tpu.memory_space<vmem>>, %arg7: memref<8x128xf32, #tpu.memory_space<vmem>>) attributes {dimension_semantics = [#tpu.dimension_semantics<parallel>, #tpu.dimension_semantics<parallel>, #tpu.dimension_semantics<arbitrary>], iteration_bounds = array<i64: 1, 1, 1>, scalar_prefetch = 0 : i64, scratch_operands = 1 : i64, tpu.core_type = #tpu.core_type<tc>, window_params = [{transform_indices = @transform_0, window_bounds = array<i64: 8, 512>}, {transform_indices = @transform_1, window_bounds = array<i64: 512, 128>}, {transform_indices = @transform_2, window_bounds = array<i64: 1, 128>}, {transform_indices = @transform_3, window_bounds = array<i64: 8, 128>}]} {
    %c0_i32 = arith.constant 0 : i32
    %0 = arith.cmpi eq, %arg2, %c0_i32 : i32
    %1 = arith.extui %0 : i1 to i32
    %c0_i32_0 = arith.constant 0 : i32
    %2 = arith.cmpi ne, %1, %c0_i32_0 : i32
    scf.if %2 {
      %cst_10 = arith.constant 0.000000e+00 : f32
      %12 = vector.broadcast %cst_10 : f32 to vector<8x128xf32>
      %c0_11 = arith.constant 0 : index
      %c0_12 = arith.constant 0 : index
      %13 = vector.load %arg7[%c0_11, %c0_12] : memref<8x128xf32, #tpu.memory_space<vmem>>, vector<8x128xf32>
      tpu.vector_store %arg7[%c0_11, %c0_12], %12 {strides = array<i32>} : memref<8x128xf32, #tpu.memory_space<vmem>>, vector<8x128xf32>,
    } else {
    }
    %c0 = arith.constant 0 : index
    %c0_1 = arith.constant 0 : index
    %3 = vector.load %arg7[%c0, %c0_1] : memref<8x128xf32, #tpu.memory_space<vmem>>, vector<8x128xf32>
    %c0_2 = arith.constant 0 : index
    %c0_3 = arith.constant 0 : index
    %4 = vector.load %arg3[%c0_2, %c0_3] : memref<8x512xbf16, #tpu.memory_space<vmem>>, vector<8x512xbf16>
    %c0_4 = arith.constant 0 : index
    %c0_5 = arith.constant 0 : index
    %5 = vector.load %arg4[%c0_4, %c0_5] : memref<512x128xbf16, #tpu.memory_space<vmem>>, vector<512x128xbf16>
    %cst = arith.constant dense<0.000000e+00> : vector<8x128xf32>
    %6 = tpu.matmul %4, %5, %cst {dimension_numbers = #tpu.dot_dimension_numbers<[1], [0], [0], [1], [0, 0, 1, 1], [], []>} : vector<8x512xbf16>, vector<512x128xbf16>, vector<8x128xf32> -> vector<8x128xf32>
    %7 = arith.addf %3, %6 : vector<8x128xf32>
    %c0_6 = arith.constant 0 : index
    %c0_7 = arith.constant 0 : index
    %8 = vector.load %arg7[%c0_6, %c0_7] : memref<8x128xf32, #tpu.memory_space<vmem>>, vector<8x128xf32>
    tpu.vector_store %arg7[%c0_6, %c0_7], %7 {strides = array<i32>} : memref<8x128xf32, #tpu.memory_space<vmem>>, vector<8x128xf32>,
    %c0_i32_8 = arith.constant 0 : i32
    %9 = arith.cmpi eq, %arg2, %c0_i32_8 : i32
    %10 = arith.extui %9 : i1 to i32
    %c0_i32_9 = arith.constant 0 : i32
    %11 = arith.cmpi ne, %10, %c0_i32_9 : i32
    scf.if %11 {
      %c0_10 = arith.constant 0 : index
      %c0_11 = arith.constant 0 : index
      %12 = vector.load %arg7[%c0_10, %c0_11] : memref<8x128xf32, #tpu.memory_space<vmem>>, vector<8x128xf32>
      %c0_12 = arith.constant 0 : index
      %c0_13 = arith.constant 0 : index
      %13 = vector.load %arg5[%c0_12, %c0_13] : memref<1x128xf32, #tpu.memory_space<vmem>>, vector<1x128xf32>
      %14 = vector.broadcast %13 : vector<1x128xf32> to vector<8x128xf32>
      %15 = arith.addf %12, %14 : vector<8x128xf32>
      %c0_14 = arith.constant 0 : index
      %c0_15 = arith.constant 0 : index
      %16 = vector.load %arg6[%c0_14, %c0_15] : memref<8x128xf32, #tpu.memory_space<vmem>>, vector<8x128xf32>
      tpu.vector_store %arg6[%c0_14, %c0_15], %15 {strides = array<i32>} : memref<8x128xf32, #tpu.memory_space<vmem>>, vector<8x128xf32>,
    } else {
    }
    return
  }
  func.func @transform_0(%arg0: i32, %arg1: i32, %arg2: i32) -> (i32, i32) {
    %c0_i32 = arith.constant 0 : i32
    return %arg0, %arg2 : i32, i32
  }
  func.func @transform_1(%arg0: i32, %arg1: i32, %arg2: i32) -> (i32, i32) {
    %c0_i32 = arith.constant 0 : i32
    return %arg2, %arg1 : i32, i32
  }
  func.func @transform_2(%arg0: i32, %arg1: i32, %arg2: i32) -> (i32, i32) {
    %c0_i32 = arith.constant 0 : i32
    %c0_i32_0 = arith.constant 0 : i32
    return %c0_i32, %arg1 : i32, i32
  }
  func.func @transform_3(%arg0: i32, %arg1: i32, %arg2: i32) -> (i32, i32) {
    %c0_i32 = arith.constant 0 : i32
    return %arg0, %arg1 : i32, i32
  }
}

</mosaic_0001>

<llo_original>
// kernel: resnet_forward.14
$region0: #{resnet_forward.14}
  #allocation0 [shape = 'u32[]', space=smem, size = 0x4, offset = 0x4, fixed_abs, tag = 'smem constant byte address 0x4 - core index']
  #allocation1 [shape = 'u32[144,128]{1,0:T(1,128)}', space=vmem, size = 0x12000, scoped, tag = 'internal scratch']
  #allocation2 [shape = 'f32[256,128]{1,0:T(8,128)}', space=vmem, size = 0x20000, scoped, tag = 'scratch operand']
  %s0 = inlined_call_operand.vmem [shape: bf16[512,256], index: 0, kind: input, shape index: {}]
  %s1 = inlined_call_operand.vmem [shape: bf16[256,128], index: 1, kind: input, shape index: {}]
  %s2 = inlined_call_operand.vmem [shape: f32[1,128], index: 2, kind: input, shape index: {}]
  %s3 = inlined_call_operand.vmem [shape: bf16[512,128], index: 3, kind: output, shape index: {}]
  %s4 = sld [smem:[#allocation0]]
  $region53: #{resnet_forward.14} parent=0
    _
  %s6 = ssub.s32 1, %s4
  %s7 = scalar_select 0, %s6, %s4
  loop: start=0, step=1, limit=4
  $region2: #{resnet_forward.14} parent=0 // loop_pre_header
    _
  $region3: #{resnet_forward.14} parent=0 // loop_header
    %s9 = sphi 0, %s13
    %p10 = scmp.ge.s32.totalorder %s9, 4
    %s16 = sphi 0, %s35
    %s17 = sphi 0, %s31
    %s18 = sphi 0, %s27
    %s19 = sphi 0, %s16
    %s20 = sphi 0, %s17
    %s21 = sphi 0, %s18
    %s22 = sphi 0, %s19
    %s23 = sphi 0, %s20
    %s24 = sphi 0, %s21
    %s40 = sphi 0, %s42
    %s43 = sphi 0, %s40
    %s44 = sphi 0, %s43
    %s60 = sphi 0, %s44
    %s68 = sphi 0, %s70
    %s71 = sphi 0, %s68
    %s72 = sphi 0, %s71
    %s88 = sphi 0, %s72
    %s94 = sphi 0, %s96
    %s97 = sphi 0, %s94
    %s98 = sphi 0, %s97
    %s114 = sphi 0, %s98
    %s122 = sphi 0, %s124
    %s125 = sphi 0, %s122
    %s126 = sphi 0, %s125
    %s142 = sphi 0, %s126
  $region4: #{resnet_forward.14} parent=0 // loop_header_branch
    %12 = sbr.rel (%p10) target = $region8
  $region5: #{resnet_forward.14} parent=0 // loop_body
    %s14 = ssub.s32 %s9, 1
    %s15 = ssub.s32 %s9, 2
    %s25 = sadd.s32 1, %s18
    %p26 = scmp.ge.s32.totalorder %s25, 1
    %s27 = scalar_select %p26, 0, %s25
    %s28 = sadd.s32 1, %s17
    %s29 = scalar_select %p26, %s28, %s17
    %p30 = scmp.ge.s32.totalorder %s29, 1
    %s31 = scalar_select %p30, 0, %s29
    %s32 = sadd.s32 1, %s16
    %s33 = scalar_select %p30, %s32, %s16
    %p34 = scmp.ge.s32.totalorder %s33, 2
    %s35 = scalar_select %p34, 0, %s33
    %s36 = ssub.s32 %s16, %s35
    %s37 = ssub.s32 %s18, %s27
    %s38 = sor.u32 %s36, %s37
    %p39 = scmp.eq.s32.totalorder %s38, 0
    %s41 = sadd.s32 %s40, 1
    %s42 = scalar_select %p39, %s40, %s41
    %p45 = pneg %p39
    %p46 = scmp.eq.s32.totalorder %s9, 1
    %p47 = por %p45, %p46
    %p48 = scmp.ne.s32.totalorder %s40, %s43
    %p49 = scmp.eq.s32.totalorder %s9, 0
    %p50 = por %p48, %p49
    %p51 = scmp.ne.s32.totalorder %s40, %s43
    %p52 = scmp.eq.s32.totalorder %s14, 1
    %p53 = por %p51, %p52
    %p54 = scmp.ne.s32.totalorder %s43, %s44
    %p55 = scmp.eq.s32.totalorder %s14, 0
    %p56 = por %p54, %p55
    %p57 = scmp.ne.s32.totalorder %s43, %s44
    %p58 = scmp.eq.s32.totalorder %s15, 1
    %p59 = por %p57, %p58
    %p61 = scmp.ne.s32.totalorder %s44, %s60
    %p62 = scmp.eq.s32.totalorder %s15, 0
    %p63 = por %p61, %p62
    %s64 = ssub.s32 %s18, %s27
    %s65 = ssub.s32 %s17, %s31
    %s66 = sor.u32 %s64, %s65
    %p67 = scmp.eq.s32.totalorder %s66, 0
    %s69 = sadd.s32 %s68, 1
    %s70 = scalar_select %p67, %s68, %s69
    %p73 = pneg %p67
    %p74 = scmp.eq.s32.totalorder %s9, 1
    %p75 = por %p73, %p74
    %p76 = scmp.ne.s32.totalorder %s68, %s71
    %p77 = scmp.eq.s32.totalorder %s9, 0
    %p78 = por %p76, %p77
    %p79 = scmp.ne.s32.totalorder %s68, %s71
    %p80 = scmp.eq.s32.totalorder %s14, 1
    %p81 = por %p79, %p80
    %p82 = scmp.ne.s32.totalorder %s71, %s72
    %p83 = scmp.eq.s32.totalorder %s14, 0
    %p84 = por %p82, %p83
    %p85 = scmp.ne.s32.totalorder %s71, %s72
    %p86 = scmp.eq.s32.totalorder %s15, 1
    %p87 = por %p85, %p86
    %p89 = scmp.ne.s32.totalorder %s72, %s88
    %p90 = scmp.eq.s32.totalorder %s15, 0
    %p91 = por %p89, %p90
    %s92 = ssub.s32 %s17, %s31
    %p93 = scmp.eq.s32.totalorder %s92, 0
    %s95 = sadd.s32 %s94, 1
    %s96 = scalar_select %p93, %s94, %s95
    %p99 = pneg %p93
    %p100 = scmp.eq.s32.totalorder %s9, 1
    %p101 = por %p99, %p100
    %p102 = scmp.ne.s32.totalorder %s94, %s97
    %p103 = scmp.eq.s32.totalorder %s9, 0
    %p104 = por %p102, %p103
    %p105 = scmp.ne.s32.totalorder %s94, %s97
    %p106 = scmp.eq.s32.totalorder %s14, 1
    %p107 = por %p105, %p106
    %p108 = scmp.ne.s32.totalorder %s97, %s98
    %p109 = scmp.eq.s32.totalorder %s14, 0
    %p110 = por %p108, %p109
    %p111 = scmp.ne.s32.totalorder %s97, %s98
    %p112 = scmp.eq.s32.totalorder %s15, 1
    %p113 = por %p111, %p112
    %p115 = scmp.ne.s32.totalorder %s98, %s114
    %p116 = scmp.eq.s32.totalorder %s15, 0
    %p117 = por %p115, %p116
    %s118 = ssub.s32 %s16, %s35
    %s119 = ssub.s32 %s17, %s31
    %s120 = sor.u32 %s118, %s119
    %p121 = scmp.eq.s32.totalorder %s120, 0
    %s123 = sadd.s32 %s122, 1
    %s124 = scalar_select %p121, %s122, %s123
    %p127 = pneg %p121
    %p128 = scmp.eq.s32.totalorder %s9, 1
    %p129 = por %p127, %p128
    %p130 = scmp.ne.s32.totalorder %s122, %s125
    %p131 = scmp.eq.s32.totalorder %s9, 0
    %p132 = por %p130, %p131
    %p133 = scmp.ne.s32.totalorder %s122, %s125
    %p134 = scmp.eq.s32.totalorder %s14, 1
    %p135 = por %p133, %p134
    %p136 = scmp.ne.s32.totalorder %s125, %s126
    %p137 = scmp.eq.s32.totalorder %s14, 0
    %p138 = por %p136, %p137
    %p139 = scmp.ne.s32.totalorder %s125, %s126
    %p140 = scmp.eq.s32.totalorder %s15, 1
    %p141 = por %p139, %p140
    %p143 = scmp.ne.s32.totalorder %s126, %s142
    %p144 = scmp.eq.s32.totalorder %s15, 0
    %p145 = por %p143, %p144
    %p146 = scmp.le.s32.totalorder 1, %s9
    %p147 = scmp.lt.s32.totalorder %s9, 3
    %p148 = pnand %p146, %p147
    %p149 = pneg %p148
    // Predicated region
    $region9: #{resnet_forward.14} parent=5 // pred_check
      _
    $region10: #{resnet_forward.14} parent=5 // pred_check_branch
      %151 = sbr.rel (%p148) target = $region12
    $region11: #{resnet_forward.14} parent=5 // pred_region
      %s152 = ssub.s32 %s9, 1
      // Predicated region
      $region13: #{resnet_forward.14} parent=11 // pred_check
        %p153 = pneg %p84
      $region14: #{resnet_forward.14} parent=11 // pred_check_branch
        %155 = sbr.rel (%p153) target = $region16
      $region15: #{resnet_forward.14} parent=11 // pred_region
        %s156 = smul.u32 32, %s21
        %p157 = scmp.lt.s32.totalorder %s156, 31
        %s158 = scalar_select %p157, %s156, 31
        %p159 = scmp.lt.s32.totalorder %s20, 0
        %s160 = scalar_select %p159, %s20, 0
        %s161 = sadd.s32 %s160, %s158
        %s162 = smul.addr %s161, 4
        %s163 = scalar_lea.vmem %s1, %s162
        %s164 = smul.u32 32, %s21
      $region16: #{resnet_forward.14} parent=11 // pred_fallthru
        _
      // Predicated region
      $region17: #{resnet_forward.14} parent=11 // pred_check
        %p165 = pneg %p110
      $region18: #{resnet_forward.14} parent=11 // pred_check_branch
        %167 = sbr.rel (%p165) target = $region20
      $region19: #{resnet_forward.14} parent=11 // pred_region
        %p168 = scmp.lt.s32.totalorder %s20, 0
        %s169 = scalar_select %p168, %s20, 0
        %s170 = scalar_lea.vmem %s2, %s169
      $region20: #{resnet_forward.14} parent=11 // pred_fallthru
        _
    $region12: #{resnet_forward.14} parent=5 // pred_fallthru
      _
    %p171 = scmp.lt.s32.totalorder %s9, 2
    // Predicated region
    $region21: #{resnet_forward.14} parent=5 // pred_check
      %p172 = pneg %p171
    $region22: #{resnet_forward.14} parent=5 // pred_check_branch
      %174 = sbr.rel (%p172) target = $region24
    $region23: #{resnet_forward.14} parent=5 // pred_region
      // Predicated region
      $region25: #{resnet_forward.14} parent=23 // pred_check
        %p175 = pneg %p50
      $region26: #{resnet_forward.14} parent=23 // pred_check_branch
        %177 = sbr.rel (%p175) target = $region28
      $region27: #{resnet_forward.14} parent=23 // pred_region
        %s178 = smul.u32 32, %s16
        %s179 = smul.u32 2, %s18
        %p180 = scmp.lt.s32.totalorder %s178, 63
        %s181 = scalar_select %p180, %s178, 63
        %p182 = scmp.lt.s32.totalorder %s179, 1
        %s183 = scalar_select %p182, %s179, 1
        %s184 = smul.addr %s181, 2
        %s185 = sadd.s32 %s183, %s184
        %s186 = smul.addr %s185, 4
        %s187 = scalar_lea.vmem %s0, %s186
        %s188 = smul.u32 32, %s16
        %s189 = smul.u32 2, %s18
      $region28: #{resnet_forward.14} parent=23 // pred_fallthru
        _
    $region24: #{resnet_forward.14} parent=5 // pred_fallthru
      _
    %p190 = scmp.le.s32.totalorder 1, %s9
    %p191 = scmp.lt.s32.totalorder %s9, 3
    %p192 = pnand %p190, %p191
    %p193 = pneg %p192
    // Predicated region
    $region29: #{resnet_forward.14} parent=5 // pred_check
      _
    $region30: #{resnet_forward.14} parent=5 // pred_check_branch
      %195 = sbr.rel (%p192) target = $region32
    $region31: #{resnet_forward.14} parent=5 // pred_region
      %s196 = ssub.s32 %s9, 1
      %s197 = smul.u32 32, %s19
      %s198 = smul.u32 2, %s21
      %p199 = scmp.lt.s32.totalorder %s197, 63
      %s200 = scalar_select %p199, %s197, 63
      %p201 = scmp.lt.s32.totalorder %s198, 1
      %s202 = scalar_select %p201, %s198, 1
      %s203 = smul.addr %s200, 2
      %s204 = sadd.s32 %s202, %s203
      %s205 = smul.addr %s204, 4
      %s206 = scalar_lea.vmem %s0, %s205
      %p207 = pneg %p56
      %p208 = pneg %p53
      %s209 = smul.u32 32, %s21
      %p210 = scmp.lt.s32.totalorder %s209, 31
      %s211 = scalar_select %p210, %s209, 31
      %p212 = scmp.lt.s32.totalorder %s20, 0
      %s213 = scalar_select %p212, %s20, 0
      %s214 = sadd.s32 %s213, %s211
      %s215 = smul.addr %s214, 4
      %s216 = scalar_lea.vmem %s1, %s215
      %p217 = pneg %p84
      %p218 = pneg %p81
      %p219 = scmp.lt.s32.totalorder %s20, 0
      %s220 = scalar_select %p219, %s20, 0
      %s221 = scalar_lea.vmem %s2, %s220
      %p222 = pneg %p110
      %p223 = pneg %p107
      %p224 = pneg %p138
      %p225 = pneg %p135
      %s226 = smul.u32 32, %s19
      %p227 = scmp.lt.s32.totalorder %s226, 63
      %s228 = scalar_select %p227, %s226, 63
      %p229 = scmp.lt.s32.totalorder %s20, 0
      %s230 = scalar_select %p229, %s20, 0
      %s231 = sadd.s32 %s230, %s228
      %s232 = smul.addr %s231, 4
      %s233 = scalar_lea.vmem %s3, %s232
      %s234 = smul.u32 32, %s19
      %s235 = smul.u32 2, %s21
      %p236 = scmp.lt.s32.totalorder %s234, 63
      %s237 = scalar_select %p236, %s234, 63
      %p238 = scmp.lt.s32.totalorder %s235, 1
      %s239 = scalar_select %p238, %s235, 1
      %s240 = smul.addr %s237, 2
      %s241 = sadd.s32 %s239, %s240
      %s242 = smul.addr %s241, 4
      %s243 = scalar_lea.vmem %s0, %s242
      %s244 = smul.u32 32, %s19
      %s245 = smul.u32 2, %s21
      %s246 = smul.u32 32, %s21
      %p247 = scmp.lt.s32.totalorder %s246, 31
      %s248 = scalar_select %p247, %s246, 31
      %p249 = scmp.lt.s32.totalorder %s20, 0
      %s250 = scalar_select %p249, %s20, 0
      %s251 = sadd.s32 %s250, %s248
      %s252 = smul.addr %s251, 4
      %s253 = scalar_lea.vmem %s1, %s252
      %s254 = smul.u32 32, %s21
      %p255 = scmp.lt.s32.totalorder %s20, 0
      %s256 = scalar_select %p255, %s20, 0
      %s257 = scalar_lea.vmem %s2, %s256
      %s258 = smul.u32 32, %s19
      %p259 = scmp.lt.s32.totalorder %s258, 63
      %s260 = scalar_select %p259, %s258, 63
      %p261 = scmp.lt.s32.totalorder %s20, 0
      %s262 = scalar_select %p261, %s20, 0
      %s263 = sadd.s32 %s262, %s260
      %s264 = smul.addr %s263, 4
      %s265 = scalar_lea.vmem %s3, %s264
      %s266 = smul.u32 32, %s19
      %p268 = scmp.eq.s32.totalorder %s21, 0
      // Predicated region
      $region33: #{resnet_forward.14} parent=31 // pred_check
        %p269 = pneg %p268
      $region34: #{resnet_forward.14} parent=31 // pred_check_branch
        %271 = sbr.rel (%p269) target = $region36
      $region35: #{resnet_forward.14} parent=31 // pred_region
        %272 = vst [vmem:[#allocation2] sm:$0xff] 0.0
        %273 = vst [vmem:[#allocation2 + $0x8] sm:$0xff] 0.0
        %274 = vst [vmem:[#allocation2 + $0x10] sm:$0xff] 0.0
        %275 = vst [vmem:[#allocation2 + $0x18] sm:$0xff] 0.0
        %276 = vst [vmem:[#allocation2 + $0x20] sm:$0xff] 0.0
        %277 = vst [vmem:[#allocation2 + $0x28] sm:$0xff] 0.0
        %278 = vst [vmem:[#allocation2 + $0x30] sm:$0xff] 0.0
        %279 = vst [vmem:[#allocation2 + $0x38] sm:$0xff] 0.0
        %280 = vst [vmem:[#allocation2 + $0x40] sm:$0xff] 0.0
        %281 = vst [vmem:[#allocation2 + $0x48] sm:$0xff] 0.0
        %282 = vst [vmem:[#allocation2 + $0x50] sm:$0xff] 0.0
        %283 = vst [vmem:[#allocation2 + $0x58] sm:$0xff] 0.0
        %284 = vst [vmem:[#allocation2 + $0x60] sm:$0xff] 0.0
        %285 = vst [vmem:[#allocation2 + $0x68] sm:$0xff] 0.0
        %286 = vst [vmem:[#allocation2 + $0x70] sm:$0xff] 0.0
        %287 = vst [vmem:[#allocation2 + $0x78] sm:$0xff] 0.0
        %288 = vst [vmem:[#allocation2 + $0x80] sm:$0xff] 0.0
        %289 = vst [vmem:[#allocation2 + $0x88] sm:$0xff] 0.0
        %290 = vst [vmem:[#allocation2 + $0x90] sm:$0xff] 0.0
        %291 = vst [vmem:[#allocation2 + $0x98] sm:$0xff] 0.0
        %292 = vst [vmem:[#allocation2 + $0xa0] sm:$0xff] 0.0
        %293 = vst [vmem:[#allocation2 + $0xa8] sm:$0xff] 0.0
        %294 = vst [vmem:[#allocation2 + $0xb0] sm:$0xff] 0.0
        %295 = vst [vmem:[#allocation2 + $0xb8] sm:$0xff] 0.0
        %296 = vst [vmem:[#allocation2 + $0xc0] sm:$0xff] 0.0
        %297 = vst [vmem:[#allocation2 + $0xc8] sm:$0xff] 0.0
        %298 = vst [vmem:[#allocation2 + $0xd0] sm:$0xff] 0.0
        %299 = vst [vmem:[#allocation2 + $0xd8] sm:$0xff] 0.0
        %300 = vst [vmem:[#allocation2 + $0xe0] sm:$0xff] 0.0
        %301 = vst [vmem:[#allocation2 + $0xe8] sm:$0xff] 0.0
        %302 = vst [vmem:[#allocation2 + $0xf0] sm:$0xff] 0.0
        %303 = vst [vmem:[#allocation2 + $0xf8] sm:$0xff] 0.0
      $region36: #{resnet_forward.14} parent=31 // pred_fallthru
        _
      %v304 = vld [vmem:[#allocation2] sm:$0xff]
      %v305 = vld [vmem:[#allocation2 + $0x8] sm:$0xff]
      %v306 = vld [vmem:[#allocation2 + $0x10] sm:$0xff]
      %v307 = vld [vmem:[#allocation2 + $0x18] sm:$0xff]
      %v308 = vld [vmem:[#allocation2 + $0x20] sm:$0xff]
      %v309 = vld [vmem:[#allocation2 + $0x28] sm:$0xff]
      %v310 = vld [vmem:[#allocation2 + $0x30] sm:$0xff]
      %v311 = vld [vmem:[#allocation2 + $0x38] sm:$0xff]
      %v312 = vld [vmem:[#allocation2 + $0x40] sm:$0xff]
      %v313 = vld [vmem:[#allocation2 + $0x48] sm:$0xff]
      %v314 = vld [vmem:[#allocation2 + $0x50] sm:$0xff]
      %v315 = vld [vmem:[#allocation2 + $0x58] sm:$0xff]
      %v316 = vld [vmem:[#allocation2 + $0x60] sm:$0xff]
      %v317 = vld [vmem:[#allocation2 + $0x68] sm:$0xff]
      %v318 = vld [vmem:[#allocation2 + $0x70] sm:$0xff]
      %v319 = vld [vmem:[#allocation2 + $0x78] sm:$0xff]
      %v320 = vld [vmem:[#allocation2 + $0x80] sm:$0xff]
      %v321 = vld [vmem:[#allocation2 + $0x88] sm:$0xff]
      %v322 = vld [vmem:[#allocation2 + $0x90] sm:$0xff]
      %v323 = vld [vmem:[#allocation2 + $0x98] sm:$0xff]
      %v324 = vld [vmem:[#allocation2 + $0xa0] sm:$0xff]
      %v325 = vld [vmem:[#allocation2 + $0xa8] sm:$0xff]
      %v326 = vld [vmem:[#allocation2 + $0xb0] sm:$0xff]
      %v327 = vld [vmem:[#allocation2 + $0xb8] sm:$0xff]
      %v328 = vld [vmem:[#allocation2 + $0xc0] sm:$0xff]
      %v329 = vld [vmem:[#allocation2 + $0xc8] sm:$0xff]
      %v330 = vld [vmem:[#allocation2 + $0xd0] sm:$0xff]
      %v331 = vld [vmem:[#allocation2 + $0xd8] sm:$0xff]
      %v332 = vld [vmem:[#allocation2 + $0xe0] sm:$0xff]
      %v333 = vld [vmem:[#allocation2 + $0xe8] sm:$0xff]
      %v334 = vld [vmem:[#allocation2 + $0xf0] sm:$0xff]
      %v335 = vld [vmem:[#allocation2 + $0xf8] sm:$0xff]
      %v336 = vld [vmem:[%s243] sm:$0xff]
      %v337 = vld [vmem:[%s243 + $0x8] sm:$0xff]
      %v338 = vld [vmem:[%s243 + $0x10] sm:$0xff]
      %v339 = vld [vmem:[%s243 + $0x18] sm:$0xff]
      %v340 = vld [vmem:[%s243 + $0x20] sm:$0xff]
      %v341 = vld [vmem:[%s243 + $0x28] sm:$0xff]
      %v342 = vld [vmem:[%s243 + $0x30] sm:$0xff]
      %v343 = vld [vmem:[%s243 + $0x38] sm:$0xff]
      %v344 = vld [vmem:[%s243 + $0x40] sm:$0xff]
      %v345 = vld [vmem:[%s243 + $0x48] sm:$0xff]
      %v346 = vld [vmem:[%s243 + $0x50] sm:$0xff]
      %v347 = vld [vmem:[%s243 + $0x58] sm:$0xff]
      %v348 = vld [vmem:[%s243 + $0x60] sm:$0xff]
      %v349 = vld [vmem:[%s243 + $0x68] sm:$0xff]
      %v350 = vld [vmem:[%s243 + $0x70] sm:$0xff]
      %v351 = vld [vmem:[%s243 + $0x78] sm:$0xff]
      %v352 = vld [vmem:[%s243 + $0x80] sm:$0xff]
      %v353 = vld [vmem:[%s243 + $0x88] sm:$0xff]
      %v354 = vld [vmem:[%s243 + $0x90] sm:$0xff]
      %v355 = vld [vmem:[%s243 + $0x98] sm:$0xff]
      %v356 = vld [vmem:[%s243 + $0xa0] sm:$0xff]
      %v357 = vld [vmem:[%s243 + $0xa8] sm:$0xff]
      %v358 = vld [vmem:[%s243 + $0xb0] sm:$0xff]
      %v359 = vld [vmem:[%s243 + $0xb8] sm:$0xff]
      %v360 = vld [vmem:[%s243 + $0xc0] sm:$0xff]
      %v361 = vld [vmem:[%s243 + $0xc8] sm:$0xff]
      %v362 = vld [vmem:[%s243 + $0xd0] sm:$0xff]
      %v363 = vld [vmem:[%s243 + $0xd8] sm:$0xff]
      %v364 = vld [vmem:[%s243 + $0xe0] sm:$0xff]
      %v365 = vld [vmem:[%s243 + $0xe8] sm:$0xff]
      %v366 = vld [vmem:[%s243 + $0xf0] sm:$0xff]
      %v367 = vld [vmem:[%s243 + $0xf8] sm:$0xff]
      %v368 = vld [vmem:[%s253] sm:$0xf]
      %v369 = vld [vmem:[%s253 + $0x4] sm:$0xf]
      %v370 = vld [vmem:[%s253 + $0x8] sm:$0xf]
      %v371 = vld [vmem:[%s253 + $0xc] sm:$0xf]
      %v372 = vld [vmem:[%s253 + $0x10] sm:$0xf]
      %v373 = vld [vmem:[%s253 + $0x14] sm:$0xf]
      %v374 = vld [vmem:[%s253 + $0x18] sm:$0xf]
      %v375 = vld [vmem:[%s253 + $0x1c] sm:$0xf]
      %v376 = vld [vmem:[%s253 + $0x20] sm:$0xf]
      %v377 = vld [vmem:[%s253 + $0x24] sm:$0xf]
      %v378 = vld [vmem:[%s253 + $0x28] sm:$0xf]
      %v379 = vld [vmem:[%s253 + $0x2c] sm:$0xf]
      %v380 = vld [vmem:[%s253 + $0x30] sm:$0xf]
      %v381 = vld [vmem:[%s253 + $0x34] sm:$0xf]
      %v382 = vld [vmem:[%s253 + $0x38] sm:$0xf]
      %v383 = vld [vmem:[%s253 + $0x3c] sm:$0xf]
      %v384 = vld [vmem:[%s253 + $0x40] sm:$0xf]
      %v385 = vld [vmem:[%s253 + $0x44] sm:$0xf]
      %v386 = vld [vmem:[%s253 + $0x48] sm:$0xf]
      %v387 = vld [vmem:[%s253 + $0x4c] sm:$0xf]
      %v388 = vld [vmem:[%s253 + $0x50] sm:$0xf]
      %v389 = vld [vmem:[%s253 + $0x54] sm:$0xf]
      %v390 = vld [vmem:[%s253 + $0x58] sm:$0xf]
      %v391 = vld [vmem:[%s253 + $0x5c] sm:$0xf]
      %v392 = vld [vmem:[%s253 + $0x60] sm:$0xf]
      %v393 = vld [vmem:[%s253 + $0x64] sm:$0xf]
      %v394 = vld [vmem:[%s253 + $0x68] sm:$0xf]
      %v395 = vld [vmem:[%s253 + $0x6c] sm:$0xf]
      %v396 = vld [vmem:[%s253 + $0x70] sm:$0xf]
      %v397 = vld [vmem:[%s253 + $0x74] sm:$0xf]
      %v398 = vld [vmem:[%s253 + $0x78] sm:$0xf]
      %v399 = vld [vmem:[%s253 + $0x7c] sm:$0xf]
      %v432 = vunpack.c.l.b16 %v336
      %v433 = vunpack.c.h.b16 %v336
      %v434 = vunpack.c.l.b16 %v337
      %v435 = vunpack.c.h.b16 %v337
      %v436 = vunpack.c.l.b16 %v338
      %v437 = vunpack.c.h.b16 %v338
      %v438 = vunpack.c.l.b16 %v339
      %v439 = vunpack.c.h.b16 %v339
      %v440 = vunpack.c.l.b16 %v340
      %v441 = vunpack.c.h.b16 %v340
      %v442 = vunpack.c.l.b16 %v341
      %v443 = vunpack.c.h.b16 %v341
      %v444 = vunpack.c.l.b16 %v342
      %v445 = vunpack.c.h.b16 %v342
      %v446 = vunpack.c.l.b16 %v343
      %v447 = vunpack.c.h.b16 %v343
      %v448 = vunpack.c.l.b16 %v344
      %v449 = vunpack.c.h.b16 %v344
      %v450 = vunpack.c.l.b16 %v345
      %v451 = vunpack.c.h.b16 %v345
      %v452 = vunpack.c.l.b16 %v346
      %v453 = vunpack.c.h.b16 %v346
      %v454 = vunpack.c.l.b16 %v347
      %v455 = vunpack.c.h.b16 %v347
      %v456 = vunpack.c.l.b16 %v348
      %v457 = vunpack.c.h.b16 %v348
      %v458 = vunpack.c.l.b16 %v349
      %v459 = vunpack.c.h.b16 %v349
      %v460 = vunpack.c.l.b16 %v350
      %v461 = vunpack.c.h.b16 %v350
      %v462 = vunpack.c.l.b16 %v351
      %v463 = vunpack.c.h.b16 %v351
      %v464 = vunpack.c.l.b16 %v352
      %v465 = vunpack.c.h.b16 %v352
      %v466 = vunpack.c.l.b16 %v353
      %v467 = vunpack.c.h.b16 %v353
      %v468 = vunpack.c.l.b16 %v354
      %v469 = vunpack.c.h.b16 %v354
      %v470 = vunpack.c.l.b16 %v355
      %v471 = vunpack.c.h.b16 %v355
      %v472 = vunpack.c.l.b16 %v356
      %v473 = vunpack.c.h.b16 %v356
      %v474 = vunpack.c.l.b16 %v357
      %v475 = vunpack.c.h.b16 %v357
      %v476 = vunpack.c.l.b16 %v358
      %v477 = vunpack.c.h.b16 %v358
      %v478 = vunpack.c.l.b16 %v359
      %v479 = vunpack.c.h.b16 %v359
      %v480 = vunpack.c.l.b16 %v360
      %v481 = vunpack.c.h.b16 %v360
      %v482 = vunpack.c.l.b16 %v361
      %v483 = vunpack.c.h.b16 %v361
      %v484 = vunpack.c.l.b16 %v362
      %v485 = vunpack.c.h.b16 %v362
      %v486 = vunpack.c.l.b16 %v363
      %v487 = vunpack.c.h.b16 %v363
      %v488 = vunpack.c.l.b16 %v364
      %v489 = vunpack.c.h.b16 %v364
      %v490 = vunpack.c.l.b16 %v365
      %v491 = vunpack.c.h.b16 %v365
      %v492 = vunpack.c.l.b16 %v366
      %v493 = vunpack.c.h.b16 %v366
      %v494 = vunpack.c.l.b16 %v367
      %v495 = vunpack.c.h.b16 %v367
      %v496 = vpack.c.b16 %v434, %v432
      %v497 = vpack.c.b16 %v435, %v433
      %v498 = vpack.c.b16 %v438, %v436
      %v499 = vpack.c.b16 %v439, %v437
      %v500 = vpack.c.b16 %v442, %v440
      %v501 = vpack.c.b16 %v443, %v441
      %v502 = vpack.c.b16 %v446, %v444
      %v503 = vpack.c.b16 %v447, %v445
      %v504 = vpack.c.b16 %v450, %v448
      %v505 = vpack.c.b16 %v451, %v449
      %v506 = vpack.c.b16 %v454, %v452
      %v507 = vpack.c.b16 %v455, %v453
      %v508 = vpack.c.b16 %v458, %v456
      %v509 = vpack.c.b16 %v459, %v457
      %v510 = vpack.c.b16 %v462, %v460
      %v511 = vpack.c.b16 %v463, %v461
      %v512 = vpack.c.b16 %v466, %v464
      %v513 = vpack.c.b16 %v467, %v465
      %v514 = vpack.c.b16 %v470, %v468
      %v515 = vpack.c.b16 %v471, %v469
      %v516 = vpack.c.b16 %v474, %v472
      %v517 = vpack.c.b16 %v475, %v473
      %v518 = vpack.c.b16 %v478, %v476
      %v519 = vpack.c.b16 %v479, %v477
      %v520 = vpack.c.b16 %v482, %v480
      %v521 = vpack.c.b16 %v483, %v481
      %v522 = vpack.c.b16 %v486, %v484
      %v523 = vpack.c.b16 %v487, %v485
      %v524 = vpack.c.b16 %v490, %v488
      %v525 = vpack.c.b16 %v491, %v489
      %v526 = vpack.c.b16 %v494, %v492
      %v527 = vpack.c.b16 %v495, %v493
      %v592 = vunpack.c.l.b16 %v368
      %v593 = vunpack.c.l.b16 %v369
      %v594 = vunpack.c.l.b16 %v370
      %v595 = vunpack.c.l.b16 %v371
      %v596 = vunpack.c.l.b16 %v372
      %v597 = vunpack.c.l.b16 %v373
      %v598 = vunpack.c.l.b16 %v374
      %v599 = vunpack.c.l.b16 %v375
      %v600 = vunpack.c.l.b16 %v376
      %v601 = vunpack.c.l.b16 %v377
      %v602 = vunpack.c.l.b16 %v378
      %v603 = vunpack.c.l.b16 %v379
      %v604 = vunpack.c.l.b16 %v380
      %v605 = vunpack.c.l.b16 %v381
      %v606 = vunpack.c.l.b16 %v382
      %v607 = vunpack.c.l.b16 %v383
      %v608 = vunpack.c.l.b16 %v384
      %v609 = vunpack.c.l.b16 %v385
      %v610 = vunpack.c.l.b16 %v386
      %v611 = vunpack.c.l.b16 %v387
      %v612 = vunpack.c.l.b16 %v388
      %v613 = vunpack.c.l.b16 %v389
      %v614 = vunpack.c.l.b16 %v390
      %v615 = vunpack.c.l.b16 %v391
      %v616 = vunpack.c.l.b16 %v392
      %v617 = vunpack.c.l.b16 %v393
      %v618 = vunpack.c.l.b16 %v394
      %v619 = vunpack.c.l.b16 %v395
      %v620 = vunpack.c.l.b16 %v396
      %v621 = vunpack.c.l.b16 %v397
      %v622 = vunpack.c.l.b16 %v398
      %v623 = vunpack.c.l.b16 %v399
      %v624 = vpack.c.b16 %v593, %v592
      %v625 = vpack.c.b16 %v595, %v594
      %v626 = vpack.c.b16 %v597, %v596
      %v627 = vpack.c.b16 %v599, %v598
      %v628 = vpack.c.b16 %v601, %v600
      %v629 = vpack.c.b16 %v603, %v602
      %v630 = vpack.c.b16 %v605, %v604
      %v631 = vpack.c.b16 %v607, %v606
      %v632 = vpack.c.b16 %v609, %v608
      %v633 = vpack.c.b16 %v611, %v610
      %v634 = vpack.c.b16 %v613, %v612
      %v635 = vpack.c.b16 %v615, %v614
      %v636 = vpack.c.b16 %v617, %v616
      %v637 = vpack.c.b16 %v619, %v618
      %v638 = vpack.c.b16 %v621, %v620
      %v639 = vpack.c.b16 %v623, %v622
      %656 = vmatprep.subr.bf16.mxu0 0
      %657 = vmatpush1.bf16.msra.mxu0 %v624
      %658 = vmatprep.subr.bf16.mxu0 0
      %659 = vmatpush1.bf16.msra.mxu0 %v625
      %660 = vmatprep.subr.bf16.mxu0 0
      %661 = vmatpush1.bf16.msra.mxu0 %v626
      %662 = vmatprep.subr.bf16.mxu0 0
      %663 = vmatpush1.bf16.msra.mxu0 %v627
      %664 = vmatprep.subr.bf16.mxu0 0
      %665 = vmatpush1.bf16.msra.mxu0 %v628
      %666 = vmatprep.subr.bf16.mxu0 0
      %667 = vmatpush1.bf16.msra.mxu0 %v629
      %668 = vmatprep.subr.bf16.mxu0 0
      %669 = vmatpush1.bf16.msra.mxu0 %v630
      %670 = vmatprep.subr.bf16.mxu0 0
      %671 = vmatpush1.bf16.msra.mxu0 %v631
      %672 = vmatprep.subr.bf16.mxu0 0
      %673 = vmatpush1.bf16.msra.mxu0 %v632
      %674 = vmatprep.subr.bf16.mxu0 0
      %675 = vmatpush1.bf16.msra.mxu0 %v633
      %676 = vmatprep.subr.bf16.mxu0 0
      %677 = vmatpush1.bf16.msra.mxu0 %v634
      %678 = vmatprep.subr.bf16.mxu0 0
      %679 = vmatpush1.bf16.msra.mxu0 %v635
      %680 = vmatprep.subr.bf16.mxu0 0
      %681 = vmatpush1.bf16.msra.mxu0 %v636
      %682 = vmatprep.subr.bf16.mxu0 0
      %683 = vmatpush1.bf16.msra.mxu0 %v637
      %684 = vmatprep.subr.bf16.mxu0 0
      %685 = vmatpush1.bf16.msra.mxu0 %v638
      %686 = vmatprep.subr.bf16.mxu0 0
      %687 = vmatpush1.bf16.msra.mxu0 %v639
      %688 = vmatprep.mubr.bf16.mxu0 %v497
      %689 = vmatmul.mubr.bf16.gmra.mrb[0].mxu0 %v496
      %v690 = vpop.f32.mrb[0].mxu0
      %v691 = vadd.f32 0.0, %v690
      %v692 = vpop.f32.mrb[0].mxu0
      %v693 = vpop.f32.mrb[0].mxu0
      %v694 = vadd.f32 0.0, %v693
      %v695 = vpop.f32.mrb[0].mxu0
      %696 = vmatprep.mubr.bf16.mxu0 %v499
      %697 = vmatmul.mubr.bf16.gmra.mrb[0].mxu0 %v498
      %v698 = vpop.f32.mrb[0].mxu0
      %v699 = vadd.f32 0.0, %v698
      %v700 = vpop.f32.mrb[0].mxu0
      %v701 = vpop.f32.mrb[0].mxu0
      %v702 = vadd.f32 0.0, %v701
      %v703 = vpop.f32.mrb[0].mxu0
      %704 = vmatprep.mubr.bf16.mxu0 %v501
      %705 = vmatmul.mubr.bf16.gmra.mrb[0].mxu0 %v500
      %v706 = vpop.f32.mrb[0].mxu0
      %v707 = vadd.f32 0.0, %v706
      %v708 = vpop.f32.mrb[0].mxu0
      %v709 = vpop.f32.mrb[0].mxu0
      %v710 = vadd.f32 0.0, %v709
      %v711 = vpop.f32.mrb[0].mxu0
      %712 = vmatprep.mubr.bf16.mxu0 %v503
      %713 = vmatmul.mubr.bf16.gmra.mrb[0].mxu0 %v502
      %v714 = vpop.f32.mrb[0].mxu0
      %v715 = vadd.f32 0.0, %v714
      %v716 = vpop.f32.mrb[0].mxu0
      %v717 = vpop.f32.mrb[0].mxu0
      %v718 = vadd.f32 0.0, %v717
      %v719 = vpop.f32.mrb[0].mxu0
      %720 = vmatprep.mubr.bf16.mxu0 %v505
      %721 = vmatmul.mubr.bf16.gmra.mrb[0].mxu0 %v504
      %v722 = vpop.f32.mrb[0].mxu0
      %v723 = vadd.f32 0.0, %v722
      %v724 = vpop.f32.mrb[0].mxu0
      %v725 = vpop.f32.mrb[0].mxu0
      %v726 = vadd.f32 0.0, %v725
      %v727 = vpop.f32.mrb[0].mxu0
      %728 = vmatprep.mubr.bf16.mxu0 %v507
      %729 = vmatmul.mubr.bf16.gmra.mrb[0].mxu0 %v506
      %v730 = vpop.f32.mrb[0].mxu0
      %v731 = vadd.f32 0.0, %v730
      %v732 = vpop.f32.mrb[0].mxu0
      %v733 = vpop.f32.mrb[0].mxu0
      %v734 = vadd.f32 0.0, %v733
      %v735 = vpop.f32.mrb[0].mxu0
      %736 = vmatprep.mubr.bf16.mxu0 %v509
      %737 = vmatmul.mubr.bf16.gmra.mrb[0].mxu0 %v508
      %v738 = vpop.f32.mrb[0].mxu0
      %v739 = vadd.f32 0.0, %v738
      %v740 = vpop.f32.mrb[0].mxu0
      %v741 = vpop.f32.mrb[0].mxu0
      %v742 = vadd.f32 0.0, %v741
      %v743 = vpop.f32.mrb[0].mxu0
      %744 = vmatprep.mubr.bf16.mxu0 %v511
      %745 = vmatmul.mubr.bf16.gmra.mrb[0].mxu0 %v510
      %v746 = vpop.f32.mrb[0].mxu0
      %v747 = vadd.f32 0.0, %v746
      %v748 = vpop.f32.mrb[0].mxu0
      %v749 = vpop.f32.mrb[0].mxu0
      %v750 = vadd.f32 0.0, %v749
      %v751 = vpop.f32.mrb[0].mxu0
      %752 = vmatprep.mubr.bf16.mxu0 %v513
      %753 = vmatmul.mubr.bf16.gmra.mrb[0].mxu0 %v512
      %v754 = vpop.f32.mrb[0].mxu0
      %v755 = vadd.f32 0.0, %v754
      %v756 = vpop.f32.mrb[0].mxu0
      %v757 = vpop.f32.mrb[0].mxu0
      %v758 = vadd.f32 0.0, %v757
      %v759 = vpop.f32.mrb[0].mxu0
      %760 = vmatprep.mubr.bf16.mxu0 %v515
      %761 = vmatmul.mubr.bf16.gmra.mrb[0].mxu0 %v514
      %v762 = vpop.f32.mrb[0].mxu0
      %v763 = vadd.f32 0.0, %v762
      %v764 = vpop.f32.mrb[0].mxu0
      %v765 = vpop.f32.mrb[0].mxu0
      %v766 = vadd.f32 0.0, %v765
      %v767 = vpop.f32.mrb[0].mxu0
      %768 = vmatprep.mubr.bf16.mxu0 %v517
      %769 = vmatmul.mubr.bf16.gmra.mrb[0].mxu0 %v516
      %v770 = vpop.f32.mrb[0].mxu0
      %v771 = vadd.f32 0.0, %v770
      %v772 = vpop.f32.mrb[0].mxu0
      %v773 = vpop.f32.mrb[0].mxu0
      %v774 = vadd.f32 0.0, %v773
      %v775 = vpop.f32.mrb[0].mxu0
      %776 = vmatprep.mubr.bf16.mxu0 %v519
      %777 = vmatmul.mubr.bf16.gmra.mrb[0].mxu0 %v518
      %v778 = vpop.f32.mrb[0].mxu0
      %v779 = vadd.f32 0.0, %v778
      %v780 = vpop.f32.mrb[0].mxu0
      %v781 = vpop.f32.mrb[0].mxu0
      %v782 = vadd.f32 0.0, %v781
      %v783 = vpop.f32.mrb[0].mxu0
      %784 = vmatprep.mubr.bf16.mxu0 %v521
      %785 = vmatmul.mubr.bf16.gmra.mrb[0].mxu0 %v520
      %v786 = vpop.f32.mrb[0].mxu0
      %v787 = vadd.f32 0.0, %v786
      %v788 = vpop.f32.mrb[0].mxu0
      %v789 = vpop.f32.mrb[0].mxu0
      %v790 = vadd.f32 0.0, %v789
      %v791 = vpop.f32.mrb[0].mxu0
      %792 = vmatprep.mubr.bf16.mxu0 %v523
      %793 = vmatmul.mubr.bf16.gmra.mrb[0].mxu0 %v522
      %v794 = vpop.f32.mrb[0].mxu0
      %v795 = vadd.f32 0.0, %v794
      %v796 = vpop.f32.mrb[0].mxu0
      %v797 = vpop.f32.mrb[0].mxu0
      %v798 = vadd.f32 0.0, %v797
      %v799 = vpop.f32.mrb[0].mxu0
      %800 = vmatprep.mubr.bf16.mxu0 %v525
      %801 = vmatmul.mubr.bf16.gmra.mrb[0].mxu0 %v524
      %v802 = vpop.f32.mrb[0].mxu0
      %v803 = vadd.f32 0.0, %v802
      %v804 = vpop.f32.mrb[0].mxu0
      %v805 = vpop.f32.mrb[0].mxu0
      %v806 = vadd.f32 0.0, %v805
      %v807 = vpop.f32.mrb[0].mxu0
      %808 = vmatprep.mubr.bf16.mxu0 %v527
      %809 = vmatmul.mubr.bf16.gmra.mrb[0].mxu0 %v526
      %v810 = vpop.f32.mrb[0].mxu0
      %v811 = vadd.f32 0.0, %v810
      %v812 = vpop.f32.mrb[0].mxu0
      %v813 = vpop.f32.mrb[0].mxu0
      %v814 = vadd.f32 0.0, %v813
      %v815 = vpop.f32.mrb[0].mxu0
      %816 = vdwg.mxu0
      %v817 = vadd.f32 %v304, %v691
      %v818 = vadd.f32 %v305, %v694
      %v819 = vadd.f32 %v306, %v699
      %v820 = vadd.f32 %v307, %v702
      %v821 = vadd.f32 %v308, %v707
      %v822 = vadd.f32 %v309, %v710
      %v823 = vadd.f32 %v310, %v715
      %v824 = vadd.f32 %v311, %v718
      %v825 = vadd.f32 %v312, %v723
      %v826 = vadd.f32 %v313, %v726
      %v827 = vadd.f32 %v314, %v731
      %v828 = vadd.f32 %v315, %v734
      %v829 = vadd.f32 %v316, %v739
      %v830 = vadd.f32 %v317, %v742
      %v831 = vadd.f32 %v318, %v747
      %v832 = vadd.f32 %v319, %v750
      %v833 = vadd.f32 %v320, %v755
      %v834 = vadd.f32 %v321, %v758
      %v835 = vadd.f32 %v322, %v763
      %v836 = vadd.f32 %v323, %v766
      %v837 = vadd.f32 %v324, %v771
      %v838 = vadd.f32 %v325, %v774
      %v839 = vadd.f32 %v326, %v779
      %v840 = vadd.f32 %v327, %v782
      %v841 = vadd.f32 %v328, %v787
      %v842 = vadd.f32 %v329, %v790
      %v843 = vadd.f32 %v330, %v795
      %v844 = vadd.f32 %v331, %v798
      %v845 = vadd.f32 %v332, %v803
      %v846 = vadd.f32 %v333, %v806
      %v847 = vadd.f32 %v334, %v811
      %v848 = vadd.f32 %v335, %v814
      %849 = vst [vmem:[#allocation2] sm:$0xff] %v817
      %850 = vst [vmem:[#allocation2 + $0x8] sm:$0xff] %v818
      %851 = vst [vmem:[#allocation2 + $0x10] sm:$0xff] %v819
      %852 = vst [vmem:[#allocation2 + $0x18] sm:$0xff] %v820
      %853 = vst [vmem:[#allocation2 + $0x20] sm:$0xff] %v821
      %854 = vst [vmem:[#allocation2 + $0x28] sm:$0xff] %v822
      %855 = vst [vmem:[#allocation2 + $0x30] sm:$0xff] %v823
      %856 = vst [vmem:[#allocation2 + $0x38] sm:$0xff] %v824
      %857 = vst [vmem:[#allocation2 + $0x40] sm:$0xff] %v825
      %858 = vst [vmem:[#allocation2 + $0x48] sm:$0xff] %v826
      %859 = vst [vmem:[#allocation2 + $0x50] sm:$0xff] %v827
      %860 = vst [vmem:[#allocation2 + $0x58] sm:$0xff] %v828
      %861 = vst [vmem:[#allocation2 + $0x60] sm:$0xff] %v829
      %862 = vst [vmem:[#allocation2 + $0x68] sm:$0xff] %v830
      %863 = vst [vmem:[#allocation2 + $0x70] sm:$0xff] %v831
      %864 = vst [vmem:[#allocation2 + $0x78] sm:$0xff] %v832
      %865 = vst [vmem:[#allocation2 + $0x80] sm:$0xff] %v833
      %866 = vst [vmem:[#allocation2 + $0x88] sm:$0xff] %v834
      %867 = vst [vmem:[#allocation2 + $0x90] sm:$0xff] %v835
      %868 = vst [vmem:[#allocation2 + $0x98] sm:$0xff] %v836
      %869 = vst [vmem:[#allocation2 + $0xa0] sm:$0xff] %v837
      %870 = vst [vmem:[#allocation2 + $0xa8] sm:$0xff] %v838
      %871 = vst [vmem:[#allocation2 + $0xb0] sm:$0xff] %v839
      %872 = vst [vmem:[#allocation2 + $0xb8] sm:$0xff] %v840
      %873 = vst [vmem:[#allocation2 + $0xc0] sm:$0xff] %v841
      %874 = vst [vmem:[#allocation2 + $0xc8] sm:$0xff] %v842
      %875 = vst [vmem:[#allocation2 + $0xd0] sm:$0xff] %v843
      %876 = vst [vmem:[#allocation2 + $0xd8] sm:$0xff] %v844
      %877 = vst [vmem:[#allocation2 + $0xe0] sm:$0xff] %v845
      %878 = vst [vmem:[#allocation2 + $0xe8] sm:$0xff] %v846
      %879 = vst [vmem:[#allocation2 + $0xf0] sm:$0xff] %v847
      %880 = vst [vmem:[#allocation2 + $0xf8] sm:$0xff] %v848
      // Predicated region
      $region37: #{resnet_forward.14} parent=31 // pred_check
        %p881 = pneg %p268
      $region38: #{resnet_forward.14} parent=31 // pred_check_branch
        %883 = sbr.rel (%p881) target = $region40
      $region39: #{resnet_forward.14} parent=31 // pred_region
        %v884 = vld [vmem:[#allocation2] sm:$0xff]
        %v885 = vld [vmem:[#allocation2 + $0x8] sm:$0xff]
        %v886 = vld [vmem:[#allocation2 + $0x10] sm:$0xff]
        %v887 = vld [vmem:[#allocation2 + $0x18] sm:$0xff]
        %v888 = vld [vmem:[#allocation2 + $0x20] sm:$0xff]
        %v889 = vld [vmem:[#allocation2 + $0x28] sm:$0xff]
        %v890 = vld [vmem:[#allocation2 + $0x30] sm:$0xff]
        %v891 = vld [vmem:[#allocation2 + $0x38] sm:$0xff]
        %v892 = vld [vmem:[#allocation2 + $0x40] sm:$0xff]
        %v893 = vld [vmem:[#allocation2 + $0x48] sm:$0xff]
        %v894 = vld [vmem:[#allocation2 + $0x50] sm:$0xff]
        %v895 = vld [vmem:[#allocation2 + $0x58] sm:$0xff]
        %v896 = vld [vmem:[#allocation2 + $0x60] sm:$0xff]
        %v897 = vld [vmem:[#allocation2 + $0x68] sm:$0xff]
        %v898 = vld [vmem:[#allocation2 + $0x70] sm:$0xff]
        %v899 = vld [vmem:[#allocation2 + $0x78] sm:$0xff]
        %v900 = vld [vmem:[#allocation2 + $0x80] sm:$0xff]
        %v901 = vld [vmem:[#allocation2 + $0x88] sm:$0xff]
        %v902 = vld [vmem:[#allocation2 + $0x90] sm:$0xff]
        %v903 = vld [vmem:[#allocation2 + $0x98] sm:$0xff]
        %v904 = vld [vmem:[#allocation2 + $0xa0] sm:$0xff]
        %v905 = vld [vmem:[#allocation2 + $0xa8] sm:$0xff]
        %v906 = vld [vmem:[#allocation2 + $0xb0] sm:$0xff]
        %v907 = vld [vmem:[#allocation2 + $0xb8] sm:$0xff]
        %v908 = vld [vmem:[#allocation2 + $0xc0] sm:$0xff]
        %v909 = vld [vmem:[#allocation2 + $0xc8] sm:$0xff]
        %v910 = vld [vmem:[#allocation2 + $0xd0] sm:$0xff]
        %v911 = vld [vmem:[#allocation2 + $0xd8] sm:$0xff]
        %v912 = vld [vmem:[#allocation2 + $0xe0] sm:$0xff]
        %v913 = vld [vmem:[#allocation2 + $0xe8] sm:$0xff]
        %v914 = vld [vmem:[#allocation2 + $0xf0] sm:$0xff]
        %v915 = vld [vmem:[#allocation2 + $0xf8] sm:$0xff]
        %v916 = vld [vmem:[%s257] sm:$0x1]
        %v918 = vlaneseq
        %v919 = vshrl.u32 %v918, 7
        %v920 = vsub.s32 0, %v919
        %v921 = vrot.slane %v916, %v920
        %v923 = vadd.f32 %v884, %v921
        %v924 = vadd.f32 %v885, %v921
        %v925 = vadd.f32 %v886, %v921
        %v926 = vadd.f32 %v887, %v921
        %v927 = vadd.f32 %v888, %v921
        %v928 = vadd.f32 %v889, %v921
        %v929 = vadd.f32 %v890, %v921
        %v930 = vadd.f32 %v891, %v921
        %v931 = vadd.f32 %v892, %v921
        %v932 = vadd.f32 %v893, %v921
        %v933 = vadd.f32 %v894, %v921
        %v934 = vadd.f32 %v895, %v921
        %v935 = vadd.f32 %v896, %v921
        %v936 = vadd.f32 %v897, %v921
        %v937 = vadd.f32 %v898, %v921
        %v938 = vadd.f32 %v899, %v921
        %v939 = vadd.f32 %v900, %v921
        %v940 = vadd.f32 %v901, %v921
        %v941 = vadd.f32 %v902, %v921
        %v942 = vadd.f32 %v903, %v921
        %v943 = vadd.f32 %v904, %v921
        %v944 = vadd.f32 %v905, %v921
        %v945 = vadd.f32 %v906, %v921
        %v946 = vadd.f32 %v907, %v921
        %v947 = vadd.f32 %v908, %v921
        %v948 = vadd.f32 %v909, %v921
        %v949 = vadd.f32 %v910, %v921
        %v950 = vadd.f32 %v911, %v921
        %v951 = vadd.f32 %v912, %v921
        %v952 = vadd.f32 %v913, %v921
        %v953 = vadd.f32 %v914, %v921
        %v954 = vadd.f32 %v915, %v921
        %v955 = vmax.f32 %v923, 0.0
        %v956 = vmax.f32 %v924, 0.0
        %v957 = vmax.f32 %v925, 0.0
        %v958 = vmax.f32 %v926, 0.0
        %v959 = vmax.f32 %v927, 0.0
        %v960 = vmax.f32 %v928, 0.0
        %v961 = vmax.f32 %v929, 0.0
        %v962 = vmax.f32 %v930, 0.0
        %v963 = vmax.f32 %v931, 0.0
        %v964 = vmax.f32 %v932, 0.0
        %v965 = vmax.f32 %v933, 0.0
        %v966 = vmax.f32 %v934, 0.0
        %v967 = vmax.f32 %v935, 0.0
        %v968 = vmax.f32 %v936, 0.0
        %v969 = vmax.f32 %v937, 0.0
        %v970 = vmax.f32 %v938, 0.0
        %v971 = vmax.f32 %v939, 0.0
        %v972 = vmax.f32 %v940, 0.0
        %v973 = vmax.f32 %v941, 0.0
        %v974 = vmax.f32 %v942, 0.0
        %v975 = vmax.f32 %v943, 0.0
        %v976 = vmax.f32 %v944, 0.0
        %v977 = vmax.f32 %v945, 0.0
        %v978 = vmax.f32 %v946, 0.0
        %v979 = vmax.f32 %v947, 0.0
        %v980 = vmax.f32 %v948, 0.0
        %v981 = vmax.f32 %v949, 0.0
        %v982 = vmax.f32 %v950, 0.0
        %v983 = vmax.f32 %v951, 0.0
        %v984 = vmax.f32 %v952, 0.0
        %v985 = vmax.f32 %v953, 0.0
        %v986 = vmax.f32 %v954, 0.0
        %v987 = vpack.c.bf16 %v956, %v955
        %v988 = vpack.c.bf16 %v958, %v957
        %v989 = vpack.c.bf16 %v960, %v959
        %v990 = vpack.c.bf16 %v962, %v961
        %v991 = vpack.c.bf16 %v964, %v963
        %v992 = vpack.c.bf16 %v966, %v965
        %v993 = vpack.c.bf16 %v968, %v967
        %v994 = vpack.c.bf16 %v970, %v969
        %v995 = vpack.c.bf16 %v972, %v971
        %v996 = vpack.c.bf16 %v974, %v973
        %v997 = vpack.c.bf16 %v976, %v975
        %v998 = vpack.c.bf16 %v978, %v977
        %v999 = vpack.c.bf16 %v980, %v979
        %v1000 = vpack.c.bf16 %v982, %v981
        %v1001 = vpack.c.bf16 %v984, %v983
        %v1002 = vpack.c.bf16 %v986, %v985
        %v1019 = vunpack.c.l.b16 %v987
        %v1020 = vunpack.c.h.b16 %v987
        %v1021 = vunpack.c.l.b16 %v988
        %v1022 = vunpack.c.h.b16 %v988
        %v1023 = vunpack.c.l.b16 %v989
        %v1024 = vunpack.c.h.b16 %v989
        %v1025 = vunpack.c.l.b16 %v990
        %v1026 = vunpack.c.h.b16 %v990
        %v1027 = vunpack.c.l.b16 %v991
        %v1028 = vunpack.c.h.b16 %v991
        %v1029 = vunpack.c.l.b16 %v992
        %v1030 = vunpack.c.h.b16 %v992
        %v1031 = vunpack.c.l.b16 %v993
        %v1032 = vunpack.c.h.b16 %v993
        %v1033 = vunpack.c.l.b16 %v994
        %v1034 = vunpack.c.h.b16 %v994
        %v1035 = vunpack.c.l.b16 %v995
        %v1036 = vunpack.c.h.b16 %v995
        %v1037 = vunpack.c.l.b16 %v996
        %v1038 = vunpack.c.h.b16 %v996
        %v1039 = vunpack.c.l.b16 %v997
        %v1040 = vunpack.c.h.b16 %v997
        %v1041 = vunpack.c.l.b16 %v998
        %v1042 = vunpack.c.h.b16 %v998
        %v1043 = vunpack.c.l.b16 %v999
        %v1044 = vunpack.c.h.b16 %v999
        %v1045 = vunpack.c.l.b16 %v1000
        %v1046 = vunpack.c.h.b16 %v1000
        %v1047 = vunpack.c.l.b16 %v1001
        %v1048 = vunpack.c.h.b16 %v1001
        %v1049 = vunpack.c.l.b16 %v1002
        %v1050 = vunpack.c.h.b16 %v1002
        %v1051 = vpack.c.b16 %v1019, %v1019
        %v1052 = vpack.c.b16 %v1020, %v1020
        %v1053 = vpack.c.b16 %v1021, %v1021
        %v1054 = vpack.c.b16 %v1022, %v1022
        %v1055 = vpack.c.b16 %v1023, %v1023
        %v1056 = vpack.c.b16 %v1024, %v1024
        %v1057 = vpack.c.b16 %v1025, %v1025
        %v1058 = vpack.c.b16 %v1026, %v1026
        %v1059 = vpack.c.b16 %v1027, %v1027
        %v1060 = vpack.c.b16 %v1028, %v1028
        %v1061 = vpack.c.b16 %v1029, %v1029
        %v1062 = vpack.c.b16 %v1030, %v1030
        %v1063 = vpack.c.b16 %v1031, %v1031
        %v1064 = vpack.c.b16 %v1032, %v1032
        %v1065 = vpack.c.b16 %v1033, %v1033
        %v1066 = vpack.c.b16 %v1034, %v1034
        %v1067 = vpack.c.b16 %v1035, %v1035
        %v1068 = vpack.c.b16 %v1036, %v1036
        %v1069 = vpack.c.b16 %v1037, %v1037
        %v1070 = vpack.c.b16 %v1038, %v1038
        %v1071 = vpack.c.b16 %v1039, %v1039
        %v1072 = vpack.c.b16 %v1040, %v1040
        %v1073 = vpack.c.b16 %v1041, %v1041
        %v1074 = vpack.c.b16 %v1042, %v1042
        %v1075 = vpack.c.b16 %v1043, %v1043
        %v1076 = vpack.c.b16 %v1044, %v1044
        %v1077 = vpack.c.b16 %v1045, %v1045
        %v1078 = vpack.c.b16 %v1046, %v1046
        %v1079 = vpack.c.b16 %v1047, %v1047
        %v1080 = vpack.c.b16 %v1048, %v1048
        %v1081 = vpack.c.b16 %v1049, %v1049
        %v1082 = vpack.c.b16 %v1050, %v1050
        %1115 = vst [vmem:[%s265] sm:$0xf] %v1051
        %1116 = vst [vmem:[%s265 + $0x4] sm:$0xf] %v1052
        %1117 = vst [vmem:[%s265 + $0x8] sm:$0xf] %v1053
        %1118 = vst [vmem:[%s265 + $0xc] sm:$0xf] %v1054
        %1119 = vst [vmem:[%s265 + $0x10] sm:$0xf] %v1055
        %1120 = vst [vmem:[%s265 + $0x14] sm:$0xf] %v1056
        %1121 = vst [vmem:[%s265 + $0x18] sm:$0xf] %v1057
        %1122 = vst [vmem:[%s265 + $0x1c] sm:$0xf] %v1058
        %1123 = vst [vmem:[%s265 + $0x20] sm:$0xf] %v1059
        %1124 = vst [vmem:[%s265 + $0x24] sm:$0xf] %v1060
        %1125 = vst [vmem:[%s265 + $0x28] sm:$0xf] %v1061
        %1126 = vst [vmem:[%s265 + $0x2c] sm:$0xf] %v1062
        %1127 = vst [vmem:[%s265 + $0x30] sm:$0xf] %v1063
        %1128 = vst [vmem:[%s265 + $0x34] sm:$0xf] %v1064
        %1129 = vst [vmem:[%s265 + $0x38] sm:$0xf] %v1065
        %1130 = vst [vmem:[%s265 + $0x3c] sm:$0xf] %v1066
        %1131 = vst [vmem:[%s265 + $0x40] sm:$0xf] %v1067
        %1132 = vst [vmem:[%s265 + $0x44] sm:$0xf] %v1068
        %1133 = vst [vmem:[%s265 + $0x48] sm:$0xf] %v1069
        %1134 = vst [vmem:[%s265 + $0x4c] sm:$0xf] %v1070
        %1135 = vst [vmem:[%s265 + $0x50] sm:$0xf] %v1071
        %1136 = vst [vmem:[%s265 + $0x54] sm:$0xf] %v1072
        %1137 = vst [vmem:[%s265 + $0x58] sm:$0xf] %v1073
        %1138 = vst [vmem:[%s265 + $0x5c] sm:$0xf] %v1074
        %1139 = vst [vmem:[%s265 + $0x60] sm:$0xf] %v1075
        %1140 = vst [vmem:[%s265 + $0x64] sm:$0xf] %v1076
        %1141 = vst [vmem:[%s265 + $0x68] sm:$0xf] %v1077
        %1142 = vst [vmem:[%s265 + $0x6c] sm:$0xf] %v1078
        %1143 = vst [vmem:[%s265 + $0x70] sm:$0xf] %v1079
        %1144 = vst [vmem:[%s265 + $0x74] sm:$0xf] %v1080
        %1145 = vst [vmem:[%s265 + $0x78] sm:$0xf] %v1081
        %1146 = vst [vmem:[%s265 + $0x7c] sm:$0xf] %v1082
      $region40: #{resnet_forward.14} parent=31 // pred_fallthru
        _
      %s1147 = smul.u32 32, %s19
      %p1148 = scmp.lt.s32.totalorder %s1147, 63
      %s1149 = scalar_select %p1148, %s1147, 63
      %p1150 = scmp.lt.s32.totalorder %s20, 0
      %s1151 = scalar_select %p1150, %s20, 0
      %s1152 = sadd.s32 %s1151, %s1149
      %s1153 = smul.addr %s1152, 4
      %s1154 = scalar_lea.vmem %s3, %s1153
      // Predicated region
      $region41: #{resnet_forward.14} parent=31 // pred_check
        %p1155 = pneg %p135
      $region42: #{resnet_forward.14} parent=31 // pred_check_branch
        %1157 = sbr.rel (%p1155) target = $region44
      $region43: #{resnet_forward.14} parent=31 // pred_region
        %s1158 = smul.u32 32, %s19
      $region44: #{resnet_forward.14} parent=31 // pred_fallthru
        _
    $region32: #{resnet_forward.14} parent=5 // pred_fallthru
      _
    %p1159 = scmp.le.s32.totalorder 2, %s9
    // Predicated region
    $region45: #{resnet_forward.14} parent=5 // pred_check
      %p1160 = pneg %p1159
    $region46: #{resnet_forward.14} parent=5 // pred_check_branch
      %1162 = sbr.rel (%p1160) target = $region48
    $region47: #{resnet_forward.14} parent=5 // pred_region
      %s1163 = ssub.s32 %s9, 2
      // Predicated region
      $region49: #{resnet_forward.14} parent=47 // pred_check
        %p1164 = pneg %p141
      $region50: #{resnet_forward.14} parent=47 // pred_check_branch
        %1166 = sbr.rel (%p1164) target = $region52
      $region51: #{resnet_forward.14} parent=47 // pred_region
        %s1167 = smul.u32 32, %s22
        %p1168 = scmp.lt.s32.totalorder %s1167, 63
        %s1169 = scalar_select %p1168, %s1167, 63
        %p1170 = scmp.lt.s32.totalorder %s23, 0
        %s1171 = scalar_select %p1170, %s23, 0
        %s1172 = sadd.s32 %s1171, %s1169
        %s1173 = smul.addr %s1172, 4
        %s1174 = scalar_lea.vmem %s3, %s1173
      $region52: #{resnet_forward.14} parent=47 // pred_fallthru
        _
    $region48: #{resnet_forward.14} parent=5 // pred_fallthru
      _
  $region6: #{resnet_forward.14} parent=0 // loop_footer
    %s13 = sadd.s32 1, %s9
  $region7: #{resnet_forward.14} parent=0 // loop_footer_branch
    %8 = sbr.rel target = $region3
  $region8: #{resnet_forward.14} parent=0 // loop_exit
    _

// kernel: resnet_forward.15
$region0: #{resnet_forward.15}
  #allocation0 [shape = 'u32[]', space=smem, size = 0x4, offset = 0x4, fixed_abs, tag = 'smem constant byte address 0x4 - core index']
  #allocation1 [shape = 'u32[144,128]{1,0:T(1,128)}', space=vmem, size = 0x12000, scoped, tag = 'internal scratch']
  #allocation2 [shape = 'f32[128,128]{1,0:T(8,128)}', space=vmem, size = 0x10000, scoped, tag = 'scratch operand']
  %s0 = inlined_call_operand.vmem [shape: bf16[128,640], index: 0, kind: input, shape index: {}]
  %s1 = inlined_call_operand.vmem [shape: bf16[640,128], index: 1, kind: input, shape index: {}]
  %s2 = inlined_call_operand.vmem [shape: f32[1,128], index: 2, kind: input, shape index: {}]
  %s3 = inlined_call_operand.vmem [shape: bf16[128,128], index: 3, kind: output, shape index: {}]
  %s4 = sld [smem:[#allocation0]]
  $region94: #{resnet_forward.15} parent=0
    _
  %s6 = ssub.s32 1, %s4
  %s7 = scalar_select 0, %s6, %s4
  $region1: #{resnet_forward.15} parent=0
    #allocation3 [shape = 'u8[65536]{0}', space=vmem, size = 0x10000, scoped, tag = 'input window, operand 0']
    loop: start=0, step=1, limit=7
    $region2: #{resnet_forward.15} parent=1 // loop_pre_header
      _
    $region3: #{resnet_forward.15} parent=1 // loop_header
      %s9 = sphi 0, %s13
      %p10 = scmp.ge.s32.totalorder %s9, 7
      %s16 = sphi 0, %s35
      %s17 = sphi 0, %s31
      %s18 = sphi 0, %s27
      %s19 = sphi 0, %s16
      %s20 = sphi 0, %s17
      %s21 = sphi 0, %s18
      %s22 = sphi 0, %s19
      %s23 = sphi 0, %s20
      %s24 = sphi 0, %s21
      %s40 = sphi 0, %s42
      %s43 = sphi 0, %s40
      %s44 = sphi 0, %s43
      %s60 = sphi 0, %s44
      %s68 = sphi 0, %s70
      %s71 = sphi 0, %s68
      %s72 = sphi 0, %s71
      %s88 = sphi 0, %s72
      %s94 = sphi 0, %s96
      %s97 = sphi 0, %s94
      %s98 = sphi 0, %s97
      %s114 = sphi 0, %s98
      %s122 = sphi 0, %s124
      %s125 = sphi 0, %s122
      %s126 = sphi 0, %s125
      %s142 = sphi 0, %s126
    $region4: #{resnet_forward.15} parent=1 // loop_header_branch
      %12 = sbr.rel (%p10) target = $region8
    $region5: #{resnet_forward.15} parent=1 // loop_body
      %s14 = ssub.s32 %s9, 1
      %s15 = ssub.s32 %s9, 2
      %s25 = sadd.s32 1, %s18
      %p26 = scmp.ge.s32.totalorder %s25, 5
      %s27 = scalar_select %p26, 0, %s25
      %s28 = sadd.s32 1, %s17
      %s29 = scalar_select %p26, %s28, %s17
      %p30 = scmp.ge.s32.totalorder %s29, 1
      %s31 = scalar_select %p30, 0, %s29
      %s32 = sadd.s32 1, %s16
      %s33 = scalar_select %p30, %s32, %s16
      %p34 = scmp.ge.s32.totalorder %s33, 1
      %s35 = scalar_select %p34, 0, %s33
      %s36 = ssub.s32 %s16, %s35
      %s37 = ssub.s32 %s18, %s27
      %s38 = sor.u32 %s36, %s37
      %p39 = scmp.eq.s32.totalorder %s38, 0
      %s41 = sadd.s32 %s40, 1
      %s42 = scalar_select %p39, %s40, %s41
      %p45 = pneg %p39
      %p46 = scmp.eq.s32.totalorder %s9, 4
      %p47 = por %p45, %p46
      %p48 = scmp.ne.s32.totalorder %s40, %s43
      %p49 = scmp.eq.s32.totalorder %s9, 0
      %p50 = por %p48, %p49
      %p51 = scmp.ne.s32.totalorder %s40, %s43
      %p52 = scmp.eq.s32.totalorder %s14, 4
      %p53 = por %p51, %p52
      %p54 = scmp.ne.s32.totalorder %s43, %s44
      %p55 = scmp.eq.s32.totalorder %s14, 0
      %p56 = por %p54, %p55
      %p57 = scmp.ne.s32.totalorder %s43, %s44
      %p58 = scmp.eq.s32.totalorder %s15, 4
      %p59 = por %p57, %p58
      %p61 = scmp.ne.s32.totalorder %s44, %s60
      %p62 = scmp.eq.s32.totalorder %s15, 0
      %p63 = por %p61, %p62
      %s64 = ssub.s32 %s18, %s27
      %s65 = ssub.s32 %s17, %s31
      %s66 = sor.u32 %s64, %s65
      %p67 = scmp.eq.s32.totalorder %s66, 0
      %s69 = sadd.s32 %s68, 1
      %s70 = scalar_select %p67, %s68, %s69
      %p73 = pneg %p67
      %p74 = scmp.eq.s32.totalorder %s9, 4
      %p75 = por %p73, %p74
      %p76 = scmp.ne.s32.totalorder %s68, %s71
      %p77 = scmp.eq.s32.totalorder %s9, 0
      %p78 = por %p76, %p77
      %p79 = scmp.ne.s32.totalorder %s68, %s71
      %p80 = scmp.eq.s32.totalorder %s14, 4
      %p81 = por %p79, %p80
      %p82 = scmp.ne.s32.totalorder %s71, %s72
      %p83 = scmp.eq.s32.totalorder %s14, 0
      %p84 = por %p82, %p83
      %p85 = scmp.ne.s32.totalorder %s71, %s72
      %p86 = scmp.eq.s32.totalorder %s15, 4
      %p87 = por %p85, %p86
      %p89 = scmp.ne.s32.totalorder %s72, %s88
      %p90 = scmp.eq.s32.totalorder %s15, 0
      %p91 = por %p89, %p90
      %s92 = ssub.s32 %s17, %s31
      %p93 = scmp.eq.s32.totalorder %s92, 0
      %s95 = sadd.s32 %s94, 1
      %s96 = scalar_select %p93, %s94, %s95
      %p99 = pneg %p93
      %p100 = scmp.eq.s32.totalorder %s9, 4
      %p101 = por %p99, %p100
      %p102 = scmp.ne.s32.totalorder %s94, %s97
      %p103 = scmp.eq.s32.totalorder %s9, 0
      %p104 = por %p102, %p103
      %p105 = scmp.ne.s32.totalorder %s94, %s97
      %p106 = scmp.eq.s32.totalorder %s14, 4
      %p107 = por %p105, %p106
      %p108 = scmp.ne.s32.totalorder %s97, %s98
      %p109 = scmp.eq.s32.totalorder %s14, 0
      %p110 = por %p108, %p109
      %p111 = scmp.ne.s32.totalorder %s97, %s98
      %p112 = scmp.eq.s32.totalorder %s15, 4
      %p113 = por %p111, %p112
      %p115 = scmp.ne.s32.totalorder %s98, %s114
      %p116 = scmp.eq.s32.totalorder %s15, 0
      %p117 = por %p115, %p116
      %s118 = ssub.s32 %s16, %s35
      %s119 = ssub.s32 %s17, %s31
      %s120 = sor.u32 %s118, %s119
      %p121 = scmp.eq.s32.totalorder %s120, 0
      %s123 = sadd.s32 %s122, 1
      %s124 = scalar_select %p121, %s122, %s123
      %p127 = pneg %p121
      %p128 = scmp.eq.s32.totalorder %s9, 4
      %p129 = por %p127, %p128
      %p130 = scmp.ne.s32.totalorder %s122, %s125
      %p131 = scmp.eq.s32.totalorder %s9, 0
      %p132 = por %p130, %p131
      %p133 = scmp.ne.s32.totalorder %s122, %s125
      %p134 = scmp.eq.s32.totalorder %s14, 4
      %p135 = por %p133, %p134
      %p136 = scmp.ne.s32.totalorder %s125, %s126
      %p137 = scmp.eq.s32.totalorder %s14, 0
      %p138 = por %p136, %p137
      %p139 = scmp.ne.s32.totalorder %s125, %s126
      %p140 = scmp.eq.s32.totalorder %s15, 4
      %p141 = por %p139, %p140
      %p143 = scmp.ne.s32.totalorder %s126, %s142
      %p144 = scmp.eq.s32.totalorder %s15, 0
      %p145 = por %p143, %p144
      %p146 = scmp.le.s32.totalorder 1, %s9
      %p147 = scmp.lt.s32.totalorder %s9, 6
      %p148 = pnand %p146, %p147
      %p149 = pneg %p148
      // Predicated region
      $region9: #{resnet_forward.15} parent=5 // pred_check
        _
      $region10: #{resnet_forward.15} parent=5 // pred_check_branch
        %151 = sbr.rel (%p148) target = $region12
      $region11: #{resnet_forward.15} parent=5 // pred_region
        %s152 = ssub.s32 %s9, 1
        // Predicated region
        $region13: #{resnet_forward.15} parent=11 // pred_check
          %p153 = pneg %p110
        $region14: #{resnet_forward.15} parent=11 // pred_check_branch
          %155 = sbr.rel (%p153) target = $region16
        $region15: #{resnet_forward.15} parent=11 // pred_region
          %p156 = scmp.lt.s32.totalorder %s20, 0
          %s157 = scalar_select %p156, %s20, 0
          %s158 = scalar_lea.vmem %s2, %s157
        $region16: #{resnet_forward.15} parent=11 // pred_fallthru
          _
      $region12: #{resnet_forward.15} parent=5 // pred_fallthru
        _
      %p159 = scmp.lt.s32.totalorder %s9, 5
      // Predicated region
      $region17: #{resnet_forward.15} parent=5 // pred_check
        %p160 = pneg %p159
      $region18: #{resnet_forward.15} parent=5 // pred_check_branch
        %162 = sbr.rel (%p160) target = $region20
      $region19: #{resnet_forward.15} parent=5 // pred_region
        // Predicated region
        $region21: #{resnet_forward.15} parent=19 // pred_check
          %p163 = pneg %p50
        $region22: #{resnet_forward.15} parent=19 // pred_check_branch
          %165 = sbr.rel (%p163) target = $region24
        $region23: #{resnet_forward.15} parent=19 // pred_region
          %s166 = sand.u32 %s40, 1
          %s167 = sand.u32 %s40, 1
          %s168 = smul.addr %s167, 64
          %s169 = scalar_lea.vmem [#allocation3], %s168
          %s170 = smul.u32 16, %s16
          %s171 = smul.addr %s170, 5
          %s172 = sadd.s32 %s18, %s171
          %s173 = smul.addr %s172, 4
          %s174 = scalar_lea.vmem %s0, %s173
          // Predicated region
          $region25: #{resnet_forward.15} parent=23 // pred_check
            _
          $region26: #{resnet_forward.15} parent=23 // pred_check_branch
            %176 = sbr.rel (0) target = $region28
          $region27: #{resnet_forward.15} parent=23 // pred_region
            // Predicated region
            $region29: #{resnet_forward.15} parent=27 // pred_check
              _
            $region30: #{resnet_forward.15} parent=27 // pred_check_branch
              %178 = sbr.rel target = $region32
            $region31: #{resnet_forward.15} parent=27 // pred_region
              // Predicated region
              $region44: #{resnet_forward.15} parent=31 // pred_check
                _
              $region45: #{resnet_forward.15} parent=31 // pred_check_branch
                %223 = sbr.rel (0) target = $region47
              $region46: #{resnet_forward.15} parent=31 // pred_region
                loop: start=0, step=1, limit=1
                $region48: #{resnet_forward.15} parent=46 // loop_pre_header
                  _
                $region49: #{resnet_forward.15} parent=46 // loop_header
                  %s225 = sphi 0, %s229
                  %p226 = scmp.ge.s32.totalorder %s225, 1
                  %s230 = sphi %s174, %s174
                  %s231 = sphi %s169, %s169
                $region50: #{resnet_forward.15} parent=46 // loop_header_branch
                  %228 = sbr.rel (%p226) target = $region54
                $region51: #{resnet_forward.15} parent=46 // loop_body
                  _
                $region52: #{resnet_forward.15} parent=46 // loop_footer
                  %s229 = sadd.s32 1, %s225
                $region53: #{resnet_forward.15} parent=46 // loop_footer_branch
                  %224 = sbr.rel target = $region49
                $region54: #{resnet_forward.15} parent=46 // loop_exit
                  _
                loop: start=0, step=1, limit=1
                $region55: #{resnet_forward.15} parent=46 // loop_pre_header
                  _
                $region56: #{resnet_forward.15} parent=46 // loop_header
                  %s234 = sphi 0, %s238
                  %p235 = scmp.ge.s32.totalorder %s234, 1
                  %s239 = sphi %s174, %s174
                  %s240 = sphi %s169, %s169
                $region57: #{resnet_forward.15} parent=46 // loop_header_branch
                  %237 = sbr.rel (%p235) target = $region61
                $region58: #{resnet_forward.15} parent=46 // loop_body
                  %v241 = vld [vmem:[%s239] sm:$0xf]
                  %242 = vst [vmem:[%s240] sm:$0xf] %v241
                  %v243 = vld [vmem:[%s239 + $0x14] sm:$0xf]
                  %244 = vst [vmem:[%s240 + $0x4] sm:$0xf] %v243
                  %v245 = vld [vmem:[%s239 + $0x28] sm:$0xf]
                  %246 = vst [vmem:[%s240 + $0x8] sm:$0xf] %v245
                  %v247 = vld [vmem:[%s239 + $0x3c] sm:$0xf]
                  %248 = vst [vmem:[%s240 + $0xc] sm:$0xf] %v247
                  %v249 = vld [vmem:[%s239 + $0x50] sm:$0xf]
                  %250 = vst [vmem:[%s240 + $0x10] sm:$0xf] %v249
                  %v251 = vld [vmem:[%s239 + $0x64] sm:$0xf]
                  %252 = vst [vmem:[%s240 + $0x14] sm:$0xf] %v251
                  %v253 = vld [vmem:[%s239 + $0x78] sm:$0xf]
                  %254 = vst [vmem:[%s240 + $0x18] sm:$0xf] %v253
                  %v255 = vld [vmem:[%s239 + $0x8c] sm:$0xf]
                  %256 = vst [vmem:[%s240 + $0x1c] sm:$0xf] %v255
                  %v257 = vld [vmem:[%s239 + $0xa0] sm:$0xf]
                  %258 = vst [vmem:[%s240 + $0x20] sm:$0xf] %v257
                  %v259 = vld [vmem:[%s239 + $0xb4] sm:$0xf]
                  %260 = vst [vmem:[%s240 + $0x24] sm:$0xf] %v259
                  %v261 = vld [vmem:[%s239 + $0xc8] sm:$0xf]
                  %262 = vst [vmem:[%s240 + $0x28] sm:$0xf] %v261
                  %v263 = vld [vmem:[%s239 + $0xdc] sm:$0xf]
                  %264 = vst [vmem:[%s240 + $0x2c] sm:$0xf] %v263
                  %v265 = vld [vmem:[%s239 + $0xf0] sm:$0xf]
                  %266 = vst [vmem:[%s240 + $0x30] sm:$0xf] %v265
                  %v267 = vld [vmem:[%s239 + $0x104] sm:$0xf]
                  %268 = vst [vmem:[%s240 + $0x34] sm:$0xf] %v267
                  %v269 = vld [vmem:[%s239 + $0x118] sm:$0xf]
                  %270 = vst [vmem:[%s240 + $0x38] sm:$0xf] %v269
                  %v271 = vld [vmem:[%s239 + $0x12c] sm:$0xf]
                  %272 = vst [vmem:[%s240 + $0x3c] sm:$0xf] %v271
                $region59: #{resnet_forward.15} parent=46 // loop_footer
                  %s238 = sadd.s32 1, %s234
                $region60: #{resnet_forward.15} parent=46 // loop_footer_branch
                  %233 = sbr.rel target = $region56
                $region61: #{resnet_forward.15} parent=46 // loop_exit
                  _
              $region47: #{resnet_forward.15} parent=31 // pred_fallthru
                _
            $region32: #{resnet_forward.15} parent=27 // pred_fallthru
              _
            // Predicated region
            $region33: #{resnet_forward.15} parent=27 // pred_check
              _
            $region34: #{resnet_forward.15} parent=27 // pred_check_branch
              %180 = sbr.rel (0) target = $region36
            $region35: #{resnet_forward.15} parent=27 // pred_region
              loop: start=0, step=1, limit=1
              $region37: #{resnet_forward.15} parent=35 // loop_pre_header
                _
              $region38: #{resnet_forward.15} parent=35 // loop_header
                %s183 = sphi 0, %s187
                %p184 = scmp.ge.s32.totalorder %s183, 1
                %s188 = sphi %s174, %s174
                %s189 = sphi %s169, %s169
              $region39: #{resnet_forward.15} parent=35 // loop_header_branch
                %186 = sbr.rel (%p184) target = $region43
              $region40: #{resnet_forward.15} parent=35 // loop_body
                %v190 = vld [vmem:[%s188] sm:$0xf]
                %191 = vst [vmem:[%s189] sm:$0xf] %v190
                %v192 = vld [vmem:[%s188 + $0x14] sm:$0xf]
                %193 = vst [vmem:[%s189 + $0x4] sm:$0xf] %v192
                %v194 = vld [vmem:[%s188 + $0x28] sm:$0xf]
                %195 = vst [vmem:[%s189 + $0x8] sm:$0xf] %v194
                %v196 = vld [vmem:[%s188 + $0x3c] sm:$0xf]
                %197 = vst [vmem:[%s189 + $0xc] sm:$0xf] %v196
                %v198 = vld [vmem:[%s188 + $0x50] sm:$0xf]
                %199 = vst [vmem:[%s189 + $0x10] sm:$0xf] %v198
                %v200 = vld [vmem:[%s188 + $0x64] sm:$0xf]
                %201 = vst [vmem:[%s189 + $0x14] sm:$0xf] %v200
                %v202 = vld [vmem:[%s188 + $0x78] sm:$0xf]
                %203 = vst [vmem:[%s189 + $0x18] sm:$0xf] %v202
                %v204 = vld [vmem:[%s188 + $0x8c] sm:$0xf]
                %205 = vst [vmem:[%s189 + $0x1c] sm:$0xf] %v204
                %v206 = vld [vmem:[%s188 + $0xa0] sm:$0xf]
                %207 = vst [vmem:[%s189 + $0x20] sm:$0xf] %v206
                %v208 = vld [vmem:[%s188 + $0xb4] sm:$0xf]
                %209 = vst [vmem:[%s189 + $0x24] sm:$0xf] %v208
                %v210 = vld [vmem:[%s188 + $0xc8] sm:$0xf]
                %211 = vst [vmem:[%s189 + $0x28] sm:$0xf] %v210
                %v212 = vld [vmem:[%s188 + $0xdc] sm:$0xf]
                %213 = vst [vmem:[%s189 + $0x2c] sm:$0xf] %v212
                %v214 = vld [vmem:[%s188 + $0xf0] sm:$0xf]
                %215 = vst [vmem:[%s189 + $0x30] sm:$0xf] %v214
                %v216 = vld [vmem:[%s188 + $0x104] sm:$0xf]
                %217 = vst [vmem:[%s189 + $0x34] sm:$0xf] %v216
                %v218 = vld [vmem:[%s188 + $0x118] sm:$0xf]
                %219 = vst [vmem:[%s189 + $0x38] sm:$0xf] %v218
                %v220 = vld [vmem:[%s188 + $0x12c] sm:$0xf]
                %221 = vst [vmem:[%s189 + $0x3c] sm:$0xf] %v220
              $region41: #{resnet_forward.15} parent=35 // loop_footer
                %s187 = sadd.s32 1, %s183
              $region42: #{resnet_forward.15} parent=35 // loop_footer_branch
                %182 = sbr.rel target = $region38
              $region43: #{resnet_forward.15} parent=35 // loop_exit
                _
            $region36: #{resnet_forward.15} parent=27 // pred_fallthru
              _
          $region28: #{resnet_forward.15} parent=23 // pred_fallthru
            _
          %273 = vnop
        $region24: #{resnet_forward.15} parent=19 // pred_fallthru
          _
        // Predicated region
        $region62: #{resnet_forward.15} parent=19 // pred_check
          %p274 = pneg %p78
        $region63: #{resnet_forward.15} parent=19 // pred_check_branch
          %276 = sbr.rel (%p274) target = $region65
        $region64: #{resnet_forward.15} parent=19 // pred_region
          %s277 = smul.u32 16, %s18
          %p278 = scmp.lt.s32.totalorder %s277, 79
          %s279 = scalar_select %p278, %s277, 79
          %p280 = scmp.lt.s32.totalorder %s17, 0
          %s281 = scalar_select %p280, %s17, 0
          %s282 = sadd.s32 %s281, %s279
          %s283 = smul.addr %s282, 4
          %s284 = scalar_lea.vmem %s1, %s283
          %s285 = smul.u32 16, %s18
        $region65: #{resnet_forward.15} parent=19 // pred_fallthru
          _
      $region20: #{resnet_forward.15} parent=5 // pred_fallthru
        _
      %p286 = scmp.le.s32.totalorder 1, %s9
      %p287 = scmp.lt.s32.totalorder %s9, 6
      %p288 = pnand %p286, %p287
      %p289 = pneg %p288
      // Predicated region
      $region66: #{resnet_forward.15} parent=5 // pred_check
        _
      $region67: #{resnet_forward.15} parent=5 // pred_check_branch
        %291 = sbr.rel (%p288) target = $region69
      $region68: #{resnet_forward.15} parent=5 // pred_region
        %s292 = ssub.s32 %s9, 1
        %s293 = sand.u32 %s43, 1
        %s294 = sand.u32 %s43, 1
        %s295 = smul.addr %s294, 64
        %s296 = scalar_lea.vmem [#allocation3], %s295
        // Predicated region
        $region70: #{resnet_forward.15} parent=68 // pred_check
          %p297 = pneg %p56
        $region71: #{resnet_forward.15} parent=68 // pred_check_branch
          %299 = sbr.rel (%p297) target = $region73
        $region72: #{resnet_forward.15} parent=68 // pred_region
          _
        $region73: #{resnet_forward.15} parent=68 // pred_fallthru
          _
        %s300 = sand.u32 %s43, 1
        %s301 = sand.u32 %s43, 1
        %s302 = smul.addr %s301, 64
        %s303 = scalar_lea.vmem [#allocation3], %s302
        %p304 = pneg %p56
        %p305 = pneg %p53
        %s306 = smul.u32 16, %s21
        %p307 = scmp.lt.s32.totalorder %s306, 79
        %s308 = scalar_select %p307, %s306, 79
        %p309 = scmp.lt.s32.totalorder %s20, 0
        %s310 = scalar_select %p309, %s20, 0
        %s311 = sadd.s32 %s310, %s308
        %s312 = smul.addr %s311, 4
        %s313 = scalar_lea.vmem %s1, %s312
        %p314 = pneg %p84
        %p315 = pneg %p81
        %p316 = scmp.lt.s32.totalorder %s20, 0
        %s317 = scalar_select %p316, %s20, 0
        %s318 = scalar_lea.vmem %s2, %s317
        %p319 = pneg %p110
        %p320 = pneg %p107
        %p321 = pneg %p138
        %p322 = pneg %p135
        %s323 = smul.u32 16, %s19
        %p324 = scmp.lt.s32.totalorder %s323, 15
        %s325 = scalar_select %p324, %s323, 15
        %p326 = scmp.lt.s32.totalorder %s20, 0
        %s327 = scalar_select %p326, %s20, 0
        %s328 = sadd.s32 %s327, %s325
        %s329 = smul.addr %s328, 4
        %s330 = scalar_lea.vmem %s3, %s329
        %s331 = smul.u32 16, %s19
        %s332 = smul.u32 16, %s21
        %p333 = scmp.lt.s32.totalorder %s332, 79
        %s334 = scalar_select %p333, %s332, 79
        %p335 = scmp.lt.s32.totalorder %s20, 0
        %s336 = scalar_select %p335, %s20, 0
        %s337 = sadd.s32 %s336, %s334
        %s338 = smul.addr %s337, 4
        %s339 = scalar_lea.vmem %s1, %s338
        %s340 = smul.u32 16, %s21
        %p341 = scmp.lt.s32.totalorder %s20, 0
        %s342 = scalar_select %p341, %s20, 0
        %s343 = scalar_lea.vmem %s2, %s342
        %s344 = smul.u32 16, %s19
        %p345 = scmp.lt.s32.totalorder %s344, 15
        %s346 = scalar_select %p345, %s344, 15
        %p347 = scmp.lt.s32.totalorder %s20, 0
        %s348 = scalar_select %p347, %s20, 0
        %s349 = sadd.s32 %s348, %s346
        %s350 = smul.addr %s349, 4
        %s351 = scalar_lea.vmem %s3, %s350
        %s352 = smul.u32 16, %s19
        %p354 = scmp.eq.s32.totalorder %s21, 0
        // Predicated region
        $region74: #{resnet_forward.15} parent=68 // pred_check
          %p355 = pneg %p354
        $region75: #{resnet_forward.15} parent=68 // pred_check_branch
          %357 = sbr.rel (%p355) target = $region77
        $region76: #{resnet_forward.15} parent=68 // pred_region
          %358 = vst [vmem:[#allocation2] sm:$0xff] 0.0
          %359 = vst [vmem:[#allocation2 + $0x8] sm:$0xff] 0.0
          %360 = vst [vmem:[#allocation2 + $0x10] sm:$0xff] 0.0
          %361 = vst [vmem:[#allocation2 + $0x18] sm:$0xff] 0.0
          %362 = vst [vmem:[#allocation2 + $0x20] sm:$0xff] 0.0
          %363 = vst [vmem:[#allocation2 + $0x28] sm:$0xff] 0.0
          %364 = vst [vmem:[#allocation2 + $0x30] sm:$0xff] 0.0
          %365 = vst [vmem:[#allocation2 + $0x38] sm:$0xff] 0.0
          %366 = vst [vmem:[#allocation2 + $0x40] sm:$0xff] 0.0
          %367 = vst [vmem:[#allocation2 + $0x48] sm:$0xff] 0.0
          %368 = vst [vmem:[#allocation2 + $0x50] sm:$0xff] 0.0
          %369 = vst [vmem:[#allocation2 + $0x58] sm:$0xff] 0.0
          %370 = vst [vmem:[#allocation2 + $0x60] sm:$0xff] 0.0
          %371 = vst [vmem:[#allocation2 + $0x68] sm:$0xff] 0.0
          %372 = vst [vmem:[#allocation2 + $0x70] sm:$0xff] 0.0
          %373 = vst [vmem:[#allocation2 + $0x78] sm:$0xff] 0.0
        $region77: #{resnet_forward.15} parent=68 // pred_fallthru
          _
        %v374 = vld [vmem:[#allocation2] sm:$0xff]
        %v375 = vld [vmem:[#allocation2 + $0x8] sm:$0xff]
        %v376 = vld [vmem:[#allocation2 + $0x10] sm:$0xff]
        %v377 = vld [vmem:[#allocation2 + $0x18] sm:$0xff]
        %v378 = vld [vmem:[#allocation2 + $0x20] sm:$0xff]
        %v379 = vld [vmem:[#allocation2 + $0x28] sm:$0xff]
        %v380 = vld [vmem:[#allocation2 + $0x30] sm:$0xff]
        %v381 = vld [vmem:[#allocation2 + $0x38] sm:$0xff]
        %v382 = vld [vmem:[#allocation2 + $0x40] sm:$0xff]
        %v383 = vld [vmem:[#allocation2 + $0x48] sm:$0xff]
        %v384 = vld [vmem:[#allocation2 + $0x50] sm:$0xff]
        %v385 = vld [vmem:[#allocation2 + $0x58] sm:$0xff]
        %v386 = vld [vmem:[#allocation2 + $0x60] sm:$0xff]
        %v387 = vld [vmem:[#allocation2 + $0x68] sm:$0xff]
        %v388 = vld [vmem:[#allocation2 + $0x70] sm:$0xff]
        %v389 = vld [vmem:[#allocation2 + $0x78] sm:$0xff]
        %v390 = vld [vmem:[%s296] sm:$0xf]
        %v391 = vld [vmem:[%s296 + $0x4] sm:$0xf]
        %v392 = vld [vmem:[%s296 + $0x8] sm:$0xf]
        %v393 = vld [vmem:[%s296 + $0xc] sm:$0xf]
        %v394 = vld [vmem:[%s296 + $0x10] sm:$0xf]
        %v395 = vld [vmem:[%s296 + $0x14] sm:$0xf]
        %v396 = vld [vmem:[%s296 + $0x18] sm:$0xf]
        %v397 = vld [vmem:[%s296 + $0x1c] sm:$0xf]
        %v398 = vld [vmem:[%s296 + $0x20] sm:$0xf]
        %v399 = vld [vmem:[%s296 + $0x24] sm:$0xf]
        %v400 = vld [vmem:[%s296 + $0x28] sm:$0xf]
        %v401 = vld [vmem:[%s296 + $0x2c] sm:$0xf]
        %v402 = vld [vmem:[%s296 + $0x30] sm:$0xf]
        %v403 = vld [vmem:[%s296 + $0x34] sm:$0xf]
        %v404 = vld [vmem:[%s296 + $0x38] sm:$0xf]
        %v405 = vld [vmem:[%s296 + $0x3c] sm:$0xf]
        %v406 = vld [vmem:[%s339] sm:$0xf]
        %v407 = vld [vmem:[%s339 + $0x4] sm:$0xf]
        %v408 = vld [vmem:[%s339 + $0x8] sm:$0xf]
        %v409 = vld [vmem:[%s339 + $0xc] sm:$0xf]
        %v410 = vld [vmem:[%s339 + $0x10] sm:$0xf]
        %v411 = vld [vmem:[%s339 + $0x14] sm:$0xf]
        %v412 = vld [vmem:[%s339 + $0x18] sm:$0xf]
        %v413 = vld [vmem:[%s339 + $0x1c] sm:$0xf]
        %v414 = vld [vmem:[%s339 + $0x20] sm:$0xf]
        %v415 = vld [vmem:[%s339 + $0x24] sm:$0xf]
        %v416 = vld [vmem:[%s339 + $0x28] sm:$0xf]
        %v417 = vld [vmem:[%s339 + $0x2c] sm:$0xf]
        %v418 = vld [vmem:[%s339 + $0x30] sm:$0xf]
        %v419 = vld [vmem:[%s339 + $0x34] sm:$0xf]
        %v420 = vld [vmem:[%s339 + $0x38] sm:$0xf]
        %v421 = vld [vmem:[%s339 + $0x3c] sm:$0xf]
        %v438 = vunpack.c.l.b16 %v390
        %v439 = vunpack.c.l.b16 %v391
        %v440 = vunpack.c.l.b16 %v392
        %v441 = vunpack.c.l.b16 %v393
        %v442 = vunpack.c.l.b16 %v394
        %v443 = vunpack.c.l.b16 %v395
        %v444 = vunpack.c.l.b16 %v396
        %v445 = vunpack.c.l.b16 %v397
        %v446 = vunpack.c.l.b16 %v398
        %v447 = vunpack.c.l.b16 %v399
        %v448 = vunpack.c.l.b16 %v400
        %v449 = vunpack.c.l.b16 %v401
        %v450 = vunpack.c.l.b16 %v402
        %v451 = vunpack.c.l.b16 %v403
        %v452 = vunpack.c.l.b16 %v404
        %v453 = vunpack.c.l.b16 %v405
        %v454 = vpack.c.b16 %v439, %v438
        %v455 = vpack.c.b16 %v441, %v440
        %v456 = vpack.c.b16 %v443, %v442
        %v457 = vpack.c.b16 %v445, %v444
        %v458 = vpack.c.b16 %v447, %v446
        %v459 = vpack.c.b16 %v449, %v448
        %v460 = vpack.c.b16 %v451, %v450
        %v461 = vpack.c.b16 %v453, %v452
        %v486 = vunpack.c.l.b16 %v406
        %v487 = vunpack.c.l.b16 %v407
        %v488 = vunpack.c.l.b16 %v408
        %v489 = vunpack.c.l.b16 %v409
        %v490 = vunpack.c.l.b16 %v410
        %v491 = vunpack.c.l.b16 %v411
        %v492 = vunpack.c.l.b16 %v412
        %v493 = vunpack.c.l.b16 %v413
        %v494 = vunpack.c.l.b16 %v414
        %v495 = vunpack.c.l.b16 %v415
        %v496 = vunpack.c.l.b16 %v416
        %v497 = vunpack.c.l.b16 %v417
        %v498 = vunpack.c.l.b16 %v418
        %v499 = vunpack.c.l.b16 %v419
        %v500 = vunpack.c.l.b16 %v420
        %v501 = vunpack.c.l.b16 %v421
        %v502 = vpack.c.b16 %v487, %v486
        %v503 = vpack.c.b16 %v489, %v488
        %v504 = vpack.c.b16 %v491, %v490
        %v505 = vpack.c.b16 %v493, %v492
        %v506 = vpack.c.b16 %v495, %v494
        %v507 = vpack.c.b16 %v497, %v496
        %v508 = vpack.c.b16 %v499, %v498
        %v509 = vpack.c.b16 %v501, %v500
        %518 = vmatprep.subr.bf16.mxu0 0
        %519 = vmatpush1.bf16.msra.mxu0 %v502
        %520 = vmatprep.subr.bf16.mxu0 0
        %521 = vmatpush1.bf16.msra.mxu0 %v503
        %522 = vmatprep.subr.bf16.mxu0 0
        %523 = vmatpush1.bf16.msra.mxu0 %v504
        %524 = vmatprep.subr.bf16.mxu0 0
        %525 = vmatpush1.bf16.msra.mxu0 %v505
        %526 = vmatprep.subr.bf16.mxu0 0
        %527 = vmatpush1.bf16.msra.mxu0 %v506
        %528 = vmatprep.subr.bf16.mxu0 0
        %529 = vmatpush1.bf16.msra.mxu0 %v507
        %530 = vmatprep.subr.bf16.mxu0 0
        %531 = vmatpush1.bf16.msra.mxu0 %v508
        %532 = vmatprep.subr.bf16.mxu0 0
        %533 = vmatpush1.bf16.msra.mxu0 %v509
        %534 = vmatprep.subr.bf16.mxu0 0
        %535 = vmatpush1.bf16.msra.mxu0 0
        %536 = vmatprep.subr.bf16.mxu0 0
        %537 = vmatpush1.bf16.msra.mxu0 0
        %538 = vmatprep.subr.bf16.mxu0 0
        %539 = vmatpush1.bf16.msra.mxu0 0
        %540 = vmatprep.subr.bf16.mxu0 0
        %541 = vmatpush1.bf16.msra.mxu0 0
        %542 = vmatprep.subr.bf16.mxu0 0
        %543 = vmatpush1.bf16.msra.mxu0 0
        %544 = vmatprep.subr.bf16.mxu0 0
        %545 = vmatpush1.bf16.msra.mxu0 0
        %546 = vmatprep.subr.bf16.mxu0 0
        %547 = vmatpush1.bf16.msra.mxu0 0
        %548 = vmatprep.subr.bf16.mxu0 0
        %549 = vmatpush1.bf16.msra.mxu0 0
        %550 = vmatprep.mubr.bf16.mxu0 0
        %551 = vmatmul.mubr.bf16.gmra.mrb[0].mxu0 %v454
        %v552 = vpop.f32.mrb[0].mxu0
        %v553 = vadd.f32 0.0, %v552
        %v554 = vpop.f32.mrb[0].mxu0
        %v555 = vpop.f32.mrb[0].mxu0
        %v556 = vadd.f32 0.0, %v555
        %v557 = vpop.f32.mrb[0].mxu0
        %558 = vmatprep.mubr.bf16.mxu0 0
        %559 = vmatmul.mubr.bf16.gmra.mrb[0].mxu0 %v455
        %v560 = vpop.f32.mrb[0].mxu0
        %v561 = vadd.f32 0.0, %v560
        %v562 = vpop.f32.mrb[0].mxu0
        %v563 = vpop.f32.mrb[0].mxu0
        %v564 = vadd.f32 0.0, %v563
        %v565 = vpop.f32.mrb[0].mxu0
        %566 = vmatprep.mubr.bf16.mxu0 0
        %567 = vmatmul.mubr.bf16.gmra.mrb[0].mxu0 %v456
        %v568 = vpop.f32.mrb[0].mxu0
        %v569 = vadd.f32 0.0, %v568
        %v570 = vpop.f32.mrb[0].mxu0
        %v571 = vpop.f32.mrb[0].mxu0
        %v572 = vadd.f32 0.0, %v571
        %v573 = vpop.f32.mrb[0].mxu0
        %574 = vmatprep.mubr.bf16.mxu0 0
        %575 = vmatmul.mubr.bf16.gmra.mrb[0].mxu0 %v457
        %v576 = vpop.f32.mrb[0].mxu0
        %v577 = vadd.f32 0.0, %v576
        %v578 = vpop.f32.mrb[0].mxu0
        %v579 = vpop.f32.mrb[0].mxu0
        %v580 = vadd.f32 0.0, %v579
        %v581 = vpop.f32.mrb[0].mxu0
        %582 = vmatprep.mubr.bf16.mxu0 0
        %583 = vmatmul.mubr.bf16.gmra.mrb[0].mxu0 %v458
        %v584 = vpop.f32.mrb[0].mxu0
        %v585 = vadd.f32 0.0, %v584
        %v586 = vpop.f32.mrb[0].mxu0
        %v587 = vpop.f32.mrb[0].mxu0
        %v588 = vadd.f32 0.0, %v587
        %v589 = vpop.f32.mrb[0].mxu0
        %590 = vmatprep.mubr.bf16.mxu0 0
        %591 = vmatmul.mubr.bf16.gmra.mrb[0].mxu0 %v459
        %v592 = vpop.f32.mrb[0].mxu0
        %v593 = vadd.f32 0.0, %v592
        %v594 = vpop.f32.mrb[0].mxu0
        %v595 = vpop.f32.mrb[0].mxu0
        %v596 = vadd.f32 0.0, %v595
        %v597 = vpop.f32.mrb[0].mxu0
        %598 = vmatprep.mubr.bf16.mxu0 0
        %599 = vmatmul.mubr.bf16.gmra.mrb[0].mxu0 %v460
        %v600 = vpop.f32.mrb[0].mxu0
        %v601 = vadd.f32 0.0, %v600
        %v602 = vpop.f32.mrb[0].mxu0
        %v603 = vpop.f32.mrb[0].mxu0
        %v604 = vadd.f32 0.0, %v603
        %v605 = vpop.f32.mrb[0].mxu0
        %606 = vmatprep.mubr.bf16.mxu0 0
        %607 = vmatmul.mubr.bf16.gmra.mrb[0].mxu0 %v461
        %v608 = vpop.f32.mrb[0].mxu0
        %v609 = vadd.f32 0.0, %v608
        %v610 = vpop.f32.mrb[0].mxu0
        %v611 = vpop.f32.mrb[0].mxu0
        %v612 = vadd.f32 0.0, %v611
        %v613 = vpop.f32.mrb[0].mxu0
        %614 = vdwg.mxu0
        %v615 = vadd.f32 %v374, %v553
        %v616 = vadd.f32 %v375, %v556
        %v617 = vadd.f32 %v376, %v561
        %v618 = vadd.f32 %v377, %v564
        %v619 = vadd.f32 %v378, %v569
        %v620 = vadd.f32 %v379, %v572
        %v621 = vadd.f32 %v380, %v577
        %v622 = vadd.f32 %v381, %v580
        %v623 = vadd.f32 %v382, %v585
        %v624 = vadd.f32 %v383, %v588
        %v625 = vadd.f32 %v384, %v593
        %v626 = vadd.f32 %v385, %v596
        %v627 = vadd.f32 %v386, %v601
        %v628 = vadd.f32 %v387, %v604
        %v629 = vadd.f32 %v388, %v609
        %v630 = vadd.f32 %v389, %v612
        %631 = vst [vmem:[#allocation2] sm:$0xff] %v615
        %632 = vst [vmem:[#allocation2 + $0x8] sm:$0xff] %v616
        %633 = vst [vmem:[#allocation2 + $0x10] sm:$0xff] %v617
        %634 = vst [vmem:[#allocation2 + $0x18] sm:$0xff] %v618
        %635 = vst [vmem:[#allocation2 + $0x20] sm:$0xff] %v619
        %636 = vst [vmem:[#allocation2 + $0x28] sm:$0xff] %v620
        %637 = vst [vmem:[#allocation2 + $0x30] sm:$0xff] %v621
        %638 = vst [vmem:[#allocation2 + $0x38] sm:$0xff] %v622
        %639 = vst [vmem:[#allocation2 + $0x40] sm:$0xff] %v623
        %640 = vst [vmem:[#allocation2 + $0x48] sm:$0xff] %v624
        %641 = vst [vmem:[#allocation2 + $0x50] sm:$0xff] %v625
        %642 = vst [vmem:[#allocation2 + $0x58] sm:$0xff] %v626
        %643 = vst [vmem:[#allocation2 + $0x60] sm:$0xff] %v627
        %644 = vst [vmem:[#allocation2 + $0x68] sm:$0xff] %v628
        %645 = vst [vmem:[#allocation2 + $0x70] sm:$0xff] %v629
        %646 = vst [vmem:[#allocation2 + $0x78] sm:$0xff] %v630
        %p647 = scmp.eq.s32.totalorder %s21, 4
        // Predicated region
        $region78: #{resnet_forward.15} parent=68 // pred_check
          %p648 = pneg %p647
        $region79: #{resnet_forward.15} parent=68 // pred_check_branch
          %650 = sbr.rel (%p648) target = $region81
        $region80: #{resnet_forward.15} parent=68 // pred_region
          %v651 = vld [vmem:[#allocation2] sm:$0xff]
          %v652 = vld [vmem:[#allocation2 + $0x8] sm:$0xff]
          %v653 = vld [vmem:[#allocation2 + $0x10] sm:$0xff]
          %v654 = vld [vmem:[#allocation2 + $0x18] sm:$0xff]
          %v655 = vld [vmem:[#allocation2 + $0x20] sm:$0xff]
          %v656 = vld [vmem:[#allocation2 + $0x28] sm:$0xff]
          %v657 = vld [vmem:[#allocation2 + $0x30] sm:$0xff]
          %v658 = vld [vmem:[#allocation2 + $0x38] sm:$0xff]
          %v659 = vld [vmem:[#allocation2 + $0x40] sm:$0xff]
          %v660 = vld [vmem:[#allocation2 + $0x48] sm:$0xff]
          %v661 = vld [vmem:[#allocation2 + $0x50] sm:$0xff]
          %v662 = vld [vmem:[#allocation2 + $0x58] sm:$0xff]
          %v663 = vld [vmem:[#allocation2 + $0x60] sm:$0xff]
          %v664 = vld [vmem:[#allocation2 + $0x68] sm:$0xff]
          %v665 = vld [vmem:[#allocation2 + $0x70] sm:$0xff]
          %v666 = vld [vmem:[#allocation2 + $0x78] sm:$0xff]
          %v667 = vld [vmem:[%s343] sm:$0x1]
          %v669 = vlaneseq
          %v670 = vshrl.u32 %v669, 7
          %v671 = vsub.s32 0, %v670
          %v672 = vrot.slane %v667, %v671
          %v674 = vadd.f32 %v651, %v672
          %v675 = vadd.f32 %v652, %v672
          %v676 = vadd.f32 %v653, %v672
          %v677 = vadd.f32 %v654, %v672
          %v678 = vadd.f32 %v655, %v672
          %v679 = vadd.f32 %v656, %v672
          %v680 = vadd.f32 %v657, %v672
          %v681 = vadd.f32 %v658, %v672
          %v682 = vadd.f32 %v659, %v672
          %v683 = vadd.f32 %v660, %v672
          %v684 = vadd.f32 %v661, %v672
          %v685 = vadd.f32 %v662, %v672
          %v686 = vadd.f32 %v663, %v672
          %v687 = vadd.f32 %v664, %v672
          %v688 = vadd.f32 %v665, %v672
          %v689 = vadd.f32 %v666, %v672
          %v690 = vmax.f32 %v674, 0.0
          %v691 = vmax.f32 %v675, 0.0
          %v692 = vmax.f32 %v676, 0.0
          %v693 = vmax.f32 %v677, 0.0
          %v694 = vmax.f32 %v678, 0.0
          %v695 = vmax.f32 %v679, 0.0
          %v696 = vmax.f32 %v680, 0.0
          %v697 = vmax.f32 %v681, 0.0
          %v698 = vmax.f32 %v682, 0.0
          %v699 = vmax.f32 %v683, 0.0
          %v700 = vmax.f32 %v684, 0.0
          %v701 = vmax.f32 %v685, 0.0
          %v702 = vmax.f32 %v686, 0.0
          %v703 = vmax.f32 %v687, 0.0
          %v704 = vmax.f32 %v688, 0.0
          %v705 = vmax.f32 %v689, 0.0
          %v706 = vpack.c.bf16 %v691, %v690
          %v707 = vpack.c.bf16 %v693, %v692
          %v708 = vpack.c.bf16 %v695, %v694
          %v709 = vpack.c.bf16 %v697, %v696
          %v710 = vpack.c.bf16 %v699, %v698
          %v711 = vpack.c.bf16 %v701, %v700
          %v712 = vpack.c.bf16 %v703, %v702
          %v713 = vpack.c.bf16 %v705, %v704
          %v722 = vunpack.c.l.b16 %v706
          %v723 = vunpack.c.h.b16 %v706
          %v724 = vunpack.c.l.b16 %v707
          %v725 = vunpack.c.h.b16 %v707
          %v726 = vunpack.c.l.b16 %v708
          %v727 = vunpack.c.h.b16 %v708
          %v728 = vunpack.c.l.b16 %v709
          %v729 = vunpack.c.h.b16 %v709
          %v730 = vunpack.c.l.b16 %v710
          %v731 = vunpack.c.h.b16 %v710
          %v732 = vunpack.c.l.b16 %v711
          %v733 = vunpack.c.h.b16 %v711
          %v734 = vunpack.c.l.b16 %v712
          %v735 = vunpack.c.h.b16 %v712
          %v736 = vunpack.c.l.b16 %v713
          %v737 = vunpack.c.h.b16 %v713
          %v738 = vpack.c.b16 %v722, %v722
          %v739 = vpack.c.b16 %v723, %v723
          %v740 = vpack.c.b16 %v724, %v724
          %v741 = vpack.c.b16 %v725, %v725
          %v742 = vpack.c.b16 %v726, %v726
          %v743 = vpack.c.b16 %v727, %v727
          %v744 = vpack.c.b16 %v728, %v728
          %v745 = vpack.c.b16 %v729, %v729
          %v746 = vpack.c.b16 %v730, %v730
          %v747 = vpack.c.b16 %v731, %v731
          %v748 = vpack.c.b16 %v732, %v732
          %v749 = vpack.c.b16 %v733, %v733
          %v750 = vpack.c.b16 %v734, %v734
          %v751 = vpack.c.b16 %v735, %v735
          %v752 = vpack.c.b16 %v736, %v736
          %v753 = vpack.c.b16 %v737, %v737
          %770 = vst [vmem:[%s351] sm:$0xf] %v738
          %771 = vst [vmem:[%s351 + $0x4] sm:$0xf] %v739
          %772 = vst [vmem:[%s351 + $0x8] sm:$0xf] %v740
          %773 = vst [vmem:[%s351 + $0xc] sm:$0xf] %v741
          %774 = vst [vmem:[%s351 + $0x10] sm:$0xf] %v742
          %775 = vst [vmem:[%s351 + $0x14] sm:$0xf] %v743
          %776 = vst [vmem:[%s351 + $0x18] sm:$0xf] %v744
          %777 = vst [vmem:[%s351 + $0x1c] sm:$0xf] %v745
          %778 = vst [vmem:[%s351 + $0x20] sm:$0xf] %v746
          %779 = vst [vmem:[%s351 + $0x24] sm:$0xf] %v747
          %780 = vst [vmem:[%s351 + $0x28] sm:$0xf] %v748
          %781 = vst [vmem:[%s351 + $0x2c] sm:$0xf] %v749
          %782 = vst [vmem:[%s351 + $0x30] sm:$0xf] %v750
          %783 = vst [vmem:[%s351 + $0x34] sm:$0xf] %v751
          %784 = vst [vmem:[%s351 + $0x38] sm:$0xf] %v752
          %785 = vst [vmem:[%s351 + $0x3c] sm:$0xf] %v753
        $region81: #{resnet_forward.15} parent=68 // pred_fallthru
          _
        %s786 = smul.u32 16, %s19
        %p787 = scmp.lt.s32.totalorder %s786, 15
        %s788 = scalar_select %p787, %s786, 15
        %p789 = scmp.lt.s32.totalorder %s20, 0
        %s790 = scalar_select %p789, %s20, 0
        %s791 = sadd.s32 %s790, %s788
        %s792 = smul.addr %s791, 4
        %s793 = scalar_lea.vmem %s3, %s792
        // Predicated region
        $region82: #{resnet_forward.15} parent=68 // pred_check
          %p794 = pneg %p135
        $region83: #{resnet_forward.15} parent=68 // pred_check_branch
          %796 = sbr.rel (%p794) target = $region85
        $region84: #{resnet_forward.15} parent=68 // pred_region
          %s797 = smul.u32 16, %s19
        $region85: #{resnet_forward.15} parent=68 // pred_fallthru
          _
        // Predicated region
        $region86: #{resnet_forward.15} parent=68 // pred_check
          %p798 = pneg %p135
        $region87: #{resnet_forward.15} parent=68 // pred_check_branch
          %800 = sbr.rel (%p798) target = $region89
        $region88: #{resnet_forward.15} parent=68 // pred_region
          %s801 = smul.u32 16, %s19
          %p802 = scmp.lt.s32.totalorder %s801, 15
          %s803 = scalar_select %p802, %s801, 15
          %p804 = scmp.lt.s32.totalorder %s20, 0
          %s805 = scalar_select %p804, %s20, 0
          %s806 = sadd.s32 %s805, %s803
          %s807 = smul.addr %s806, 4
          %s808 = scalar_lea.vmem %s3, %s807
        $region89: #{resnet_forward.15} parent=68 // pred_fallthru
          _
      $region69: #{resnet_forward.15} parent=5 // pred_fallthru
        _
      %p809 = scmp.le.s32.totalorder 2, %s9
      // Predicated region
      $region90: #{resnet_forward.15} parent=5 // pred_check
        %p810 = pneg %p809
      $region91: #{resnet_forward.15} parent=5 // pred_check_branch
        %812 = sbr.rel (%p810) target = $region93
      $region92: #{resnet_forward.15} parent=5 // pred_region
        %s813 = ssub.s32 %s9, 2
      $region93: #{resnet_forward.15} parent=5 // pred_fallthru
        _
    $region6: #{resnet_forward.15} parent=1 // loop_footer
      %s13 = sadd.s32 1, %s9
    $region7: #{resnet_forward.15} parent=1 // loop_footer_branch
      %8 = sbr.rel target = $region3
    $region8: #{resnet_forward.15} parent=1 // loop_exit
      _

// kernel: resnet_forward.16
$region0: #{resnet_forward.16}
  #allocation0 [shape = 'u32[]', space=smem, size = 0x4, offset = 0x4, fixed_abs, tag = 'smem constant byte address 0x4 - core index']
  #allocation1 [shape = 'u32[144,128]{1,0:T(1,128)}', space=vmem, size = 0x12000, scoped, tag = 'internal scratch']
  #allocation2 [shape = 'f32[128,128]{1,0:T(8,128)}', space=vmem, size = 0x10000, scoped, tag = 'scratch operand']
  %s0 = inlined_call_operand.vmem [shape: bf16[128,640], index: 0, kind: input, shape index: {}]
  %s1 = inlined_call_operand.vmem [shape: bf16[640,128], index: 1, kind: input, shape index: {}]
  %s2 = inlined_call_operand.vmem [shape: f32[1,128], index: 2, kind: input, shape index: {}]
  %s3 = inlined_call_operand.vmem [shape: bf16[128,128], index: 3, kind: input, shape index: {}]
  %s4 = inlined_call_operand.vmem [shape: bf16[128,128], index: 4, kind: output, shape index: {}]
  %s5 = sld [smem:[#allocation0]]
  $region98: #{resnet_forward.16} parent=0
    _
  %s7 = ssub.s32 1, %s5
  %s8 = scalar_select 0, %s7, %s5
  $region1: #{resnet_forward.16} parent=0
    #allocation3 [shape = 'u8[65536]{0}', space=vmem, size = 0x10000, scoped, tag = 'input window, operand 0']
    loop: start=0, step=1, limit=7
    $region2: #{resnet_forward.16} parent=1 // loop_pre_header
      _
    $region3: #{resnet_forward.16} parent=1 // loop_header
      %s10 = sphi 0, %s14
      %p11 = scmp.ge.s32.totalorder %s10, 7
      %s17 = sphi 0, %s36
      %s18 = sphi 0, %s32
      %s19 = sphi 0, %s28
      %s20 = sphi 0, %s17
      %s21 = sphi 0, %s18
      %s22 = sphi 0, %s19
      %s23 = sphi 0, %s20
      %s24 = sphi 0, %s21
      %s25 = sphi 0, %s22
      %s41 = sphi 0, %s43
      %s44 = sphi 0, %s41
      %s45 = sphi 0, %s44
      %s61 = sphi 0, %s45
      %s69 = sphi 0, %s71
      %s72 = sphi 0, %s69
      %s73 = sphi 0, %s72
      %s89 = sphi 0, %s73
      %s95 = sphi 0, %s97
      %s98 = sphi 0, %s95
      %s99 = sphi 0, %s98
      %s115 = sphi 0, %s99
      %s123 = sphi 0, %s125
      %s126 = sphi 0, %s123
      %s127 = sphi 0, %s126
      %s143 = sphi 0, %s127
      %s151 = sphi 0, %s153
      %s154 = sphi 0, %s151
      %s155 = sphi 0, %s154
      %s171 = sphi 0, %s155
    $region4: #{resnet_forward.16} parent=1 // loop_header_branch
      %13 = sbr.rel (%p11) target = $region8
    $region5: #{resnet_forward.16} parent=1 // loop_body
      %s15 = ssub.s32 %s10, 1
      %s16 = ssub.s32 %s10, 2
      %s26 = sadd.s32 1, %s19
      %p27 = scmp.ge.s32.totalorder %s26, 5
      %s28 = scalar_select %p27, 0, %s26
      %s29 = sadd.s32 1, %s18
      %s30 = scalar_select %p27, %s29, %s18
      %p31 = scmp.ge.s32.totalorder %s30, 1
      %s32 = scalar_select %p31, 0, %s30
      %s33 = sadd.s32 1, %s17
      %s34 = scalar_select %p31, %s33, %s17
      %p35 = scmp.ge.s32.totalorder %s34, 1
      %s36 = scalar_select %p35, 0, %s34
      %s37 = ssub.s32 %s17, %s36
      %s38 = ssub.s32 %s19, %s28
      %s39 = sor.u32 %s37, %s38
      %p40 = scmp.eq.s32.totalorder %s39, 0
      %s42 = sadd.s32 %s41, 1
      %s43 = scalar_select %p40, %s41, %s42
      %p46 = pneg %p40
      %p47 = scmp.eq.s32.totalorder %s10, 4
      %p48 = por %p46, %p47
      %p49 = scmp.ne.s32.totalorder %s41, %s44
      %p50 = scmp.eq.s32.totalorder %s10, 0
      %p51 = por %p49, %p50
      %p52 = scmp.ne.s32.totalorder %s41, %s44
      %p53 = scmp.eq.s32.totalorder %s15, 4
      %p54 = por %p52, %p53
      %p55 = scmp.ne.s32.totalorder %s44, %s45
      %p56 = scmp.eq.s32.totalorder %s15, 0
      %p57 = por %p55, %p56
      %p58 = scmp.ne.s32.totalorder %s44, %s45
      %p59 = scmp.eq.s32.totalorder %s16, 4
      %p60 = por %p58, %p59
      %p62 = scmp.ne.s32.totalorder %s45, %s61
      %p63 = scmp.eq.s32.totalorder %s16, 0
      %p64 = por %p62, %p63
      %s65 = ssub.s32 %s19, %s28
      %s66 = ssub.s32 %s18, %s32
      %s67 = sor.u32 %s65, %s66
      %p68 = scmp.eq.s32.totalorder %s67, 0
      %s70 = sadd.s32 %s69, 1
      %s71 = scalar_select %p68, %s69, %s70
      %p74 = pneg %p68
      %p75 = scmp.eq.s32.totalorder %s10, 4
      %p76 = por %p74, %p75
      %p77 = scmp.ne.s32.totalorder %s69, %s72
      %p78 = scmp.eq.s32.totalorder %s10, 0
      %p79 = por %p77, %p78
      %p80 = scmp.ne.s32.totalorder %s69, %s72
      %p81 = scmp.eq.s32.totalorder %s15, 4
      %p82 = por %p80, %p81
      %p83 = scmp.ne.s32.totalorder %s72, %s73
      %p84 = scmp.eq.s32.totalorder %s15, 0
      %p85 = por %p83, %p84
      %p86 = scmp.ne.s32.totalorder %s72, %s73
      %p87 = scmp.eq.s32.totalorder %s16, 4
      %p88 = por %p86, %p87
      %p90 = scmp.ne.s32.totalorder %s73, %s89
      %p91 = scmp.eq.s32.totalorder %s16, 0
      %p92 = por %p90, %p91
      %s93 = ssub.s32 %s18, %s32
      %p94 = scmp.eq.s32.totalorder %s93, 0
      %s96 = sadd.s32 %s95, 1
      %s97 = scalar_select %p94, %s95, %s96
      %p100 = pneg %p94
      %p101 = scmp.eq.s32.totalorder %s10, 4
      %p102 = por %p100, %p101
      %p103 = scmp.ne.s32.totalorder %s95, %s98
      %p104 = scmp.eq.s32.totalorder %s10, 0
      %p105 = por %p103, %p104
      %p106 = scmp.ne.s32.totalorder %s95, %s98
      %p107 = scmp.eq.s32.totalorder %s15, 4
      %p108 = por %p106, %p107
      %p109 = scmp.ne.s32.totalorder %s98, %s99
      %p110 = scmp.eq.s32.totalorder %s15, 0
      %p111 = por %p109, %p110
      %p112 = scmp.ne.s32.totalorder %s98, %s99
      %p113 = scmp.eq.s32.totalorder %s16, 4
      %p114 = por %p112, %p113
      %p116 = scmp.ne.s32.totalorder %s99, %s115
      %p117 = scmp.eq.s32.totalorder %s16, 0
      %p118 = por %p116, %p117
      %s119 = ssub.s32 %s17, %s36
      %s120 = ssub.s32 %s18, %s32
      %s121 = sor.u32 %s119, %s120
      %p122 = scmp.eq.s32.totalorder %s121, 0
      %s124 = sadd.s32 %s123, 1
      %s125 = scalar_select %p122, %s123, %s124
      %p128 = pneg %p122
      %p129 = scmp.eq.s32.totalorder %s10, 4
      %p130 = por %p128, %p129
      %p131 = scmp.ne.s32.totalorder %s123, %s126
      %p132 = scmp.eq.s32.totalorder %s10, 0
      %p133 = por %p131, %p132
      %p134 = scmp.ne.s32.totalorder %s123, %s126
      %p135 = scmp.eq.s32.totalorder %s15, 4
      %p136 = por %p134, %p135
      %p137 = scmp.ne.s32.totalorder %s126, %s127
      %p138 = scmp.eq.s32.totalorder %s15, 0
      %p139 = por %p137, %p138
      %p140 = scmp.ne.s32.totalorder %s126, %s127
      %p141 = scmp.eq.s32.totalorder %s16, 4
      %p142 = por %p140, %p141
      %p144 = scmp.ne.s32.totalorder %s127, %s143
      %p145 = scmp.eq.s32.totalorder %s16, 0
      %p146 = por %p144, %p145
      %s147 = ssub.s32 %s17, %s36
      %s148 = ssub.s32 %s18, %s32
      %s149 = sor.u32 %s147, %s148
      %p150 = scmp.eq.s32.totalorder %s149, 0
      %s152 = sadd.s32 %s151, 1
      %s153 = scalar_select %p150, %s151, %s152
      %p156 = pneg %p150
      %p157 = scmp.eq.s32.totalorder %s10, 4
      %p158 = por %p156, %p157
      %p159 = scmp.ne.s32.totalorder %s151, %s154
      %p160 = scmp.eq.s32.totalorder %s10, 0
      %p161 = por %p159, %p160
      %p162 = scmp.ne.s32.totalorder %s151, %s154
      %p163 = scmp.eq.s32.totalorder %s15, 4
      %p164 = por %p162, %p163
      %p165 = scmp.ne.s32.totalorder %s154, %s155
      %p166 = scmp.eq.s32.totalorder %s15, 0
      %p167 = por %p165, %p166
      %p168 = scmp.ne.s32.totalorder %s154, %s155
      %p169 = scmp.eq.s32.totalorder %s16, 4
      %p170 = por %p168, %p169
      %p172 = scmp.ne.s32.totalorder %s155, %s171
      %p173 = scmp.eq.s32.totalorder %s16, 0
      %p174 = por %p172, %p173
      %p175 = scmp.le.s32.totalorder 1, %s10
      %p176 = scmp.lt.s32.totalorder %s10, 6
      %p177 = pnand %p175, %p176
      %p178 = pneg %p177
      // Predicated region
      $region9: #{resnet_forward.16} parent=5 // pred_check
        _
      $region10: #{resnet_forward.16} parent=5 // pred_check_branch
        %180 = sbr.rel (%p177) target = $region12
      $region11: #{resnet_forward.16} parent=5 // pred_region
        %s181 = ssub.s32 %s10, 1
        // Predicated region
        $region13: #{resnet_forward.16} parent=11 // pred_check
          %p182 = pneg %p111
        $region14: #{resnet_forward.16} parent=11 // pred_check_branch
          %184 = sbr.rel (%p182) target = $region16
        $region15: #{resnet_forward.16} parent=11 // pred_region
          %p185 = scmp.lt.s32.totalorder %s21, 0
          %s186 = scalar_select %p185, %s21, 0
          %s187 = scalar_lea.vmem %s2, %s186
        $region16: #{resnet_forward.16} parent=11 // pred_fallthru
          _
        // Predicated region
        $region17: #{resnet_forward.16} parent=11 // pred_check
          %p188 = pneg %p139
        $region18: #{resnet_forward.16} parent=11 // pred_check_branch
          %190 = sbr.rel (%p188) target = $region20
        $region19: #{resnet_forward.16} parent=11 // pred_region
          %s191 = smul.u32 16, %s20
          %p192 = scmp.lt.s32.totalorder %s191, 15
          %s193 = scalar_select %p192, %s191, 15
          %p194 = scmp.lt.s32.totalorder %s21, 0
          %s195 = scalar_select %p194, %s21, 0
          %s196 = sadd.s32 %s195, %s193
          %s197 = smul.addr %s196, 4
          %s198 = scalar_lea.vmem %s3, %s197
          %s199 = smul.u32 16, %s20
        $region20: #{resnet_forward.16} parent=11 // pred_fallthru
          _
      $region12: #{resnet_forward.16} parent=5 // pred_fallthru
        _
      %p200 = scmp.lt.s32.totalorder %s10, 5
      // Predicated region
      $region21: #{resnet_forward.16} parent=5 // pred_check
        %p201 = pneg %p200
      $region22: #{resnet_forward.16} parent=5 // pred_check_branch
        %203 = sbr.rel (%p201) target = $region24
      $region23: #{resnet_forward.16} parent=5 // pred_region
        // Predicated region
        $region25: #{resnet_forward.16} parent=23 // pred_check
          %p204 = pneg %p51
        $region26: #{resnet_forward.16} parent=23 // pred_check_branch
          %206 = sbr.rel (%p204) target = $region28
        $region27: #{resnet_forward.16} parent=23 // pred_region
          %s207 = sand.u32 %s41, 1
          %s208 = sand.u32 %s41, 1
          %s209 = smul.addr %s208, 64
          %s210 = scalar_lea.vmem [#allocation3], %s209
          %s211 = smul.u32 16, %s17
          %s212 = smul.addr %s211, 5
          %s213 = sadd.s32 %s19, %s212
          %s214 = smul.addr %s213, 4
          %s215 = scalar_lea.vmem %s0, %s214
          // Predicated region
          $region29: #{resnet_forward.16} parent=27 // pred_check
            _
          $region30: #{resnet_forward.16} parent=27 // pred_check_branch
            %217 = sbr.rel (0) target = $region32
          $region31: #{resnet_forward.16} parent=27 // pred_region
            // Predicated region
            $region33: #{resnet_forward.16} parent=31 // pred_check
              _
            $region34: #{resnet_forward.16} parent=31 // pred_check_branch
              %219 = sbr.rel target = $region36
            $region35: #{resnet_forward.16} parent=31 // pred_region
              // Predicated region
              $region48: #{resnet_forward.16} parent=35 // pred_check
                _
              $region49: #{resnet_forward.16} parent=35 // pred_check_branch
                %264 = sbr.rel (0) target = $region51
              $region50: #{resnet_forward.16} parent=35 // pred_region
                loop: start=0, step=1, limit=1
                $region52: #{resnet_forward.16} parent=50 // loop_pre_header
                  _
                $region53: #{resnet_forward.16} parent=50 // loop_header
                  %s266 = sphi 0, %s270
                  %p267 = scmp.ge.s32.totalorder %s266, 1
                  %s271 = sphi %s215, %s215
                  %s272 = sphi %s210, %s210
                $region54: #{resnet_forward.16} parent=50 // loop_header_branch
                  %269 = sbr.rel (%p267) target = $region58
                $region55: #{resnet_forward.16} parent=50 // loop_body
                  _
                $region56: #{resnet_forward.16} parent=50 // loop_footer
                  %s270 = sadd.s32 1, %s266
                $region57: #{resnet_forward.16} parent=50 // loop_footer_branch
                  %265 = sbr.rel target = $region53
                $region58: #{resnet_forward.16} parent=50 // loop_exit
                  _
                loop: start=0, step=1, limit=1
                $region59: #{resnet_forward.16} parent=50 // loop_pre_header
                  _
                $region60: #{resnet_forward.16} parent=50 // loop_header
                  %s275 = sphi 0, %s279
                  %p276 = scmp.ge.s32.totalorder %s275, 1
                  %s280 = sphi %s215, %s215
                  %s281 = sphi %s210, %s210
                $region61: #{resnet_forward.16} parent=50 // loop_header_branch
                  %278 = sbr.rel (%p276) target = $region65
                $region62: #{resnet_forward.16} parent=50 // loop_body
                  %v282 = vld [vmem:[%s280] sm:$0xf]
                  %283 = vst [vmem:[%s281] sm:$0xf] %v282
                  %v284 = vld [vmem:[%s280 + $0x14] sm:$0xf]
                  %285 = vst [vmem:[%s281 + $0x4] sm:$0xf] %v284
                  %v286 = vld [vmem:[%s280 + $0x28] sm:$0xf]
                  %287 = vst [vmem:[%s281 + $0x8] sm:$0xf] %v286
                  %v288 = vld [vmem:[%s280 + $0x3c] sm:$0xf]
                  %289 = vst [vmem:[%s281 + $0xc] sm:$0xf] %v288
                  %v290 = vld [vmem:[%s280 + $0x50] sm:$0xf]
                  %291 = vst [vmem:[%s281 + $0x10] sm:$0xf] %v290
                  %v292 = vld [vmem:[%s280 + $0x64] sm:$0xf]
                  %293 = vst [vmem:[%s281 + $0x14] sm:$0xf] %v292
                  %v294 = vld [vmem:[%s280 + $0x78] sm:$0xf]
                  %295 = vst [vmem:[%s281 + $0x18] sm:$0xf] %v294
                  %v296 = vld [vmem:[%s280 + $0x8c] sm:$0xf]
                  %297 = vst [vmem:[%s281 + $0x1c] sm:$0xf] %v296
                  %v298 = vld [vmem:[%s280 + $0xa0] sm:$0xf]
                  %299 = vst [vmem:[%s281 + $0x20] sm:$0xf] %v298
                  %v300 = vld [vmem:[%s280 + $0xb4] sm:$0xf]
                  %301 = vst [vmem:[%s281 + $0x24] sm:$0xf] %v300
                  %v302 = vld [vmem:[%s280 + $0xc8] sm:$0xf]
                  %303 = vst [vmem:[%s281 + $0x28] sm:$0xf] %v302
                  %v304 = vld [vmem:[%s280 + $0xdc] sm:$0xf]
                  %305 = vst [vmem:[%s281 + $0x2c] sm:$0xf] %v304
                  %v306 = vld [vmem:[%s280 + $0xf0] sm:$0xf]
                  %307 = vst [vmem:[%s281 + $0x30] sm:$0xf] %v306
                  %v308 = vld [vmem:[%s280 + $0x104] sm:$0xf]
                  %309 = vst [vmem:[%s281 + $0x34] sm:$0xf] %v308
                  %v310 = vld [vmem:[%s280 + $0x118] sm:$0xf]
                  %311 = vst [vmem:[%s281 + $0x38] sm:$0xf] %v310
                  %v312 = vld [vmem:[%s280 + $0x12c] sm:$0xf]
                  %313 = vst [vmem:[%s281 + $0x3c] sm:$0xf] %v312
                $region63: #{resnet_forward.16} parent=50 // loop_footer
                  %s279 = sadd.s32 1, %s275
                $region64: #{resnet_forward.16} parent=50 // loop_footer_branch
                  %274 = sbr.rel target = $region60
                $region65: #{resnet_forward.16} parent=50 // loop_exit
                  _
              $region51: #{resnet_forward.16} parent=35 // pred_fallthru
                _
            $region36: #{resnet_forward.16} parent=31 // pred_fallthru
              _
            // Predicated region
            $region37: #{resnet_forward.16} parent=31 // pred_check
              _
            $region38: #{resnet_forward.16} parent=31 // pred_check_branch
              %221 = sbr.rel (0) target = $region40
            $region39: #{resnet_forward.16} parent=31 // pred_region
              loop: start=0, step=1, limit=1
              $region41: #{resnet_forward.16} parent=39 // loop_pre_header
                _
              $region42: #{resnet_forward.16} parent=39 // loop_header
                %s224 = sphi 0, %s228
                %p225 = scmp.ge.s32.totalorder %s224, 1
                %s229 = sphi %s215, %s215
                %s230 = sphi %s210, %s210
              $region43: #{resnet_forward.16} parent=39 // loop_header_branch
                %227 = sbr.rel (%p225) target = $region47
              $region44: #{resnet_forward.16} parent=39 // loop_body
                %v231 = vld [vmem:[%s229] sm:$0xf]
                %232 = vst [vmem:[%s230] sm:$0xf] %v231
                %v233 = vld [vmem:[%s229 + $0x14] sm:$0xf]
                %234 = vst [vmem:[%s230 + $0x4] sm:$0xf] %v233
                %v235 = vld [vmem:[%s229 + $0x28] sm:$0xf]
                %236 = vst [vmem:[%s230 + $0x8] sm:$0xf] %v235
                %v237 = vld [vmem:[%s229 + $0x3c] sm:$0xf]
                %238 = vst [vmem:[%s230 + $0xc] sm:$0xf] %v237
                %v239 = vld [vmem:[%s229 + $0x50] sm:$0xf]
                %240 = vst [vmem:[%s230 + $0x10] sm:$0xf] %v239
                %v241 = vld [vmem:[%s229 + $0x64] sm:$0xf]
                %242 = vst [vmem:[%s230 + $0x14] sm:$0xf] %v241
                %v243 = vld [vmem:[%s229 + $0x78] sm:$0xf]
                %244 = vst [vmem:[%s230 + $0x18] sm:$0xf] %v243
                %v245 = vld [vmem:[%s229 + $0x8c] sm:$0xf]
                %246 = vst [vmem:[%s230 + $0x1c] sm:$0xf] %v245
                %v247 = vld [vmem:[%s229 + $0xa0] sm:$0xf]
                %248 = vst [vmem:[%s230 + $0x20] sm:$0xf] %v247
                %v249 = vld [vmem:[%s229 + $0xb4] sm:$0xf]
                %250 = vst [vmem:[%s230 + $0x24] sm:$0xf] %v249
                %v251 = vld [vmem:[%s229 + $0xc8] sm:$0xf]
                %252 = vst [vmem:[%s230 + $0x28] sm:$0xf] %v251
                %v253 = vld [vmem:[%s229 + $0xdc] sm:$0xf]
                %254 = vst [vmem:[%s230 + $0x2c] sm:$0xf] %v253
                %v255 = vld [vmem:[%s229 + $0xf0] sm:$0xf]
                %256 = vst [vmem:[%s230 + $0x30] sm:$0xf] %v255
                %v257 = vld [vmem:[%s229 + $0x104] sm:$0xf]
                %258 = vst [vmem:[%s230 + $0x34] sm:$0xf] %v257
                %v259 = vld [vmem:[%s229 + $0x118] sm:$0xf]
                %260 = vst [vmem:[%s230 + $0x38] sm:$0xf] %v259
                %v261 = vld [vmem:[%s229 + $0x12c] sm:$0xf]
                %262 = vst [vmem:[%s230 + $0x3c] sm:$0xf] %v261
              $region45: #{resnet_forward.16} parent=39 // loop_footer
                %s228 = sadd.s32 1, %s224
              $region46: #{resnet_forward.16} parent=39 // loop_footer_branch
                %223 = sbr.rel target = $region42
              $region47: #{resnet_forward.16} parent=39 // loop_exit
                _
            $region40: #{resnet_forward.16} parent=31 // pred_fallthru
              _
          $region32: #{resnet_forward.16} parent=27 // pred_fallthru
            _
          %314 = vnop
        $region28: #{resnet_forward.16} parent=23 // pred_fallthru
          _
        // Predicated region
        $region66: #{resnet_forward.16} parent=23 // pred_check
          %p315 = pneg %p79
        $region67: #{resnet_forward.16} parent=23 // pred_check_branch
          %317 = sbr.rel (%p315) target = $region69
        $region68: #{resnet_forward.16} parent=23 // pred_region
          %s318 = smul.u32 16, %s19
          %p319 = scmp.lt.s32.totalorder %s318, 79
          %s320 = scalar_select %p319, %s318, 79
          %p321 = scmp.lt.s32.totalorder %s18, 0
          %s322 = scalar_select %p321, %s18, 0
          %s323 = sadd.s32 %s322, %s320
          %s324 = smul.addr %s323, 4
          %s325 = scalar_lea.vmem %s1, %s324
          %s326 = smul.u32 16, %s19
        $region69: #{resnet_forward.16} parent=23 // pred_fallthru
          _
      $region24: #{resnet_forward.16} parent=5 // pred_fallthru
        _
      %p327 = scmp.le.s32.totalorder 1, %s10
      %p328 = scmp.lt.s32.totalorder %s10, 6
      %p329 = pnand %p327, %p328
      %p330 = pneg %p329
      // Predicated region
      $region70: #{resnet_forward.16} parent=5 // pred_check
        _
      $region71: #{resnet_forward.16} parent=5 // pred_check_branch
        %332 = sbr.rel (%p329) target = $region73
      $region72: #{resnet_forward.16} parent=5 // pred_region
        %s333 = ssub.s32 %s10, 1
        %s334 = sand.u32 %s44, 1
        %s335 = sand.u32 %s44, 1
        %s336 = smul.addr %s335, 64
        %s337 = scalar_lea.vmem [#allocation3], %s336
        // Predicated region
        $region74: #{resnet_forward.16} parent=72 // pred_check
          %p338 = pneg %p57
        $region75: #{resnet_forward.16} parent=72 // pred_check_branch
          %340 = sbr.rel (%p338) target = $region77
        $region76: #{resnet_forward.16} parent=72 // pred_region
          _
        $region77: #{resnet_forward.16} parent=72 // pred_fallthru
          _
        %s341 = sand.u32 %s44, 1
        %s342 = sand.u32 %s44, 1
        %s343 = smul.addr %s342, 64
        %s344 = scalar_lea.vmem [#allocation3], %s343
        %p345 = pneg %p57
        %p346 = pneg %p54
        %s347 = smul.u32 16, %s22
        %p348 = scmp.lt.s32.totalorder %s347, 79
        %s349 = scalar_select %p348, %s347, 79
        %p350 = scmp.lt.s32.totalorder %s21, 0
        %s351 = scalar_select %p350, %s21, 0
        %s352 = sadd.s32 %s351, %s349
        %s353 = smul.addr %s352, 4
        %s354 = scalar_lea.vmem %s1, %s353
        %p355 = pneg %p85
        %p356 = pneg %p82
        %p357 = scmp.lt.s32.totalorder %s21, 0
        %s358 = scalar_select %p357, %s21, 0
        %s359 = scalar_lea.vmem %s2, %s358
        %p360 = pneg %p111
        %p361 = pneg %p108
        %s362 = smul.u32 16, %s20
        %p363 = scmp.lt.s32.totalorder %s362, 15
        %s364 = scalar_select %p363, %s362, 15
        %p365 = scmp.lt.s32.totalorder %s21, 0
        %s366 = scalar_select %p365, %s21, 0
        %s367 = sadd.s32 %s366, %s364
        %s368 = smul.addr %s367, 4
        %s369 = scalar_lea.vmem %s3, %s368
        %p370 = pneg %p139
        %p371 = pneg %p136
        %p372 = pneg %p167
        %p373 = pneg %p164
        %s374 = smul.u32 16, %s20
        %p375 = scmp.lt.s32.totalorder %s374, 15
        %s376 = scalar_select %p375, %s374, 15
        %p377 = scmp.lt.s32.totalorder %s21, 0
        %s378 = scalar_select %p377, %s21, 0
        %s379 = sadd.s32 %s378, %s376
        %s380 = smul.addr %s379, 4
        %s381 = scalar_lea.vmem %s4, %s380
        %s382 = smul.u32 16, %s20
        %s383 = smul.u32 16, %s22
        %p384 = scmp.lt.s32.totalorder %s383, 79
        %s385 = scalar_select %p384, %s383, 79
        %p386 = scmp.lt.s32.totalorder %s21, 0
        %s387 = scalar_select %p386, %s21, 0
        %s388 = sadd.s32 %s387, %s385
        %s389 = smul.addr %s388, 4
        %s390 = scalar_lea.vmem %s1, %s389
        %s391 = smul.u32 16, %s22
        %p392 = scmp.lt.s32.totalorder %s21, 0
        %s393 = scalar_select %p392, %s21, 0
        %s394 = scalar_lea.vmem %s2, %s393
        %s395 = smul.u32 16, %s20
        %p396 = scmp.lt.s32.totalorder %s395, 15
        %s397 = scalar_select %p396, %s395, 15
        %p398 = scmp.lt.s32.totalorder %s21, 0
        %s399 = scalar_select %p398, %s21, 0
        %s400 = sadd.s32 %s399, %s397
        %s401 = smul.addr %s400, 4
        %s402 = scalar_lea.vmem %s3, %s401
        %s403 = smul.u32 16, %s20
        %s404 = smul.u32 16, %s20
        %p405 = scmp.lt.s32.totalorder %s404, 15
        %s406 = scalar_select %p405, %s404, 15
        %p407 = scmp.lt.s32.totalorder %s21, 0
        %s408 = scalar_select %p407, %s21, 0
        %s409 = sadd.s32 %s408, %s406
        %s410 = smul.addr %s409, 4
        %s411 = scalar_lea.vmem %s4, %s410
        %s412 = smul.u32 16, %s20
        %p414 = scmp.eq.s32.totalorder %s22, 0
        // Predicated region
        $region78: #{resnet_forward.16} parent=72 // pred_check
          %p415 = pneg %p414
        $region79: #{resnet_forward.16} parent=72 // pred_check_branch
          %417 = sbr.rel (%p415) target = $region81
        $region80: #{resnet_forward.16} parent=72 // pred_region
          %418 = vst [vmem:[#allocation2] sm:$0xff] 0.0
          %419 = vst [vmem:[#allocation2 + $0x8] sm:$0xff] 0.0
          %420 = vst [vmem:[#allocation2 + $0x10] sm:$0xff] 0.0
          %421 = vst [vmem:[#allocation2 + $0x18] sm:$0xff] 0.0
          %422 = vst [vmem:[#allocation2 + $0x20] sm:$0xff] 0.0
          %423 = vst [vmem:[#allocation2 + $0x28] sm:$0xff] 0.0
          %424 = vst [vmem:[#allocation2 + $0x30] sm:$0xff] 0.0
          %425 = vst [vmem:[#allocation2 + $0x38] sm:$0xff] 0.0
          %426 = vst [vmem:[#allocation2 + $0x40] sm:$0xff] 0.0
          %427 = vst [vmem:[#allocation2 + $0x48] sm:$0xff] 0.0
          %428 = vst [vmem:[#allocation2 + $0x50] sm:$0xff] 0.0
          %429 = vst [vmem:[#allocation2 + $0x58] sm:$0xff] 0.0
          %430 = vst [vmem:[#allocation2 + $0x60] sm:$0xff] 0.0
          %431 = vst [vmem:[#allocation2 + $0x68] sm:$0xff] 0.0
          %432 = vst [vmem:[#allocation2 + $0x70] sm:$0xff] 0.0
          %433 = vst [vmem:[#allocation2 + $0x78] sm:$0xff] 0.0
        $region81: #{resnet_forward.16} parent=72 // pred_fallthru
          _
        %v434 = vld [vmem:[#allocation2] sm:$0xff]
        %v435 = vld [vmem:[#allocation2 + $0x8] sm:$0xff]
        %v436 = vld [vmem:[#allocation2 + $0x10] sm:$0xff]
        %v437 = vld [vmem:[#allocation2 + $0x18] sm:$0xff]
        %v438 = vld [vmem:[#allocation2 + $0x20] sm:$0xff]
        %v439 = vld [vmem:[#allocation2 + $0x28] sm:$0xff]
        %v440 = vld [vmem:[#allocation2 + $0x30] sm:$0xff]
        %v441 = vld [vmem:[#allocation2 + $0x38] sm:$0xff]
        %v442 = vld [vmem:[#allocation2 + $0x40] sm:$0xff]
        %v443 = vld [vmem:[#allocation2 + $0x48] sm:$0xff]
        %v444 = vld [vmem:[#allocation2 + $0x50] sm:$0xff]
        %v445 = vld [vmem:[#allocation2 + $0x58] sm:$0xff]
        %v446 = vld [vmem:[#allocation2 + $0x60] sm:$0xff]
        %v447 = vld [vmem:[#allocation2 + $0x68] sm:$0xff]
        %v448 = vld [vmem:[#allocation2 + $0x70] sm:$0xff]
        %v449 = vld [vmem:[#allocation2 + $0x78] sm:$0xff]
        %v450 = vld [vmem:[%s337] sm:$0xf]
        %v451 = vld [vmem:[%s337 + $0x4] sm:$0xf]
        %v452 = vld [vmem:[%s337 + $0x8] sm:$0xf]
        %v453 = vld [vmem:[%s337 + $0xc] sm:$0xf]
        %v454 = vld [vmem:[%s337 + $0x10] sm:$0xf]
        %v455 = vld [vmem:[%s337 + $0x14] sm:$0xf]
        %v456 = vld [vmem:[%s337 + $0x18] sm:$0xf]
        %v457 = vld [vmem:[%s337 + $0x1c] sm:$0xf]
        %v458 = vld [vmem:[%s337 + $0x20] sm:$0xf]
        %v459 = vld [vmem:[%s337 + $0x24] sm:$0xf]
        %v460 = vld [vmem:[%s337 + $0x28] sm:$0xf]
        %v461 = vld [vmem:[%s337 + $0x2c] sm:$0xf]
        %v462 = vld [vmem:[%s337 + $0x30] sm:$0xf]
        %v463 = vld [vmem:[%s337 + $0x34] sm:$0xf]
        %v464 = vld [vmem:[%s337 + $0x38] sm:$0xf]
        %v465 = vld [vmem:[%s337 + $0x3c] sm:$0xf]
        %v466 = vld [vmem:[%s390] sm:$0xf]
        %v467 = vld [vmem:[%s390 + $0x4] sm:$0xf]
        %v468 = vld [vmem:[%s390 + $0x8] sm:$0xf]
        %v469 = vld [vmem:[%s390 + $0xc] sm:$0xf]
        %v470 = vld [vmem:[%s390 + $0x10] sm:$0xf]
        %v471 = vld [vmem:[%s390 + $0x14] sm:$0xf]
        %v472 = vld [vmem:[%s390 + $0x18] sm:$0xf]
        %v473 = vld [vmem:[%s390 + $0x1c] sm:$0xf]
        %v474 = vld [vmem:[%s390 + $0x20] sm:$0xf]
        %v475 = vld [vmem:[%s390 + $0x24] sm:$0xf]
        %v476 = vld [vmem:[%s390 + $0x28] sm:$0xf]
        %v477 = vld [vmem:[%s390 + $0x2c] sm:$0xf]
        %v478 = vld [vmem:[%s390 + $0x30] sm:$0xf]
        %v479 = vld [vmem:[%s390 + $0x34] sm:$0xf]
        %v480 = vld [vmem:[%s390 + $0x38] sm:$0xf]
        %v481 = vld [vmem:[%s390 + $0x3c] sm:$0xf]
        %v498 = vunpack.c.l.b16 %v450
        %v499 = vunpack.c.l.b16 %v451
        %v500 = vunpack.c.l.b16 %v452
        %v501 = vunpack.c.l.b16 %v453
        %v502 = vunpack.c.l.b16 %v454
        %v503 = vunpack.c.l.b16 %v455
        %v504 = vunpack.c.l.b16 %v456
        %v505 = vunpack.c.l.b16 %v457
        %v506 = vunpack.c.l.b16 %v458
        %v507 = vunpack.c.l.b16 %v459
        %v508 = vunpack.c.l.b16 %v460
        %v509 = vunpack.c.l.b16 %v461
        %v510 = vunpack.c.l.b16 %v462
        %v511 = vunpack.c.l.b16 %v463
        %v512 = vunpack.c.l.b16 %v464
        %v513 = vunpack.c.l.b16 %v465
        %v514 = vpack.c.b16 %v499, %v498
        %v515 = vpack.c.b16 %v501, %v500
        %v516 = vpack.c.b16 %v503, %v502
        %v517 = vpack.c.b16 %v505, %v504
        %v518 = vpack.c.b16 %v507, %v506
        %v519 = vpack.c.b16 %v509, %v508
        %v520 = vpack.c.b16 %v511, %v510
        %v521 = vpack.c.b16 %v513, %v512
        %v546 = vunpack.c.l.b16 %v466
        %v547 = vunpack.c.l.b16 %v467
        %v548 = vunpack.c.l.b16 %v468
        %v549 = vunpack.c.l.b16 %v469
        %v550 = vunpack.c.l.b16 %v470
        %v551 = vunpack.c.l.b16 %v471
        %v552 = vunpack.c.l.b16 %v472
        %v553 = vunpack.c.l.b16 %v473
        %v554 = vunpack.c.l.b16 %v474
        %v555 = vunpack.c.l.b16 %v475
        %v556 = vunpack.c.l.b16 %v476
        %v557 = vunpack.c.l.b16 %v477
        %v558 = vunpack.c.l.b16 %v478
        %v559 = vunpack.c.l.b16 %v479
        %v560 = vunpack.c.l.b16 %v480
        %v561 = vunpack.c.l.b16 %v481
        %v562 = vpack.c.b16 %v547, %v546
        %v563 = vpack.c.b16 %v549, %v548
        %v564 = vpack.c.b16 %v551, %v550
        %v565 = vpack.c.b16 %v553, %v552
        %v566 = vpack.c.b16 %v555, %v554
        %v567 = vpack.c.b16 %v557, %v556
        %v568 = vpack.c.b16 %v559, %v558
        %v569 = vpack.c.b16 %v561, %v560
        %578 = vmatprep.subr.bf16.mxu0 0
        %579 = vmatpush1.bf16.msra.mxu0 %v562
        %580 = vmatprep.subr.bf16.mxu0 0
        %581 = vmatpush1.bf16.msra.mxu0 %v563
        %582 = vmatprep.subr.bf16.mxu0 0
        %583 = vmatpush1.bf16.msra.mxu0 %v564
        %584 = vmatprep.subr.bf16.mxu0 0
        %585 = vmatpush1.bf16.msra.mxu0 %v565
        %586 = vmatprep.subr.bf16.mxu0 0
        %587 = vmatpush1.bf16.msra.mxu0 %v566
        %588 = vmatprep.subr.bf16.mxu0 0
        %589 = vmatpush1.bf16.msra.mxu0 %v567
        %590 = vmatprep.subr.bf16.mxu0 0
        %591 = vmatpush1.bf16.msra.mxu0 %v568
        %592 = vmatprep.subr.bf16.mxu0 0
        %593 = vmatpush1.bf16.msra.mxu0 %v569
        %594 = vmatprep.subr.bf16.mxu0 0
        %595 = vmatpush1.bf16.msra.mxu0 0
        %596 = vmatprep.subr.bf16.mxu0 0
        %597 = vmatpush1.bf16.msra.mxu0 0
        %598 = vmatprep.subr.bf16.mxu0 0
        %599 = vmatpush1.bf16.msra.mxu0 0
        %600 = vmatprep.subr.bf16.mxu0 0
        %601 = vmatpush1.bf16.msra.mxu0 0
        %602 = vmatprep.subr.bf16.mxu0 0
        %603 = vmatpush1.bf16.msra.mxu0 0
        %604 = vmatprep.subr.bf16.mxu0 0
        %605 = vmatpush1.bf16.msra.mxu0 0
        %606 = vmatprep.subr.bf16.mxu0 0
        %607 = vmatpush1.bf16.msra.mxu0 0
        %608 = vmatprep.subr.bf16.mxu0 0
        %609 = vmatpush1.bf16.msra.mxu0 0
        %610 = vmatprep.mubr.bf16.mxu0 0
        %611 = vmatmul.mubr.bf16.gmra.mrb[0].mxu0 %v514
        %v612 = vpop.f32.mrb[0].mxu0
        %v613 = vadd.f32 0.0, %v612
        %v614 = vpop.f32.mrb[0].mxu0
        %v615 = vpop.f32.mrb[0].mxu0
        %v616 = vadd.f32 0.0, %v615
        %v617 = vpop.f32.mrb[0].mxu0
        %618 = vmatprep.mubr.bf16.mxu0 0
        %619 = vmatmul.mubr.bf16.gmra.mrb[0].mxu0 %v515
        %v620 = vpop.f32.mrb[0].mxu0
        %v621 = vadd.f32 0.0, %v620
        %v622 = vpop.f32.mrb[0].mxu0
        %v623 = vpop.f32.mrb[0].mxu0
        %v624 = vadd.f32 0.0, %v623
        %v625 = vpop.f32.mrb[0].mxu0
        %626 = vmatprep.mubr.bf16.mxu0 0
        %627 = vmatmul.mubr.bf16.gmra.mrb[0].mxu0 %v516
        %v628 = vpop.f32.mrb[0].mxu0
        %v629 = vadd.f32 0.0, %v628
        %v630 = vpop.f32.mrb[0].mxu0
        %v631 = vpop.f32.mrb[0].mxu0
        %v632 = vadd.f32 0.0, %v631
        %v633 = vpop.f32.mrb[0].mxu0
        %634 = vmatprep.mubr.bf16.mxu0 0
        %635 = vmatmul.mubr.bf16.gmra.mrb[0].mxu0 %v517
        %v636 = vpop.f32.mrb[0].mxu0
        %v637 = vadd.f32 0.0, %v636
        %v638 = vpop.f32.mrb[0].mxu0
        %v639 = vpop.f32.mrb[0].mxu0
        %v640 = vadd.f32 0.0, %v639
        %v641 = vpop.f32.mrb[0].mxu0
        %642 = vmatprep.mubr.bf16.mxu0 0
        %643 = vmatmul.mubr.bf16.gmra.mrb[0].mxu0 %v518
        %v644 = vpop.f32.mrb[0].mxu0
        %v645 = vadd.f32 0.0, %v644
        %v646 = vpop.f32.mrb[0].mxu0
        %v647 = vpop.f32.mrb[0].mxu0
        %v648 = vadd.f32 0.0, %v647
        %v649 = vpop.f32.mrb[0].mxu0
        %650 = vmatprep.mubr.bf16.mxu0 0
        %651 = vmatmul.mubr.bf16.gmra.mrb[0].mxu0 %v519
        %v652 = vpop.f32.mrb[0].mxu0
        %v653 = vadd.f32 0.0, %v652
        %v654 = vpop.f32.mrb[0].mxu0
        %v655 = vpop.f32.mrb[0].mxu0
        %v656 = vadd.f32 0.0, %v655
        %v657 = vpop.f32.mrb[0].mxu0
        %658 = vmatprep.mubr.bf16.mxu0 0
        %659 = vmatmul.mubr.bf16.gmra.mrb[0].mxu0 %v520
        %v660 = vpop.f32.mrb[0].mxu0
        %v661 = vadd.f32 0.0, %v660
        %v662 = vpop.f32.mrb[0].mxu0
        %v663 = vpop.f32.mrb[0].mxu0
        %v664 = vadd.f32 0.0, %v663
        %v665 = vpop.f32.mrb[0].mxu0
        %666 = vmatprep.mubr.bf16.mxu0 0
        %667 = vmatmul.mubr.bf16.gmra.mrb[0].mxu0 %v521
        %v668 = vpop.f32.mrb[0].mxu0
        %v669 = vadd.f32 0.0, %v668
        %v670 = vpop.f32.mrb[0].mxu0
        %v671 = vpop.f32.mrb[0].mxu0
        %v672 = vadd.f32 0.0, %v671
        %v673 = vpop.f32.mrb[0].mxu0
        %674 = vdwg.mxu0
        %v675 = vadd.f32 %v434, %v613
        %v676 = vadd.f32 %v435, %v616
        %v677 = vadd.f32 %v436, %v621
        %v678 = vadd.f32 %v437, %v624
        %v679 = vadd.f32 %v438, %v629
        %v680 = vadd.f32 %v439, %v632
        %v681 = vadd.f32 %v440, %v637
        %v682 = vadd.f32 %v441, %v640
        %v683 = vadd.f32 %v442, %v645
        %v684 = vadd.f32 %v443, %v648
        %v685 = vadd.f32 %v444, %v653
        %v686 = vadd.f32 %v445, %v656
        %v687 = vadd.f32 %v446, %v661
        %v688 = vadd.f32 %v447, %v664
        %v689 = vadd.f32 %v448, %v669
        %v690 = vadd.f32 %v449, %v672
        %691 = vst [vmem:[#allocation2] sm:$0xff] %v675
        %692 = vst [vmem:[#allocation2 + $0x8] sm:$0xff] %v676
        %693 = vst [vmem:[#allocation2 + $0x10] sm:$0xff] %v677
        %694 = vst [vmem:[#allocation2 + $0x18] sm:$0xff] %v678
        %695 = vst [vmem:[#allocation2 + $0x20] sm:$0xff] %v679
        %696 = vst [vmem:[#allocation2 + $0x28] sm:$0xff] %v680
        %697 = vst [vmem:[#allocation2 + $0x30] sm:$0xff] %v681
        %698 = vst [vmem:[#allocation2 + $0x38] sm:$0xff] %v682
        %699 = vst [vmem:[#allocation2 + $0x40] sm:$0xff] %v683
        %700 = vst [vmem:[#allocation2 + $0x48] sm:$0xff] %v684
        %701 = vst [vmem:[#allocation2 + $0x50] sm:$0xff] %v685
        %702 = vst [vmem:[#allocation2 + $0x58] sm:$0xff] %v686
        %703 = vst [vmem:[#allocation2 + $0x60] sm:$0xff] %v687
        %704 = vst [vmem:[#allocation2 + $0x68] sm:$0xff] %v688
        %705 = vst [vmem:[#allocation2 + $0x70] sm:$0xff] %v689
        %706 = vst [vmem:[#allocation2 + $0x78] sm:$0xff] %v690
        %p707 = scmp.eq.s32.totalorder %s22, 4
        // Predicated region
        $region82: #{resnet_forward.16} parent=72 // pred_check
          %p708 = pneg %p707
        $region83: #{resnet_forward.16} parent=72 // pred_check_branch
          %710 = sbr.rel (%p708) target = $region85
        $region84: #{resnet_forward.16} parent=72 // pred_region
          %v711 = vld [vmem:[#allocation2] sm:$0xff]
          %v712 = vld [vmem:[#allocation2 + $0x8] sm:$0xff]
          %v713 = vld [vmem:[#allocation2 + $0x10] sm:$0xff]
          %v714 = vld [vmem:[#allocation2 + $0x18] sm:$0xff]
          %v715 = vld [vmem:[#allocation2 + $0x20] sm:$0xff]
          %v716 = vld [vmem:[#allocation2 + $0x28] sm:$0xff]
          %v717 = vld [vmem:[#allocation2 + $0x30] sm:$0xff]
          %v718 = vld [vmem:[#allocation2 + $0x38] sm:$0xff]
          %v719 = vld [vmem:[#allocation2 + $0x40] sm:$0xff]
          %v720 = vld [vmem:[#allocation2 + $0x48] sm:$0xff]
          %v721 = vld [vmem:[#allocation2 + $0x50] sm:$0xff]
          %v722 = vld [vmem:[#allocation2 + $0x58] sm:$0xff]
          %v723 = vld [vmem:[#allocation2 + $0x60] sm:$0xff]
          %v724 = vld [vmem:[#allocation2 + $0x68] sm:$0xff]
          %v725 = vld [vmem:[#allocation2 + $0x70] sm:$0xff]
          %v726 = vld [vmem:[#allocation2 + $0x78] sm:$0xff]
          %v727 = vld [vmem:[%s394] sm:$0x1]
          %v729 = vlaneseq
          %v730 = vshrl.u32 %v729, 7
          %v731 = vsub.s32 0, %v730
          %v732 = vrot.slane %v727, %v731
          %v734 = vadd.f32 %v711, %v732
          %v735 = vadd.f32 %v712, %v732
          %v736 = vadd.f32 %v713, %v732
          %v737 = vadd.f32 %v714, %v732
          %v738 = vadd.f32 %v715, %v732
          %v739 = vadd.f32 %v716, %v732
          %v740 = vadd.f32 %v717, %v732
          %v741 = vadd.f32 %v718, %v732
          %v742 = vadd.f32 %v719, %v732
          %v743 = vadd.f32 %v720, %v732
          %v744 = vadd.f32 %v721, %v732
          %v745 = vadd.f32 %v722, %v732
          %v746 = vadd.f32 %v723, %v732
          %v747 = vadd.f32 %v724, %v732
          %v748 = vadd.f32 %v725, %v732
          %v749 = vadd.f32 %v726, %v732
          %v750 = vld [vmem:[%s402] sm:$0xf]
          %v751 = vld [vmem:[%s402 + $0x4] sm:$0xf]
          %v752 = vld [vmem:[%s402 + $0x8] sm:$0xf]
          %v753 = vld [vmem:[%s402 + $0xc] sm:$0xf]
          %v754 = vld [vmem:[%s402 + $0x10] sm:$0xf]
          %v755 = vld [vmem:[%s402 + $0x14] sm:$0xf]
          %v756 = vld [vmem:[%s402 + $0x18] sm:$0xf]
          %v757 = vld [vmem:[%s402 + $0x1c] sm:$0xf]
          %v758 = vld [vmem:[%s402 + $0x20] sm:$0xf]
          %v759 = vld [vmem:[%s402 + $0x24] sm:$0xf]
          %v760 = vld [vmem:[%s402 + $0x28] sm:$0xf]
          %v761 = vld [vmem:[%s402 + $0x2c] sm:$0xf]
          %v762 = vld [vmem:[%s402 + $0x30] sm:$0xf]
          %v763 = vld [vmem:[%s402 + $0x34] sm:$0xf]
          %v764 = vld [vmem:[%s402 + $0x38] sm:$0xf]
          %v765 = vld [vmem:[%s402 + $0x3c] sm:$0xf]
          %v766 = vunpack.c.l.bf16 %v750
          %v767 = vunpack.c.l.bf16 %v751
          %v768 = vunpack.c.l.bf16 %v752
          %v769 = vunpack.c.l.bf16 %v753
          %v770 = vunpack.c.l.bf16 %v754
          %v771 = vunpack.c.l.bf16 %v755
          %v772 = vunpack.c.l.bf16 %v756
          %v773 = vunpack.c.l.bf16 %v757
          %v774 = vunpack.c.l.bf16 %v758
          %v775 = vunpack.c.l.bf16 %v759
          %v776 = vunpack.c.l.bf16 %v760
          %v777 = vunpack.c.l.bf16 %v761
          %v778 = vunpack.c.l.bf16 %v762
          %v779 = vunpack.c.l.bf16 %v763
          %v780 = vunpack.c.l.bf16 %v764
          %v781 = vunpack.c.l.bf16 %v765
          %v782 = vadd.f32 %v734, %v766
          %v783 = vadd.f32 %v735, %v767
          %v784 = vadd.f32 %v736, %v768
          %v785 = vadd.f32 %v737, %v769
          %v786 = vadd.f32 %v738, %v770
          %v787 = vadd.f32 %v739, %v771
          %v788 = vadd.f32 %v740, %v772
          %v789 = vadd.f32 %v741, %v773
          %v790 = vadd.f32 %v742, %v774
          %v791 = vadd.f32 %v743, %v775
          %v792 = vadd.f32 %v744, %v776
          %v793 = vadd.f32 %v745, %v777
          %v794 = vadd.f32 %v746, %v778
          %v795 = vadd.f32 %v747, %v779
          %v796 = vadd.f32 %v748, %v780
          %v797 = vadd.f32 %v749, %v781
          %v798 = vmax.f32 %v782, 0.0
          %v799 = vmax.f32 %v783, 0.0
          %v800 = vmax.f32 %v784, 0.0
          %v801 = vmax.f32 %v785, 0.0
          %v802 = vmax.f32 %v786, 0.0
          %v803 = vmax.f32 %v787, 0.0
          %v804 = vmax.f32 %v788, 0.0
          %v805 = vmax.f32 %v789, 0.0
          %v806 = vmax.f32 %v790, 0.0
          %v807 = vmax.f32 %v791, 0.0
          %v808 = vmax.f32 %v792, 0.0
          %v809 = vmax.f32 %v793, 0.0
          %v810 = vmax.f32 %v794, 0.0
          %v811 = vmax.f32 %v795, 0.0
          %v812 = vmax.f32 %v796, 0.0
          %v813 = vmax.f32 %v797, 0.0
          %v814 = vpack.c.bf16 %v799, %v798
          %v815 = vpack.c.bf16 %v801, %v800
          %v816 = vpack.c.bf16 %v803, %v802
          %v817 = vpack.c.bf16 %v805, %v804
          %v818 = vpack.c.bf16 %v807, %v806
          %v819 = vpack.c.bf16 %v809, %v808
          %v820 = vpack.c.bf16 %v811, %v810
          %v821 = vpack.c.bf16 %v813, %v812
          %v830 = vunpack.c.l.b16 %v814
          %v831 = vunpack.c.h.b16 %v814
          %v832 = vunpack.c.l.b16 %v815
          %v833 = vunpack.c.h.b16 %v815
          %v834 = vunpack.c.l.b16 %v816
          %v835 = vunpack.c.h.b16 %v816
          %v836 = vunpack.c.l.b16 %v817
          %v837 = vunpack.c.h.b16 %v817
          %v838 = vunpack.c.l.b16 %v818
          %v839 = vunpack.c.h.b16 %v818
          %v840 = vunpack.c.l.b16 %v819
          %v841 = vunpack.c.h.b16 %v819
          %v842 = vunpack.c.l.b16 %v820
          %v843 = vunpack.c.h.b16 %v820
          %v844 = vunpack.c.l.b16 %v821
          %v845 = vunpack.c.h.b16 %v821
          %v846 = vpack.c.b16 %v830, %v830
          %v847 = vpack.c.b16 %v831, %v831
          %v848 = vpack.c.b16 %v832, %v832
          %v849 = vpack.c.b16 %v833, %v833
          %v850 = vpack.c.b16 %v834, %v834
          %v851 = vpack.c.b16 %v835, %v835
          %v852 = vpack.c.b16 %v836, %v836
          %v853 = vpack.c.b16 %v837, %v837
          %v854 = vpack.c.b16 %v838, %v838
          %v855 = vpack.c.b16 %v839, %v839
          %v856 = vpack.c.b16 %v840, %v840
          %v857 = vpack.c.b16 %v841, %v841
          %v858 = vpack.c.b16 %v842, %v842
          %v859 = vpack.c.b16 %v843, %v843
          %v860 = vpack.c.b16 %v844, %v844
          %v861 = vpack.c.b16 %v845, %v845
          %878 = vst [vmem:[%s411] sm:$0xf] %v846
          %879 = vst [vmem:[%s411 + $0x4] sm:$0xf] %v847
          %880 = vst [vmem:[%s411 + $0x8] sm:$0xf] %v848
          %881 = vst [vmem:[%s411 + $0xc] sm:$0xf] %v849
          %882 = vst [vmem:[%s411 + $0x10] sm:$0xf] %v850
          %883 = vst [vmem:[%s411 + $0x14] sm:$0xf] %v851
          %884 = vst [vmem:[%s411 + $0x18] sm:$0xf] %v852
          %885 = vst [vmem:[%s411 + $0x1c] sm:$0xf] %v853
          %886 = vst [vmem:[%s411 + $0x20] sm:$0xf] %v854
          %887 = vst [vmem:[%s411 + $0x24] sm:$0xf] %v855
          %888 = vst [vmem:[%s411 + $0x28] sm:$0xf] %v856
          %889 = vst [vmem:[%s411 + $0x2c] sm:$0xf] %v857
          %890 = vst [vmem:[%s411 + $0x30] sm:$0xf] %v858
          %891 = vst [vmem:[%s411 + $0x34] sm:$0xf] %v859
          %892 = vst [vmem:[%s411 + $0x38] sm:$0xf] %v860
          %893 = vst [vmem:[%s411 + $0x3c] sm:$0xf] %v861
        $region85: #{resnet_forward.16} parent=72 // pred_fallthru
          _
        %s894 = smul.u32 16, %s20
        %p895 = scmp.lt.s32.totalorder %s894, 15
        %s896 = scalar_select %p895, %s894, 15
        %p897 = scmp.lt.s32.totalorder %s21, 0
        %s898 = scalar_select %p897, %s21, 0
        %s899 = sadd.s32 %s898, %s896
        %s900 = smul.addr %s899, 4
        %s901 = scalar_lea.vmem %s4, %s900
        // Predicated region
        $region86: #{resnet_forward.16} parent=72 // pred_check
          %p902 = pneg %p164
        $region87: #{resnet_forward.16} parent=72 // pred_check_branch
          %904 = sbr.rel (%p902) target = $region89
        $region88: #{resnet_forward.16} parent=72 // pred_region
          %s905 = smul.u32 16, %s20
        $region89: #{resnet_forward.16} parent=72 // pred_fallthru
          _
        // Predicated region
        $region90: #{resnet_forward.16} parent=72 // pred_check
          %p906 = pneg %p164
        $region91: #{resnet_forward.16} parent=72 // pred_check_branch
          %908 = sbr.rel (%p906) target = $region93
        $region92: #{resnet_forward.16} parent=72 // pred_region
          %s909 = smul.u32 16, %s20
          %p910 = scmp.lt.s32.totalorder %s909, 15
          %s911 = scalar_select %p910, %s909, 15
          %p912 = scmp.lt.s32.totalorder %s21, 0
          %s913 = scalar_select %p912, %s21, 0
          %s914 = sadd.s32 %s913, %s911
          %s915 = smul.addr %s914, 4
          %s916 = scalar_lea.vmem %s4, %s915
        $region93: #{resnet_forward.16} parent=72 // pred_fallthru
          _
      $region73: #{resnet_forward.16} parent=5 // pred_fallthru
        _
      %p917 = scmp.le.s32.totalorder 2, %s10
      // Predicated region
      $region94: #{resnet_forward.16} parent=5 // pred_check
        %p918 = pneg %p917
      $region95: #{resnet_forward.16} parent=5 // pred_check_branch
        %920 = sbr.rel (%p918) target = $region97
      $region96: #{resnet_forward.16} parent=5 // pred_region
        %s921 = ssub.s32 %s10, 2
      $region97: #{resnet_forward.16} parent=5 // pred_fallthru
        _
    $region6: #{resnet_forward.16} parent=1 // loop_footer
      %s14 = sadd.s32 1, %s10
    $region7: #{resnet_forward.16} parent=1 // loop_footer_branch
      %9 = sbr.rel target = $region3
    $region8: #{resnet_forward.16} parent=1 // loop_exit
      _

// kernel: resnet_forward.17
$region0: #{resnet_forward.17}
  #allocation0 [shape = 'u32[]', space=smem, size = 0x4, offset = 0x4, fixed_abs, tag = 'smem constant byte address 0x4 - core index']
  #allocation1 [shape = 'u32[144,128]{1,0:T(1,128)}', space=vmem, size = 0x12000, scoped, tag = 'internal scratch']
  #allocation2 [shape = 'f32[32,128]{1,0:T(8,128)}', space=vmem, size = 0x4000, scoped, tag = 'scratch operand']
  %s0 = inlined_call_operand.vmem [shape: bf16[32,640], index: 0, kind: input, shape index: {}]
  %s1 = inlined_call_operand.vmem [shape: bf16[640,128], index: 1, kind: input, shape index: {}]
  %s2 = inlined_call_operand.vmem [shape: f32[1,128], index: 2, kind: input, shape index: {}]
  %s3 = inlined_call_operand.vmem [shape: bf16[32,128], index: 3, kind: output, shape index: {}]
  %s4 = sld [smem:[#allocation0]]
  $region94: #{resnet_forward.17} parent=0
    _
  %s6 = ssub.s32 1, %s4
  %s7 = scalar_select 0, %s6, %s4
  $region1: #{resnet_forward.17} parent=0
    #allocation3 [shape = 'u8[16384]{0}', space=vmem, size = 0x4000, scoped, tag = 'input window, operand 0']
    loop: start=0, step=1, limit=7
    $region2: #{resnet_forward.17} parent=1 // loop_pre_header
      _
    $region3: #{resnet_forward.17} parent=1 // loop_header
      %s9 = sphi 0, %s13
      %p10 = scmp.ge.s32.totalorder %s9, 7
      %s16 = sphi 0, %s35
      %s17 = sphi 0, %s31
      %s18 = sphi 0, %s27
      %s19 = sphi 0, %s16
      %s20 = sphi 0, %s17
      %s21 = sphi 0, %s18
      %s22 = sphi 0, %s19
      %s23 = sphi 0, %s20
      %s24 = sphi 0, %s21
      %s40 = sphi 0, %s42
      %s43 = sphi 0, %s40
      %s44 = sphi 0, %s43
      %s60 = sphi 0, %s44
      %s68 = sphi 0, %s70
      %s71 = sphi 0, %s68
      %s72 = sphi 0, %s71
      %s88 = sphi 0, %s72
      %s94 = sphi 0, %s96
      %s97 = sphi 0, %s94
      %s98 = sphi 0, %s97
      %s114 = sphi 0, %s98
      %s122 = sphi 0, %s124
      %s125 = sphi 0, %s122
      %s126 = sphi 0, %s125
      %s142 = sphi 0, %s126
    $region4: #{resnet_forward.17} parent=1 // loop_header_branch
      %12 = sbr.rel (%p10) target = $region8
    $region5: #{resnet_forward.17} parent=1 // loop_body
      %s14 = ssub.s32 %s9, 1
      %s15 = ssub.s32 %s9, 2
      %s25 = sadd.s32 1, %s18
      %p26 = scmp.ge.s32.totalorder %s25, 5
      %s27 = scalar_select %p26, 0, %s25
      %s28 = sadd.s32 1, %s17
      %s29 = scalar_select %p26, %s28, %s17
      %p30 = scmp.ge.s32.totalorder %s29, 1
      %s31 = scalar_select %p30, 0, %s29
      %s32 = sadd.s32 1, %s16
      %s33 = scalar_select %p30, %s32, %s16
      %p34 = scmp.ge.s32.totalorder %s33, 1
      %s35 = scalar_select %p34, 0, %s33
      %s36 = ssub.s32 %s16, %s35
      %s37 = ssub.s32 %s18, %s27
      %s38 = sor.u32 %s36, %s37
      %p39 = scmp.eq.s32.totalorder %s38, 0
      %s41 = sadd.s32 %s40, 1
      %s42 = scalar_select %p39, %s40, %s41
      %p45 = pneg %p39
      %p46 = scmp.eq.s32.totalorder %s9, 4
      %p47 = por %p45, %p46
      %p48 = scmp.ne.s32.totalorder %s40, %s43
      %p49 = scmp.eq.s32.totalorder %s9, 0
      %p50 = por %p48, %p49
      %p51 = scmp.ne.s32.totalorder %s40, %s43
      %p52 = scmp.eq.s32.totalorder %s14, 4
      %p53 = por %p51, %p52
      %p54 = scmp.ne.s32.totalorder %s43, %s44
      %p55 = scmp.eq.s32.totalorder %s14, 0
      %p56 = por %p54, %p55
      %p57 = scmp.ne.s32.totalorder %s43, %s44
      %p58 = scmp.eq.s32.totalorder %s15, 4
      %p59 = por %p57, %p58
      %p61 = scmp.ne.s32.totalorder %s44, %s60
      %p62 = scmp.eq.s32.totalorder %s15, 0
      %p63 = por %p61, %p62
      %s64 = ssub.s32 %s18, %s27
      %s65 = ssub.s32 %s17, %s31
      %s66 = sor.u32 %s64, %s65
      %p67 = scmp.eq.s32.totalorder %s66, 0
      %s69 = sadd.s32 %s68, 1
      %s70 = scalar_select %p67, %s68, %s69
      %p73 = pneg %p67
      %p74 = scmp.eq.s32.totalorder %s9, 4
      %p75 = por %p73, %p74
      %p76 = scmp.ne.s32.totalorder %s68, %s71
      %p77 = scmp.eq.s32.totalorder %s9, 0
      %p78 = por %p76, %p77
      %p79 = scmp.ne.s32.totalorder %s68, %s71
      %p80 = scmp.eq.s32.totalorder %s14, 4
      %p81 = por %p79, %p80
      %p82 = scmp.ne.s32.totalorder %s71, %s72
      %p83 = scmp.eq.s32.totalorder %s14, 0
      %p84 = por %p82, %p83
      %p85 = scmp.ne.s32.totalorder %s71, %s72
      %p86 = scmp.eq.s32.totalorder %s15, 4
      %p87 = por %p85, %p86
      %p89 = scmp.ne.s32.totalorder %s72, %s88
      %p90 = scmp.eq.s32.totalorder %s15, 0
      %p91 = por %p89, %p90
      %s92 = ssub.s32 %s17, %s31
      %p93 = scmp.eq.s32.totalorder %s92, 0
      %s95 = sadd.s32 %s94, 1
      %s96 = scalar_select %p93, %s94, %s95
      %p99 = pneg %p93
      %p100 = scmp.eq.s32.totalorder %s9, 4
      %p101 = por %p99, %p100
      %p102 = scmp.ne.s32.totalorder %s94, %s97
      %p103 = scmp.eq.s32.totalorder %s9, 0
      %p104 = por %p102, %p103
      %p105 = scmp.ne.s32.totalorder %s94, %s97
      %p106 = scmp.eq.s32.totalorder %s14, 4
      %p107 = por %p105, %p106
      %p108 = scmp.ne.s32.totalorder %s97, %s98
      %p109 = scmp.eq.s32.totalorder %s14, 0
      %p110 = por %p108, %p109
      %p111 = scmp.ne.s32.totalorder %s97, %s98
      %p112 = scmp.eq.s32.totalorder %s15, 4
      %p113 = por %p111, %p112
      %p115 = scmp.ne.s32.totalorder %s98, %s114
      %p116 = scmp.eq.s32.totalorder %s15, 0
      %p117 = por %p115, %p116
      %s118 = ssub.s32 %s16, %s35
      %s119 = ssub.s32 %s17, %s31
      %s120 = sor.u32 %s118, %s119
      %p121 = scmp.eq.s32.totalorder %s120, 0
      %s123 = sadd.s32 %s122, 1
      %s124 = scalar_select %p121, %s122, %s123
      %p127 = pneg %p121
      %p128 = scmp.eq.s32.totalorder %s9, 4
      %p129 = por %p127, %p128
      %p130 = scmp.ne.s32.totalorder %s122, %s125
      %p131 = scmp.eq.s32.totalorder %s9, 0
      %p132 = por %p130, %p131
      %p133 = scmp.ne.s32.totalorder %s122, %s125
      %p134 = scmp.eq.s32.totalorder %s14, 4
      %p135 = por %p133, %p134
      %p136 = scmp.ne.s32.totalorder %s125, %s126
      %p137 = scmp.eq.s32.totalorder %s14, 0
      %p138 = por %p136, %p137
      %p139 = scmp.ne.s32.totalorder %s125, %s126
      %p140 = scmp.eq.s32.totalorder %s15, 4
      %p141 = por %p139, %p140
      %p143 = scmp.ne.s32.totalorder %s126, %s142
      %p144 = scmp.eq.s32.totalorder %s15, 0
      %p145 = por %p143, %p144
      %p146 = scmp.le.s32.totalorder 1, %s9
      %p147 = scmp.lt.s32.totalorder %s9, 6
      %p148 = pnand %p146, %p147
      %p149 = pneg %p148
      // Predicated region
      $region9: #{resnet_forward.17} parent=5 // pred_check
        _
      $region10: #{resnet_forward.17} parent=5 // pred_check_branch
        %151 = sbr.rel (%p148) target = $region12
      $region11: #{resnet_forward.17} parent=5 // pred_region
        %s152 = ssub.s32 %s9, 1
        // Predicated region
        $region13: #{resnet_forward.17} parent=11 // pred_check
          %p153 = pneg %p110
        $region14: #{resnet_forward.17} parent=11 // pred_check_branch
          %155 = sbr.rel (%p153) target = $region16
        $region15: #{resnet_forward.17} parent=11 // pred_region
          %p156 = scmp.lt.s32.totalorder %s20, 0
          %s157 = scalar_select %p156, %s20, 0
          %s158 = scalar_lea.vmem %s2, %s157
        $region16: #{resnet_forward.17} parent=11 // pred_fallthru
          _
      $region12: #{resnet_forward.17} parent=5 // pred_fallthru
        _
      %p159 = scmp.lt.s32.totalorder %s9, 5
      // Predicated region
      $region17: #{resnet_forward.17} parent=5 // pred_check
        %p160 = pneg %p159
      $region18: #{resnet_forward.17} parent=5 // pred_check_branch
        %162 = sbr.rel (%p160) target = $region20
      $region19: #{resnet_forward.17} parent=5 // pred_region
        // Predicated region
        $region21: #{resnet_forward.17} parent=19 // pred_check
          %p163 = pneg %p50
        $region22: #{resnet_forward.17} parent=19 // pred_check_branch
          %165 = sbr.rel (%p163) target = $region24
        $region23: #{resnet_forward.17} parent=19 // pred_region
          %s166 = sand.u32 %s40, 1
          %s167 = sand.u32 %s40, 1
          %s168 = smul.addr %s167, 16
          %s169 = scalar_lea.vmem [#allocation3], %s168
          %s170 = smul.u32 4, %s16
          %s171 = smul.addr %s170, 5
          %s172 = sadd.s32 %s18, %s171
          %s173 = smul.addr %s172, 4
          %s174 = scalar_lea.vmem %s0, %s173
          // Predicated region
          $region25: #{resnet_forward.17} parent=23 // pred_check
            _
          $region26: #{resnet_forward.17} parent=23 // pred_check_branch
            %176 = sbr.rel (0) target = $region28
          $region27: #{resnet_forward.17} parent=23 // pred_region
            // Predicated region
            $region29: #{resnet_forward.17} parent=27 // pred_check
              _
            $region30: #{resnet_forward.17} parent=27 // pred_check_branch
              %178 = sbr.rel target = $region32
            $region31: #{resnet_forward.17} parent=27 // pred_region
              // Predicated region
              $region44: #{resnet_forward.17} parent=31 // pred_check
                _
              $region45: #{resnet_forward.17} parent=31 // pred_check_branch
                %199 = sbr.rel (0) target = $region47
              $region46: #{resnet_forward.17} parent=31 // pred_region
                loop: start=0, step=1, limit=1
                $region48: #{resnet_forward.17} parent=46 // loop_pre_header
                  _
                $region49: #{resnet_forward.17} parent=46 // loop_header
                  %s201 = sphi 0, %s205
                  %p202 = scmp.ge.s32.totalorder %s201, 1
                  %s206 = sphi %s174, %s174
                  %s207 = sphi %s169, %s169
                $region50: #{resnet_forward.17} parent=46 // loop_header_branch
                  %204 = sbr.rel (%p202) target = $region54
                $region51: #{resnet_forward.17} parent=46 // loop_body
                  _
                $region52: #{resnet_forward.17} parent=46 // loop_footer
                  %s205 = sadd.s32 1, %s201
                $region53: #{resnet_forward.17} parent=46 // loop_footer_branch
                  %200 = sbr.rel target = $region49
                $region54: #{resnet_forward.17} parent=46 // loop_exit
                  _
                loop: start=0, step=1, limit=1
                $region55: #{resnet_forward.17} parent=46 // loop_pre_header
                  _
                $region56: #{resnet_forward.17} parent=46 // loop_header
                  %s210 = sphi 0, %s214
                  %p211 = scmp.ge.s32.totalorder %s210, 1
                  %s215 = sphi %s174, %s174
                  %s216 = sphi %s169, %s169
                $region57: #{resnet_forward.17} parent=46 // loop_header_branch
                  %213 = sbr.rel (%p211) target = $region61
                $region58: #{resnet_forward.17} parent=46 // loop_body
                  %v217 = vld [vmem:[%s215] sm:$0xf]
                  %218 = vst [vmem:[%s216] sm:$0xf] %v217
                  %v219 = vld [vmem:[%s215 + $0x14] sm:$0xf]
                  %220 = vst [vmem:[%s216 + $0x4] sm:$0xf] %v219
                  %v221 = vld [vmem:[%s215 + $0x28] sm:$0xf]
                  %222 = vst [vmem:[%s216 + $0x8] sm:$0xf] %v221
                  %v223 = vld [vmem:[%s215 + $0x3c] sm:$0xf]
                  %224 = vst [vmem:[%s216 + $0xc] sm:$0xf] %v223
                $region59: #{resnet_forward.17} parent=46 // loop_footer
                  %s214 = sadd.s32 1, %s210
                $region60: #{resnet_forward.17} parent=46 // loop_footer_branch
                  %209 = sbr.rel target = $region56
                $region61: #{resnet_forward.17} parent=46 // loop_exit
                  _
              $region47: #{resnet_forward.17} parent=31 // pred_fallthru
                _
            $region32: #{resnet_forward.17} parent=27 // pred_fallthru
              _
            // Predicated region
            $region33: #{resnet_forward.17} parent=27 // pred_check
              _
            $region34: #{resnet_forward.17} parent=27 // pred_check_branch
              %180 = sbr.rel (0) target = $region36
            $region35: #{resnet_forward.17} parent=27 // pred_region
              loop: start=0, step=1, limit=1
              $region37: #{resnet_forward.17} parent=35 // loop_pre_header
                _
              $region38: #{resnet_forward.17} parent=35 // loop_header
                %s183 = sphi 0, %s187
                %p184 = scmp.ge.s32.totalorder %s183, 1
                %s188 = sphi %s174, %s174
                %s189 = sphi %s169, %s169
              $region39: #{resnet_forward.17} parent=35 // loop_header_branch
                %186 = sbr.rel (%p184) target = $region43
              $region40: #{resnet_forward.17} parent=35 // loop_body
                %v190 = vld [vmem:[%s188] sm:$0xf]
                %191 = vst [vmem:[%s189] sm:$0xf] %v190
                %v192 = vld [vmem:[%s188 + $0x14] sm:$0xf]
                %193 = vst [vmem:[%s189 + $0x4] sm:$0xf] %v192
                %v194 = vld [vmem:[%s188 + $0x28] sm:$0xf]
                %195 = vst [vmem:[%s189 + $0x8] sm:$0xf] %v194
                %v196 = vld [vmem:[%s188 + $0x3c] sm:$0xf]
                %197 = vst [vmem:[%s189 + $0xc] sm:$0xf] %v196
              $region41: #{resnet_forward.17} parent=35 // loop_footer
                %s187 = sadd.s32 1, %s183
              $region42: #{resnet_forward.17} parent=35 // loop_footer_branch
                %182 = sbr.rel target = $region38
              $region43: #{resnet_forward.17} parent=35 // loop_exit
                _
            $region36: #{resnet_forward.17} parent=27 // pred_fallthru
              _
          $region28: #{resnet_forward.17} parent=23 // pred_fallthru
            _
          %225 = vnop
        $region24: #{resnet_forward.17} parent=19 // pred_fallthru
          _
        // Predicated region
        $region62: #{resnet_forward.17} parent=19 // pred_check
          %p226 = pneg %p78
        $region63: #{resnet_forward.17} parent=19 // pred_check_branch
          %228 = sbr.rel (%p226) target = $region65
        $region64: #{resnet_forward.17} parent=19 // pred_region
          %s229 = smul.u32 16, %s18
          %p230 = scmp.lt.s32.totalorder %s229, 79
          %s231 = scalar_select %p230, %s229, 79
          %p232 = scmp.lt.s32.totalorder %s17, 0
          %s233 = scalar_select %p232, %s17, 0
          %s234 = sadd.s32 %s233, %s231
          %s235 = smul.addr %s234, 4
          %s236 = scalar_lea.vmem %s1, %s235
          %s237 = smul.u32 16, %s18
        $region65: #{resnet_forward.17} parent=19 // pred_fallthru
          _
      $region20: #{resnet_forward.17} parent=5 // pred_fallthru
        _
      %p238 = scmp.le.s32.totalorder 1, %s9
      %p239 = scmp.lt.s32.totalorder %s9, 6
      %p240 = pnand %p238, %p239
      %p241 = pneg %p240
      // Predicated region
      $region66: #{resnet_forward.17} parent=5 // pred_check
        _
      $region67: #{resnet_forward.17} parent=5 // pred_check_branch
        %243 = sbr.rel (%p240) target = $region69
      $region68: #{resnet_forward.17} parent=5 // pred_region
        %s244 = ssub.s32 %s9, 1
        %s245 = sand.u32 %s43, 1
        %s246 = sand.u32 %s43, 1
        %s247 = smul.addr %s246, 16
        %s248 = scalar_lea.vmem [#allocation3], %s247
        // Predicated region
        $region70: #{resnet_forward.17} parent=68 // pred_check
          %p249 = pneg %p56
        $region71: #{resnet_forward.17} parent=68 // pred_check_branch
          %251 = sbr.rel (%p249) target = $region73
        $region72: #{resnet_forward.17} parent=68 // pred_region
          _
        $region73: #{resnet_forward.17} parent=68 // pred_fallthru
          _
        %s252 = sand.u32 %s43, 1
        %s253 = sand.u32 %s43, 1
        %s254 = smul.addr %s253, 16
        %s255 = scalar_lea.vmem [#allocation3], %s254
        %p256 = pneg %p56
        %p257 = pneg %p53
        %s258 = smul.u32 16, %s21
        %p259 = scmp.lt.s32.totalorder %s258, 79
        %s260 = scalar_select %p259, %s258, 79
        %p261 = scmp.lt.s32.totalorder %s20, 0
        %s262 = scalar_select %p261, %s20, 0
        %s263 = sadd.s32 %s262, %s260
        %s264 = smul.addr %s263, 4
        %s265 = scalar_lea.vmem %s1, %s264
        %p266 = pneg %p84
        %p267 = pneg %p81
        %p268 = scmp.lt.s32.totalorder %s20, 0
        %s269 = scalar_select %p268, %s20, 0
        %s270 = scalar_lea.vmem %s2, %s269
        %p271 = pneg %p110
        %p272 = pneg %p107
        %p273 = pneg %p138
        %p274 = pneg %p135
        %s275 = smul.u32 4, %s19
        %p276 = scmp.lt.s32.totalorder %s275, 3
        %s277 = scalar_select %p276, %s275, 3
        %p278 = scmp.lt.s32.totalorder %s20, 0
        %s279 = scalar_select %p278, %s20, 0
        %s280 = sadd.s32 %s279, %s277
        %s281 = smul.addr %s280, 4
        %s282 = scalar_lea.vmem %s3, %s281
        %s283 = smul.u32 4, %s19
        %s284 = smul.u32 16, %s21
        %p285 = scmp.lt.s32.totalorder %s284, 79
        %s286 = scalar_select %p285, %s284, 79
        %p287 = scmp.lt.s32.totalorder %s20, 0
        %s288 = scalar_select %p287, %s20, 0
        %s289 = sadd.s32 %s288, %s286
        %s290 = smul.addr %s289, 4
        %s291 = scalar_lea.vmem %s1, %s290
        %s292 = smul.u32 16, %s21
        %p293 = scmp.lt.s32.totalorder %s20, 0
        %s294 = scalar_select %p293, %s20, 0
        %s295 = scalar_lea.vmem %s2, %s294
        %s296 = smul.u32 4, %s19
        %p297 = scmp.lt.s32.totalorder %s296, 3
        %s298 = scalar_select %p297, %s296, 3
        %p299 = scmp.lt.s32.totalorder %s20, 0
        %s300 = scalar_select %p299, %s20, 0
        %s301 = sadd.s32 %s300, %s298
        %s302 = smul.addr %s301, 4
        %s303 = scalar_lea.vmem %s3, %s302
        %s304 = smul.u32 4, %s19
        %p306 = scmp.eq.s32.totalorder %s21, 0
        // Predicated region
        $region74: #{resnet_forward.17} parent=68 // pred_check
          %p307 = pneg %p306
        $region75: #{resnet_forward.17} parent=68 // pred_check_branch
          %309 = sbr.rel (%p307) target = $region77
        $region76: #{resnet_forward.17} parent=68 // pred_region
          %310 = vst [vmem:[#allocation2] sm:$0xff] 0.0
          %311 = vst [vmem:[#allocation2 + $0x8] sm:$0xff] 0.0
          %312 = vst [vmem:[#allocation2 + $0x10] sm:$0xff] 0.0
          %313 = vst [vmem:[#allocation2 + $0x18] sm:$0xff] 0.0
        $region77: #{resnet_forward.17} parent=68 // pred_fallthru
          _
        %v314 = vld [vmem:[#allocation2] sm:$0xff]
        %v315 = vld [vmem:[#allocation2 + $0x8] sm:$0xff]
        %v316 = vld [vmem:[#allocation2 + $0x10] sm:$0xff]
        %v317 = vld [vmem:[#allocation2 + $0x18] sm:$0xff]
        %v318 = vld [vmem:[%s248] sm:$0xf]
        %v319 = vld [vmem:[%s248 + $0x4] sm:$0xf]
        %v320 = vld [vmem:[%s248 + $0x8] sm:$0xf]
        %v321 = vld [vmem:[%s248 + $0xc] sm:$0xf]
        %v322 = vld [vmem:[%s291] sm:$0xf]
        %v323 = vld [vmem:[%s291 + $0x4] sm:$0xf]
        %v324 = vld [vmem:[%s291 + $0x8] sm:$0xf]
        %v325 = vld [vmem:[%s291 + $0xc] sm:$0xf]
        %v326 = vld [vmem:[%s291 + $0x10] sm:$0xf]
        %v327 = vld [vmem:[%s291 + $0x14] sm:$0xf]
        %v328 = vld [vmem:[%s291 + $0x18] sm:$0xf]
        %v329 = vld [vmem:[%s291 + $0x1c] sm:$0xf]
        %v330 = vld [vmem:[%s291 + $0x20] sm:$0xf]
        %v331 = vld [vmem:[%s291 + $0x24] sm:$0xf]
        %v332 = vld [vmem:[%s291 + $0x28] sm:$0xf]
        %v333 = vld [vmem:[%s291 + $0x2c] sm:$0xf]
        %v334 = vld [vmem:[%s291 + $0x30] sm:$0xf]
        %v335 = vld [vmem:[%s291 + $0x34] sm:$0xf]
        %v336 = vld [vmem:[%s291 + $0x38] sm:$0xf]
        %v337 = vld [vmem:[%s291 + $0x3c] sm:$0xf]
        %v342 = vunpack.c.l.b16 %v318
        %v343 = vunpack.c.l.b16 %v319
        %v344 = vunpack.c.l.b16 %v320
        %v345 = vunpack.c.l.b16 %v321
        %v346 = vpack.c.b16 %v343, %v342
        %v347 = vpack.c.b16 %v345, %v344
        %v366 = vunpack.c.l.b16 %v322
        %v367 = vunpack.c.l.b16 %v323
        %v368 = vunpack.c.l.b16 %v324
        %v369 = vunpack.c.l.b16 %v325
        %v370 = vunpack.c.l.b16 %v326
        %v371 = vunpack.c.l.b16 %v327
        %v372 = vunpack.c.l.b16 %v328
        %v373 = vunpack.c.l.b16 %v329
        %v374 = vunpack.c.l.b16 %v330
        %v375 = vunpack.c.l.b16 %v331
        %v376 = vunpack.c.l.b16 %v332
        %v377 = vunpack.c.l.b16 %v333
        %v378 = vunpack.c.l.b16 %v334
        %v379 = vunpack.c.l.b16 %v335
        %v380 = vunpack.c.l.b16 %v336
        %v381 = vunpack.c.l.b16 %v337
        %v382 = vpack.c.b16 %v367, %v366
        %v383 = vpack.c.b16 %v369, %v368
        %v384 = vpack.c.b16 %v371, %v370
        %v385 = vpack.c.b16 %v373, %v372
        %v386 = vpack.c.b16 %v375, %v374
        %v387 = vpack.c.b16 %v377, %v376
        %v388 = vpack.c.b16 %v379, %v378
        %v389 = vpack.c.b16 %v381, %v380
        %398 = vmatprep.subr.bf16.mxu0 0
        %399 = vmatpush1.bf16.msra.mxu0 %v382
        %400 = vmatprep.subr.bf16.mxu0 0
        %401 = vmatpush1.bf16.msra.mxu0 %v383
        %402 = vmatprep.subr.bf16.mxu0 0
        %403 = vmatpush1.bf16.msra.mxu0 %v384
        %404 = vmatprep.subr.bf16.mxu0 0
        %405 = vmatpush1.bf16.msra.mxu0 %v385
        %406 = vmatprep.subr.bf16.mxu0 0
        %407 = vmatpush1.bf16.msra.mxu0 %v386
        %408 = vmatprep.subr.bf16.mxu0 0
        %409 = vmatpush1.bf16.msra.mxu0 %v387
        %410 = vmatprep.subr.bf16.mxu0 0
        %411 = vmatpush1.bf16.msra.mxu0 %v388
        %412 = vmatprep.subr.bf16.mxu0 0
        %413 = vmatpush1.bf16.msra.mxu0 %v389
        %414 = vmatprep.subr.bf16.mxu0 0
        %415 = vmatpush1.bf16.msra.mxu0 0
        %416 = vmatprep.subr.bf16.mxu0 0
        %417 = vmatpush1.bf16.msra.mxu0 0
        %418 = vmatprep.subr.bf16.mxu0 0
        %419 = vmatpush1.bf16.msra.mxu0 0
        %420 = vmatprep.subr.bf16.mxu0 0
        %421 = vmatpush1.bf16.msra.mxu0 0
        %422 = vmatprep.subr.bf16.mxu0 0
        %423 = vmatpush1.bf16.msra.mxu0 0
        %424 = vmatprep.subr.bf16.mxu0 0
        %425 = vmatpush1.bf16.msra.mxu0 0
        %426 = vmatprep.subr.bf16.mxu0 0
        %427 = vmatpush1.bf16.msra.mxu0 0
        %428 = vmatprep.subr.bf16.mxu0 0
        %429 = vmatpush1.bf16.msra.mxu0 0
        %430 = vmatprep.mubr.bf16.mxu0 0
        %431 = vmatmul.mubr.bf16.gmra.mrb[0].mxu0 %v346
        %v432 = vpop.f32.mrb[0].mxu0
        %v433 = vadd.f32 0.0, %v432
        %v434 = vpop.f32.mrb[0].mxu0
        %v435 = vpop.f32.mrb[0].mxu0
        %v436 = vadd.f32 0.0, %v435
        %v437 = vpop.f32.mrb[0].mxu0
        %438 = vmatprep.mubr.bf16.mxu0 0
        %439 = vmatmul.mubr.bf16.gmra.mrb[0].mxu0 %v347
        %v440 = vpop.f32.mrb[0].mxu0
        %v441 = vadd.f32 0.0, %v440
        %v442 = vpop.f32.mrb[0].mxu0
        %v443 = vpop.f32.mrb[0].mxu0
        %v444 = vadd.f32 0.0, %v443
        %v445 = vpop.f32.mrb[0].mxu0
        %446 = vdwg.mxu0
        %v447 = vadd.f32 %v314, %v433
        %v448 = vadd.f32 %v315, %v436
        %v449 = vadd.f32 %v316, %v441
        %v450 = vadd.f32 %v317, %v444
        %451 = vst [vmem:[#allocation2] sm:$0xff] %v447
        %452 = vst [vmem:[#allocation2 + $0x8] sm:$0xff] %v448
        %453 = vst [vmem:[#allocation2 + $0x10] sm:$0xff] %v449
        %454 = vst [vmem:[#allocation2 + $0x18] sm:$0xff] %v450
        %p455 = scmp.eq.s32.totalorder %s21, 4
        // Predicated region
        $region78: #{resnet_forward.17} parent=68 // pred_check
          %p456 = pneg %p455
        $region79: #{resnet_forward.17} parent=68 // pred_check_branch
          %458 = sbr.rel (%p456) target = $region81
        $region80: #{resnet_forward.17} parent=68 // pred_region
          %v459 = vld [vmem:[#allocation2] sm:$0xff]
          %v460 = vld [vmem:[#allocation2 + $0x8] sm:$0xff]
          %v461 = vld [vmem:[#allocation2 + $0x10] sm:$0xff]
          %v462 = vld [vmem:[#allocation2 + $0x18] sm:$0xff]
          %v463 = vld [vmem:[%s295] sm:$0x1]
          %v465 = vlaneseq
          %v466 = vshrl.u32 %v465, 7
          %v467 = vsub.s32 0, %v466
          %v468 = vrot.slane %v463, %v467
          %v470 = vadd.f32 %v459, %v468
          %v471 = vadd.f32 %v460, %v468
          %v472 = vadd.f32 %v461, %v468
          %v473 = vadd.f32 %v462, %v468
          %v474 = vmax.f32 %v470, 0.0
          %v475 = vmax.f32 %v471, 0.0
          %v476 = vmax.f32 %v472, 0.0
          %v477 = vmax.f32 %v473, 0.0
          %v478 = vpack.c.bf16 %v475, %v474
          %v479 = vpack.c.bf16 %v477, %v476
          %v482 = vunpack.c.l.b16 %v478
          %v483 = vunpack.c.h.b16 %v478
          %v484 = vunpack.c.l.b16 %v479
          %v485 = vunpack.c.h.b16 %v479
          %v486 = vpack.c.b16 %v482, %v482
          %v487 = vpack.c.b16 %v483, %v483
          %v488 = vpack.c.b16 %v484, %v484
          %v489 = vpack.c.b16 %v485, %v485
          %494 = vst [vmem:[%s303] sm:$0xf] %v486
          %495 = vst [vmem:[%s303 + $0x4] sm:$0xf] %v487
          %496 = vst [vmem:[%s303 + $0x8] sm:$0xf] %v488
          %497 = vst [vmem:[%s303 + $0xc] sm:$0xf] %v489
        $region81: #{resnet_forward.17} parent=68 // pred_fallthru
          _
        %s498 = smul.u32 4, %s19
        %p499 = scmp.lt.s32.totalorder %s498, 3
        %s500 = scalar_select %p499, %s498, 3
        %p501 = scmp.lt.s32.totalorder %s20, 0
        %s502 = scalar_select %p501, %s20, 0
        %s503 = sadd.s32 %s502, %s500
        %s504 = smul.addr %s503, 4
        %s505 = scalar_lea.vmem %s3, %s504
        // Predicated region
        $region82: #{resnet_forward.17} parent=68 // pred_check
          %p506 = pneg %p135
        $region83: #{resnet_forward.17} parent=68 // pred_check_branch
          %508 = sbr.rel (%p506) target = $region85
        $region84: #{resnet_forward.17} parent=68 // pred_region
          %s509 = smul.u32 4, %s19
        $region85: #{resnet_forward.17} parent=68 // pred_fallthru
          _
        // Predicated region
        $region86: #{resnet_forward.17} parent=68 // pred_check
          %p510 = pneg %p135
        $region87: #{resnet_forward.17} parent=68 // pred_check_branch
          %512 = sbr.rel (%p510) target = $region89
        $region88: #{resnet_forward.17} parent=68 // pred_region
          %s513 = smul.u32 4, %s19
          %p514 = scmp.lt.s32.totalorder %s513, 3
          %s515 = scalar_select %p514, %s513, 3
          %p516 = scmp.lt.s32.totalorder %s20, 0
          %s517 = scalar_select %p516, %s20, 0
          %s518 = sadd.s32 %s517, %s515
          %s519 = smul.addr %s518, 4
          %s520 = scalar_lea.vmem %s3, %s519
        $region89: #{resnet_forward.17} parent=68 // pred_fallthru
          _
      $region69: #{resnet_forward.17} parent=5 // pred_fallthru
        _
      %p521 = scmp.le.s32.totalorder 2, %s9
      // Predicated region
      $region90: #{resnet_forward.17} parent=5 // pred_check
        %p522 = pneg %p521
      $region91: #{resnet_forward.17} parent=5 // pred_check_branch
        %524 = sbr.rel (%p522) target = $region93
      $region92: #{resnet_forward.17} parent=5 // pred_region
        %s525 = ssub.s32 %s9, 2
      $region93: #{resnet_forward.17} parent=5 // pred_fallthru
        _
    $region6: #{resnet_forward.17} parent=1 // loop_footer
      %s13 = sadd.s32 1, %s9
    $region7: #{resnet_forward.17} parent=1 // loop_footer_branch
      %8 = sbr.rel target = $region3
    $region8: #{resnet_forward.17} parent=1 // loop_exit
      _

// kernel: resnet_forward.19
$region0: #{resnet_forward.19}
  #allocation0 [shape = 'u32[]', space=smem, size = 0x4, offset = 0x4, fixed_abs, tag = 'smem constant byte address 0x4 - core index']
  #allocation1 [shape = 'u32[144,128]{1,0:T(1,128)}', space=vmem, size = 0x12000, scoped, tag = 'internal scratch']
  #allocation2 [shape = 'f32[32,128]{1,0:T(8,128)}', space=vmem, size = 0x4000, scoped, tag = 'scratch operand']
  %s0 = inlined_call_operand.vmem [shape: bf16[32,1152], index: 0, kind: input, shape index: {}]
  %s1 = inlined_call_operand.vmem [shape: bf16[1152,128], index: 1, kind: input, shape index: {}]
  %s2 = inlined_call_operand.vmem [shape: f32[1,128], index: 2, kind: input, shape index: {}]
  %s3 = inlined_call_operand.vmem [shape: bf16[32,128], index: 3, kind: input, shape index: {}]
  %s4 = inlined_call_operand.vmem [shape: bf16[32,128], index: 4, kind: output, shape index: {}]
  %s5 = sld [smem:[#allocation0]]
  $region98: #{resnet_forward.19} parent=0
    _
  %s7 = ssub.s32 1, %s5
  %s8 = scalar_select 0, %s7, %s5
  $region1: #{resnet_forward.19} parent=0
    #allocation3 [shape = 'u8[16384]{0}', space=vmem, size = 0x4000, scoped, tag = 'input window, operand 0']
    loop: start=0, step=1, limit=11
    $region2: #{resnet_forward.19} parent=1 // loop_pre_header
      _
    $region3: #{resnet_forward.19} parent=1 // loop_header
      %s10 = sphi 0, %s14
      %p11 = scmp.ge.s32.totalorder %s10, 11
      %s17 = sphi 0, %s36
      %s18 = sphi 0, %s32
      %s19 = sphi 0, %s28
      %s20 = sphi 0, %s17
      %s21 = sphi 0, %s18
      %s22 = sphi 0, %s19
      %s23 = sphi 0, %s20
      %s24 = sphi 0, %s21
      %s25 = sphi 0, %s22
      %s41 = sphi 0, %s43
      %s44 = sphi 0, %s41
      %s45 = sphi 0, %s44
      %s61 = sphi 0, %s45
      %s69 = sphi 0, %s71
      %s72 = sphi 0, %s69
      %s73 = sphi 0, %s72
      %s89 = sphi 0, %s73
      %s95 = sphi 0, %s97
      %s98 = sphi 0, %s95
      %s99 = sphi 0, %s98
      %s115 = sphi 0, %s99
      %s123 = sphi 0, %s125
      %s126 = sphi 0, %s123
      %s127 = sphi 0, %s126
      %s143 = sphi 0, %s127
      %s151 = sphi 0, %s153
      %s154 = sphi 0, %s151
      %s155 = sphi 0, %s154
      %s171 = sphi 0, %s155
    $region4: #{resnet_forward.19} parent=1 // loop_header_branch
      %13 = sbr.rel (%p11) target = $region8
    $region5: #{resnet_forward.19} parent=1 // loop_body
      %s15 = ssub.s32 %s10, 1
      %s16 = ssub.s32 %s10, 2
      %s26 = sadd.s32 1, %s19
      %p27 = scmp.ge.s32.totalorder %s26, 9
      %s28 = scalar_select %p27, 0, %s26
      %s29 = sadd.s32 1, %s18
      %s30 = scalar_select %p27, %s29, %s18
      %p31 = scmp.ge.s32.totalorder %s30, 1
      %s32 = scalar_select %p31, 0, %s30
      %s33 = sadd.s32 1, %s17
      %s34 = scalar_select %p31, %s33, %s17
      %p35 = scmp.ge.s32.totalorder %s34, 1
      %s36 = scalar_select %p35, 0, %s34
      %s37 = ssub.s32 %s17, %s36
      %s38 = ssub.s32 %s19, %s28
      %s39 = sor.u32 %s37, %s38
      %p40 = scmp.eq.s32.totalorder %s39, 0
      %s42 = sadd.s32 %s41, 1
      %s43 = scalar_select %p40, %s41, %s42
      %p46 = pneg %p40
      %p47 = scmp.eq.s32.totalorder %s10, 8
      %p48 = por %p46, %p47
      %p49 = scmp.ne.s32.totalorder %s41, %s44
      %p50 = scmp.eq.s32.totalorder %s10, 0
      %p51 = por %p49, %p50
      %p52 = scmp.ne.s32.totalorder %s41, %s44
      %p53 = scmp.eq.s32.totalorder %s15, 8
      %p54 = por %p52, %p53
      %p55 = scmp.ne.s32.totalorder %s44, %s45
      %p56 = scmp.eq.s32.totalorder %s15, 0
      %p57 = por %p55, %p56
      %p58 = scmp.ne.s32.totalorder %s44, %s45
      %p59 = scmp.eq.s32.totalorder %s16, 8
      %p60 = por %p58, %p59
      %p62 = scmp.ne.s32.totalorder %s45, %s61
      %p63 = scmp.eq.s32.totalorder %s16, 0
      %p64 = por %p62, %p63
      %s65 = ssub.s32 %s19, %s28
      %s66 = ssub.s32 %s18, %s32
      %s67 = sor.u32 %s65, %s66
      %p68 = scmp.eq.s32.totalorder %s67, 0
      %s70 = sadd.s32 %s69, 1
      %s71 = scalar_select %p68, %s69, %s70
      %p74 = pneg %p68
      %p75 = scmp.eq.s32.totalorder %s10, 8
      %p76 = por %p74, %p75
      %p77 = scmp.ne.s32.totalorder %s69, %s72
      %p78 = scmp.eq.s32.totalorder %s10, 0
      %p79 = por %p77, %p78
      %p80 = scmp.ne.s32.totalorder %s69, %s72
      %p81 = scmp.eq.s32.totalorder %s15, 8
      %p82 = por %p80, %p81
      %p83 = scmp.ne.s32.totalorder %s72, %s73
      %p84 = scmp.eq.s32.totalorder %s15, 0
      %p85 = por %p83, %p84
      %p86 = scmp.ne.s32.totalorder %s72, %s73
      %p87 = scmp.eq.s32.totalorder %s16, 8
      %p88 = por %p86, %p87
      %p90 = scmp.ne.s32.totalorder %s73, %s89
      %p91 = scmp.eq.s32.totalorder %s16, 0
      %p92 = por %p90, %p91
      %s93 = ssub.s32 %s18, %s32
      %p94 = scmp.eq.s32.totalorder %s93, 0
      %s96 = sadd.s32 %s95, 1
      %s97 = scalar_select %p94, %s95, %s96
      %p100 = pneg %p94
      %p101 = scmp.eq.s32.totalorder %s10, 8
      %p102 = por %p100, %p101
      %p103 = scmp.ne.s32.totalorder %s95, %s98
      %p104 = scmp.eq.s32.totalorder %s10, 0
      %p105 = por %p103, %p104
      %p106 = scmp.ne.s32.totalorder %s95, %s98
      %p107 = scmp.eq.s32.totalorder %s15, 8
      %p108 = por %p106, %p107
      %p109 = scmp.ne.s32.totalorder %s98, %s99
      %p110 = scmp.eq.s32.totalorder %s15, 0
      %p111 = por %p109, %p110
      %p112 = scmp.ne.s32.totalorder %s98, %s99
      %p113 = scmp.eq.s32.totalorder %s16, 8
      %p114 = por %p112, %p113
      %p116 = scmp.ne.s32.totalorder %s99, %s115
      %p117 = scmp.eq.s32.totalorder %s16, 0
      %p118 = por %p116, %p117
      %s119 = ssub.s32 %s17, %s36
      %s120 = ssub.s32 %s18, %s32
      %s121 = sor.u32 %s119, %s120
      %p122 = scmp.eq.s32.totalorder %s121, 0
      %s124 = sadd.s32 %s123, 1
      %s125 = scalar_select %p122, %s123, %s124
      %p128 = pneg %p122
      %p129 = scmp.eq.s32.totalorder %s10, 8
      %p130 = por %p128, %p129
      %p131 = scmp.ne.s32.totalorder %s123, %s126
      %p132 = scmp.eq.s32.totalorder %s10, 0
      %p133 = por %p131, %p132
      %p134 = scmp.ne.s32.totalorder %s123, %s126
      %p135 = scmp.eq.s32.totalorder %s15, 8
      %p136 = por %p134, %p135
      %p137 = scmp.ne.s32.totalorder %s126, %s127
      %p138 = scmp.eq.s32.totalorder %s15, 0
      %p139 = por %p137, %p138
      %p140 = scmp.ne.s32.totalorder %s126, %s127
      %p141 = scmp.eq.s32.totalorder %s16, 8
      %p142 = por %p140, %p141
      %p144 = scmp.ne.s32.totalorder %s127, %s143
      %p145 = scmp.eq.s32.totalorder %s16, 0
      %p146 = por %p144, %p145
      %s147 = ssub.s32 %s17, %s36
      %s148 = ssub.s32 %s18, %s32
      %s149 = sor.u32 %s147, %s148
      %p150 = scmp.eq.s32.totalorder %s149, 0
      %s152 = sadd.s32 %s151, 1
      %s153 = scalar_select %p150, %s151, %s152
      %p156 = pneg %p150
      %p157 = scmp.eq.s32.totalorder %s10, 8
      %p158 = por %p156, %p157
      %p159 = scmp.ne.s32.totalorder %s151, %s154
      %p160 = scmp.eq.s32.totalorder %s10, 0
      %p161 = por %p159, %p160
      %p162 = scmp.ne.s32.totalorder %s151, %s154
      %p163 = scmp.eq.s32.totalorder %s15, 8
      %p164 = por %p162, %p163
      %p165 = scmp.ne.s32.totalorder %s154, %s155
      %p166 = scmp.eq.s32.totalorder %s15, 0
      %p167 = por %p165, %p166
      %p168 = scmp.ne.s32.totalorder %s154, %s155
      %p169 = scmp.eq.s32.totalorder %s16, 8
      %p170 = por %p168, %p169
      %p172 = scmp.ne.s32.totalorder %s155, %s171
      %p173 = scmp.eq.s32.totalorder %s16, 0
      %p174 = por %p172, %p173
      %p175 = scmp.le.s32.totalorder 1, %s10
      %p176 = scmp.lt.s32.totalorder %s10, 10
      %p177 = pnand %p175, %p176
      %p178 = pneg %p177
      // Predicated region
      $region9: #{resnet_forward.19} parent=5 // pred_check
        _
      $region10: #{resnet_forward.19} parent=5 // pred_check_branch
        %180 = sbr.rel (%p177) target = $region12
      $region11: #{resnet_forward.19} parent=5 // pred_region
        %s181 = ssub.s32 %s10, 1
        // Predicated region
        $region13: #{resnet_forward.19} parent=11 // pred_check
          %p182 = pneg %p111
        $region14: #{resnet_forward.19} parent=11 // pred_check_branch
          %184 = sbr.rel (%p182) target = $region16
        $region15: #{resnet_forward.19} parent=11 // pred_region
          %p185 = scmp.lt.s32.totalorder %s21, 0
          %s186 = scalar_select %p185, %s21, 0
          %s187 = scalar_lea.vmem %s2, %s186
        $region16: #{resnet_forward.19} parent=11 // pred_fallthru
          _
        // Predicated region
        $region17: #{resnet_forward.19} parent=11 // pred_check
          %p188 = pneg %p139
        $region18: #{resnet_forward.19} parent=11 // pred_check_branch
          %190 = sbr.rel (%p188) target = $region20
        $region19: #{resnet_forward.19} parent=11 // pred_region
          %s191 = smul.u32 4, %s20
          %p192 = scmp.lt.s32.totalorder %s191, 3
          %s193 = scalar_select %p192, %s191, 3
          %p194 = scmp.lt.s32.totalorder %s21, 0
          %s195 = scalar_select %p194, %s21, 0
          %s196 = sadd.s32 %s195, %s193
          %s197 = smul.addr %s196, 4
          %s198 = scalar_lea.vmem %s3, %s197
          %s199 = smul.u32 4, %s20
        $region20: #{resnet_forward.19} parent=11 // pred_fallthru
          _
      $region12: #{resnet_forward.19} parent=5 // pred_fallthru
        _
      %p200 = scmp.lt.s32.totalorder %s10, 9
      // Predicated region
      $region21: #{resnet_forward.19} parent=5 // pred_check
        %p201 = pneg %p200
      $region22: #{resnet_forward.19} parent=5 // pred_check_branch
        %203 = sbr.rel (%p201) target = $region24
      $region23: #{resnet_forward.19} parent=5 // pred_region
        // Predicated region
        $region25: #{resnet_forward.19} parent=23 // pred_check
          %p204 = pneg %p51
        $region26: #{resnet_forward.19} parent=23 // pred_check_branch
          %206 = sbr.rel (%p204) target = $region28
        $region27: #{resnet_forward.19} parent=23 // pred_region
          %s207 = sand.u32 %s41, 1
          %s208 = sand.u32 %s41, 1
          %s209 = smul.addr %s208, 16
          %s210 = scalar_lea.vmem [#allocation3], %s209
          %s211 = smul.u32 4, %s17
          %s212 = smul.addr %s211, 9
          %s213 = sadd.s32 %s19, %s212
          %s214 = smul.addr %s213, 4
          %s215 = scalar_lea.vmem %s0, %s214
          // Predicated region
          $region29: #{resnet_forward.19} parent=27 // pred_check
            _
          $region30: #{resnet_forward.19} parent=27 // pred_check_branch
            %217 = sbr.rel (0) target = $region32
          $region31: #{resnet_forward.19} parent=27 // pred_region
            // Predicated region
            $region33: #{resnet_forward.19} parent=31 // pred_check
              _
            $region34: #{resnet_forward.19} parent=31 // pred_check_branch
              %219 = sbr.rel target = $region36
            $region35: #{resnet_forward.19} parent=31 // pred_region
              // Predicated region
              $region48: #{resnet_forward.19} parent=35 // pred_check
                _
              $region49: #{resnet_forward.19} parent=35 // pred_check_branch
                %240 = sbr.rel (0) target = $region51
              $region50: #{resnet_forward.19} parent=35 // pred_region
                loop: start=0, step=1, limit=1
                $region52: #{resnet_forward.19} parent=50 // loop_pre_header
                  _
                $region53: #{resnet_forward.19} parent=50 // loop_header
                  %s242 = sphi 0, %s246
                  %p243 = scmp.ge.s32.totalorder %s242, 1
                  %s247 = sphi %s215, %s215
                  %s248 = sphi %s210, %s210
                $region54: #{resnet_forward.19} parent=50 // loop_header_branch
                  %245 = sbr.rel (%p243) target = $region58
                $region55: #{resnet_forward.19} parent=50 // loop_body
                  _
                $region56: #{resnet_forward.19} parent=50 // loop_footer
                  %s246 = sadd.s32 1, %s242
                $region57: #{resnet_forward.19} parent=50 // loop_footer_branch
                  %241 = sbr.rel target = $region53
                $region58: #{resnet_forward.19} parent=50 // loop_exit
                  _
                loop: start=0, step=1, limit=1
                $region59: #{resnet_forward.19} parent=50 // loop_pre_header
                  _
                $region60: #{resnet_forward.19} parent=50 // loop_header
                  %s251 = sphi 0, %s255
                  %p252 = scmp.ge.s32.totalorder %s251, 1
                  %s256 = sphi %s215, %s215
                  %s257 = sphi %s210, %s210
                $region61: #{resnet_forward.19} parent=50 // loop_header_branch
                  %254 = sbr.rel (%p252) target = $region65
                $region62: #{resnet_forward.19} parent=50 // loop_body
                  %v258 = vld [vmem:[%s256] sm:$0xf]
                  %259 = vst [vmem:[%s257] sm:$0xf] %v258
                  %v260 = vld [vmem:[%s256 + $0x24] sm:$0xf]
                  %261 = vst [vmem:[%s257 + $0x4] sm:$0xf] %v260
                  %v262 = vld [vmem:[%s256 + $0x48] sm:$0xf]
                  %263 = vst [vmem:[%s257 + $0x8] sm:$0xf] %v262
                  %v264 = vld [vmem:[%s256 + $0x6c] sm:$0xf]
                  %265 = vst [vmem:[%s257 + $0xc] sm:$0xf] %v264
                $region63: #{resnet_forward.19} parent=50 // loop_footer
                  %s255 = sadd.s32 1, %s251
                $region64: #{resnet_forward.19} parent=50 // loop_footer_branch
                  %250 = sbr.rel target = $region60
                $region65: #{resnet_forward.19} parent=50 // loop_exit
                  _
              $region51: #{resnet_forward.19} parent=35 // pred_fallthru
                _
            $region36: #{resnet_forward.19} parent=31 // pred_fallthru
              _
            // Predicated region
            $region37: #{resnet_forward.19} parent=31 // pred_check
              _
            $region38: #{resnet_forward.19} parent=31 // pred_check_branch
              %221 = sbr.rel (0) target = $region40
            $region39: #{resnet_forward.19} parent=31 // pred_region
              loop: start=0, step=1, limit=1
              $region41: #{resnet_forward.19} parent=39 // loop_pre_header
                _
              $region42: #{resnet_forward.19} parent=39 // loop_header
                %s224 = sphi 0, %s228
                %p225 = scmp.ge.s32.totalorder %s224, 1
                %s229 = sphi %s215, %s215
                %s230 = sphi %s210, %s210
              $region43: #{resnet_forward.19} parent=39 // loop_header_branch
                %227 = sbr.rel (%p225) target = $region47
              $region44: #{resnet_forward.19} parent=39 // loop_body
                %v231 = vld [vmem:[%s229] sm:$0xf]
                %232 = vst [vmem:[%s230] sm:$0xf] %v231
                %v233 = vld [vmem:[%s229 + $0x24] sm:$0xf]
                %234 = vst [vmem:[%s230 + $0x4] sm:$0xf] %v233
                %v235 = vld [vmem:[%s229 + $0x48] sm:$0xf]
                %236 = vst [vmem:[%s230 + $0x8] sm:$0xf] %v235
                %v237 = vld [vmem:[%s229 + $0x6c] sm:$0xf]
                %238 = vst [vmem:[%s230 + $0xc] sm:$0xf] %v237
              $region45: #{resnet_forward.19} parent=39 // loop_footer
                %s228 = sadd.s32 1, %s224
              $region46: #{resnet_forward.19} parent=39 // loop_footer_branch
                %223 = sbr.rel target = $region42
              $region47: #{resnet_forward.19} parent=39 // loop_exit
                _
            $region40: #{resnet_forward.19} parent=31 // pred_fallthru
              _
          $region32: #{resnet_forward.19} parent=27 // pred_fallthru
            _
          %266 = vnop
        $region28: #{resnet_forward.19} parent=23 // pred_fallthru
          _
        // Predicated region
        $region66: #{resnet_forward.19} parent=23 // pred_check
          %p267 = pneg %p79
        $region67: #{resnet_forward.19} parent=23 // pred_check_branch
          %269 = sbr.rel (%p267) target = $region69
        $region68: #{resnet_forward.19} parent=23 // pred_region
          %s270 = smul.u32 16, %s19
          %p271 = scmp.lt.s32.totalorder %s270, 143
          %s272 = scalar_select %p271, %s270, 143
          %p273 = scmp.lt.s32.totalorder %s18, 0
          %s274 = scalar_select %p273, %s18, 0
          %s275 = sadd.s32 %s274, %s272
          %s276 = smul.addr %s275, 4
          %s277 = scalar_lea.vmem %s1, %s276
          %s278 = smul.u32 16, %s19
        $region69: #{resnet_forward.19} parent=23 // pred_fallthru
          _
      $region24: #{resnet_forward.19} parent=5 // pred_fallthru
        _
      %p279 = scmp.le.s32.totalorder 1, %s10
      %p280 = scmp.lt.s32.totalorder %s10, 10
      %p281 = pnand %p279, %p280
      %p282 = pneg %p281
      // Predicated region
      $region70: #{resnet_forward.19} parent=5 // pred_check
        _
      $region71: #{resnet_forward.19} parent=5 // pred_check_branch
        %284 = sbr.rel (%p281) target = $region73
      $region72: #{resnet_forward.19} parent=5 // pred_region
        %s285 = ssub.s32 %s10, 1
        %s286 = sand.u32 %s44, 1
        %s287 = sand.u32 %s44, 1
        %s288 = smul.addr %s287, 16
        %s289 = scalar_lea.vmem [#allocation3], %s288
        // Predicated region
        $region74: #{resnet_forward.19} parent=72 // pred_check
          %p290 = pneg %p57
        $region75: #{resnet_forward.19} parent=72 // pred_check_branch
          %292 = sbr.rel (%p290) target = $region77
        $region76: #{resnet_forward.19} parent=72 // pred_region
          _
        $region77: #{resnet_forward.19} parent=72 // pred_fallthru
          _
        %s293 = sand.u32 %s44, 1
        %s294 = sand.u32 %s44, 1
        %s295 = smul.addr %s294, 16
        %s296 = scalar_lea.vmem [#allocation3], %s295
        %p297 = pneg %p57
        %p298 = pneg %p54
        %s299 = smul.u32 16, %s22
        %p300 = scmp.lt.s32.totalorder %s299, 143
        %s301 = scalar_select %p300, %s299, 143
        %p302 = scmp.lt.s32.totalorder %s21, 0
        %s303 = scalar_select %p302, %s21, 0
        %s304 = sadd.s32 %s303, %s301
        %s305 = smul.addr %s304, 4
        %s306 = scalar_lea.vmem %s1, %s305
        %p307 = pneg %p85
        %p308 = pneg %p82
        %p309 = scmp.lt.s32.totalorder %s21, 0
        %s310 = scalar_select %p309, %s21, 0
        %s311 = scalar_lea.vmem %s2, %s310
        %p312 = pneg %p111
        %p313 = pneg %p108
        %s314 = smul.u32 4, %s20
        %p315 = scmp.lt.s32.totalorder %s314, 3
        %s316 = scalar_select %p315, %s314, 3
        %p317 = scmp.lt.s32.totalorder %s21, 0
        %s318 = scalar_select %p317, %s21, 0
        %s319 = sadd.s32 %s318, %s316
        %s320 = smul.addr %s319, 4
        %s321 = scalar_lea.vmem %s3, %s320
        %p322 = pneg %p139
        %p323 = pneg %p136
        %p324 = pneg %p167
        %p325 = pneg %p164
        %s326 = smul.u32 4, %s20
        %p327 = scmp.lt.s32.totalorder %s326, 3
        %s328 = scalar_select %p327, %s326, 3
        %p329 = scmp.lt.s32.totalorder %s21, 0
        %s330 = scalar_select %p329, %s21, 0
        %s331 = sadd.s32 %s330, %s328
        %s332 = smul.addr %s331, 4
        %s333 = scalar_lea.vmem %s4, %s332
        %s334 = smul.u32 4, %s20
        %s335 = smul.u32 16, %s22
        %p336 = scmp.lt.s32.totalorder %s335, 143
        %s337 = scalar_select %p336, %s335, 143
        %p338 = scmp.lt.s32.totalorder %s21, 0
        %s339 = scalar_select %p338, %s21, 0
        %s340 = sadd.s32 %s339, %s337
        %s341 = smul.addr %s340, 4
        %s342 = scalar_lea.vmem %s1, %s341
        %s343 = smul.u32 16, %s22
        %p344 = scmp.lt.s32.totalorder %s21, 0
        %s345 = scalar_select %p344, %s21, 0
        %s346 = scalar_lea.vmem %s2, %s345
        %s347 = smul.u32 4, %s20
        %p348 = scmp.lt.s32.totalorder %s347, 3
        %s349 = scalar_select %p348, %s347, 3
        %p350 = scmp.lt.s32.totalorder %s21, 0
        %s351 = scalar_select %p350, %s21, 0
        %s352 = sadd.s32 %s351, %s349
        %s353 = smul.addr %s352, 4
        %s354 = scalar_lea.vmem %s3, %s353
        %s355 = smul.u32 4, %s20
        %s356 = smul.u32 4, %s20
        %p357 = scmp.lt.s32.totalorder %s356, 3
        %s358 = scalar_select %p357, %s356, 3
        %p359 = scmp.lt.s32.totalorder %s21, 0
        %s360 = scalar_select %p359, %s21, 0
        %s361 = sadd.s32 %s360, %s358
        %s362 = smul.addr %s361, 4
        %s363 = scalar_lea.vmem %s4, %s362
        %s364 = smul.u32 4, %s20
        %p366 = scmp.eq.s32.totalorder %s22, 0
        // Predicated region
        $region78: #{resnet_forward.19} parent=72 // pred_check
          %p367 = pneg %p366
        $region79: #{resnet_forward.19} parent=72 // pred_check_branch
          %369 = sbr.rel (%p367) target = $region81
        $region80: #{resnet_forward.19} parent=72 // pred_region
          %370 = vst [vmem:[#allocation2] sm:$0xff] 0.0
          %371 = vst [vmem:[#allocation2 + $0x8] sm:$0xff] 0.0
          %372 = vst [vmem:[#allocation2 + $0x10] sm:$0xff] 0.0
          %373 = vst [vmem:[#allocation2 + $0x18] sm:$0xff] 0.0
        $region81: #{resnet_forward.19} parent=72 // pred_fallthru
          _
        %v374 = vld [vmem:[#allocation2] sm:$0xff]
        %v375 = vld [vmem:[#allocation2 + $0x8] sm:$0xff]
        %v376 = vld [vmem:[#allocation2 + $0x10] sm:$0xff]
        %v377 = vld [vmem:[#allocation2 + $0x18] sm:$0xff]
        %v378 = vld [vmem:[%s289] sm:$0xf]
        %v379 = vld [vmem:[%s289 + $0x4] sm:$0xf]
        %v380 = vld [vmem:[%s289 + $0x8] sm:$0xf]
        %v381 = vld [vmem:[%s289 + $0xc] sm:$0xf]
        %v382 = vld [vmem:[%s342] sm:$0xf]
        %v383 = vld [vmem:[%s342 + $0x4] sm:$0xf]
        %v384 = vld [vmem:[%s342 + $0x8] sm:$0xf]
        %v385 = vld [vmem:[%s342 + $0xc] sm:$0xf]
        %v386 = vld [vmem:[%s342 + $0x10] sm:$0xf]
        %v387 = vld [vmem:[%s342 + $0x14] sm:$0xf]
        %v388 = vld [vmem:[%s342 + $0x18] sm:$0xf]
        %v389 = vld [vmem:[%s342 + $0x1c] sm:$0xf]
        %v390 = vld [vmem:[%s342 + $0x20] sm:$0xf]
        %v391 = vld [vmem:[%s342 + $0x24] sm:$0xf]
        %v392 = vld [vmem:[%s342 + $0x28] sm:$0xf]
        %v393 = vld [vmem:[%s342 + $0x2c] sm:$0xf]
        %v394 = vld [vmem:[%s342 + $0x30] sm:$0xf]
        %v395 = vld [vmem:[%s342 + $0x34] sm:$0xf]
        %v396 = vld [vmem:[%s342 + $0x38] sm:$0xf]
        %v397 = vld [vmem:[%s342 + $0x3c] sm:$0xf]
        %v402 = vunpack.c.l.b16 %v378
        %v403 = vunpack.c.l.b16 %v379
        %v404 = vunpack.c.l.b16 %v380
        %v405 = vunpack.c.l.b16 %v381
        %v406 = vpack.c.b16 %v403, %v402
        %v407 = vpack.c.b16 %v405, %v404
        %v426 = vunpack.c.l.b16 %v382
        %v427 = vunpack.c.l.b16 %v383
        %v428 = vunpack.c.l.b16 %v384
        %v429 = vunpack.c.l.b16 %v385
        %v430 = vunpack.c.l.b16 %v386
        %v431 = vunpack.c.l.b16 %v387
        %v432 = vunpack.c.l.b16 %v388
        %v433 = vunpack.c.l.b16 %v389
        %v434 = vunpack.c.l.b16 %v390
        %v435 = vunpack.c.l.b16 %v391
        %v436 = vunpack.c.l.b16 %v392
        %v437 = vunpack.c.l.b16 %v393
        %v438 = vunpack.c.l.b16 %v394
        %v439 = vunpack.c.l.b16 %v395
        %v440 = vunpack.c.l.b16 %v396
        %v441 = vunpack.c.l.b16 %v397
        %v442 = vpack.c.b16 %v427, %v426
        %v443 = vpack.c.b16 %v429, %v428
        %v444 = vpack.c.b16 %v431, %v430
        %v445 = vpack.c.b16 %v433, %v432
        %v446 = vpack.c.b16 %v435, %v434
        %v447 = vpack.c.b16 %v437, %v436
        %v448 = vpack.c.b16 %v439, %v438
        %v449 = vpack.c.b16 %v441, %v440
        %458 = vmatprep.subr.bf16.mxu0 0
        %459 = vmatpush1.bf16.msra.mxu0 %v442
        %460 = vmatprep.subr.bf16.mxu0 0
        %461 = vmatpush1.bf16.msra.mxu0 %v443
        %462 = vmatprep.subr.bf16.mxu0 0
        %463 = vmatpush1.bf16.msra.mxu0 %v444
        %464 = vmatprep.subr.bf16.mxu0 0
        %465 = vmatpush1.bf16.msra.mxu0 %v445
        %466 = vmatprep.subr.bf16.mxu0 0
        %467 = vmatpush1.bf16.msra.mxu0 %v446
        %468 = vmatprep.subr.bf16.mxu0 0
        %469 = vmatpush1.bf16.msra.mxu0 %v447
        %470 = vmatprep.subr.bf16.mxu0 0
        %471 = vmatpush1.bf16.msra.mxu0 %v448
        %472 = vmatprep.subr.bf16.mxu0 0
        %473 = vmatpush1.bf16.msra.mxu0 %v449
        %474 = vmatprep.subr.bf16.mxu0 0
        %475 = vmatpush1.bf16.msra.mxu0 0
        %476 = vmatprep.subr.bf16.mxu0 0
        %477 = vmatpush1.bf16.msra.mxu0 0
        %478 = vmatprep.subr.bf16.mxu0 0
        %479 = vmatpush1.bf16.msra.mxu0 0
        %480 = vmatprep.subr.bf16.mxu0 0
        %481 = vmatpush1.bf16.msra.mxu0 0
        %482 = vmatprep.subr.bf16.mxu0 0
        %483 = vmatpush1.bf16.msra.mxu0 0
        %484 = vmatprep.subr.bf16.mxu0 0
        %485 = vmatpush1.bf16.msra.mxu0 0
        %486 = vmatprep.subr.bf16.mxu0 0
        %487 = vmatpush1.bf16.msra.mxu0 0
        %488 = vmatprep.subr.bf16.mxu0 0
        %489 = vmatpush1.bf16.msra.mxu0 0
        %490 = vmatprep.mubr.bf16.mxu0 0
        %491 = vmatmul.mubr.bf16.gmra.mrb[0].mxu0 %v406
        %v492 = vpop.f32.mrb[0].mxu0
        %v493 = vadd.f32 0.0, %v492
        %v494 = vpop.f32.mrb[0].mxu0
        %v495 = vpop.f32.mrb[0].mxu0
        %v496 = vadd.f32 0.0, %v495
        %v497 = vpop.f32.mrb[0].mxu0
        %498 = vmatprep.mubr.bf16.mxu0 0
        %499 = vmatmul.mubr.bf16.gmra.mrb[0].mxu0 %v407
        %v500 = vpop.f32.mrb[0].mxu0
        %v501 = vadd.f32 0.0, %v500
        %v502 = vpop.f32.mrb[0].mxu0
        %v503 = vpop.f32.mrb[0].mxu0
        %v504 = vadd.f32 0.0, %v503
        %v505 = vpop.f32.mrb[0].mxu0
        %506 = vdwg.mxu0
        %v507 = vadd.f32 %v374, %v493
        %v508 = vadd.f32 %v375, %v496
        %v509 = vadd.f32 %v376, %v501
        %v510 = vadd.f32 %v377, %v504
        %511 = vst [vmem:[#allocation2] sm:$0xff] %v507
        %512 = vst [vmem:[#allocation2 + $0x8] sm:$0xff] %v508
        %513 = vst [vmem:[#allocation2 + $0x10] sm:$0xff] %v509
        %514 = vst [vmem:[#allocation2 + $0x18] sm:$0xff] %v510
        %p515 = scmp.eq.s32.totalorder %s22, 8
        // Predicated region
        $region82: #{resnet_forward.19} parent=72 // pred_check
          %p516 = pneg %p515
        $region83: #{resnet_forward.19} parent=72 // pred_check_branch
          %518 = sbr.rel (%p516) target = $region85
        $region84: #{resnet_forward.19} parent=72 // pred_region
          %v519 = vld [vmem:[#allocation2] sm:$0xff]
          %v520 = vld [vmem:[#allocation2 + $0x8] sm:$0xff]
          %v521 = vld [vmem:[#allocation2 + $0x10] sm:$0xff]
          %v522 = vld [vmem:[#allocation2 + $0x18] sm:$0xff]
          %v523 = vld [vmem:[%s346] sm:$0x1]
          %v525 = vlaneseq
          %v526 = vshrl.u32 %v525, 7
          %v527 = vsub.s32 0, %v526
          %v528 = vrot.slane %v523, %v527
          %v530 = vadd.f32 %v519, %v528
          %v531 = vadd.f32 %v520, %v528
          %v532 = vadd.f32 %v521, %v528
          %v533 = vadd.f32 %v522, %v528
          %v534 = vld [vmem:[%s354] sm:$0xf]
          %v535 = vld [vmem:[%s354 + $0x4] sm:$0xf]
          %v536 = vld [vmem:[%s354 + $0x8] sm:$0xf]
          %v537 = vld [vmem:[%s354 + $0xc] sm:$0xf]
          %v538 = vunpack.c.l.bf16 %v534
          %v539 = vunpack.c.l.bf16 %v535
          %v540 = vunpack.c.l.bf16 %v536
          %v541 = vunpack.c.l.bf16 %v537
          %v542 = vadd.f32 %v530, %v538
          %v543 = vadd.f32 %v531, %v539
          %v544 = vadd.f32 %v532, %v540
          %v545 = vadd.f32 %v533, %v541
          %v546 = vmax.f32 %v542, 0.0
          %v547 = vmax.f32 %v543, 0.0
          %v548 = vmax.f32 %v544, 0.0
          %v549 = vmax.f32 %v545, 0.0
          %v550 = vpack.c.bf16 %v547, %v546
          %v551 = vpack.c.bf16 %v549, %v548
          %v554 = vunpack.c.l.b16 %v550
          %v555 = vunpack.c.h.b16 %v550
          %v556 = vunpack.c.l.b16 %v551
          %v557 = vunpack.c.h.b16 %v551
          %v558 = vpack.c.b16 %v554, %v554
          %v559 = vpack.c.b16 %v555, %v555
          %v560 = vpack.c.b16 %v556, %v556
          %v561 = vpack.c.b16 %v557, %v557
          %566 = vst [vmem:[%s363] sm:$0xf] %v558
          %567 = vst [vmem:[%s363 + $0x4] sm:$0xf] %v559
          %568 = vst [vmem:[%s363 + $0x8] sm:$0xf] %v560
          %569 = vst [vmem:[%s363 + $0xc] sm:$0xf] %v561
        $region85: #{resnet_forward.19} parent=72 // pred_fallthru
          _
        %s570 = smul.u32 4, %s20
        %p571 = scmp.lt.s32.totalorder %s570, 3
        %s572 = scalar_select %p571, %s570, 3
        %p573 = scmp.lt.s32.totalorder %s21, 0
        %s574 = scalar_select %p573, %s21, 0
        %s575 = sadd.s32 %s574, %s572
        %s576 = smul.addr %s575, 4
        %s577 = scalar_lea.vmem %s4, %s576
        // Predicated region
        $region86: #{resnet_forward.19} parent=72 // pred_check
          %p578 = pneg %p164
        $region87: #{resnet_forward.19} parent=72 // pred_check_branch
          %580 = sbr.rel (%p578) target = $region89
        $region88: #{resnet_forward.19} parent=72 // pred_region
          %s581 = smul.u32 4, %s20
        $region89: #{resnet_forward.19} parent=72 // pred_fallthru
          _
        // Predicated region
        $region90: #{resnet_forward.19} parent=72 // pred_check
          %p582 = pneg %p164
        $region91: #{resnet_forward.19} parent=72 // pred_check_branch
          %584 = sbr.rel (%p582) target = $region93
        $region92: #{resnet_forward.19} parent=72 // pred_region
          %s585 = smul.u32 4, %s20
          %p586 = scmp.lt.s32.totalorder %s585, 3
          %s587 = scalar_select %p586, %s585, 3
          %p588 = scmp.lt.s32.totalorder %s21, 0
          %s589 = scalar_select %p588, %s21, 0
          %s590 = sadd.s32 %s589, %s587
          %s591 = smul.addr %s590, 4
          %s592 = scalar_lea.vmem %s4, %s591
        $region93: #{resnet_forward.19} parent=72 // pred_fallthru
          _
      $region73: #{resnet_forward.19} parent=5 // pred_fallthru
        _
      %p593 = scmp.le.s32.totalorder 2, %s10
      // Predicated region
      $region94: #{resnet_forward.19} parent=5 // pred_check
        %p594 = pneg %p593
      $region95: #{resnet_forward.19} parent=5 // pred_check_branch
        %596 = sbr.rel (%p594) target = $region97
      $region96: #{resnet_forward.19} parent=5 // pred_region
        %s597 = ssub.s32 %s10, 2
      $region97: #{resnet_forward.19} parent=5 // pred_fallthru
        _
    $region6: #{resnet_forward.19} parent=1 // loop_footer
      %s14 = sadd.s32 1, %s10
    $region7: #{resnet_forward.19} parent=1 // loop_footer_branch
      %9 = sbr.rel target = $region3
    $region8: #{resnet_forward.19} parent=1 // loop_exit
      _

// kernel: resnet_forward.18
$region0: #{resnet_forward.18}
  #allocation0 [shape = 'u32[]', space=smem, size = 0x4, offset = 0x4, fixed_abs, tag = 'smem constant byte address 0x4 - core index']
  #allocation1 [shape = 'u32[144,128]{1,0:T(1,128)}', space=vmem, size = 0x12000, scoped, tag = 'internal scratch']
  #allocation2 [shape = 'f32[32,128]{1,0:T(8,128)}', space=vmem, size = 0x4000, scoped, tag = 'scratch operand']
  %s0 = inlined_call_operand.vmem [shape: bf16[32,128], index: 0, kind: input, shape index: {}]
  %s1 = inlined_call_operand.vmem [shape: bf16[128,128], index: 1, kind: input, shape index: {}]
  %s2 = inlined_call_operand.vmem [shape: f32[1,128], index: 2, kind: input, shape index: {}]
  %s3 = inlined_call_operand.vmem [shape: bf16[32,128], index: 3, kind: output, shape index: {}]
  %s4 = sld [smem:[#allocation0]]
  $region30: #{resnet_forward.18} parent=0
    _
  %s6 = ssub.s32 1, %s4
  %s7 = scalar_select 0, %s6, %s4
  // Predicated region
  $region2: #{resnet_forward.18} parent=0 // pred_check
    _
  $region3: #{resnet_forward.18} parent=0 // pred_check_branch
    %9 = sbr.rel (0) target = $region5
  $region4: #{resnet_forward.18} parent=0 // pred_region
    _
  $region5: #{resnet_forward.18} parent=0 // pred_fallthru
    _
  // Predicated region
  $region6: #{resnet_forward.18} parent=0 // pred_check
    _
  $region7: #{resnet_forward.18} parent=0 // pred_check_branch
    %11 = sbr.rel (0) target = $region9
  $region8: #{resnet_forward.18} parent=0 // pred_region
    _
  $region9: #{resnet_forward.18} parent=0 // pred_fallthru
    _
  // Predicated region
  $region10: #{resnet_forward.18} parent=0 // pred_check
    _
  $region11: #{resnet_forward.18} parent=0 // pred_check_branch
    %13 = sbr.rel (0) target = $region13
  $region12: #{resnet_forward.18} parent=0 // pred_region
    _
  $region13: #{resnet_forward.18} parent=0 // pred_fallthru
    _
  %p15 = scmp.eq.s32.totalorder 0, 0
  // Predicated region
  $region14: #{resnet_forward.18} parent=0 // pred_check
    %p16 = pneg %p15
  $region15: #{resnet_forward.18} parent=0 // pred_check_branch
    %18 = sbr.rel (%p16) target = $region17
  $region16: #{resnet_forward.18} parent=0 // pred_region
    %19 = vst [vmem:[#allocation2] sm:$0xff] 0.0
    %20 = vst [vmem:[#allocation2 + $0x8] sm:$0xff] 0.0
    %21 = vst [vmem:[#allocation2 + $0x10] sm:$0xff] 0.0
    %22 = vst [vmem:[#allocation2 + $0x18] sm:$0xff] 0.0
  $region17: #{resnet_forward.18} parent=0 // pred_fallthru
    _
  %v23 = vld [vmem:[#allocation2] sm:$0xff]
  %v24 = vld [vmem:[#allocation2 + $0x8] sm:$0xff]
  %v25 = vld [vmem:[#allocation2 + $0x10] sm:$0xff]
  %v26 = vld [vmem:[#allocation2 + $0x18] sm:$0xff]
  %v27 = vld [vmem:[%s0] sm:$0xf]
  %v28 = vld [vmem:[%s0 + $0x4] sm:$0xf]
  %v29 = vld [vmem:[%s0 + $0x8] sm:$0xf]
  %v30 = vld [vmem:[%s0 + $0xc] sm:$0xf]
  %v31 = vld [vmem:[%s1] sm:$0xf]
  %v32 = vld [vmem:[%s1 + $0x4] sm:$0xf]
  %v33 = vld [vmem:[%s1 + $0x8] sm:$0xf]
  %v34 = vld [vmem:[%s1 + $0xc] sm:$0xf]
  %v35 = vld [vmem:[%s1 + $0x10] sm:$0xf]
  %v36 = vld [vmem:[%s1 + $0x14] sm:$0xf]
  %v37 = vld [vmem:[%s1 + $0x18] sm:$0xf]
  %v38 = vld [vmem:[%s1 + $0x1c] sm:$0xf]
  %v39 = vld [vmem:[%s1 + $0x20] sm:$0xf]
  %v40 = vld [vmem:[%s1 + $0x24] sm:$0xf]
  %v41 = vld [vmem:[%s1 + $0x28] sm:$0xf]
  %v42 = vld [vmem:[%s1 + $0x2c] sm:$0xf]
  %v43 = vld [vmem:[%s1 + $0x30] sm:$0xf]
  %v44 = vld [vmem:[%s1 + $0x34] sm:$0xf]
  %v45 = vld [vmem:[%s1 + $0x38] sm:$0xf]
  %v46 = vld [vmem:[%s1 + $0x3c] sm:$0xf]
  %v51 = vunpack.c.l.b16 %v27
  %v52 = vunpack.c.l.b16 %v28
  %v53 = vunpack.c.l.b16 %v29
  %v54 = vunpack.c.l.b16 %v30
  %v55 = vpack.c.b16 %v52, %v51
  %v56 = vpack.c.b16 %v54, %v53
  %v75 = vunpack.c.l.b16 %v31
  %v76 = vunpack.c.l.b16 %v32
  %v77 = vunpack.c.l.b16 %v33
  %v78 = vunpack.c.l.b16 %v34
  %v79 = vunpack.c.l.b16 %v35
  %v80 = vunpack.c.l.b16 %v36
  %v81 = vunpack.c.l.b16 %v37
  %v82 = vunpack.c.l.b16 %v38
  %v83 = vunpack.c.l.b16 %v39
  %v84 = vunpack.c.l.b16 %v40
  %v85 = vunpack.c.l.b16 %v41
  %v86 = vunpack.c.l.b16 %v42
  %v87 = vunpack.c.l.b16 %v43
  %v88 = vunpack.c.l.b16 %v44
  %v89 = vunpack.c.l.b16 %v45
  %v90 = vunpack.c.l.b16 %v46
  %v91 = vpack.c.b16 %v76, %v75
  %v92 = vpack.c.b16 %v78, %v77
  %v93 = vpack.c.b16 %v80, %v79
  %v94 = vpack.c.b16 %v82, %v81
  %v95 = vpack.c.b16 %v84, %v83
  %v96 = vpack.c.b16 %v86, %v85
  %v97 = vpack.c.b16 %v88, %v87
  %v98 = vpack.c.b16 %v90, %v89
  %107 = vmatprep.subr.bf16.mxu0 0
  %108 = vmatpush1.bf16.msra.mxu0 %v91
  %109 = vmatprep.subr.bf16.mxu0 0
  %110 = vmatpush1.bf16.msra.mxu0 %v92
  %111 = vmatprep.subr.bf16.mxu0 0
  %112 = vmatpush1.bf16.msra.mxu0 %v93
  %113 = vmatprep.subr.bf16.mxu0 0
  %114 = vmatpush1.bf16.msra.mxu0 %v94
  %115 = vmatprep.subr.bf16.mxu0 0
  %116 = vmatpush1.bf16.msra.mxu0 %v95
  %117 = vmatprep.subr.bf16.mxu0 0
  %118 = vmatpush1.bf16.msra.mxu0 %v96
  %119 = vmatprep.subr.bf16.mxu0 0
  %120 = vmatpush1.bf16.msra.mxu0 %v97
  %121 = vmatprep.subr.bf16.mxu0 0
  %122 = vmatpush1.bf16.msra.mxu0 %v98
  %123 = vmatprep.subr.bf16.mxu0 0
  %124 = vmatpush1.bf16.msra.mxu0 0
  %125 = vmatprep.subr.bf16.mxu0 0
  %126 = vmatpush1.bf16.msra.mxu0 0
  %127 = vmatprep.subr.bf16.mxu0 0
  %128 = vmatpush1.bf16.msra.mxu0 0
  %129 = vmatprep.subr.bf16.mxu0 0
  %130 = vmatpush1.bf16.msra.mxu0 0
  %131 = vmatprep.subr.bf16.mxu0 0
  %132 = vmatpush1.bf16.msra.mxu0 0
  %133 = vmatprep.subr.bf16.mxu0 0
  %134 = vmatpush1.bf16.msra.mxu0 0
  %135 = vmatprep.subr.bf16.mxu0 0
  %136 = vmatpush1.bf16.msra.mxu0 0
  %137 = vmatprep.subr.bf16.mxu0 0
  %138 = vmatpush1.bf16.msra.mxu0 0
  %139 = vmatprep.mubr.bf16.mxu0 0
  %140 = vmatmul.mubr.bf16.gmra.mrb[0].mxu0 %v55
  %v141 = vpop.f32.mrb[0].mxu0
  %v142 = vadd.f32 0.0, %v141
  %v143 = vpop.f32.mrb[0].mxu0
  %v144 = vpop.f32.mrb[0].mxu0
  %v145 = vadd.f32 0.0, %v144
  %v146 = vpop.f32.mrb[0].mxu0
  %147 = vmatprep.mubr.bf16.mxu0 0
  %148 = vmatmul.mubr.bf16.gmra.mrb[0].mxu0 %v56
  %v149 = vpop.f32.mrb[0].mxu0
  %v150 = vadd.f32 0.0, %v149
  %v151 = vpop.f32.mrb[0].mxu0
  %v152 = vpop.f32.mrb[0].mxu0
  %v153 = vadd.f32 0.0, %v152
  %v154 = vpop.f32.mrb[0].mxu0
  %155 = vdwg.mxu0
  %v156 = vadd.f32 %v23, %v142
  %v157 = vadd.f32 %v24, %v145
  %v158 = vadd.f32 %v25, %v150
  %v159 = vadd.f32 %v26, %v153
  %160 = vst [vmem:[#allocation2] sm:$0xff] %v156
  %161 = vst [vmem:[#allocation2 + $0x8] sm:$0xff] %v157
  %162 = vst [vmem:[#allocation2 + $0x10] sm:$0xff] %v158
  %163 = vst [vmem:[#allocation2 + $0x18] sm:$0xff] %v159
  // Predicated region
  $region18: #{resnet_forward.18} parent=0 // pred_check
    %p164 = pneg %p15
  $region19: #{resnet_forward.18} parent=0 // pred_check_branch
    %166 = sbr.rel (%p164) target = $region21
  $region20: #{resnet_forward.18} parent=0 // pred_region
    %v167 = vld [vmem:[#allocation2] sm:$0xff]
    %v168 = vld [vmem:[#allocation2 + $0x8] sm:$0xff]
    %v169 = vld [vmem:[#allocation2 + $0x10] sm:$0xff]
    %v170 = vld [vmem:[#allocation2 + $0x18] sm:$0xff]
    %v171 = vld [vmem:[%s2] sm:$0x1]
    %v173 = vlaneseq
    %v174 = vshrl.u32 %v173, 7
    %v175 = vsub.s32 0, %v174
    %v176 = vrot.slane %v171, %v175
    %v178 = vadd.f32 %v167, %v176
    %v179 = vadd.f32 %v168, %v176
    %v180 = vadd.f32 %v169, %v176
    %v181 = vadd.f32 %v170, %v176
    %v182 = vpack.c.bf16 %v179, %v178
    %v183 = vpack.c.bf16 %v181, %v180
    %v186 = vunpack.c.l.b16 %v182
    %v187 = vunpack.c.h.b16 %v182
    %v188 = vunpack.c.l.b16 %v183
    %v189 = vunpack.c.h.b16 %v183
    %v190 = vpack.c.b16 %v186, %v186
    %v191 = vpack.c.b16 %v187, %v187
    %v192 = vpack.c.b16 %v188, %v188
    %v193 = vpack.c.b16 %v189, %v189
    %198 = vst [vmem:[%s3] sm:$0xf] %v190
    %199 = vst [vmem:[%s3 + $0x4] sm:$0xf] %v191
    %200 = vst [vmem:[%s3 + $0x8] sm:$0xf] %v192
    %201 = vst [vmem:[%s3 + $0xc] sm:$0xf] %v193
  $region21: #{resnet_forward.18} parent=0 // pred_fallthru
    _
  // Predicated region
  $region22: #{resnet_forward.18} parent=0 // pred_check
    _
  $region23: #{resnet_forward.18} parent=0 // pred_check_branch
    %203 = sbr.rel (0) target = $region25
  $region24: #{resnet_forward.18} parent=0 // pred_region
    _
  $region25: #{resnet_forward.18} parent=0 // pred_fallthru
    _
  // Predicated region
  $region26: #{resnet_forward.18} parent=0 // pred_check
    _
  $region27: #{resnet_forward.18} parent=0 // pred_check_branch
    %205 = sbr.rel (0) target = $region29
  $region28: #{resnet_forward.18} parent=0 // pred_region
    _
  $region29: #{resnet_forward.18} parent=0 // pred_fallthru
    _

// kernel: resnet_forward.20
$region0: #{resnet_forward.20}
  #allocation0 [shape = 'u32[]', space=smem, size = 0x4, offset = 0x4, fixed_abs, tag = 'smem constant byte address 0x4 - core index']
  #allocation1 [shape = 'u32[144,128]{1,0:T(1,128)}', space=vmem, size = 0x12000, scoped, tag = 'internal scratch']
  #allocation2 [shape = 'f32[8,256]{1,0:T(8,128)}', space=vmem, size = 0x2000, scoped, tag = 'scratch operand']
  %s0 = inlined_call_operand.vmem [shape: bf16[8,1152], index: 0, kind: input, shape index: {}]
  %s1 = inlined_call_operand.vmem [shape: bf16[1152,256], index: 1, kind: input, shape index: {}]
  %s2 = inlined_call_operand.vmem [shape: f32[1,256], index: 2, kind: input, shape index: {}]
  %s3 = inlined_call_operand.vmem [shape: bf16[8,256], index: 3, kind: output, shape index: {}]
  %s4 = sld [smem:[#allocation0]]
  $region53: #{resnet_forward.20} parent=0
    _
  %s6 = ssub.s32 1, %s4
  %s7 = scalar_select 0, %s6, %s4
  loop: start=0, step=1, limit=11
  $region2: #{resnet_forward.20} parent=0 // loop_pre_header
    _
  $region3: #{resnet_forward.20} parent=0 // loop_header
    %s9 = sphi 0, %s13
    %p10 = scmp.ge.s32.totalorder %s9, 11
    %s16 = sphi 0, %s35
    %s17 = sphi 0, %s31
    %s18 = sphi 0, %s27
    %s19 = sphi 0, %s16
    %s20 = sphi 0, %s17
    %s21 = sphi 0, %s18
    %s22 = sphi 0, %s19
    %s23 = sphi 0, %s20
    %s24 = sphi 0, %s21
    %s40 = sphi 0, %s42
    %s43 = sphi 0, %s40
    %s44 = sphi 0, %s43
    %s60 = sphi 0, %s44
    %s68 = sphi 0, %s70
    %s71 = sphi 0, %s68
    %s72 = sphi 0, %s71
    %s88 = sphi 0, %s72
    %s94 = sphi 0, %s96
    %s97 = sphi 0, %s94
    %s98 = sphi 0, %s97
    %s114 = sphi 0, %s98
    %s122 = sphi 0, %s124
    %s125 = sphi 0, %s122
    %s126 = sphi 0, %s125
    %s142 = sphi 0, %s126
  $region4: #{resnet_forward.20} parent=0 // loop_header_branch
    %12 = sbr.rel (%p10) target = $region8
  $region5: #{resnet_forward.20} parent=0 // loop_body
    %s14 = ssub.s32 %s9, 1
    %s15 = ssub.s32 %s9, 2
    %s25 = sadd.s32 1, %s18
    %p26 = scmp.ge.s32.totalorder %s25, 9
    %s27 = scalar_select %p26, 0, %s25
    %s28 = sadd.s32 1, %s17
    %s29 = scalar_select %p26, %s28, %s17
    %p30 = scmp.ge.s32.totalorder %s29, 1
    %s31 = scalar_select %p30, 0, %s29
    %s32 = sadd.s32 1, %s16
    %s33 = scalar_select %p30, %s32, %s16
    %p34 = scmp.ge.s32.totalorder %s33, 1
    %s35 = scalar_select %p34, 0, %s33
    %s36 = ssub.s32 %s16, %s35
    %s37 = ssub.s32 %s18, %s27
    %s38 = sor.u32 %s36, %s37
    %p39 = scmp.eq.s32.totalorder %s38, 0
    %s41 = sadd.s32 %s40, 1
    %s42 = scalar_select %p39, %s40, %s41
    %p45 = pneg %p39
    %p46 = scmp.eq.s32.totalorder %s9, 8
    %p47 = por %p45, %p46
    %p48 = scmp.ne.s32.totalorder %s40, %s43
    %p49 = scmp.eq.s32.totalorder %s9, 0
    %p50 = por %p48, %p49
    %p51 = scmp.ne.s32.totalorder %s40, %s43
    %p52 = scmp.eq.s32.totalorder %s14, 8
    %p53 = por %p51, %p52
    %p54 = scmp.ne.s32.totalorder %s43, %s44
    %p55 = scmp.eq.s32.totalorder %s14, 0
    %p56 = por %p54, %p55
    %p57 = scmp.ne.s32.totalorder %s43, %s44
    %p58 = scmp.eq.s32.totalorder %s15, 8
    %p59 = por %p57, %p58
    %p61 = scmp.ne.s32.totalorder %s44, %s60
    %p62 = scmp.eq.s32.totalorder %s15, 0
    %p63 = por %p61, %p62
    %s64 = ssub.s32 %s18, %s27
    %s65 = ssub.s32 %s17, %s31
    %s66 = sor.u32 %s64, %s65
    %p67 = scmp.eq.s32.totalorder %s66, 0
    %s69 = sadd.s32 %s68, 1
    %s70 = scalar_select %p67, %s68, %s69
    %p73 = pneg %p67
    %p74 = scmp.eq.s32.totalorder %s9, 8
    %p75 = por %p73, %p74
    %p76 = scmp.ne.s32.totalorder %s68, %s71
    %p77 = scmp.eq.s32.totalorder %s9, 0
    %p78 = por %p76, %p77
    %p79 = scmp.ne.s32.totalorder %s68, %s71
    %p80 = scmp.eq.s32.totalorder %s14, 8
    %p81 = por %p79, %p80
    %p82 = scmp.ne.s32.totalorder %s71, %s72
    %p83 = scmp.eq.s32.totalorder %s14, 0
    %p84 = por %p82, %p83
    %p85 = scmp.ne.s32.totalorder %s71, %s72
    %p86 = scmp.eq.s32.totalorder %s15, 8
    %p87 = por %p85, %p86
    %p89 = scmp.ne.s32.totalorder %s72, %s88
    %p90 = scmp.eq.s32.totalorder %s15, 0
    %p91 = por %p89, %p90
    %s92 = ssub.s32 %s17, %s31
    %p93 = scmp.eq.s32.totalorder %s92, 0
    %s95 = sadd.s32 %s94, 1
    %s96 = scalar_select %p93, %s94, %s95
    %p99 = pneg %p93
    %p100 = scmp.eq.s32.totalorder %s9, 8
    %p101 = por %p99, %p100
    %p102 = scmp.ne.s32.totalorder %s94, %s97
    %p103 = scmp.eq.s32.totalorder %s9, 0
    %p104 = por %p102, %p103
    %p105 = scmp.ne.s32.totalorder %s94, %s97
    %p106 = scmp.eq.s32.totalorder %s14, 8
    %p107 = por %p105, %p106
    %p108 = scmp.ne.s32.totalorder %s97, %s98
    %p109 = scmp.eq.s32.totalorder %s14, 0
    %p110 = por %p108, %p109
    %p111 = scmp.ne.s32.totalorder %s97, %s98
    %p112 = scmp.eq.s32.totalorder %s15, 8
    %p113 = por %p111, %p112
    %p115 = scmp.ne.s32.totalorder %s98, %s114
    %p116 = scmp.eq.s32.totalorder %s15, 0
    %p117 = por %p115, %p116
    %s118 = ssub.s32 %s16, %s35
    %s119 = ssub.s32 %s17, %s31
    %s120 = sor.u32 %s118, %s119
    %p121 = scmp.eq.s32.totalorder %s120, 0
    %s123 = sadd.s32 %s122, 1
    %s124 = scalar_select %p121, %s122, %s123
    %p127 = pneg %p121
    %p128 = scmp.eq.s32.totalorder %s9, 8
    %p129 = por %p127, %p128
    %p130 = scmp.ne.s32.totalorder %s122, %s125
    %p131 = scmp.eq.s32.totalorder %s9, 0
    %p132 = por %p130, %p131
    %p133 = scmp.ne.s32.totalorder %s122, %s125
    %p134 = scmp.eq.s32.totalorder %s14, 8
    %p135 = por %p133, %p134
    %p136 = scmp.ne.s32.totalorder %s125, %s126
    %p137 = scmp.eq.s32.totalorder %s14, 0
    %p138 = por %p136, %p137
    %p139 = scmp.ne.s32.totalorder %s125, %s126
    %p140 = scmp.eq.s32.totalorder %s15, 8
    %p141 = por %p139, %p140
    %p143 = scmp.ne.s32.totalorder %s126, %s142
    %p144 = scmp.eq.s32.totalorder %s15, 0
    %p145 = por %p143, %p144
    %p146 = scmp.le.s32.totalorder 1, %s9
    %p147 = scmp.lt.s32.totalorder %s9, 10
    %p148 = pnand %p146, %p147
    %p149 = pneg %p148
    // Predicated region
    $region9: #{resnet_forward.20} parent=5 // pred_check
      _
    $region10: #{resnet_forward.20} parent=5 // pred_check_branch
      %151 = sbr.rel (%p148) target = $region12
    $region11: #{resnet_forward.20} parent=5 // pred_region
      %s152 = ssub.s32 %s9, 1
      // Predicated region
      $region13: #{resnet_forward.20} parent=11 // pred_check
        %p153 = pneg %p110
      $region14: #{resnet_forward.20} parent=11 // pred_check_branch
        %155 = sbr.rel (%p153) target = $region16
      $region15: #{resnet_forward.20} parent=11 // pred_region
        %s156 = smul.u32 2, %s20
        %p157 = scmp.lt.s32.totalorder %s156, 1
        %s158 = scalar_select %p157, %s156, 1
        %s159 = scalar_lea.vmem %s2, %s158
        %s160 = smul.u32 2, %s20
      $region16: #{resnet_forward.20} parent=11 // pred_fallthru
        _
    $region12: #{resnet_forward.20} parent=5 // pred_fallthru
      _
    %p161 = scmp.lt.s32.totalorder %s9, 9
    // Predicated region
    $region17: #{resnet_forward.20} parent=5 // pred_check
      %p162 = pneg %p161
    $region18: #{resnet_forward.20} parent=5 // pred_check_branch
      %164 = sbr.rel (%p162) target = $region20
    $region19: #{resnet_forward.20} parent=5 // pred_region
      // Predicated region
      $region21: #{resnet_forward.20} parent=19 // pred_check
        %p165 = pneg %p50
      $region22: #{resnet_forward.20} parent=19 // pred_check_branch
        %167 = sbr.rel (%p165) target = $region24
      $region23: #{resnet_forward.20} parent=19 // pred_region
        %p168 = scmp.lt.s32.totalorder %s16, 0
        %s169 = scalar_select %p168, %s16, 0
        %p170 = scmp.lt.s32.totalorder %s18, 8
        %s171 = scalar_select %p170, %s18, 8
        %s172 = smul.addr %s169, 9
        %s173 = sadd.s32 %s171, %s172
        %s174 = smul.addr %s173, 4
        %s175 = scalar_lea.vmem %s0, %s174
      $region24: #{resnet_forward.20} parent=19 // pred_fallthru
        _
      // Predicated region
      $region25: #{resnet_forward.20} parent=19 // pred_check
        %p176 = pneg %p78
      $region26: #{resnet_forward.20} parent=19 // pred_check_branch
        %178 = sbr.rel (%p176) target = $region28
      $region27: #{resnet_forward.20} parent=19 // pred_region
        %s179 = smul.u32 16, %s18
        %s180 = smul.u32 2, %s17
        %p181 = scmp.lt.s32.totalorder %s179, 143
        %s182 = scalar_select %p181, %s179, 143
        %p183 = scmp.lt.s32.totalorder %s180, 1
        %s184 = scalar_select %p183, %s180, 1
        %s185 = smul.addr %s182, 2
        %s186 = sadd.s32 %s184, %s185
        %s187 = smul.addr %s186, 4
        %s188 = scalar_lea.vmem %s1, %s187
        %s189 = smul.u32 16, %s18
        %s190 = smul.u32 2, %s17
      $region28: #{resnet_forward.20} parent=19 // pred_fallthru
        _
    $region20: #{resnet_forward.20} parent=5 // pred_fallthru
      _
    %p191 = scmp.le.s32.totalorder 1, %s9
    %p192 = scmp.lt.s32.totalorder %s9, 10
    %p193 = pnand %p191, %p192
    %p194 = pneg %p193
    // Predicated region
    $region29: #{resnet_forward.20} parent=5 // pred_check
      _
    $region30: #{resnet_forward.20} parent=5 // pred_check_branch
      %196 = sbr.rel (%p193) target = $region32
    $region31: #{resnet_forward.20} parent=5 // pred_region
      %s197 = ssub.s32 %s9, 1
      %p198 = scmp.lt.s32.totalorder %s19, 0
      %s199 = scalar_select %p198, %s19, 0
      %p200 = scmp.lt.s32.totalorder %s21, 8
      %s201 = scalar_select %p200, %s21, 8
      %s202 = smul.addr %s199, 9
      %s203 = sadd.s32 %s201, %s202
      %s204 = smul.addr %s203, 4
      %s205 = scalar_lea.vmem %s0, %s204
      %p206 = pneg %p56
      %p207 = pneg %p53
      %s208 = smul.u32 16, %s21
      %s209 = smul.u32 2, %s20
      %p210 = scmp.lt.s32.totalorder %s208, 143
      %s211 = scalar_select %p210, %s208, 143
      %p212 = scmp.lt.s32.totalorder %s209, 1
      %s213 = scalar_select %p212, %s209, 1
      %s214 = smul.addr %s211, 2
      %s215 = sadd.s32 %s213, %s214
      %s216 = smul.addr %s215, 4
      %s217 = scalar_lea.vmem %s1, %s216
      %p218 = pneg %p84
      %p219 = pneg %p81
      %s220 = smul.u32 2, %s20
      %p221 = scmp.lt.s32.totalorder %s220, 1
      %s222 = scalar_select %p221, %s220, 1
      %s223 = scalar_lea.vmem %s2, %s222
      %p224 = pneg %p110
      %p225 = pneg %p107
      %p226 = pneg %p138
      %p227 = pneg %p135
      %s228 = smul.u32 2, %s20
      %p229 = scmp.lt.s32.totalorder %s19, 0
      %s230 = scalar_select %p229, %s19, 0
      %p231 = scmp.lt.s32.totalorder %s228, 1
      %s232 = scalar_select %p231, %s228, 1
      %s233 = smul.addr %s230, 2
      %s234 = sadd.s32 %s232, %s233
      %s235 = smul.addr %s234, 4
      %s236 = scalar_lea.vmem %s3, %s235
      %p237 = scmp.lt.s32.totalorder %s19, 0
      %s238 = scalar_select %p237, %s19, 0
      %p239 = scmp.lt.s32.totalorder %s21, 8
      %s240 = scalar_select %p239, %s21, 8
      %s241 = smul.addr %s238, 9
      %s242 = sadd.s32 %s240, %s241
      %s243 = smul.addr %s242, 4
      %s244 = scalar_lea.vmem %s0, %s243
      %s245 = smul.u32 16, %s21
      %s246 = smul.u32 2, %s20
      %p247 = scmp.lt.s32.totalorder %s245, 143
      %s248 = scalar_select %p247, %s245, 143
      %p249 = scmp.lt.s32.totalorder %s246, 1
      %s250 = scalar_select %p249, %s246, 1
      %s251 = smul.addr %s248, 2
      %s252 = sadd.s32 %s250, %s251
      %s253 = smul.addr %s252, 4
      %s254 = scalar_lea.vmem %s1, %s253
      %s255 = smul.u32 16, %s21
      %s256 = smul.u32 2, %s20
      %s257 = smul.u32 2, %s20
      %p258 = scmp.lt.s32.totalorder %s257, 1
      %s259 = scalar_select %p258, %s257, 1
      %s260 = scalar_lea.vmem %s2, %s259
      %s261 = smul.u32 2, %s20
      %s262 = smul.u32 2, %s20
      %p263 = scmp.lt.s32.totalorder %s19, 0
      %s264 = scalar_select %p263, %s19, 0
      %p265 = scmp.lt.s32.totalorder %s262, 1
      %s266 = scalar_select %p265, %s262, 1
      %s267 = smul.addr %s264, 2
      %s268 = sadd.s32 %s266, %s267
      %s269 = smul.addr %s268, 4
      %s270 = scalar_lea.vmem %s3, %s269
      %s271 = smul.u32 2, %s20
      %p273 = scmp.eq.s32.totalorder %s21, 0
      // Predicated region
      $region33: #{resnet_forward.20} parent=31 // pred_check
        %p274 = pneg %p273
      $region34: #{resnet_forward.20} parent=31 // pred_check_branch
        %276 = sbr.rel (%p274) target = $region36
      $region35: #{resnet_forward.20} parent=31 // pred_region
        %277 = vst [vmem:[#allocation2] sm:$0xff] 0.0
        %278 = vst [vmem:[#allocation2 + $0x8] sm:$0xff] 0.0
      $region36: #{resnet_forward.20} parent=31 // pred_fallthru
        _
      %v279 = vld [vmem:[#allocation2] sm:$0xff]
      %v280 = vld [vmem:[#allocation2 + $0x8] sm:$0xff]
      %v281 = vld [vmem:[%s244] sm:$0xf]
      %v282 = vld [vmem:[%s254] sm:$0xff]
      %v283 = vld [vmem:[%s254 + $0x8] sm:$0xff]
      %v284 = vld [vmem:[%s254 + $0x10] sm:$0xff]
      %v285 = vld [vmem:[%s254 + $0x18] sm:$0xff]
      %v286 = vld [vmem:[%s254 + $0x20] sm:$0xff]
      %v287 = vld [vmem:[%s254 + $0x28] sm:$0xff]
      %v288 = vld [vmem:[%s254 + $0x30] sm:$0xff]
      %v289 = vld [vmem:[%s254 + $0x38] sm:$0xff]
      %v290 = vld [vmem:[%s254 + $0x40] sm:$0xff]
      %v291 = vld [vmem:[%s254 + $0x48] sm:$0xff]
      %v292 = vld [vmem:[%s254 + $0x50] sm:$0xff]
      %v293 = vld [vmem:[%s254 + $0x58] sm:$0xff]
      %v294 = vld [vmem:[%s254 + $0x60] sm:$0xff]
      %v295 = vld [vmem:[%s254 + $0x68] sm:$0xff]
      %v296 = vld [vmem:[%s254 + $0x70] sm:$0xff]
      %v297 = vld [vmem:[%s254 + $0x78] sm:$0xff]
      %v314 = vunpack.c.l.b16 %v282
      %v315 = vunpack.c.h.b16 %v282
      %v316 = vunpack.c.l.b16 %v283
      %v317 = vunpack.c.h.b16 %v283
      %v318 = vunpack.c.l.b16 %v284
      %v319 = vunpack.c.h.b16 %v284
      %v320 = vunpack.c.l.b16 %v285
      %v321 = vunpack.c.h.b16 %v285
      %v322 = vunpack.c.l.b16 %v286
      %v323 = vunpack.c.h.b16 %v286
      %v324 = vunpack.c.l.b16 %v287
      %v325 = vunpack.c.h.b16 %v287
      %v326 = vunpack.c.l.b16 %v288
      %v327 = vunpack.c.h.b16 %v288
      %v328 = vunpack.c.l.b16 %v289
      %v329 = vunpack.c.h.b16 %v289
      %v330 = vunpack.c.l.b16 %v290
      %v331 = vunpack.c.h.b16 %v290
      %v332 = vunpack.c.l.b16 %v291
      %v333 = vunpack.c.h.b16 %v291
      %v334 = vunpack.c.l.b16 %v292
      %v335 = vunpack.c.h.b16 %v292
      %v336 = vunpack.c.l.b16 %v293
      %v337 = vunpack.c.h.b16 %v293
      %v338 = vunpack.c.l.b16 %v294
      %v339 = vunpack.c.h.b16 %v294
      %v340 = vunpack.c.l.b16 %v295
      %v341 = vunpack.c.h.b16 %v295
      %v342 = vunpack.c.l.b16 %v296
      %v343 = vunpack.c.h.b16 %v296
      %v344 = vunpack.c.l.b16 %v297
      %v345 = vunpack.c.h.b16 %v297
      %v346 = vpack.c.b16 %v316, %v314
      %v347 = vpack.c.b16 %v317, %v315
      %v348 = vpack.c.b16 %v320, %v318
      %v349 = vpack.c.b16 %v321, %v319
      %v350 = vpack.c.b16 %v324, %v322
      %v351 = vpack.c.b16 %v325, %v323
      %v352 = vpack.c.b16 %v328, %v326
      %v353 = vpack.c.b16 %v329, %v327
      %v354 = vpack.c.b16 %v332, %v330
      %v355 = vpack.c.b16 %v333, %v331
      %v356 = vpack.c.b16 %v336, %v334
      %v357 = vpack.c.b16 %v337, %v335
      %v358 = vpack.c.b16 %v340, %v338
      %v359 = vpack.c.b16 %v341, %v339
      %v360 = vpack.c.b16 %v344, %v342
      %v361 = vpack.c.b16 %v345, %v343
      %378 = vmatprep.subr.bf16.mxu0 %v347
      %379 = vmatpush1.bf16.msra.mxu0 %v346
      %380 = vmatprep.subr.bf16.mxu0 %v349
      %381 = vmatpush1.bf16.msra.mxu0 %v348
      %382 = vmatprep.subr.bf16.mxu0 %v351
      %383 = vmatpush1.bf16.msra.mxu0 %v350
      %384 = vmatprep.subr.bf16.mxu0 %v353
      %385 = vmatpush1.bf16.msra.mxu0 %v352
      %386 = vmatprep.subr.bf16.mxu0 %v355
      %387 = vmatpush1.bf16.msra.mxu0 %v354
      %388 = vmatprep.subr.bf16.mxu0 %v357
      %389 = vmatpush1.bf16.msra.mxu0 %v356
      %390 = vmatprep.subr.bf16.mxu0 %v359
      %391 = vmatpush1.bf16.msra.mxu0 %v358
      %392 = vmatprep.subr.bf16.mxu0 %v361
      %393 = vmatpush1.bf16.msra.mxu0 %v360
      %394 = vmatprep.subr.bf16.mxu0 0
      %395 = vmatpush1.bf16.msra.mxu0 0
      %396 = vmatprep.subr.bf16.mxu0 0
      %397 = vmatpush1.bf16.msra.mxu0 0
      %398 = vmatprep.subr.bf16.mxu0 0
      %399 = vmatpush1.bf16.msra.mxu0 0
      %400 = vmatprep.subr.bf16.mxu0 0
      %401 = vmatpush1.bf16.msra.mxu0 0
      %402 = vmatprep.subr.bf16.mxu0 0
      %403 = vmatpush1.bf16.msra.mxu0 0
      %404 = vmatprep.subr.bf16.mxu0 0
      %405 = vmatpush1.bf16.msra.mxu0 0
      %406 = vmatprep.subr.bf16.mxu0 0
      %407 = vmatpush1.bf16.msra.mxu0 0
      %408 = vmatprep.subr.bf16.mxu0 0
      %409 = vmatpush1.bf16.msra.mxu0 0
      %410 = vmatprep.mubr.bf16.mxu0 0
      %411 = vmatmul.mubr.bf16.gmra.mrb[0].mxu0 %v281
      %v412 = vpop.f32.mrb[0].mxu0
      %v413 = vadd.f32 0.0, %v412
      %v414 = vpop.f32.mrb[0].mxu0
      %v415 = vadd.f32 0.0, %v414
      %v416 = vpop.f32.mrb[0].mxu0
      %v417 = vpop.f32.mrb[0].mxu0
      %418 = vdwg.mxu0
      %v419 = vadd.f32 %v279, %v413
      %v420 = vadd.f32 %v280, %v415
      %421 = vst [vmem:[#allocation2] sm:$0xff] %v419
      %422 = vst [vmem:[#allocation2 + $0x8] sm:$0xff] %v420
      %p423 = scmp.eq.s32.totalorder %s21, 8
      // Predicated region
      $region37: #{resnet_forward.20} parent=31 // pred_check
        %p424 = pneg %p423
      $region38: #{resnet_forward.20} parent=31 // pred_check_branch
        %426 = sbr.rel (%p424) target = $region40
      $region39: #{resnet_forward.20} parent=31 // pred_region
        %v427 = vld [vmem:[#allocation2] sm:$0xff]
        %v428 = vld [vmem:[#allocation2 + $0x8] sm:$0xff]
        %v429 = vld [vmem:[%s260] sm:$0x3]
        %v431 = vlaneseq
        %v432 = vshrl.u32 %v431, 7
        %v433 = vsub.s32 0, %v432
        %v434 = vrot.slane %v429, %v433
        %v435 = vlaneseq
        %v436 = vshrl.u32 %v435, 7
        %v437 = vsub.s32 1, %v436
        %v438 = vrot.slane %v429, %v437
        %v441 = vadd.f32 %v427, %v434
        %v442 = vadd.f32 %v428, %v438
        %v443 = vmax.f32 %v441, 0.0
        %v444 = vmax.f32 %v442, 0.0
        %v445 = vpack.c.bf16 %v443, %v443
        %v446 = vpack.c.bf16 %v444, %v444
        %v449 = vunpack.c.l.b16 %v445
        %v450 = vunpack.c.l.b16 %v446
        %v451 = vpack.c.b16 %v450, %v449
        %453 = vst [vmem:[%s270] sm:$0xff] %v451
      $region40: #{resnet_forward.20} parent=31 // pred_fallthru
        _
      %s454 = smul.u32 2, %s20
      %p455 = scmp.lt.s32.totalorder %s19, 0
      %s456 = scalar_select %p455, %s19, 0
      %p457 = scmp.lt.s32.totalorder %s454, 1
      %s458 = scalar_select %p457, %s454, 1
      %s459 = smul.addr %s456, 2
      %s460 = sadd.s32 %s458, %s459
      %s461 = smul.addr %s460, 4
      %s462 = scalar_lea.vmem %s3, %s461
      // Predicated region
      $region41: #{resnet_forward.20} parent=31 // pred_check
        %p463 = pneg %p135
      $region42: #{resnet_forward.20} parent=31 // pred_check_branch
        %465 = sbr.rel (%p463) target = $region44
      $region43: #{resnet_forward.20} parent=31 // pred_region
        %s466 = smul.u32 2, %s20
      $region44: #{resnet_forward.20} parent=31 // pred_fallthru
        _
      // Predicated region
      $region45: #{resnet_forward.20} parent=31 // pred_check
        %p467 = pneg %p135
      $region46: #{resnet_forward.20} parent=31 // pred_check_branch
        %469 = sbr.rel (%p467) target = $region48
      $region47: #{resnet_forward.20} parent=31 // pred_region
        %s470 = smul.u32 2, %s20
        %p471 = scmp.lt.s32.totalorder %s19, 0
        %s472 = scalar_select %p471, %s19, 0
        %p473 = scmp.lt.s32.totalorder %s470, 1
        %s474 = scalar_select %p473, %s470, 1
        %s475 = smul.addr %s472, 2
        %s476 = sadd.s32 %s474, %s475
        %s477 = smul.addr %s476, 4
        %s478 = scalar_lea.vmem %s3, %s477
      $region48: #{resnet_forward.20} parent=31 // pred_fallthru
        _
    $region32: #{resnet_forward.20} parent=5 // pred_fallthru
      _
    %p479 = scmp.le.s32.totalorder 2, %s9
    // Predicated region
    $region49: #{resnet_forward.20} parent=5 // pred_check
      %p480 = pneg %p479
    $region50: #{resnet_forward.20} parent=5 // pred_check_branch
      %482 = sbr.rel (%p480) target = $region52
    $region51: #{resnet_forward.20} parent=5 // pred_region
      %s483 = ssub.s32 %s9, 2
    $region52: #{resnet_forward.20} parent=5 // pred_fallthru
      _
  $region6: #{resnet_forward.20} parent=0 // loop_footer
    %s13 = sadd.s32 1, %s9
  $region7: #{resnet_forward.20} parent=0 // loop_footer_branch
    %8 = sbr.rel target = $region3
  $region8: #{resnet_forward.20} parent=0 // loop_exit
    _

// kernel: resnet_forward.21
$region0: #{resnet_forward.21}
  #allocation0 [shape = 'u32[]', space=smem, size = 0x4, offset = 0x4, fixed_abs, tag = 'smem constant byte address 0x4 - core index']
  #allocation1 [shape = 'u32[144,128]{1,0:T(1,128)}', space=vmem, size = 0x12000, scoped, tag = 'internal scratch']
  #allocation2 [shape = 'f32[8,256]{1,0:T(8,128)}', space=vmem, size = 0x2000, scoped, tag = 'scratch operand']
  %s0 = inlined_call_operand.vmem [shape: bf16[8,128], index: 0, kind: input, shape index: {}]
  %s1 = inlined_call_operand.vmem [shape: bf16[128,256], index: 1, kind: input, shape index: {}]
  %s2 = inlined_call_operand.vmem [shape: f32[1,256], index: 2, kind: input, shape index: {}]
  %s3 = inlined_call_operand.vmem [shape: bf16[8,256], index: 3, kind: output, shape index: {}]
  %s4 = sld [smem:[#allocation0]]
  $region30: #{resnet_forward.21} parent=0
    _
  %s6 = ssub.s32 1, %s4
  %s7 = scalar_select 0, %s6, %s4
  // Predicated region
  $region2: #{resnet_forward.21} parent=0 // pred_check
    _
  $region3: #{resnet_forward.21} parent=0 // pred_check_branch
    %9 = sbr.rel (0) target = $region5
  $region4: #{resnet_forward.21} parent=0 // pred_region
    _
  $region5: #{resnet_forward.21} parent=0 // pred_fallthru
    _
  // Predicated region
  $region6: #{resnet_forward.21} parent=0 // pred_check
    _
  $region7: #{resnet_forward.21} parent=0 // pred_check_branch
    %11 = sbr.rel (0) target = $region9
  $region8: #{resnet_forward.21} parent=0 // pred_region
    _
  $region9: #{resnet_forward.21} parent=0 // pred_fallthru
    _
  // Predicated region
  $region10: #{resnet_forward.21} parent=0 // pred_check
    _
  $region11: #{resnet_forward.21} parent=0 // pred_check_branch
    %13 = sbr.rel (0) target = $region13
  $region12: #{resnet_forward.21} parent=0 // pred_region
    _
  $region13: #{resnet_forward.21} parent=0 // pred_fallthru
    _
  %p15 = scmp.eq.s32.totalorder 0, 0
  // Predicated region
  $region14: #{resnet_forward.21} parent=0 // pred_check
    %p16 = pneg %p15
  $region15: #{resnet_forward.21} parent=0 // pred_check_branch
    %18 = sbr.rel (%p16) target = $region17
  $region16: #{resnet_forward.21} parent=0 // pred_region
    %19 = vst [vmem:[#allocation2] sm:$0xff] 0.0
    %20 = vst [vmem:[#allocation2 + $0x8] sm:$0xff] 0.0
  $region17: #{resnet_forward.21} parent=0 // pred_fallthru
    _
  %v21 = vld [vmem:[#allocation2] sm:$0xff]
  %v22 = vld [vmem:[#allocation2 + $0x8] sm:$0xff]
  %v23 = vld [vmem:[%s0] sm:$0xf]
  %v24 = vld [vmem:[%s1] sm:$0xff]
  %v25 = vld [vmem:[%s1 + $0x8] sm:$0xff]
  %v26 = vld [vmem:[%s1 + $0x10] sm:$0xff]
  %v27 = vld [vmem:[%s1 + $0x18] sm:$0xff]
  %v28 = vld [vmem:[%s1 + $0x20] sm:$0xff]
  %v29 = vld [vmem:[%s1 + $0x28] sm:$0xff]
  %v30 = vld [vmem:[%s1 + $0x30] sm:$0xff]
  %v31 = vld [vmem:[%s1 + $0x38] sm:$0xff]
  %v32 = vld [vmem:[%s1 + $0x40] sm:$0xff]
  %v33 = vld [vmem:[%s1 + $0x48] sm:$0xff]
  %v34 = vld [vmem:[%s1 + $0x50] sm:$0xff]
  %v35 = vld [vmem:[%s1 + $0x58] sm:$0xff]
  %v36 = vld [vmem:[%s1 + $0x60] sm:$0xff]
  %v37 = vld [vmem:[%s1 + $0x68] sm:$0xff]
  %v38 = vld [vmem:[%s1 + $0x70] sm:$0xff]
  %v39 = vld [vmem:[%s1 + $0x78] sm:$0xff]
  %v56 = vunpack.c.l.b16 %v24
  %v57 = vunpack.c.h.b16 %v24
  %v58 = vunpack.c.l.b16 %v25
  %v59 = vunpack.c.h.b16 %v25
  %v60 = vunpack.c.l.b16 %v26
  %v61 = vunpack.c.h.b16 %v26
  %v62 = vunpack.c.l.b16 %v27
  %v63 = vunpack.c.h.b16 %v27
  %v64 = vunpack.c.l.b16 %v28
  %v65 = vunpack.c.h.b16 %v28
  %v66 = vunpack.c.l.b16 %v29
  %v67 = vunpack.c.h.b16 %v29
  %v68 = vunpack.c.l.b16 %v30
  %v69 = vunpack.c.h.b16 %v30
  %v70 = vunpack.c.l.b16 %v31
  %v71 = vunpack.c.h.b16 %v31
  %v72 = vunpack.c.l.b16 %v32
  %v73 = vunpack.c.h.b16 %v32
  %v74 = vunpack.c.l.b16 %v33
  %v75 = vunpack.c.h.b16 %v33
  %v76 = vunpack.c.l.b16 %v34
  %v77 = vunpack.c.h.b16 %v34
  %v78 = vunpack.c.l.b16 %v35
  %v79 = vunpack.c.h.b16 %v35
  %v80 = vunpack.c.l.b16 %v36
  %v81 = vunpack.c.h.b16 %v36
  %v82 = vunpack.c.l.b16 %v37
  %v83 = vunpack.c.h.b16 %v37
  %v84 = vunpack.c.l.b16 %v38
  %v85 = vunpack.c.h.b16 %v38
  %v86 = vunpack.c.l.b16 %v39
  %v87 = vunpack.c.h.b16 %v39
  %v88 = vpack.c.b16 %v58, %v56
  %v89 = vpack.c.b16 %v59, %v57
  %v90 = vpack.c.b16 %v62, %v60
  %v91 = vpack.c.b16 %v63, %v61
  %v92 = vpack.c.b16 %v66, %v64
  %v93 = vpack.c.b16 %v67, %v65
  %v94 = vpack.c.b16 %v70, %v68
  %v95 = vpack.c.b16 %v71, %v69
  %v96 = vpack.c.b16 %v74, %v72
  %v97 = vpack.c.b16 %v75, %v73
  %v98 = vpack.c.b16 %v78, %v76
  %v99 = vpack.c.b16 %v79, %v77
  %v100 = vpack.c.b16 %v82, %v80
  %v101 = vpack.c.b16 %v83, %v81
  %v102 = vpack.c.b16 %v86, %v84
  %v103 = vpack.c.b16 %v87, %v85
  %120 = vmatprep.subr.bf16.mxu0 %v89
  %121 = vmatpush1.bf16.msra.mxu0 %v88
  %122 = vmatprep.subr.bf16.mxu0 %v91
  %123 = vmatpush1.bf16.msra.mxu0 %v90
  %124 = vmatprep.subr.bf16.mxu0 %v93
  %125 = vmatpush1.bf16.msra.mxu0 %v92
  %126 = vmatprep.subr.bf16.mxu0 %v95
  %127 = vmatpush1.bf16.msra.mxu0 %v94
  %128 = vmatprep.subr.bf16.mxu0 %v97
  %129 = vmatpush1.bf16.msra.mxu0 %v96
  %130 = vmatprep.subr.bf16.mxu0 %v99
  %131 = vmatpush1.bf16.msra.mxu0 %v98
  %132 = vmatprep.subr.bf16.mxu0 %v101
  %133 = vmatpush1.bf16.msra.mxu0 %v100
  %134 = vmatprep.subr.bf16.mxu0 %v103
  %135 = vmatpush1.bf16.msra.mxu0 %v102
  %136 = vmatprep.subr.bf16.mxu0 0
  %137 = vmatpush1.bf16.msra.mxu0 0
  %138 = vmatprep.subr.bf16.mxu0 0
  %139 = vmatpush1.bf16.msra.mxu0 0
  %140 = vmatprep.subr.bf16.mxu0 0
  %141 = vmatpush1.bf16.msra.mxu0 0
  %142 = vmatprep.subr.bf16.mxu0 0
  %143 = vmatpush1.bf16.msra.mxu0 0
  %144 = vmatprep.subr.bf16.mxu0 0
  %145 = vmatpush1.bf16.msra.mxu0 0
  %146 = vmatprep.subr.bf16.mxu0 0
  %147 = vmatpush1.bf16.msra.mxu0 0
  %148 = vmatprep.subr.bf16.mxu0 0
  %149 = vmatpush1.bf16.msra.mxu0 0
  %150 = vmatprep.subr.bf16.mxu0 0
  %151 = vmatpush1.bf16.msra.mxu0 0
  %152 = vmatprep.mubr.bf16.mxu0 0
  %153 = vmatmul.mubr.bf16.gmra.mrb[0].mxu0 %v23
  %v154 = vpop.f32.mrb[0].mxu0
  %v155 = vadd.f32 0.0, %v154
  %v156 = vpop.f32.mrb[0].mxu0
  %v157 = vadd.f32 0.0, %v156
  %v158 = vpop.f32.mrb[0].mxu0
  %v159 = vpop.f32.mrb[0].mxu0
  %160 = vdwg.mxu0
  %v161 = vadd.f32 %v21, %v155
  %v162 = vadd.f32 %v22, %v157
  %163 = vst [vmem:[#allocation2] sm:$0xff] %v161
  %164 = vst [vmem:[#allocation2 + $0x8] sm:$0xff] %v162
  // Predicated region
  $region18: #{resnet_forward.21} parent=0 // pred_check
    %p165 = pneg %p15
  $region19: #{resnet_forward.21} parent=0 // pred_check_branch
    %167 = sbr.rel (%p165) target = $region21
  $region20: #{resnet_forward.21} parent=0 // pred_region
    %v168 = vld [vmem:[#allocation2] sm:$0xff]
    %v169 = vld [vmem:[#allocation2 + $0x8] sm:$0xff]
    %v170 = vld [vmem:[%s2] sm:$0x3]
    %v172 = vlaneseq
    %v173 = vshrl.u32 %v172, 7
    %v174 = vsub.s32 0, %v173
    %v175 = vrot.slane %v170, %v174
    %v176 = vlaneseq
    %v177 = vshrl.u32 %v176, 7
    %v178 = vsub.s32 1, %v177
    %v179 = vrot.slane %v170, %v178
    %v182 = vadd.f32 %v168, %v175
    %v183 = vadd.f32 %v169, %v179
    %v184 = vpack.c.bf16 %v182, %v182
    %v185 = vpack.c.bf16 %v183, %v183
    %v188 = vunpack.c.l.b16 %v184
    %v189 = vunpack.c.l.b16 %v185
    %v190 = vpack.c.b16 %v189, %v188
    %192 = vst [vmem:[%s3] sm:$0xff] %v190
  $region21: #{resnet_forward.21} parent=0 // pred_fallthru
    _
  // Predicated region
  $region22: #{resnet_forward.21} parent=0 // pred_check
    _
  $region23: #{resnet_forward.21} parent=0 // pred_check_branch
    %194 = sbr.rel (0) target = $region25
  $region24: #{resnet_forward.21} parent=0 // pred_region
    _
  $region25: #{resnet_forward.21} parent=0 // pred_fallthru
    _
  // Predicated region
  $region26: #{resnet_forward.21} parent=0 // pred_check
    _
  $region27: #{resnet_forward.21} parent=0 // pred_check_branch
    %196 = sbr.rel (0) target = $region29
  $region28: #{resnet_forward.21} parent=0 // pred_region
    _
  $region29: #{resnet_forward.21} parent=0 // pred_fallthru
    _

// kernel: resnet_forward.22
$region0: #{resnet_forward.22}
  #allocation0 [shape = 'u32[]', space=smem, size = 0x4, offset = 0x4, fixed_abs, tag = 'smem constant byte address 0x4 - core index']
  #allocation1 [shape = 'u32[144,128]{1,0:T(1,128)}', space=vmem, size = 0x12000, scoped, tag = 'internal scratch']
  #allocation2 [shape = 'f32[8,256]{1,0:T(8,128)}', space=vmem, size = 0x2000, scoped, tag = 'scratch operand']
  %s0 = inlined_call_operand.vmem [shape: bf16[8,2304], index: 0, kind: input, shape index: {}]
  %s1 = inlined_call_operand.vmem [shape: bf16[2304,256], index: 1, kind: input, shape index: {}]
  %s2 = inlined_call_operand.vmem [shape: f32[1,256], index: 2, kind: input, shape index: {}]
  %s3 = inlined_call_operand.vmem [shape: bf16[8,256], index: 3, kind: input, shape index: {}]
  %s4 = inlined_call_operand.vmem [shape: bf16[8,256], index: 4, kind: output, shape index: {}]
  %s5 = sld [smem:[#allocation0]]
  $region57: #{resnet_forward.22} parent=0
    _
  %s7 = ssub.s32 1, %s5
  %s8 = scalar_select 0, %s7, %s5
  loop: start=0, step=1, limit=11
  $region2: #{resnet_forward.22} parent=0 // loop_pre_header
    _
  $region3: #{resnet_forward.22} parent=0 // loop_header
    %s10 = sphi 0, %s14
    %p11 = scmp.ge.s32.totalorder %s10, 11
    %s17 = sphi 0, %s36
    %s18 = sphi 0, %s32
    %s19 = sphi 0, %s28
    %s20 = sphi 0, %s17
    %s21 = sphi 0, %s18
    %s22 = sphi 0, %s19
    %s23 = sphi 0, %s20
    %s24 = sphi 0, %s21
    %s25 = sphi 0, %s22
    %s41 = sphi 0, %s43
    %s44 = sphi 0, %s41
    %s45 = sphi 0, %s44
    %s61 = sphi 0, %s45
    %s69 = sphi 0, %s71
    %s72 = sphi 0, %s69
    %s73 = sphi 0, %s72
    %s89 = sphi 0, %s73
    %s95 = sphi 0, %s97
    %s98 = sphi 0, %s95
    %s99 = sphi 0, %s98
    %s115 = sphi 0, %s99
    %s123 = sphi 0, %s125
    %s126 = sphi 0, %s123
    %s127 = sphi 0, %s126
    %s143 = sphi 0, %s127
    %s151 = sphi 0, %s153
    %s154 = sphi 0, %s151
    %s155 = sphi 0, %s154
    %s171 = sphi 0, %s155
  $region4: #{resnet_forward.22} parent=0 // loop_header_branch
    %13 = sbr.rel (%p11) target = $region8
  $region5: #{resnet_forward.22} parent=0 // loop_body
    %s15 = ssub.s32 %s10, 1
    %s16 = ssub.s32 %s10, 2
    %s26 = sadd.s32 1, %s19
    %p27 = scmp.ge.s32.totalorder %s26, 9
    %s28 = scalar_select %p27, 0, %s26
    %s29 = sadd.s32 1, %s18
    %s30 = scalar_select %p27, %s29, %s18
    %p31 = scmp.ge.s32.totalorder %s30, 1
    %s32 = scalar_select %p31, 0, %s30
    %s33 = sadd.s32 1, %s17
    %s34 = scalar_select %p31, %s33, %s17
    %p35 = scmp.ge.s32.totalorder %s34, 1
    %s36 = scalar_select %p35, 0, %s34
    %s37 = ssub.s32 %s17, %s36
    %s38 = ssub.s32 %s19, %s28
    %s39 = sor.u32 %s37, %s38
    %p40 = scmp.eq.s32.totalorder %s39, 0
    %s42 = sadd.s32 %s41, 1
    %s43 = scalar_select %p40, %s41, %s42
    %p46 = pneg %p40
    %p47 = scmp.eq.s32.totalorder %s10, 8
    %p48 = por %p46, %p47
    %p49 = scmp.ne.s32.totalorder %s41, %s44
    %p50 = scmp.eq.s32.totalorder %s10, 0
    %p51 = por %p49, %p50
    %p52 = scmp.ne.s32.totalorder %s41, %s44
    %p53 = scmp.eq.s32.totalorder %s15, 8
    %p54 = por %p52, %p53
    %p55 = scmp.ne.s32.totalorder %s44, %s45
    %p56 = scmp.eq.s32.totalorder %s15, 0
    %p57 = por %p55, %p56
    %p58 = scmp.ne.s32.totalorder %s44, %s45
    %p59 = scmp.eq.s32.totalorder %s16, 8
    %p60 = por %p58, %p59
    %p62 = scmp.ne.s32.totalorder %s45, %s61
    %p63 = scmp.eq.s32.totalorder %s16, 0
    %p64 = por %p62, %p63
    %s65 = ssub.s32 %s19, %s28
    %s66 = ssub.s32 %s18, %s32
    %s67 = sor.u32 %s65, %s66
    %p68 = scmp.eq.s32.totalorder %s67, 0
    %s70 = sadd.s32 %s69, 1
    %s71 = scalar_select %p68, %s69, %s70
    %p74 = pneg %p68
    %p75 = scmp.eq.s32.totalorder %s10, 8
    %p76 = por %p74, %p75
    %p77 = scmp.ne.s32.totalorder %s69, %s72
    %p78 = scmp.eq.s32.totalorder %s10, 0
    %p79 = por %p77, %p78
    %p80 = scmp.ne.s32.totalorder %s69, %s72
    %p81 = scmp.eq.s32.totalorder %s15, 8
    %p82 = por %p80, %p81
    %p83 = scmp.ne.s32.totalorder %s72, %s73
    %p84 = scmp.eq.s32.totalorder %s15, 0
    %p85 = por %p83, %p84
    %p86 = scmp.ne.s32.totalorder %s72, %s73
    %p87 = scmp.eq.s32.totalorder %s16, 8
    %p88 = por %p86, %p87
    %p90 = scmp.ne.s32.totalorder %s73, %s89
    %p91 = scmp.eq.s32.totalorder %s16, 0
    %p92 = por %p90, %p91
    %s93 = ssub.s32 %s18, %s32
    %p94 = scmp.eq.s32.totalorder %s93, 0
    %s96 = sadd.s32 %s95, 1
    %s97 = scalar_select %p94, %s95, %s96
    %p100 = pneg %p94
    %p101 = scmp.eq.s32.totalorder %s10, 8
    %p102 = por %p100, %p101
    %p103 = scmp.ne.s32.totalorder %s95, %s98
    %p104 = scmp.eq.s32.totalorder %s10, 0
    %p105 = por %p103, %p104
    %p106 = scmp.ne.s32.totalorder %s95, %s98
    %p107 = scmp.eq.s32.totalorder %s15, 8
    %p108 = por %p106, %p107
    %p109 = scmp.ne.s32.totalorder %s98, %s99
    %p110 = scmp.eq.s32.totalorder %s15, 0
    %p111 = por %p109, %p110
    %p112 = scmp.ne.s32.totalorder %s98, %s99
    %p113 = scmp.eq.s32.totalorder %s16, 8
    %p114 = por %p112, %p113
    %p116 = scmp.ne.s32.totalorder %s99, %s115
    %p117 = scmp.eq.s32.totalorder %s16, 0
    %p118 = por %p116, %p117
    %s119 = ssub.s32 %s17, %s36
    %s120 = ssub.s32 %s18, %s32
    %s121 = sor.u32 %s119, %s120
    %p122 = scmp.eq.s32.totalorder %s121, 0
    %s124 = sadd.s32 %s123, 1
    %s125 = scalar_select %p122, %s123, %s124
    %p128 = pneg %p122
    %p129 = scmp.eq.s32.totalorder %s10, 8
    %p130 = por %p128, %p129
    %p131 = scmp.ne.s32.totalorder %s123, %s126
    %p132 = scmp.eq.s32.totalorder %s10, 0
    %p133 = por %p131, %p132
    %p134 = scmp.ne.s32.totalorder %s123, %s126
    %p135 = scmp.eq.s32.totalorder %s15, 8
    %p136 = por %p134, %p135
    %p137 = scmp.ne.s32.totalorder %s126, %s127
    %p138 = scmp.eq.s32.totalorder %s15, 0
    %p139 = por %p137, %p138
    %p140 = scmp.ne.s32.totalorder %s126, %s127
    %p141 = scmp.eq.s32.totalorder %s16, 8
    %p142 = por %p140, %p141
    %p144 = scmp.ne.s32.totalorder %s127, %s143
    %p145 = scmp.eq.s32.totalorder %s16, 0
    %p146 = por %p144, %p145
    %s147 = ssub.s32 %s17, %s36
    %s148 = ssub.s32 %s18, %s32
    %s149 = sor.u32 %s147, %s148
    %p150 = scmp.eq.s32.totalorder %s149, 0
    %s152 = sadd.s32 %s151, 1
    %s153 = scalar_select %p150, %s151, %s152
    %p156 = pneg %p150
    %p157 = scmp.eq.s32.totalorder %s10, 8
    %p158 = por %p156, %p157
    %p159 = scmp.ne.s32.totalorder %s151, %s154
    %p160 = scmp.eq.s32.totalorder %s10, 0
    %p161 = por %p159, %p160
    %p162 = scmp.ne.s32.totalorder %s151, %s154
    %p163 = scmp.eq.s32.totalorder %s15, 8
    %p164 = por %p162, %p163
    %p165 = scmp.ne.s32.totalorder %s154, %s155
    %p166 = scmp.eq.s32.totalorder %s15, 0
    %p167 = por %p165, %p166
    %p168 = scmp.ne.s32.totalorder %s154, %s155
    %p169 = scmp.eq.s32.totalorder %s16, 8
    %p170 = por %p168, %p169
    %p172 = scmp.ne.s32.totalorder %s155, %s171
    %p173 = scmp.eq.s32.totalorder %s16, 0
    %p174 = por %p172, %p173
    %p175 = scmp.le.s32.totalorder 1, %s10
    %p176 = scmp.lt.s32.totalorder %s10, 10
    %p177 = pnand %p175, %p176
    %p178 = pneg %p177
    // Predicated region
    $region9: #{resnet_forward.22} parent=5 // pred_check
      _
    $region10: #{resnet_forward.22} parent=5 // pred_check_branch
      %180 = sbr.rel (%p177) target = $region12
    $region11: #{resnet_forward.22} parent=5 // pred_region
      %s181 = ssub.s32 %s10, 1
      // Predicated region
      $region13: #{resnet_forward.22} parent=11 // pred_check
        %p182 = pneg %p111
      $region14: #{resnet_forward.22} parent=11 // pred_check_branch
        %184 = sbr.rel (%p182) target = $region16
      $region15: #{resnet_forward.22} parent=11 // pred_region
        %s185 = smul.u32 2, %s21
        %p186 = scmp.lt.s32.totalorder %s185, 1
        %s187 = scalar_select %p186, %s185, 1
        %s188 = scalar_lea.vmem %s2, %s187
        %s189 = smul.u32 2, %s21
      $region16: #{resnet_forward.22} parent=11 // pred_fallthru
        _
      // Predicated region
      $region17: #{resnet_forward.22} parent=11 // pred_check
        %p190 = pneg %p139
      $region18: #{resnet_forward.22} parent=11 // pred_check_branch
        %192 = sbr.rel (%p190) target = $region20
      $region19: #{resnet_forward.22} parent=11 // pred_region
        %s193 = smul.u32 2, %s21
        %p194 = scmp.lt.s32.totalorder %s20, 0
        %s195 = scalar_select %p194, %s20, 0
        %p196 = scmp.lt.s32.totalorder %s193, 1
        %s197 = scalar_select %p196, %s193, 1
        %s198 = smul.addr %s195, 2
        %s199 = sadd.s32 %s197, %s198
        %s200 = smul.addr %s199, 4
        %s201 = scalar_lea.vmem %s3, %s200
        %s202 = smul.u32 2, %s21
      $region20: #{resnet_forward.22} parent=11 // pred_fallthru
        _
    $region12: #{resnet_forward.22} parent=5 // pred_fallthru
      _
    %p203 = scmp.lt.s32.totalorder %s10, 9
    // Predicated region
    $region21: #{resnet_forward.22} parent=5 // pred_check
      %p204 = pneg %p203
    $region22: #{resnet_forward.22} parent=5 // pred_check_branch
      %206 = sbr.rel (%p204) target = $region24
    $region23: #{resnet_forward.22} parent=5 // pred_region
      // Predicated region
      $region25: #{resnet_forward.22} parent=23 // pred_check
        %p207 = pneg %p51
      $region26: #{resnet_forward.22} parent=23 // pred_check_branch
        %209 = sbr.rel (%p207) target = $region28
      $region27: #{resnet_forward.22} parent=23 // pred_region
        %s210 = smul.u32 2, %s19
        %p211 = scmp.lt.s32.totalorder %s17, 0
        %s212 = scalar_select %p211, %s17, 0
        %p213 = scmp.lt.s32.totalorder %s210, 17
        %s214 = scalar_select %p213, %s210, 17
        %s215 = smul.addr %s212, 18
        %s216 = sadd.s32 %s214, %s215
        %s217 = smul.addr %s216, 4
        %s218 = scalar_lea.vmem %s0, %s217
        %s219 = smul.u32 2, %s19
      $region28: #{resnet_forward.22} parent=23 // pred_fallthru
        _
      // Predicated region
      $region29: #{resnet_forward.22} parent=23 // pred_check
        %p220 = pneg %p79
      $region30: #{resnet_forward.22} parent=23 // pred_check_branch
        %222 = sbr.rel (%p220) target = $region32
      $region31: #{resnet_forward.22} parent=23 // pred_region
        %s223 = smul.u32 32, %s19
        %s224 = smul.u32 2, %s18
        %p225 = scmp.lt.s32.totalorder %s223, 287
        %s226 = scalar_select %p225, %s223, 287
        %p227 = scmp.lt.s32.totalorder %s224, 1
        %s228 = scalar_select %p227, %s224, 1
        %s229 = smul.addr %s226, 2
        %s230 = sadd.s32 %s228, %s229
        %s231 = smul.addr %s230, 4
        %s232 = scalar_lea.vmem %s1, %s231
        %s233 = smul.u32 32, %s19
        %s234 = smul.u32 2, %s18
      $region32: #{resnet_forward.22} parent=23 // pred_fallthru
        _
    $region24: #{resnet_forward.22} parent=5 // pred_fallthru
      _
    %p235 = scmp.le.s32.totalorder 1, %s10
    %p236 = scmp.lt.s32.totalorder %s10, 10
    %p237 = pnand %p235, %p236
    %p238 = pneg %p237
    // Predicated region
    $region33: #{resnet_forward.22} parent=5 // pred_check
      _
    $region34: #{resnet_forward.22} parent=5 // pred_check_branch
      %240 = sbr.rel (%p237) target = $region36
    $region35: #{resnet_forward.22} parent=5 // pred_region
      %s241 = ssub.s32 %s10, 1
      %s242 = smul.u32 2, %s22
      %p243 = scmp.lt.s32.totalorder %s20, 0
      %s244 = scalar_select %p243, %s20, 0
      %p245 = scmp.lt.s32.totalorder %s242, 17
      %s246 = scalar_select %p245, %s242, 17
      %s247 = smul.addr %s244, 18
      %s248 = sadd.s32 %s246, %s247
      %s249 = smul.addr %s248, 4
      %s250 = scalar_lea.vmem %s0, %s249
      %p251 = pneg %p57
      %p252 = pneg %p54
      %s253 = smul.u32 32, %s22
      %s254 = smul.u32 2, %s21
      %p255 = scmp.lt.s32.totalorder %s253, 287
      %s256 = scalar_select %p255, %s253, 287
      %p257 = scmp.lt.s32.totalorder %s254, 1
      %s258 = scalar_select %p257, %s254, 1
      %s259 = smul.addr %s256, 2
      %s260 = sadd.s32 %s258, %s259
      %s261 = smul.addr %s260, 4
      %s262 = scalar_lea.vmem %s1, %s261
      %p263 = pneg %p85
      %p264 = pneg %p82
      %s265 = smul.u32 2, %s21
      %p266 = scmp.lt.s32.totalorder %s265, 1
      %s267 = scalar_select %p266, %s265, 1
      %s268 = scalar_lea.vmem %s2, %s267
      %p269 = pneg %p111
      %p270 = pneg %p108
      %s271 = smul.u32 2, %s21
      %p272 = scmp.lt.s32.totalorder %s20, 0
      %s273 = scalar_select %p272, %s20, 0
      %p274 = scmp.lt.s32.totalorder %s271, 1
      %s275 = scalar_select %p274, %s271, 1
      %s276 = smul.addr %s273, 2
      %s277 = sadd.s32 %s275, %s276
      %s278 = smul.addr %s277, 4
      %s279 = scalar_lea.vmem %s3, %s278
      %p280 = pneg %p139
      %p281 = pneg %p136
      %p282 = pneg %p167
      %p283 = pneg %p164
      %s284 = smul.u32 2, %s21
      %p285 = scmp.lt.s32.totalorder %s20, 0
      %s286 = scalar_select %p285, %s20, 0
      %p287 = scmp.lt.s32.totalorder %s284, 1
      %s288 = scalar_select %p287, %s284, 1
      %s289 = smul.addr %s286, 2
      %s290 = sadd.s32 %s288, %s289
      %s291 = smul.addr %s290, 4
      %s292 = scalar_lea.vmem %s4, %s291
      %s293 = smul.u32 2, %s22
      %p294 = scmp.lt.s32.totalorder %s20, 0
      %s295 = scalar_select %p294, %s20, 0
      %p296 = scmp.lt.s32.totalorder %s293, 17
      %s297 = scalar_select %p296, %s293, 17
      %s298 = smul.addr %s295, 18
      %s299 = sadd.s32 %s297, %s298
      %s300 = smul.addr %s299, 4
      %s301 = scalar_lea.vmem %s0, %s300
      %s302 = smul.u32 2, %s22
      %s303 = smul.u32 32, %s22
      %s304 = smul.u32 2, %s21
      %p305 = scmp.lt.s32.totalorder %s303, 287
      %s306 = scalar_select %p305, %s303, 287
      %p307 = scmp.lt.s32.totalorder %s304, 1
      %s308 = scalar_select %p307, %s304, 1
      %s309 = smul.addr %s306, 2
      %s310 = sadd.s32 %s308, %s309
      %s311 = smul.addr %s310, 4
      %s312 = scalar_lea.vmem %s1, %s311
      %s313 = smul.u32 32, %s22
      %s314 = smul.u32 2, %s21
      %s315 = smul.u32 2, %s21
      %p316 = scmp.lt.s32.totalorder %s315, 1
      %s317 = scalar_select %p316, %s315, 1
      %s318 = scalar_lea.vmem %s2, %s317
      %s319 = smul.u32 2, %s21
      %s320 = smul.u32 2, %s21
      %p321 = scmp.lt.s32.totalorder %s20, 0
      %s322 = scalar_select %p321, %s20, 0
      %p323 = scmp.lt.s32.totalorder %s320, 1
      %s324 = scalar_select %p323, %s320, 1
      %s325 = smul.addr %s322, 2
      %s326 = sadd.s32 %s324, %s325
      %s327 = smul.addr %s326, 4
      %s328 = scalar_lea.vmem %s3, %s327
      %s329 = smul.u32 2, %s21
      %s330 = smul.u32 2, %s21
      %p331 = scmp.lt.s32.totalorder %s20, 0
      %s332 = scalar_select %p331, %s20, 0
      %p333 = scmp.lt.s32.totalorder %s330, 1
      %s334 = scalar_select %p333, %s330, 1
      %s335 = smul.addr %s332, 2
      %s336 = sadd.s32 %s334, %s335
      %s337 = smul.addr %s336, 4
      %s338 = scalar_lea.vmem %s4, %s337
      %s339 = smul.u32 2, %s21
      %p340 = scmp.eq.s32.totalorder %s22, 0
      // Predicated region
      $region37: #{resnet_forward.22} parent=35 // pred_check
        %p341 = pneg %p340
      $region38: #{resnet_forward.22} parent=35 // pred_check_branch
        %343 = sbr.rel (%p341) target = $region40
      $region39: #{resnet_forward.22} parent=35 // pred_region
        %344 = vst [vmem:[#allocation2] sm:$0xff] 0.0
        %345 = vst [vmem:[#allocation2 + $0x8] sm:$0xff] 0.0
      $region40: #{resnet_forward.22} parent=35 // pred_fallthru
        _
      %v346 = vld [vmem:[#allocation2] sm:$0xff]
      %v347 = vld [vmem:[#allocation2 + $0x8] sm:$0xff]
      %v348 = vld [vmem:[%s301] sm:$0xff]
      %v349 = vld [vmem:[%s312] sm:$0xff]
      %v350 = vld [vmem:[%s312 + $0x8] sm:$0xff]
      %v351 = vld [vmem:[%s312 + $0x10] sm:$0xff]
      %v352 = vld [vmem:[%s312 + $0x18] sm:$0xff]
      %v353 = vld [vmem:[%s312 + $0x20] sm:$0xff]
      %v354 = vld [vmem:[%s312 + $0x28] sm:$0xff]
      %v355 = vld [vmem:[%s312 + $0x30] sm:$0xff]
      %v356 = vld [vmem:[%s312 + $0x38] sm:$0xff]
      %v357 = vld [vmem:[%s312 + $0x40] sm:$0xff]
      %v358 = vld [vmem:[%s312 + $0x48] sm:$0xff]
      %v359 = vld [vmem:[%s312 + $0x50] sm:$0xff]
      %v360 = vld [vmem:[%s312 + $0x58] sm:$0xff]
      %v361 = vld [vmem:[%s312 + $0x60] sm:$0xff]
      %v362 = vld [vmem:[%s312 + $0x68] sm:$0xff]
      %v363 = vld [vmem:[%s312 + $0x70] sm:$0xff]
      %v364 = vld [vmem:[%s312 + $0x78] sm:$0xff]
      %v365 = vld [vmem:[%s312 + $0x80] sm:$0xff]
      %v366 = vld [vmem:[%s312 + $0x88] sm:$0xff]
      %v367 = vld [vmem:[%s312 + $0x90] sm:$0xff]
      %v368 = vld [vmem:[%s312 + $0x98] sm:$0xff]
      %v369 = vld [vmem:[%s312 + $0xa0] sm:$0xff]
      %v370 = vld [vmem:[%s312 + $0xa8] sm:$0xff]
      %v371 = vld [vmem:[%s312 + $0xb0] sm:$0xff]
      %v372 = vld [vmem:[%s312 + $0xb8] sm:$0xff]
      %v373 = vld [vmem:[%s312 + $0xc0] sm:$0xff]
      %v374 = vld [vmem:[%s312 + $0xc8] sm:$0xff]
      %v375 = vld [vmem:[%s312 + $0xd0] sm:$0xff]
      %v376 = vld [vmem:[%s312 + $0xd8] sm:$0xff]
      %v377 = vld [vmem:[%s312 + $0xe0] sm:$0xff]
      %v378 = vld [vmem:[%s312 + $0xe8] sm:$0xff]
      %v379 = vld [vmem:[%s312 + $0xf0] sm:$0xff]
      %v380 = vld [vmem:[%s312 + $0xf8] sm:$0xff]
      %v382 = vunpack.c.l.b16 %v348
      %v383 = vunpack.c.h.b16 %v348
      %v384 = vpack.c.b16 %v382, %v382
      %v385 = vpack.c.b16 %v383, %v383
      %v420 = vunpack.c.l.b16 %v349
      %v421 = vunpack.c.h.b16 %v349
      %v422 = vunpack.c.l.b16 %v350
      %v423 = vunpack.c.h.b16 %v350
      %v424 = vunpack.c.l.b16 %v351
      %v425 = vunpack.c.h.b16 %v351
      %v426 = vunpack.c.l.b16 %v352
      %v427 = vunpack.c.h.b16 %v352
      %v428 = vunpack.c.l.b16 %v353
      %v429 = vunpack.c.h.b16 %v353
      %v430 = vunpack.c.l.b16 %v354
      %v431 = vunpack.c.h.b16 %v354
      %v432 = vunpack.c.l.b16 %v355
      %v433 = vunpack.c.h.b16 %v355
      %v434 = vunpack.c.l.b16 %v356
      %v435 = vunpack.c.h.b16 %v356
      %v436 = vunpack.c.l.b16 %v357
      %v437 = vunpack.c.h.b16 %v357
      %v438 = vunpack.c.l.b16 %v358
      %v439 = vunpack.c.h.b16 %v358
      %v440 = vunpack.c.l.b16 %v359
      %v441 = vunpack.c.h.b16 %v359
      %v442 = vunpack.c.l.b16 %v360
      %v443 = vunpack.c.h.b16 %v360
      %v444 = vunpack.c.l.b16 %v361
      %v445 = vunpack.c.h.b16 %v361
      %v446 = vunpack.c.l.b16 %v362
      %v447 = vunpack.c.h.b16 %v362
      %v448 = vunpack.c.l.b16 %v363
      %v449 = vunpack.c.h.b16 %v363
      %v450 = vunpack.c.l.b16 %v364
      %v451 = vunpack.c.h.b16 %v364
      %v452 = vunpack.c.l.b16 %v365
      %v453 = vunpack.c.h.b16 %v365
      %v454 = vunpack.c.l.b16 %v366
      %v455 = vunpack.c.h.b16 %v366
      %v456 = vunpack.c.l.b16 %v367
      %v457 = vunpack.c.h.b16 %v367
      %v458 = vunpack.c.l.b16 %v368
      %v459 = vunpack.c.h.b16 %v368
      %v460 = vunpack.c.l.b16 %v369
      %v461 = vunpack.c.h.b16 %v369
      %v462 = vunpack.c.l.b16 %v370
      %v463 = vunpack.c.h.b16 %v370
      %v464 = vunpack.c.l.b16 %v371
      %v465 = vunpack.c.h.b16 %v371
      %v466 = vunpack.c.l.b16 %v372
      %v467 = vunpack.c.h.b16 %v372
      %v468 = vunpack.c.l.b16 %v373
      %v469 = vunpack.c.h.b16 %v373
      %v470 = vunpack.c.l.b16 %v374
      %v471 = vunpack.c.h.b16 %v374
      %v472 = vunpack.c.l.b16 %v375
      %v473 = vunpack.c.h.b16 %v375
      %v474 = vunpack.c.l.b16 %v376
      %v475 = vunpack.c.h.b16 %v376
      %v476 = vunpack.c.l.b16 %v377
      %v477 = vunpack.c.h.b16 %v377
      %v478 = vunpack.c.l.b16 %v378
      %v479 = vunpack.c.h.b16 %v378
      %v480 = vunpack.c.l.b16 %v379
      %v481 = vunpack.c.h.b16 %v379
      %v482 = vunpack.c.l.b16 %v380
      %v483 = vunpack.c.h.b16 %v380
      %v484 = vpack.c.b16 %v422, %v420
      %v485 = vpack.c.b16 %v423, %v421
      %v486 = vpack.c.b16 %v426, %v424
      %v487 = vpack.c.b16 %v427, %v425
      %v488 = vpack.c.b16 %v430, %v428
      %v489 = vpack.c.b16 %v431, %v429
      %v490 = vpack.c.b16 %v434, %v432
      %v491 = vpack.c.b16 %v435, %v433
      %v492 = vpack.c.b16 %v438, %v436
      %v493 = vpack.c.b16 %v439, %v437
      %v494 = vpack.c.b16 %v442, %v440
      %v495 = vpack.c.b16 %v443, %v441
      %v496 = vpack.c.b16 %v446, %v444
      %v497 = vpack.c.b16 %v447, %v445
      %v498 = vpack.c.b16 %v450, %v448
      %v499 = vpack.c.b16 %v451, %v449
      %v500 = vpack.c.b16 %v454, %v452
      %v501 = vpack.c.b16 %v455, %v453
      %v502 = vpack.c.b16 %v458, %v456
      %v503 = vpack.c.b16 %v459, %v457
      %v504 = vpack.c.b16 %v462, %v460
      %v505 = vpack.c.b16 %v463, %v461
      %v506 = vpack.c.b16 %v466, %v464
      %v507 = vpack.c.b16 %v467, %v465
      %v508 = vpack.c.b16 %v470, %v468
      %v509 = vpack.c.b16 %v471, %v469
      %v510 = vpack.c.b16 %v474, %v472
      %v511 = vpack.c.b16 %v475, %v473
      %v512 = vpack.c.b16 %v478, %v476
      %v513 = vpack.c.b16 %v479, %v477
      %v514 = vpack.c.b16 %v482, %v480
      %v515 = vpack.c.b16 %v483, %v481
      %548 = vmatprep.subr.bf16.mxu0 %v485
      %549 = vmatpush1.bf16.msra.mxu0 %v484
      %550 = vmatprep.subr.bf16.mxu0 %v487
      %551 = vmatpush1.bf16.msra.mxu0 %v486
      %552 = vmatprep.subr.bf16.mxu0 %v489
      %553 = vmatpush1.bf16.msra.mxu0 %v488
      %554 = vmatprep.subr.bf16.mxu0 %v491
      %555 = vmatpush1.bf16.msra.mxu0 %v490
      %556 = vmatprep.subr.bf16.mxu0 %v493
      %557 = vmatpush1.bf16.msra.mxu0 %v492
      %558 = vmatprep.subr.bf16.mxu0 %v495
      %559 = vmatpush1.bf16.msra.mxu0 %v494
      %560 = vmatprep.subr.bf16.mxu0 %v497
      %561 = vmatpush1.bf16.msra.mxu0 %v496
      %562 = vmatprep.subr.bf16.mxu0 %v499
      %563 = vmatpush1.bf16.msra.mxu0 %v498
      %564 = vmatprep.subr.bf16.mxu0 %v501
      %565 = vmatpush1.bf16.msra.mxu0 %v500
      %566 = vmatprep.subr.bf16.mxu0 %v503
      %567 = vmatpush1.bf16.msra.mxu0 %v502
      %568 = vmatprep.subr.bf16.mxu0 %v505
      %569 = vmatpush1.bf16.msra.mxu0 %v504
      %570 = vmatprep.subr.bf16.mxu0 %v507
      %571 = vmatpush1.bf16.msra.mxu0 %v506
      %572 = vmatprep.subr.bf16.mxu0 %v509
      %573 = vmatpush1.bf16.msra.mxu0 %v508
      %574 = vmatprep.subr.bf16.mxu0 %v511
      %575 = vmatpush1.bf16.msra.mxu0 %v510
      %576 = vmatprep.subr.bf16.mxu0 %v513
      %577 = vmatpush1.bf16.msra.mxu0 %v512
      %578 = vmatprep.subr.bf16.mxu0 %v515
      %579 = vmatpush1.bf16.msra.mxu0 %v514
      %580 = vmatprep.mubr.bf16.mxu0 %v385
      %581 = vmatmul.mubr.bf16.gmra.mrb[0].mxu0 %v384
      %v582 = vpop.f32.mrb[0].mxu0
      %v583 = vadd.f32 0.0, %v582
      %v584 = vpop.f32.mrb[0].mxu0
      %v585 = vadd.f32 0.0, %v584
      %v586 = vpop.f32.mrb[0].mxu0
      %v587 = vpop.f32.mrb[0].mxu0
      %588 = vdwg.mxu0
      %v589 = vadd.f32 %v346, %v583
      %v590 = vadd.f32 %v347, %v585
      %591 = vst [vmem:[#allocation2] sm:$0xff] %v589
      %592 = vst [vmem:[#allocation2 + $0x8] sm:$0xff] %v590
      %p593 = scmp.eq.s32.totalorder %s22, 8
      // Predicated region
      $region41: #{resnet_forward.22} parent=35 // pred_check
        %p594 = pneg %p593
      $region42: #{resnet_forward.22} parent=35 // pred_check_branch
        %596 = sbr.rel (%p594) target = $region44
      $region43: #{resnet_forward.22} parent=35 // pred_region
        %v597 = vld [vmem:[#allocation2] sm:$0xff]
        %v598 = vld [vmem:[#allocation2 + $0x8] sm:$0xff]
        %v599 = vld [vmem:[%s318] sm:$0x3]
        %v601 = vlaneseq
        %v602 = vshrl.u32 %v601, 7
        %v603 = vsub.s32 0, %v602
        %v604 = vrot.slane %v599, %v603
        %v605 = vlaneseq
        %v606 = vshrl.u32 %v605, 7
        %v607 = vsub.s32 1, %v606
        %v608 = vrot.slane %v599, %v607
        %v611 = vadd.f32 %v597, %v604
        %v612 = vadd.f32 %v598, %v608
        %v613 = vld [vmem:[%s328] sm:$0xff]
        %v614 = vunpack.c.l.bf16 %v613
        %v615 = vunpack.c.h.bf16 %v613
        %v616 = vadd.f32 %v611, %v614
        %v617 = vadd.f32 %v612, %v615
        %v618 = vmax.f32 %v616, 0.0
        %v619 = vmax.f32 %v617, 0.0
        %v620 = vpack.c.bf16 %v618, %v618
        %v621 = vpack.c.bf16 %v619, %v619
        %v624 = vunpack.c.l.b16 %v620
        %v625 = vunpack.c.l.b16 %v621
        %v626 = vpack.c.b16 %v625, %v624
        %628 = vst [vmem:[%s338] sm:$0xff] %v626
      $region44: #{resnet_forward.22} parent=35 // pred_fallthru
        _
      %s629 = smul.u32 2, %s21
      %p630 = scmp.lt.s32.totalorder %s20, 0
      %s631 = scalar_select %p630, %s20, 0
      %p632 = scmp.lt.s32.totalorder %s629, 1
      %s633 = scalar_select %p632, %s629, 1
      %s634 = smul.addr %s631, 2
      %s635 = sadd.s32 %s633, %s634
      %s636 = smul.addr %s635, 4
      %s637 = scalar_lea.vmem %s4, %s636
      // Predicated region
      $region45: #{resnet_forward.22} parent=35 // pred_check
        %p638 = pneg %p164
      $region46: #{resnet_forward.22} parent=35 // pred_check_branch
        %640 = sbr.rel (%p638) target = $region48
      $region47: #{resnet_forward.22} parent=35 // pred_region
        %s641 = smul.u32 2, %s21
      $region48: #{resnet_forward.22} parent=35 // pred_fallthru
        _
      // Predicated region
      $region49: #{resnet_forward.22} parent=35 // pred_check
        %p642 = pneg %p164
      $region50: #{resnet_forward.22} parent=35 // pred_check_branch
        %644 = sbr.rel (%p642) target = $region52
      $region51: #{resnet_forward.22} parent=35 // pred_region
        %s645 = smul.u32 2, %s21
        %p646 = scmp.lt.s32.totalorder %s20, 0
        %s647 = scalar_select %p646, %s20, 0
        %p648 = scmp.lt.s32.totalorder %s645, 1
        %s649 = scalar_select %p648, %s645, 1
        %s650 = smul.addr %s647, 2
        %s651 = sadd.s32 %s649, %s650
        %s652 = smul.addr %s651, 4
        %s653 = scalar_lea.vmem %s4, %s652
      $region52: #{resnet_forward.22} parent=35 // pred_fallthru
        _
    $region36: #{resnet_forward.22} parent=5 // pred_fallthru
      _
    %p654 = scmp.le.s32.totalorder 2, %s10
    // Predicated region
    $region53: #{resnet_forward.22} parent=5 // pred_check
      %p655 = pneg %p654
    $region54: #{resnet_forward.22} parent=5 // pred_check_branch
      %657 = sbr.rel (%p655) target = $region56
    $region55: #{resnet_forward.22} parent=5 // pred_region
      %s658 = ssub.s32 %s10, 2
    $region56: #{resnet_forward.22} parent=5 // pred_fallthru
      _
  $region6: #{resnet_forward.22} parent=0 // loop_footer
    %s14 = sadd.s32 1, %s10
  $region7: #{resnet_forward.22} parent=0 // loop_footer_branch
    %9 = sbr.rel target = $region3
  $region8: #{resnet_forward.22} parent=0 // loop_exit
    _

// kernel: resnet_forward.23
$region0: #{resnet_forward.23}
  #allocation0 [shape = 'u32[]', space=smem, size = 0x4, offset = 0x4, fixed_abs, tag = 'smem constant byte address 0x4 - core index']
  #allocation1 [shape = 'u32[144,128]{1,0:T(1,128)}', space=vmem, size = 0x12000, scoped, tag = 'internal scratch']
  #allocation2 [shape = 'f32[8,256]{1,0:T(8,128)}', space=vmem, size = 0x2000, scoped, tag = 'scratch operand']
  %s0 = inlined_call_operand.vmem [shape: bf16[8,2304], index: 0, kind: input, shape index: {}]
  %s1 = inlined_call_operand.vmem [shape: bf16[2304,512], index: 1, kind: input, shape index: {}]
  %s2 = inlined_call_operand.vmem [shape: f32[1,512], index: 2, kind: input, shape index: {}]
  %s3 = inlined_call_operand.vmem [shape: bf16[8,512], index: 3, kind: output, shape index: {}]
  %s4 = sld [smem:[#allocation0]]
  $region91: #{resnet_forward.23} parent=0
    _
  %s6 = ssub.s32 1, %s4
  %s7 = scalar_select 0, %s6, %s4
  $region1: #{resnet_forward.23} parent=0
    #allocation3 [shape = 'u8[262144]{0}', space=vmem, size = 0x40000, scoped, tag = 'input window, operand 1']
    loop: start=0, step=1, limit=20
    $region2: #{resnet_forward.23} parent=1 // loop_pre_header
      _
    $region3: #{resnet_forward.23} parent=1 // loop_header
      %s9 = sphi 0, %s13
      %p10 = scmp.ge.s32.totalorder %s9, 20
      %s16 = sphi 0, %s35
      %s17 = sphi 0, %s31
      %s18 = sphi 0, %s27
      %s19 = sphi 0, %s16
      %s20 = sphi 0, %s17
      %s21 = sphi 0, %s18
      %s22 = sphi 0, %s19
      %s23 = sphi 0, %s20
      %s24 = sphi 0, %s21
      %s40 = sphi 0, %s42
      %s43 = sphi 0, %s40
      %s44 = sphi 0, %s43
      %s60 = sphi 0, %s44
      %s68 = sphi 0, %s70
      %s71 = sphi 0, %s68
      %s72 = sphi 0, %s71
      %s88 = sphi 0, %s72
      %s94 = sphi 0, %s96
      %s97 = sphi 0, %s94
      %s98 = sphi 0, %s97
      %s114 = sphi 0, %s98
      %s122 = sphi 0, %s124
      %s125 = sphi 0, %s122
      %s126 = sphi 0, %s125
      %s142 = sphi 0, %s126
    $region4: #{resnet_forward.23} parent=1 // loop_header_branch
      %12 = sbr.rel (%p10) target = $region8
    $region5: #{resnet_forward.23} parent=1 // loop_body
      %s14 = ssub.s32 %s9, 1
      %s15 = ssub.s32 %s9, 2
      %s25 = sadd.s32 1, %s18
      %p26 = scmp.ge.s32.totalorder %s25, 9
      %s27 = scalar_select %p26, 0, %s25
      %s28 = sadd.s32 1, %s17
      %s29 = scalar_select %p26, %s28, %s17
      %p30 = scmp.ge.s32.totalorder %s29, 2
      %s31 = scalar_select %p30, 0, %s29
      %s32 = sadd.s32 1, %s16
      %s33 = scalar_select %p30, %s32, %s16
      %p34 = scmp.ge.s32.totalorder %s33, 1
      %s35 = scalar_select %p34, 0, %s33
      %s36 = ssub.s32 %s16, %s35
      %s37 = ssub.s32 %s18, %s27
      %s38 = sor.u32 %s36, %s37
      %p39 = scmp.eq.s32.totalorder %s38, 0
      %s41 = sadd.s32 %s40, 1
      %s42 = scalar_select %p39, %s40, %s41
      %p45 = pneg %p39
      %p46 = scmp.eq.s32.totalorder %s9, 17
      %p47 = por %p45, %p46
      %p48 = scmp.ne.s32.totalorder %s40, %s43
      %p49 = scmp.eq.s32.totalorder %s9, 0
      %p50 = por %p48, %p49
      %p51 = scmp.ne.s32.totalorder %s40, %s43
      %p52 = scmp.eq.s32.totalorder %s14, 17
      %p53 = por %p51, %p52
      %p54 = scmp.ne.s32.totalorder %s43, %s44
      %p55 = scmp.eq.s32.totalorder %s14, 0
      %p56 = por %p54, %p55
      %p57 = scmp.ne.s32.totalorder %s43, %s44
      %p58 = scmp.eq.s32.totalorder %s15, 17
      %p59 = por %p57, %p58
      %p61 = scmp.ne.s32.totalorder %s44, %s60
      %p62 = scmp.eq.s32.totalorder %s15, 0
      %p63 = por %p61, %p62
      %s64 = ssub.s32 %s18, %s27
      %s65 = ssub.s32 %s17, %s31
      %s66 = sor.u32 %s64, %s65
      %p67 = scmp.eq.s32.totalorder %s66, 0
      %s69 = sadd.s32 %s68, 1
      %s70 = scalar_select %p67, %s68, %s69
      %p73 = pneg %p67
      %p74 = scmp.eq.s32.totalorder %s9, 17
      %p75 = por %p73, %p74
      %p76 = scmp.ne.s32.totalorder %s68, %s71
      %p77 = scmp.eq.s32.totalorder %s9, 0
      %p78 = por %p76, %p77
      %p79 = scmp.ne.s32.totalorder %s68, %s71
      %p80 = scmp.eq.s32.totalorder %s14, 17
      %p81 = por %p79, %p80
      %p82 = scmp.ne.s32.totalorder %s71, %s72
      %p83 = scmp.eq.s32.totalorder %s14, 0
      %p84 = por %p82, %p83
      %p85 = scmp.ne.s32.totalorder %s71, %s72
      %p86 = scmp.eq.s32.totalorder %s15, 17
      %p87 = por %p85, %p86
      %p89 = scmp.ne.s32.totalorder %s72, %s88
      %p90 = scmp.eq.s32.totalorder %s15, 0
      %p91 = por %p89, %p90
      %s92 = ssub.s32 %s17, %s31
      %p93 = scmp.eq.s32.totalorder %s92, 0
      %s95 = sadd.s32 %s94, 1
      %s96 = scalar_select %p93, %s94, %s95
      %p99 = pneg %p93
      %p100 = scmp.eq.s32.totalorder %s9, 17
      %p101 = por %p99, %p100
      %p102 = scmp.ne.s32.totalorder %s94, %s97
      %p103 = scmp.eq.s32.totalorder %s9, 0
      %p104 = por %p102, %p103
      %p105 = scmp.ne.s32.totalorder %s94, %s97
      %p106 = scmp.eq.s32.totalorder %s14, 17
      %p107 = por %p105, %p106
      %p108 = scmp.ne.s32.totalorder %s97, %s98
      %p109 = scmp.eq.s32.totalorder %s14, 0
      %p110 = por %p108, %p109
      %p111 = scmp.ne.s32.totalorder %s97, %s98
      %p112 = scmp.eq.s32.totalorder %s15, 17
      %p113 = por %p111, %p112
      %p115 = scmp.ne.s32.totalorder %s98, %s114
      %p116 = scmp.eq.s32.totalorder %s15, 0
      %p117 = por %p115, %p116
      %s118 = ssub.s32 %s16, %s35
      %s119 = ssub.s32 %s17, %s31
      %s120 = sor.u32 %s118, %s119
      %p121 = scmp.eq.s32.totalorder %s120, 0
      %s123 = sadd.s32 %s122, 1
      %s124 = scalar_select %p121, %s122, %s123
      %p127 = pneg %p121
      %p128 = scmp.eq.s32.totalorder %s9, 17
      %p129 = por %p127, %p128
      %p130 = scmp.ne.s32.totalorder %s122, %s125
      %p131 = scmp.eq.s32.totalorder %s9, 0
      %p132 = por %p130, %p131
      %p133 = scmp.ne.s32.totalorder %s122, %s125
      %p134 = scmp.eq.s32.totalorder %s14, 17
      %p135 = por %p133, %p134
      %p136 = scmp.ne.s32.totalorder %s125, %s126
      %p137 = scmp.eq.s32.totalorder %s14, 0
      %p138 = por %p136, %p137
      %p139 = scmp.ne.s32.totalorder %s125, %s126
      %p140 = scmp.eq.s32.totalorder %s15, 17
      %p141 = por %p139, %p140
      %p143 = scmp.ne.s32.totalorder %s126, %s142
      %p144 = scmp.eq.s32.totalorder %s15, 0
      %p145 = por %p143, %p144
      %p146 = scmp.le.s32.totalorder 1, %s9
      %p147 = scmp.lt.s32.totalorder %s9, 19
      %p148 = pnand %p146, %p147
      %p149 = pneg %p148
      // Predicated region
      $region9: #{resnet_forward.23} parent=5 // pred_check
        _
      $region10: #{resnet_forward.23} parent=5 // pred_check_branch
        %151 = sbr.rel (%p148) target = $region12
      $region11: #{resnet_forward.23} parent=5 // pred_region
        %s152 = ssub.s32 %s9, 1
      $region12: #{resnet_forward.23} parent=5 // pred_fallthru
        _
      %p153 = scmp.lt.s32.totalorder %s9, 18
      // Predicated region
      $region13: #{resnet_forward.23} parent=5 // pred_check
        %p154 = pneg %p153
      $region14: #{resnet_forward.23} parent=5 // pred_check_branch
        %156 = sbr.rel (%p154) target = $region16
      $region15: #{resnet_forward.23} parent=5 // pred_region
        // Predicated region
        $region17: #{resnet_forward.23} parent=15 // pred_check
          %p157 = pneg %p50
        $region18: #{resnet_forward.23} parent=15 // pred_check_branch
          %159 = sbr.rel (%p157) target = $region20
        $region19: #{resnet_forward.23} parent=15 // pred_region
          %s160 = smul.u32 2, %s18
          %p161 = scmp.lt.s32.totalorder %s16, 0
          %s162 = scalar_select %p161, %s16, 0
          %p163 = scmp.lt.s32.totalorder %s160, 17
          %s164 = scalar_select %p163, %s160, 17
          %s165 = smul.addr %s162, 18
          %s166 = sadd.s32 %s164, %s165
          %s167 = smul.addr %s166, 4
          %s168 = scalar_lea.vmem %s0, %s167
          %s169 = smul.u32 2, %s18
        $region20: #{resnet_forward.23} parent=15 // pred_fallthru
          _
        // Predicated region
        $region21: #{resnet_forward.23} parent=15 // pred_check
          %p170 = pneg %p78
        $region22: #{resnet_forward.23} parent=15 // pred_check_branch
          %172 = sbr.rel (%p170) target = $region24
        $region23: #{resnet_forward.23} parent=15 // pred_region
          %s173 = sand.u32 %s68, 1
          %s174 = sand.u32 %s68, 1
          %s175 = smul.addr %s174, 256
          %s176 = scalar_lea.vmem [#allocation3], %s175
          %s177 = smul.u32 32, %s18
          %s178 = smul.u32 2, %s17
          %s179 = smul.addr %s177, 4
          %s180 = sadd.s32 %s178, %s179
          %s181 = smul.addr %s180, 4
          %s182 = scalar_lea.vmem %s1, %s181
          // Predicated region
          $region25: #{resnet_forward.23} parent=23 // pred_check
            _
          $region26: #{resnet_forward.23} parent=23 // pred_check_branch
            %184 = sbr.rel (0) target = $region28
          $region27: #{resnet_forward.23} parent=23 // pred_region
            // Predicated region
            $region29: #{resnet_forward.23} parent=27 // pred_check
              _
            $region30: #{resnet_forward.23} parent=27 // pred_check_branch
              %186 = sbr.rel (0) target = $region32
            $region31: #{resnet_forward.23} parent=27 // pred_region
              // Predicated region
              $region44: #{resnet_forward.23} parent=31 // pred_check
                _
              $region45: #{resnet_forward.23} parent=31 // pred_check_branch
                %263 = sbr.rel (0) target = $region47
              $region46: #{resnet_forward.23} parent=31 // pred_region
                loop: start=0, step=1, limit=1
                $region48: #{resnet_forward.23} parent=46 // loop_pre_header
                  _
                $region49: #{resnet_forward.23} parent=46 // loop_header
                  %s265 = sphi 0, %s269
                  %p266 = scmp.ge.s32.totalorder %s265, 1
                  %s270 = sphi %s182, %s182
                  %s271 = sphi %s176, %s176
                $region50: #{resnet_forward.23} parent=46 // loop_header_branch
                  %268 = sbr.rel (%p266) target = $region54
                $region51: #{resnet_forward.23} parent=46 // loop_body
                  %v272 = vld [vmem:[%s270] sm:$0xff]
                  %273 = vst [vmem:[%s271] sm:$0xff] %v272
                  %v274 = vld [vmem:[%s270 + $0x10] sm:$0xff]
                  %275 = vst [vmem:[%s271 + $0x8] sm:$0xff] %v274
                  %v276 = vld [vmem:[%s270 + $0x20] sm:$0xff]
                  %277 = vst [vmem:[%s271 + $0x10] sm:$0xff] %v276
                  %v278 = vld [vmem:[%s270 + $0x30] sm:$0xff]
                  %279 = vst [vmem:[%s271 + $0x18] sm:$0xff] %v278
                  %v280 = vld [vmem:[%s270 + $0x40] sm:$0xff]
                  %281 = vst [vmem:[%s271 + $0x20] sm:$0xff] %v280
                  %v282 = vld [vmem:[%s270 + $0x50] sm:$0xff]
                  %283 = vst [vmem:[%s271 + $0x28] sm:$0xff] %v282
                  %v284 = vld [vmem:[%s270 + $0x60] sm:$0xff]
                  %285 = vst [vmem:[%s271 + $0x30] sm:$0xff] %v284
                  %v286 = vld [vmem:[%s270 + $0x70] sm:$0xff]
                  %287 = vst [vmem:[%s271 + $0x38] sm:$0xff] %v286
                  %v288 = vld [vmem:[%s270 + $0x80] sm:$0xff]
                  %289 = vst [vmem:[%s271 + $0x40] sm:$0xff] %v288
                  %v290 = vld [vmem:[%s270 + $0x90] sm:$0xff]
                  %291 = vst [vmem:[%s271 + $0x48] sm:$0xff] %v290
                  %v292 = vld [vmem:[%s270 + $0xa0] sm:$0xff]
                  %293 = vst [vmem:[%s271 + $0x50] sm:$0xff] %v292
                  %v294 = vld [vmem:[%s270 + $0xb0] sm:$0xff]
                  %295 = vst [vmem:[%s271 + $0x58] sm:$0xff] %v294
                  %v296 = vld [vmem:[%s270 + $0xc0] sm:$0xff]
                  %297 = vst [vmem:[%s271 + $0x60] sm:$0xff] %v296
                  %v298 = vld [vmem:[%s270 + $0xd0] sm:$0xff]
                  %299 = vst [vmem:[%s271 + $0x68] sm:$0xff] %v298
                  %v300 = vld [vmem:[%s270 + $0xe0] sm:$0xff]
                  %301 = vst [vmem:[%s271 + $0x70] sm:$0xff] %v300
                  %v302 = vld [vmem:[%s270 + $0xf0] sm:$0xff]
                  %303 = vst [vmem:[%s271 + $0x78] sm:$0xff] %v302
                  %v304 = vld [vmem:[%s270 + $0x100] sm:$0xff]
                  %305 = vst [vmem:[%s271 + $0x80] sm:$0xff] %v304
                  %v306 = vld [vmem:[%s270 + $0x110] sm:$0xff]
                  %307 = vst [vmem:[%s271 + $0x88] sm:$0xff] %v306
                  %v308 = vld [vmem:[%s270 + $0x120] sm:$0xff]
                  %309 = vst [vmem:[%s271 + $0x90] sm:$0xff] %v308
                  %v310 = vld [vmem:[%s270 + $0x130] sm:$0xff]
                  %311 = vst [vmem:[%s271 + $0x98] sm:$0xff] %v310
                  %v312 = vld [vmem:[%s270 + $0x140] sm:$0xff]
                  %313 = vst [vmem:[%s271 + $0xa0] sm:$0xff] %v312
                  %v314 = vld [vmem:[%s270 + $0x150] sm:$0xff]
                  %315 = vst [vmem:[%s271 + $0xa8] sm:$0xff] %v314
                  %v316 = vld [vmem:[%s270 + $0x160] sm:$0xff]
                  %317 = vst [vmem:[%s271 + $0xb0] sm:$0xff] %v316
                  %v318 = vld [vmem:[%s270 + $0x170] sm:$0xff]
                  %319 = vst [vmem:[%s271 + $0xb8] sm:$0xff] %v318
                  %v320 = vld [vmem:[%s270 + $0x180] sm:$0xff]
                  %321 = vst [vmem:[%s271 + $0xc0] sm:$0xff] %v320
                  %v322 = vld [vmem:[%s270 + $0x190] sm:$0xff]
                  %323 = vst [vmem:[%s271 + $0xc8] sm:$0xff] %v322
                  %v324 = vld [vmem:[%s270 + $0x1a0] sm:$0xff]
                  %325 = vst [vmem:[%s271 + $0xd0] sm:$0xff] %v324
                  %v326 = vld [vmem:[%s270 + $0x1b0] sm:$0xff]
                  %327 = vst [vmem:[%s271 + $0xd8] sm:$0xff] %v326
                  %v328 = vld [vmem:[%s270 + $0x1c0] sm:$0xff]
                  %329 = vst [vmem:[%s271 + $0xe0] sm:$0xff] %v328
                  %v330 = vld [vmem:[%s270 + $0x1d0] sm:$0xff]
                  %331 = vst [vmem:[%s271 + $0xe8] sm:$0xff] %v330
                  %v332 = vld [vmem:[%s270 + $0x1e0] sm:$0xff]
                  %333 = vst [vmem:[%s271 + $0xf0] sm:$0xff] %v332
                  %v334 = vld [vmem:[%s270 + $0x1f0] sm:$0xff]
                  %335 = vst [vmem:[%s271 + $0xf8] sm:$0xff] %v334
                $region52: #{resnet_forward.23} parent=46 // loop_footer
                  %s269 = sadd.s32 1, %s265
                $region53: #{resnet_forward.23} parent=46 // loop_footer_branch
                  %264 = sbr.rel target = $region49
                $region54: #{resnet_forward.23} parent=46 // loop_exit
                  _
              $region47: #{resnet_forward.23} parent=31 // pred_fallthru
                _
              // Predicated region
              $region55: #{resnet_forward.23} parent=31 // pred_check
                _
              $region56: #{resnet_forward.23} parent=31 // pred_check_branch
                %337 = sbr.rel target = $region58
              $region57: #{resnet_forward.23} parent=31 // pred_region
                _
              $region58: #{resnet_forward.23} parent=31 // pred_fallthru
                _
            $region32: #{resnet_forward.23} parent=27 // pred_fallthru
              _
            // Predicated region
            $region33: #{resnet_forward.23} parent=27 // pred_check
              _
            $region34: #{resnet_forward.23} parent=27 // pred_check_branch
              %188 = sbr.rel target = $region36
            $region35: #{resnet_forward.23} parent=27 // pred_region
              loop: start=0, step=1, limit=1
              $region37: #{resnet_forward.23} parent=35 // loop_pre_header
                _
              $region38: #{resnet_forward.23} parent=35 // loop_header
                %s191 = sphi 0, %s195
                %p192 = scmp.ge.s32.totalorder %s191, 1
                %s196 = sphi %s182, %s182
                %s197 = sphi %s176, %s176
              $region39: #{resnet_forward.23} parent=35 // loop_header_branch
                %194 = sbr.rel (%p192) target = $region43
              $region40: #{resnet_forward.23} parent=35 // loop_body
                %v198 = vld [vmem:[%s196] sm:$0xff]
                %199 = vst [vmem:[%s197] sm:$0xff] %v198
                %v200 = vld [vmem:[%s196 + $0x10] sm:$0xff]
                %201 = vst [vmem:[%s197 + $0x8] sm:$0xff] %v200
                %v202 = vld [vmem:[%s196 + $0x20] sm:$0xff]
                %203 = vst [vmem:[%s197 + $0x10] sm:$0xff] %v202
                %v204 = vld [vmem:[%s196 + $0x30] sm:$0xff]
                %205 = vst [vmem:[%s197 + $0x18] sm:$0xff] %v204
                %v206 = vld [vmem:[%s196 + $0x40] sm:$0xff]
                %207 = vst [vmem:[%s197 + $0x20] sm:$0xff] %v206
                %v208 = vld [vmem:[%s196 + $0x50] sm:$0xff]
                %209 = vst [vmem:[%s197 + $0x28] sm:$0xff] %v208
                %v210 = vld [vmem:[%s196 + $0x60] sm:$0xff]
                %211 = vst [vmem:[%s197 + $0x30] sm:$0xff] %v210
                %v212 = vld [vmem:[%s196 + $0x70] sm:$0xff]
                %213 = vst [vmem:[%s197 + $0x38] sm:$0xff] %v212
                %v214 = vld [vmem:[%s196 + $0x80] sm:$0xff]
                %215 = vst [vmem:[%s197 + $0x40] sm:$0xff] %v214
                %v216 = vld [vmem:[%s196 + $0x90] sm:$0xff]
                %217 = vst [vmem:[%s197 + $0x48] sm:$0xff] %v216
                %v218 = vld [vmem:[%s196 + $0xa0] sm:$0xff]
                %219 = vst [vmem:[%s197 + $0x50] sm:$0xff] %v218
                %v220 = vld [vmem:[%s196 + $0xb0] sm:$0xff]
                %221 = vst [vmem:[%s197 + $0x58] sm:$0xff] %v220
                %v222 = vld [vmem:[%s196 + $0xc0] sm:$0xff]
                %223 = vst [vmem:[%s197 + $0x60] sm:$0xff] %v222
                %v224 = vld [vmem:[%s196 + $0xd0] sm:$0xff]
                %225 = vst [vmem:[%s197 + $0x68] sm:$0xff] %v224
                %v226 = vld [vmem:[%s196 + $0xe0] sm:$0xff]
                %227 = vst [vmem:[%s197 + $0x70] sm:$0xff] %v226
                %v228 = vld [vmem:[%s196 + $0xf0] sm:$0xff]
                %229 = vst [vmem:[%s197 + $0x78] sm:$0xff] %v228
                %v230 = vld [vmem:[%s196 + $0x100] sm:$0xff]
                %231 = vst [vmem:[%s197 + $0x80] sm:$0xff] %v230
                %v232 = vld [vmem:[%s196 + $0x110] sm:$0xff]
                %233 = vst [vmem:[%s197 + $0x88] sm:$0xff] %v232
                %v234 = vld [vmem:[%s196 + $0x120] sm:$0xff]
                %235 = vst [vmem:[%s197 + $0x90] sm:$0xff] %v234
                %v236 = vld [vmem:[%s196 + $0x130] sm:$0xff]
                %237 = vst [vmem:[%s197 + $0x98] sm:$0xff] %v236
                %v238 = vld [vmem:[%s196 + $0x140] sm:$0xff]
                %239 = vst [vmem:[%s197 + $0xa0] sm:$0xff] %v238
                %v240 = vld [vmem:[%s196 + $0x150] sm:$0xff]
                %241 = vst [vmem:[%s197 + $0xa8] sm:$0xff] %v240
                %v242 = vld [vmem:[%s196 + $0x160] sm:$0xff]
                %243 = vst [vmem:[%s197 + $0xb0] sm:$0xff] %v242
                %v244 = vld [vmem:[%s196 + $0x170] sm:$0xff]
                %245 = vst [vmem:[%s197 + $0xb8] sm:$0xff] %v244
                %v246 = vld [vmem:[%s196 + $0x180] sm:$0xff]
                %247 = vst [vmem:[%s197 + $0xc0] sm:$0xff] %v246
                %v248 = vld [vmem:[%s196 + $0x190] sm:$0xff]
                %249 = vst [vmem:[%s197 + $0xc8] sm:$0xff] %v248
                %v250 = vld [vmem:[%s196 + $0x1a0] sm:$0xff]
                %251 = vst [vmem:[%s197 + $0xd0] sm:$0xff] %v250
                %v252 = vld [vmem:[%s196 + $0x1b0] sm:$0xff]
                %253 = vst [vmem:[%s197 + $0xd8] sm:$0xff] %v252
                %v254 = vld [vmem:[%s196 + $0x1c0] sm:$0xff]
                %255 = vst [vmem:[%s197 + $0xe0] sm:$0xff] %v254
                %v256 = vld [vmem:[%s196 + $0x1d0] sm:$0xff]
                %257 = vst [vmem:[%s197 + $0xe8] sm:$0xff] %v256
                %v258 = vld [vmem:[%s196 + $0x1e0] sm:$0xff]
                %259 = vst [vmem:[%s197 + $0xf0] sm:$0xff] %v258
                %v260 = vld [vmem:[%s196 + $0x1f0] sm:$0xff]
                %261 = vst [vmem:[%s197 + $0xf8] sm:$0xff] %v260
              $region41: #{resnet_forward.23} parent=35 // loop_footer
                %s195 = sadd.s32 1, %s191
              $region42: #{resnet_forward.23} parent=35 // loop_footer_branch
                %190 = sbr.rel target = $region38
              $region43: #{resnet_forward.23} parent=35 // loop_exit
                _
            $region36: #{resnet_forward.23} parent=27 // pred_fallthru
              _
          $region28: #{resnet_forward.23} parent=23 // pred_fallthru
            _
          %338 = vnop
        $region24: #{resnet_forward.23} parent=15 // pred_fallthru
          _
        // Predicated region
        $region59: #{resnet_forward.23} parent=15 // pred_check
          %p339 = pneg %p104
        $region60: #{resnet_forward.23} parent=15 // pred_check_branch
          %341 = sbr.rel (%p339) target = $region62
        $region61: #{resnet_forward.23} parent=15 // pred_region
          %s342 = smul.u32 2, %s17
          %p343 = scmp.lt.s32.totalorder %s342, 3
          %s344 = scalar_select %p343, %s342, 3
          %s345 = scalar_lea.vmem %s2, %s344
          %s346 = smul.u32 2, %s17
        $region62: #{resnet_forward.23} parent=15 // pred_fallthru
          _
      $region16: #{resnet_forward.23} parent=5 // pred_fallthru
        _
      %p347 = scmp.le.s32.totalorder 1, %s9
      %p348 = scmp.lt.s32.totalorder %s9, 19
      %p349 = pnand %p347, %p348
      %p350 = pneg %p349
      // Predicated region
      $region63: #{resnet_forward.23} parent=5 // pred_check
        _
      $region64: #{resnet_forward.23} parent=5 // pred_check_branch
        %352 = sbr.rel (%p349) target = $region66
      $region65: #{resnet_forward.23} parent=5 // pred_region
        %s353 = ssub.s32 %s9, 1
        %s354 = sand.u32 %s71, 1
        %s355 = sand.u32 %s71, 1
        %s356 = smul.addr %s355, 256
        %s357 = scalar_lea.vmem [#allocation3], %s356
        // Predicated region
        $region67: #{resnet_forward.23} parent=65 // pred_check
          %p358 = pneg %p84
        $region68: #{resnet_forward.23} parent=65 // pred_check_branch
          %360 = sbr.rel (%p358) target = $region70
        $region69: #{resnet_forward.23} parent=65 // pred_region
          _
        $region70: #{resnet_forward.23} parent=65 // pred_fallthru
          _
        %s361 = smul.u32 2, %s21
        %p362 = scmp.lt.s32.totalorder %s19, 0
        %s363 = scalar_select %p362, %s19, 0
        %p364 = scmp.lt.s32.totalorder %s361, 17
        %s365 = scalar_select %p364, %s361, 17
        %s366 = smul.addr %s363, 18
        %s367 = sadd.s32 %s365, %s366
        %s368 = smul.addr %s367, 4
        %s369 = scalar_lea.vmem %s0, %s368
        %p370 = pneg %p56
        %p371 = pneg %p53
        %s372 = sand.u32 %s71, 1
        %s373 = sand.u32 %s71, 1
        %s374 = smul.addr %s373, 256
        %s375 = scalar_lea.vmem [#allocation3], %s374
        %p376 = pneg %p84
        %p377 = pneg %p81
        %s378 = smul.u32 2, %s20
        %p379 = scmp.lt.s32.totalorder %s378, 3
        %s380 = scalar_select %p379, %s378, 3
        %s381 = scalar_lea.vmem %s2, %s380
        %p382 = pneg %p110
        %p383 = pneg %p107
        %p384 = pneg %p138
        %p385 = pneg %p135
        %s386 = smul.u32 2, %s20
        %p387 = scmp.lt.s32.totalorder %s19, 0
        %s388 = scalar_select %p387, %s19, 0
        %p389 = scmp.lt.s32.totalorder %s386, 3
        %s390 = scalar_select %p389, %s386, 3
        %s391 = smul.addr %s388, 4
        %s392 = sadd.s32 %s390, %s391
        %s393 = smul.addr %s392, 4
        %s394 = scalar_lea.vmem %s3, %s393
        %s395 = smul.u32 2, %s21
        %p396 = scmp.lt.s32.totalorder %s19, 0
        %s397 = scalar_select %p396, %s19, 0
        %p398 = scmp.lt.s32.totalorder %s395, 17
        %s399 = scalar_select %p398, %s395, 17
        %s400 = smul.addr %s397, 18
        %s401 = sadd.s32 %s399, %s400
        %s402 = smul.addr %s401, 4
        %s403 = scalar_lea.vmem %s0, %s402
        %s404 = smul.u32 2, %s21
        %s405 = smul.u32 32, %s21
        %s406 = smul.u32 2, %s20
        %s407 = smul.u32 2, %s20
        %p408 = scmp.lt.s32.totalorder %s407, 3
        %s409 = scalar_select %p408, %s407, 3
        %s410 = scalar_lea.vmem %s2, %s409
        %s411 = smul.u32 2, %s20
        %s412 = smul.u32 2, %s20
        %p413 = scmp.lt.s32.totalorder %s19, 0
        %s414 = scalar_select %p413, %s19, 0
        %p415 = scmp.lt.s32.totalorder %s412, 3
        %s416 = scalar_select %p415, %s412, 3
        %s417 = smul.addr %s414, 4
        %s418 = sadd.s32 %s416, %s417
        %s419 = smul.addr %s418, 4
        %s420 = scalar_lea.vmem %s3, %s419
        %s421 = smul.u32 2, %s20
        %p422 = scmp.eq.s32.totalorder %s21, 0
        // Predicated region
        $region71: #{resnet_forward.23} parent=65 // pred_check
          %p423 = pneg %p422
        $region72: #{resnet_forward.23} parent=65 // pred_check_branch
          %425 = sbr.rel (%p423) target = $region74
        $region73: #{resnet_forward.23} parent=65 // pred_region
          %426 = vst [vmem:[#allocation2] sm:$0xff] 0.0
          %427 = vst [vmem:[#allocation2 + $0x8] sm:$0xff] 0.0
        $region74: #{resnet_forward.23} parent=65 // pred_fallthru
          _
        %v428 = vld [vmem:[#allocation2] sm:$0xff]
        %v429 = vld [vmem:[#allocation2 + $0x8] sm:$0xff]
        %v430 = vld [vmem:[%s403] sm:$0xff]
        %v431 = vld [vmem:[%s357] sm:$0xff]
        %v432 = vld [vmem:[%s357 + $0x8] sm:$0xff]
        %v433 = vld [vmem:[%s357 + $0x10] sm:$0xff]
        %v434 = vld [vmem:[%s357 + $0x18] sm:$0xff]
        %v435 = vld [vmem:[%s357 + $0x20] sm:$0xff]
        %v436 = vld [vmem:[%s357 + $0x28] sm:$0xff]
        %v437 = vld [vmem:[%s357 + $0x30] sm:$0xff]
        %v438 = vld [vmem:[%s357 + $0x38] sm:$0xff]
        %v439 = vld [vmem:[%s357 + $0x40] sm:$0xff]
        %v440 = vld [vmem:[%s357 + $0x48] sm:$0xff]
        %v441 = vld [vmem:[%s357 + $0x50] sm:$0xff]
        %v442 = vld [vmem:[%s357 + $0x58] sm:$0xff]
        %v443 = vld [vmem:[%s357 + $0x60] sm:$0xff]
        %v444 = vld [vmem:[%s357 + $0x68] sm:$0xff]
        %v445 = vld [vmem:[%s357 + $0x70] sm:$0xff]
        %v446 = vld [vmem:[%s357 + $0x78] sm:$0xff]
        %v447 = vld [vmem:[%s357 + $0x80] sm:$0xff]
        %v448 = vld [vmem:[%s357 + $0x88] sm:$0xff]
        %v449 = vld [vmem:[%s357 + $0x90] sm:$0xff]
        %v450 = vld [vmem:[%s357 + $0x98] sm:$0xff]
        %v451 = vld [vmem:[%s357 + $0xa0] sm:$0xff]
        %v452 = vld [vmem:[%s357 + $0xa8] sm:$0xff]
        %v453 = vld [vmem:[%s357 + $0xb0] sm:$0xff]
        %v454 = vld [vmem:[%s357 + $0xb8] sm:$0xff]
        %v455 = vld [vmem:[%s357 + $0xc0] sm:$0xff]
        %v456 = vld [vmem:[%s357 + $0xc8] sm:$0xff]
        %v457 = vld [vmem:[%s357 + $0xd0] sm:$0xff]
        %v458 = vld [vmem:[%s357 + $0xd8] sm:$0xff]
        %v459 = vld [vmem:[%s357 + $0xe0] sm:$0xff]
        %v460 = vld [vmem:[%s357 + $0xe8] sm:$0xff]
        %v461 = vld [vmem:[%s357 + $0xf0] sm:$0xff]
        %v462 = vld [vmem:[%s357 + $0xf8] sm:$0xff]
        %v464 = vunpack.c.l.b16 %v430
        %v465 = vunpack.c.h.b16 %v430
        %v466 = vpack.c.b16 %v464, %v464
        %v467 = vpack.c.b16 %v465, %v465
        %v502 = vunpack.c.l.b16 %v431
        %v503 = vunpack.c.h.b16 %v431
        %v504 = vunpack.c.l.b16 %v432
        %v505 = vunpack.c.h.b16 %v432
        %v506 = vunpack.c.l.b16 %v433
        %v507 = vunpack.c.h.b16 %v433
        %v508 = vunpack.c.l.b16 %v434
        %v509 = vunpack.c.h.b16 %v434
        %v510 = vunpack.c.l.b16 %v435
        %v511 = vunpack.c.h.b16 %v435
        %v512 = vunpack.c.l.b16 %v436
        %v513 = vunpack.c.h.b16 %v436
        %v514 = vunpack.c.l.b16 %v437
        %v515 = vunpack.c.h.b16 %v437
        %v516 = vunpack.c.l.b16 %v438
        %v517 = vunpack.c.h.b16 %v438
        %v518 = vunpack.c.l.b16 %v439
        %v519 = vunpack.c.h.b16 %v439
        %v520 = vunpack.c.l.b16 %v440
        %v521 = vunpack.c.h.b16 %v440
        %v522 = vunpack.c.l.b16 %v441
        %v523 = vunpack.c.h.b16 %v441
        %v524 = vunpack.c.l.b16 %v442
        %v525 = vunpack.c.h.b16 %v442
        %v526 = vunpack.c.l.b16 %v443
        %v527 = vunpack.c.h.b16 %v443
        %v528 = vunpack.c.l.b16 %v444
        %v529 = vunpack.c.h.b16 %v444
        %v530 = vunpack.c.l.b16 %v445
        %v531 = vunpack.c.h.b16 %v445
        %v532 = vunpack.c.l.b16 %v446
        %v533 = vunpack.c.h.b16 %v446
        %v534 = vunpack.c.l.b16 %v447
        %v535 = vunpack.c.h.b16 %v447
        %v536 = vunpack.c.l.b16 %v448
        %v537 = vunpack.c.h.b16 %v448
        %v538 = vunpack.c.l.b16 %v449
        %v539 = vunpack.c.h.b16 %v449
        %v540 = vunpack.c.l.b16 %v450
        %v541 = vunpack.c.h.b16 %v450
        %v542 = vunpack.c.l.b16 %v451
        %v543 = vunpack.c.h.b16 %v451
        %v544 = vunpack.c.l.b16 %v452
        %v545 = vunpack.c.h.b16 %v452
        %v546 = vunpack.c.l.b16 %v453
        %v547 = vunpack.c.h.b16 %v453
        %v548 = vunpack.c.l.b16 %v454
        %v549 = vunpack.c.h.b16 %v454
        %v550 = vunpack.c.l.b16 %v455
        %v551 = vunpack.c.h.b16 %v455
        %v552 = vunpack.c.l.b16 %v456
        %v553 = vunpack.c.h.b16 %v456
        %v554 = vunpack.c.l.b16 %v457
        %v555 = vunpack.c.h.b16 %v457
        %v556 = vunpack.c.l.b16 %v458
        %v557 = vunpack.c.h.b16 %v458
        %v558 = vunpack.c.l.b16 %v459
        %v559 = vunpack.c.h.b16 %v459
        %v560 = vunpack.c.l.b16 %v460
        %v561 = vunpack.c.h.b16 %v460
        %v562 = vunpack.c.l.b16 %v461
        %v563 = vunpack.c.h.b16 %v461
        %v564 = vunpack.c.l.b16 %v462
        %v565 = vunpack.c.h.b16 %v462
        %v566 = vpack.c.b16 %v504, %v502
        %v567 = vpack.c.b16 %v505, %v503
        %v568 = vpack.c.b16 %v508, %v506
        %v569 = vpack.c.b16 %v509, %v507
        %v570 = vpack.c.b16 %v512, %v510
        %v571 = vpack.c.b16 %v513, %v511
        %v572 = vpack.c.b16 %v516, %v514
        %v573 = vpack.c.b16 %v517, %v515
        %v574 = vpack.c.b16 %v520, %v518
        %v575 = vpack.c.b16 %v521, %v519
        %v576 = vpack.c.b16 %v524, %v522
        %v577 = vpack.c.b16 %v525, %v523
        %v578 = vpack.c.b16 %v528, %v526
        %v579 = vpack.c.b16 %v529, %v527
        %v580 = vpack.c.b16 %v532, %v530
        %v581 = vpack.c.b16 %v533, %v531
        %v582 = vpack.c.b16 %v536, %v534
        %v583 = vpack.c.b16 %v537, %v535
        %v584 = vpack.c.b16 %v540, %v538
        %v585 = vpack.c.b16 %v541, %v539
        %v586 = vpack.c.b16 %v544, %v542
        %v587 = vpack.c.b16 %v545, %v543
        %v588 = vpack.c.b16 %v548, %v546
        %v589 = vpack.c.b16 %v549, %v547
        %v590 = vpack.c.b16 %v552, %v550
        %v591 = vpack.c.b16 %v553, %v551
        %v592 = vpack.c.b16 %v556, %v554
        %v593 = vpack.c.b16 %v557, %v555
        %v594 = vpack.c.b16 %v560, %v558
        %v595 = vpack.c.b16 %v561, %v559
        %v596 = vpack.c.b16 %v564, %v562
        %v597 = vpack.c.b16 %v565, %v563
        %630 = vmatprep.subr.bf16.mxu0 %v567
        %631 = vmatpush1.bf16.msra.mxu0 %v566
        %632 = vmatprep.subr.bf16.mxu0 %v569
        %633 = vmatpush1.bf16.msra.mxu0 %v568
        %634 = vmatprep.subr.bf16.mxu0 %v571
        %635 = vmatpush1.bf16.msra.mxu0 %v570
        %636 = vmatprep.subr.bf16.mxu0 %v573
        %637 = vmatpush1.bf16.msra.mxu0 %v572
        %638 = vmatprep.subr.bf16.mxu0 %v575
        %639 = vmatpush1.bf16.msra.mxu0 %v574
        %640 = vmatprep.subr.bf16.mxu0 %v577
        %641 = vmatpush1.bf16.msra.mxu0 %v576
        %642 = vmatprep.subr.bf16.mxu0 %v579
        %643 = vmatpush1.bf16.msra.mxu0 %v578
        %644 = vmatprep.subr.bf16.mxu0 %v581
        %645 = vmatpush1.bf16.msra.mxu0 %v580
        %646 = vmatprep.subr.bf16.mxu0 %v583
        %647 = vmatpush1.bf16.msra.mxu0 %v582
        %648 = vmatprep.subr.bf16.mxu0 %v585
        %649 = vmatpush1.bf16.msra.mxu0 %v584
        %650 = vmatprep.subr.bf16.mxu0 %v587
        %651 = vmatpush1.bf16.msra.mxu0 %v586
        %652 = vmatprep.subr.bf16.mxu0 %v589
        %653 = vmatpush1.bf16.msra.mxu0 %v588
        %654 = vmatprep.subr.bf16.mxu0 %v591
        %655 = vmatpush1.bf16.msra.mxu0 %v590
        %656 = vmatprep.subr.bf16.mxu0 %v593
        %657 = vmatpush1.bf16.msra.mxu0 %v592
        %658 = vmatprep.subr.bf16.mxu0 %v595
        %659 = vmatpush1.bf16.msra.mxu0 %v594
        %660 = vmatprep.subr.bf16.mxu0 %v597
        %661 = vmatpush1.bf16.msra.mxu0 %v596
        %662 = vmatprep.mubr.bf16.mxu0 %v467
        %663 = vmatmul.mubr.bf16.gmra.mrb[0].mxu0 %v466
        %v664 = vpop.f32.mrb[0].mxu0
        %v665 = vadd.f32 0.0, %v664
        %v666 = vpop.f32.mrb[0].mxu0
        %v667 = vadd.f32 0.0, %v666
        %v668 = vpop.f32.mrb[0].mxu0
        %v669 = vpop.f32.mrb[0].mxu0
        %670 = vdwg.mxu0
        %v671 = vadd.f32 %v428, %v665
        %v672 = vadd.f32 %v429, %v667
        %673 = vst [vmem:[#allocation2] sm:$0xff] %v671
        %674 = vst [vmem:[#allocation2 + $0x8] sm:$0xff] %v672
        %p675 = scmp.eq.s32.totalorder %s21, 8
        // Predicated region
        $region75: #{resnet_forward.23} parent=65 // pred_check
          %p676 = pneg %p675
        $region76: #{resnet_forward.23} parent=65 // pred_check_branch
          %678 = sbr.rel (%p676) target = $region78
        $region77: #{resnet_forward.23} parent=65 // pred_region
          %v679 = vld [vmem:[#allocation2] sm:$0xff]
          %v680 = vld [vmem:[#allocation2 + $0x8] sm:$0xff]
          %v681 = vld [vmem:[%s410] sm:$0x3]
          %v683 = vlaneseq
          %v684 = vshrl.u32 %v683, 7
          %v685 = vsub.s32 0, %v684
          %v686 = vrot.slane %v681, %v685
          %v687 = vlaneseq
          %v688 = vshrl.u32 %v687, 7
          %v689 = vsub.s32 1, %v688
          %v690 = vrot.slane %v681, %v689
          %v693 = vadd.f32 %v679, %v686
          %v694 = vadd.f32 %v680, %v690
          %v695 = vmax.f32 %v693, 0.0
          %v696 = vmax.f32 %v694, 0.0
          %v697 = vpack.c.bf16 %v695, %v695
          %v698 = vpack.c.bf16 %v696, %v696
          %v701 = vunpack.c.l.b16 %v697
          %v702 = vunpack.c.l.b16 %v698
          %v703 = vpack.c.b16 %v702, %v701
          %705 = vst [vmem:[%s420] sm:$0xff] %v703
        $region78: #{resnet_forward.23} parent=65 // pred_fallthru
          _
        %s706 = smul.u32 2, %s20
        %p707 = scmp.lt.s32.totalorder %s19, 0
        %s708 = scalar_select %p707, %s19, 0
        %p709 = scmp.lt.s32.totalorder %s706, 3
        %s710 = scalar_select %p709, %s706, 3
        %s711 = smul.addr %s708, 4
        %s712 = sadd.s32 %s710, %s711
        %s713 = smul.addr %s712, 4
        %s714 = scalar_lea.vmem %s3, %s713
        // Predicated region
        $region79: #{resnet_forward.23} parent=65 // pred_check
          %p715 = pneg %p135
        $region80: #{resnet_forward.23} parent=65 // pred_check_branch
          %717 = sbr.rel (%p715) target = $region82
        $region81: #{resnet_forward.23} parent=65 // pred_region
          %s718 = smul.u32 2, %s20
        $region82: #{resnet_forward.23} parent=65 // pred_fallthru
          _
      $region66: #{resnet_forward.23} parent=5 // pred_fallthru
        _
      %p719 = scmp.le.s32.totalorder 2, %s9
      // Predicated region
      $region83: #{resnet_forward.23} parent=5 // pred_check
        %p720 = pneg %p719
      $region84: #{resnet_forward.23} parent=5 // pred_check_branch
        %722 = sbr.rel (%p720) target = $region86
      $region85: #{resnet_forward.23} parent=5 // pred_region
        %s723 = ssub.s32 %s9, 2
        // Predicated region
        $region87: #{resnet_forward.23} parent=85 // pred_check
          %p724 = pneg %p141
        $region88: #{resnet_forward.23} parent=85 // pred_check_branch
          %726 = sbr.rel (%p724) target = $region90
        $region89: #{resnet_forward.23} parent=85 // pred_region
          %s727 = smul.u32 2, %s23
          %p728 = scmp.lt.s32.totalorder %s22, 0
          %s729 = scalar_select %p728, %s22, 0
          %p730 = scmp.lt.s32.totalorder %s727, 3
          %s731 = scalar_select %p730, %s727, 3
          %s732 = smul.addr %s729, 4
          %s733 = sadd.s32 %s731, %s732
          %s734 = smul.addr %s733, 4
          %s735 = scalar_lea.vmem %s3, %s734
        $region90: #{resnet_forward.23} parent=85 // pred_fallthru
          _
      $region86: #{resnet_forward.23} parent=5 // pred_fallthru
        _
    $region6: #{resnet_forward.23} parent=1 // loop_footer
      %s13 = sadd.s32 1, %s9
    $region7: #{resnet_forward.23} parent=1 // loop_footer_branch
      %8 = sbr.rel target = $region3
    $region8: #{resnet_forward.23} parent=1 // loop_exit
      _

// kernel: resnet_forward.24
$region0: #{resnet_forward.24}
  #allocation0 [shape = 'u32[]', space=smem, size = 0x4, offset = 0x4, fixed_abs, tag = 'smem constant byte address 0x4 - core index']
  #allocation1 [shape = 'u32[144,128]{1,0:T(1,128)}', space=vmem, size = 0x12000, scoped, tag = 'internal scratch']
  #allocation2 [shape = 'f32[8,256]{1,0:T(8,128)}', space=vmem, size = 0x2000, scoped, tag = 'scratch operand']
  %s0 = inlined_call_operand.vmem [shape: bf16[8,256], index: 0, kind: input, shape index: {}]
  %s1 = inlined_call_operand.vmem [shape: bf16[256,512], index: 1, kind: input, shape index: {}]
  %s2 = inlined_call_operand.vmem [shape: f32[1,512], index: 2, kind: input, shape index: {}]
  %s3 = inlined_call_operand.vmem [shape: bf16[8,512], index: 3, kind: output, shape index: {}]
  %s4 = sld [smem:[#allocation0]]
  $region91: #{resnet_forward.24} parent=0
    _
  %s6 = ssub.s32 1, %s4
  %s7 = scalar_select 0, %s6, %s4
  $region1: #{resnet_forward.24} parent=0
    #allocation3 [shape = 'u8[262144]{0}', space=vmem, size = 0x40000, scoped, tag = 'input window, operand 1']
    loop: start=0, step=1, limit=4
    $region2: #{resnet_forward.24} parent=1 // loop_pre_header
      _
    $region3: #{resnet_forward.24} parent=1 // loop_header
      %s9 = sphi 0, %s13
      %p10 = scmp.ge.s32.totalorder %s9, 4
      %s16 = sphi 0, %s35
      %s17 = sphi 0, %s31
      %s18 = sphi 0, %s27
      %s19 = sphi 0, %s16
      %s20 = sphi 0, %s17
      %s21 = sphi 0, %s18
      %s22 = sphi 0, %s19
      %s23 = sphi 0, %s20
      %s24 = sphi 0, %s21
      %s40 = sphi 0, %s42
      %s43 = sphi 0, %s40
      %s44 = sphi 0, %s43
      %s60 = sphi 0, %s44
      %s68 = sphi 0, %s70
      %s71 = sphi 0, %s68
      %s72 = sphi 0, %s71
      %s88 = sphi 0, %s72
      %s94 = sphi 0, %s96
      %s97 = sphi 0, %s94
      %s98 = sphi 0, %s97
      %s114 = sphi 0, %s98
      %s122 = sphi 0, %s124
      %s125 = sphi 0, %s122
      %s126 = sphi 0, %s125
      %s142 = sphi 0, %s126
    $region4: #{resnet_forward.24} parent=1 // loop_header_branch
      %12 = sbr.rel (%p10) target = $region8
    $region5: #{resnet_forward.24} parent=1 // loop_body
      %s14 = ssub.s32 %s9, 1
      %s15 = ssub.s32 %s9, 2
      %s25 = sadd.s32 1, %s18
      %p26 = scmp.ge.s32.totalorder %s25, 1
      %s27 = scalar_select %p26, 0, %s25
      %s28 = sadd.s32 1, %s17
      %s29 = scalar_select %p26, %s28, %s17
      %p30 = scmp.ge.s32.totalorder %s29, 2
      %s31 = scalar_select %p30, 0, %s29
      %s32 = sadd.s32 1, %s16
      %s33 = scalar_select %p30, %s32, %s16
      %p34 = scmp.ge.s32.totalorder %s33, 1
      %s35 = scalar_select %p34, 0, %s33
      %s36 = ssub.s32 %s16, %s35
      %s37 = ssub.s32 %s18, %s27
      %s38 = sor.u32 %s36, %s37
      %p39 = scmp.eq.s32.totalorder %s38, 0
      %s41 = sadd.s32 %s40, 1
      %s42 = scalar_select %p39, %s40, %s41
      %p45 = pneg %p39
      %p46 = scmp.eq.s32.totalorder %s9, 1
      %p47 = por %p45, %p46
      %p48 = scmp.ne.s32.totalorder %s40, %s43
      %p49 = scmp.eq.s32.totalorder %s9, 0
      %p50 = por %p48, %p49
      %p51 = scmp.ne.s32.totalorder %s40, %s43
      %p52 = scmp.eq.s32.totalorder %s14, 1
      %p53 = por %p51, %p52
      %p54 = scmp.ne.s32.totalorder %s43, %s44
      %p55 = scmp.eq.s32.totalorder %s14, 0
      %p56 = por %p54, %p55
      %p57 = scmp.ne.s32.totalorder %s43, %s44
      %p58 = scmp.eq.s32.totalorder %s15, 1
      %p59 = por %p57, %p58
      %p61 = scmp.ne.s32.totalorder %s44, %s60
      %p62 = scmp.eq.s32.totalorder %s15, 0
      %p63 = por %p61, %p62
      %s64 = ssub.s32 %s18, %s27
      %s65 = ssub.s32 %s17, %s31
      %s66 = sor.u32 %s64, %s65
      %p67 = scmp.eq.s32.totalorder %s66, 0
      %s69 = sadd.s32 %s68, 1
      %s70 = scalar_select %p67, %s68, %s69
      %p73 = pneg %p67
      %p74 = scmp.eq.s32.totalorder %s9, 1
      %p75 = por %p73, %p74
      %p76 = scmp.ne.s32.totalorder %s68, %s71
      %p77 = scmp.eq.s32.totalorder %s9, 0
      %p78 = por %p76, %p77
      %p79 = scmp.ne.s32.totalorder %s68, %s71
      %p80 = scmp.eq.s32.totalorder %s14, 1
      %p81 = por %p79, %p80
      %p82 = scmp.ne.s32.totalorder %s71, %s72
      %p83 = scmp.eq.s32.totalorder %s14, 0
      %p84 = por %p82, %p83
      %p85 = scmp.ne.s32.totalorder %s71, %s72
      %p86 = scmp.eq.s32.totalorder %s15, 1
      %p87 = por %p85, %p86
      %p89 = scmp.ne.s32.totalorder %s72, %s88
      %p90 = scmp.eq.s32.totalorder %s15, 0
      %p91 = por %p89, %p90
      %s92 = ssub.s32 %s17, %s31
      %p93 = scmp.eq.s32.totalorder %s92, 0
      %s95 = sadd.s32 %s94, 1
      %s96 = scalar_select %p93, %s94, %s95
      %p99 = pneg %p93
      %p100 = scmp.eq.s32.totalorder %s9, 1
      %p101 = por %p99, %p100
      %p102 = scmp.ne.s32.totalorder %s94, %s97
      %p103 = scmp.eq.s32.totalorder %s9, 0
      %p104 = por %p102, %p103
      %p105 = scmp.ne.s32.totalorder %s94, %s97
      %p106 = scmp.eq.s32.totalorder %s14, 1
      %p107 = por %p105, %p106
      %p108 = scmp.ne.s32.totalorder %s97, %s98
      %p109 = scmp.eq.s32.totalorder %s14, 0
      %p110 = por %p108, %p109
      %p111 = scmp.ne.s32.totalorder %s97, %s98
      %p112 = scmp.eq.s32.totalorder %s15, 1
      %p113 = por %p111, %p112
      %p115 = scmp.ne.s32.totalorder %s98, %s114
      %p116 = scmp.eq.s32.totalorder %s15, 0
      %p117 = por %p115, %p116
      %s118 = ssub.s32 %s16, %s35
      %s119 = ssub.s32 %s17, %s31
      %s120 = sor.u32 %s118, %s119
      %p121 = scmp.eq.s32.totalorder %s120, 0
      %s123 = sadd.s32 %s122, 1
      %s124 = scalar_select %p121, %s122, %s123
      %p127 = pneg %p121
      %p128 = scmp.eq.s32.totalorder %s9, 1
      %p129 = por %p127, %p128
      %p130 = scmp.ne.s32.totalorder %s122, %s125
      %p131 = scmp.eq.s32.totalorder %s9, 0
      %p132 = por %p130, %p131
      %p133 = scmp.ne.s32.totalorder %s122, %s125
      %p134 = scmp.eq.s32.totalorder %s14, 1
      %p135 = por %p133, %p134
      %p136 = scmp.ne.s32.totalorder %s125, %s126
      %p137 = scmp.eq.s32.totalorder %s14, 0
      %p138 = por %p136, %p137
      %p139 = scmp.ne.s32.totalorder %s125, %s126
      %p140 = scmp.eq.s32.totalorder %s15, 1
      %p141 = por %p139, %p140
      %p143 = scmp.ne.s32.totalorder %s126, %s142
      %p144 = scmp.eq.s32.totalorder %s15, 0
      %p145 = por %p143, %p144
      %p146 = scmp.le.s32.totalorder 1, %s9
      %p147 = scmp.lt.s32.totalorder %s9, 3
      %p148 = pnand %p146, %p147
      %p149 = pneg %p148
      // Predicated region
      $region9: #{resnet_forward.24} parent=5 // pred_check
        _
      $region10: #{resnet_forward.24} parent=5 // pred_check_branch
        %151 = sbr.rel (%p148) target = $region12
      $region11: #{resnet_forward.24} parent=5 // pred_region
        %s152 = ssub.s32 %s9, 1
        // Predicated region
        $region13: #{resnet_forward.24} parent=11 // pred_check
          %p153 = pneg %p56
        $region14: #{resnet_forward.24} parent=11 // pred_check_branch
          %155 = sbr.rel (%p153) target = $region16
        $region15: #{resnet_forward.24} parent=11 // pred_region
          %s156 = smul.u32 2, %s21
          %p157 = scmp.lt.s32.totalorder %s19, 0
          %s158 = scalar_select %p157, %s19, 0
          %p159 = scmp.lt.s32.totalorder %s156, 1
          %s160 = scalar_select %p159, %s156, 1
          %s161 = smul.addr %s158, 2
          %s162 = sadd.s32 %s160, %s161
          %s163 = smul.addr %s162, 4
          %s164 = scalar_lea.vmem %s0, %s163
          %s165 = smul.u32 2, %s21
        $region16: #{resnet_forward.24} parent=11 // pred_fallthru
          _
      $region12: #{resnet_forward.24} parent=5 // pred_fallthru
        _
      %p166 = scmp.lt.s32.totalorder %s9, 2
      // Predicated region
      $region17: #{resnet_forward.24} parent=5 // pred_check
        %p167 = pneg %p166
      $region18: #{resnet_forward.24} parent=5 // pred_check_branch
        %169 = sbr.rel (%p167) target = $region20
      $region19: #{resnet_forward.24} parent=5 // pred_region
        // Predicated region
        $region21: #{resnet_forward.24} parent=19 // pred_check
          %p170 = pneg %p78
        $region22: #{resnet_forward.24} parent=19 // pred_check_branch
          %172 = sbr.rel (%p170) target = $region24
        $region23: #{resnet_forward.24} parent=19 // pred_region
          %s173 = sand.u32 %s68, 1
          %s174 = sand.u32 %s68, 1
          %s175 = smul.addr %s174, 256
          %s176 = scalar_lea.vmem [#allocation3], %s175
          %s177 = smul.u32 32, %s18
          %s178 = smul.u32 2, %s17
          %s179 = smul.addr %s177, 4
          %s180 = sadd.s32 %s178, %s179
          %s181 = smul.addr %s180, 4
          %s182 = scalar_lea.vmem %s1, %s181
          // Predicated region
          $region25: #{resnet_forward.24} parent=23 // pred_check
            _
          $region26: #{resnet_forward.24} parent=23 // pred_check_branch
            %184 = sbr.rel (0) target = $region28
          $region27: #{resnet_forward.24} parent=23 // pred_region
            // Predicated region
            $region29: #{resnet_forward.24} parent=27 // pred_check
              _
            $region30: #{resnet_forward.24} parent=27 // pred_check_branch
              %186 = sbr.rel (0) target = $region32
            $region31: #{resnet_forward.24} parent=27 // pred_region
              // Predicated region
              $region44: #{resnet_forward.24} parent=31 // pred_check
                _
              $region45: #{resnet_forward.24} parent=31 // pred_check_branch
                %263 = sbr.rel (0) target = $region47
              $region46: #{resnet_forward.24} parent=31 // pred_region
                loop: start=0, step=1, limit=1
                $region48: #{resnet_forward.24} parent=46 // loop_pre_header
                  _
                $region49: #{resnet_forward.24} parent=46 // loop_header
                  %s265 = sphi 0, %s269
                  %p266 = scmp.ge.s32.totalorder %s265, 1
                  %s270 = sphi %s182, %s182
                  %s271 = sphi %s176, %s176
                $region50: #{resnet_forward.24} parent=46 // loop_header_branch
                  %268 = sbr.rel (%p266) target = $region54
                $region51: #{resnet_forward.24} parent=46 // loop_body
                  %v272 = vld [vmem:[%s270] sm:$0xff]
                  %273 = vst [vmem:[%s271] sm:$0xff] %v272
                  %v274 = vld [vmem:[%s270 + $0x10] sm:$0xff]
                  %275 = vst [vmem:[%s271 + $0x8] sm:$0xff] %v274
                  %v276 = vld [vmem:[%s270 + $0x20] sm:$0xff]
                  %277 = vst [vmem:[%s271 + $0x10] sm:$0xff] %v276
                  %v278 = vld [vmem:[%s270 + $0x30] sm:$0xff]
                  %279 = vst [vmem:[%s271 + $0x18] sm:$0xff] %v278
                  %v280 = vld [vmem:[%s270 + $0x40] sm:$0xff]
                  %281 = vst [vmem:[%s271 + $0x20] sm:$0xff] %v280
                  %v282 = vld [vmem:[%s270 + $0x50] sm:$0xff]
                  %283 = vst [vmem:[%s271 + $0x28] sm:$0xff] %v282
                  %v284 = vld [vmem:[%s270 + $0x60] sm:$0xff]
                  %285 = vst [vmem:[%s271 + $0x30] sm:$0xff] %v284
                  %v286 = vld [vmem:[%s270 + $0x70] sm:$0xff]
                  %287 = vst [vmem:[%s271 + $0x38] sm:$0xff] %v286
                  %v288 = vld [vmem:[%s270 + $0x80] sm:$0xff]
                  %289 = vst [vmem:[%s271 + $0x40] sm:$0xff] %v288
                  %v290 = vld [vmem:[%s270 + $0x90] sm:$0xff]
                  %291 = vst [vmem:[%s271 + $0x48] sm:$0xff] %v290
                  %v292 = vld [vmem:[%s270 + $0xa0] sm:$0xff]
                  %293 = vst [vmem:[%s271 + $0x50] sm:$0xff] %v292
                  %v294 = vld [vmem:[%s270 + $0xb0] sm:$0xff]
                  %295 = vst [vmem:[%s271 + $0x58] sm:$0xff] %v294
                  %v296 = vld [vmem:[%s270 + $0xc0] sm:$0xff]
                  %297 = vst [vmem:[%s271 + $0x60] sm:$0xff] %v296
                  %v298 = vld [vmem:[%s270 + $0xd0] sm:$0xff]
                  %299 = vst [vmem:[%s271 + $0x68] sm:$0xff] %v298
                  %v300 = vld [vmem:[%s270 + $0xe0] sm:$0xff]
                  %301 = vst [vmem:[%s271 + $0x70] sm:$0xff] %v300
                  %v302 = vld [vmem:[%s270 + $0xf0] sm:$0xff]
                  %303 = vst [vmem:[%s271 + $0x78] sm:$0xff] %v302
                  %v304 = vld [vmem:[%s270 + $0x100] sm:$0xff]
                  %305 = vst [vmem:[%s271 + $0x80] sm:$0xff] %v304
                  %v306 = vld [vmem:[%s270 + $0x110] sm:$0xff]
                  %307 = vst [vmem:[%s271 + $0x88] sm:$0xff] %v306
                  %v308 = vld [vmem:[%s270 + $0x120] sm:$0xff]
                  %309 = vst [vmem:[%s271 + $0x90] sm:$0xff] %v308
                  %v310 = vld [vmem:[%s270 + $0x130] sm:$0xff]
                  %311 = vst [vmem:[%s271 + $0x98] sm:$0xff] %v310
                  %v312 = vld [vmem:[%s270 + $0x140] sm:$0xff]
                  %313 = vst [vmem:[%s271 + $0xa0] sm:$0xff] %v312
                  %v314 = vld [vmem:[%s270 + $0x150] sm:$0xff]
                  %315 = vst [vmem:[%s271 + $0xa8] sm:$0xff] %v314
                  %v316 = vld [vmem:[%s270 + $0x160] sm:$0xff]
                  %317 = vst [vmem:[%s271 + $0xb0] sm:$0xff] %v316
                  %v318 = vld [vmem:[%s270 + $0x170] sm:$0xff]
                  %319 = vst [vmem:[%s271 + $0xb8] sm:$0xff] %v318
                  %v320 = vld [vmem:[%s270 + $0x180] sm:$0xff]
                  %321 = vst [vmem:[%s271 + $0xc0] sm:$0xff] %v320
                  %v322 = vld [vmem:[%s270 + $0x190] sm:$0xff]
                  %323 = vst [vmem:[%s271 + $0xc8] sm:$0xff] %v322
                  %v324 = vld [vmem:[%s270 + $0x1a0] sm:$0xff]
                  %325 = vst [vmem:[%s271 + $0xd0] sm:$0xff] %v324
                  %v326 = vld [vmem:[%s270 + $0x1b0] sm:$0xff]
                  %327 = vst [vmem:[%s271 + $0xd8] sm:$0xff] %v326
                  %v328 = vld [vmem:[%s270 + $0x1c0] sm:$0xff]
                  %329 = vst [vmem:[%s271 + $0xe0] sm:$0xff] %v328
                  %v330 = vld [vmem:[%s270 + $0x1d0] sm:$0xff]
                  %331 = vst [vmem:[%s271 + $0xe8] sm:$0xff] %v330
                  %v332 = vld [vmem:[%s270 + $0x1e0] sm:$0xff]
                  %333 = vst [vmem:[%s271 + $0xf0] sm:$0xff] %v332
                  %v334 = vld [vmem:[%s270 + $0x1f0] sm:$0xff]
                  %335 = vst [vmem:[%s271 + $0xf8] sm:$0xff] %v334
                $region52: #{resnet_forward.24} parent=46 // loop_footer
                  %s269 = sadd.s32 1, %s265
                $region53: #{resnet_forward.24} parent=46 // loop_footer_branch
                  %264 = sbr.rel target = $region49
                $region54: #{resnet_forward.24} parent=46 // loop_exit
                  _
              $region47: #{resnet_forward.24} parent=31 // pred_fallthru
                _
              // Predicated region
              $region55: #{resnet_forward.24} parent=31 // pred_check
                _
              $region56: #{resnet_forward.24} parent=31 // pred_check_branch
                %337 = sbr.rel target = $region58
              $region57: #{resnet_forward.24} parent=31 // pred_region
                _
              $region58: #{resnet_forward.24} parent=31 // pred_fallthru
                _
            $region32: #{resnet_forward.24} parent=27 // pred_fallthru
              _
            // Predicated region
            $region33: #{resnet_forward.24} parent=27 // pred_check
              _
            $region34: #{resnet_forward.24} parent=27 // pred_check_branch
              %188 = sbr.rel target = $region36
            $region35: #{resnet_forward.24} parent=27 // pred_region
              loop: start=0, step=1, limit=1
              $region37: #{resnet_forward.24} parent=35 // loop_pre_header
                _
              $region38: #{resnet_forward.24} parent=35 // loop_header
                %s191 = sphi 0, %s195
                %p192 = scmp.ge.s32.totalorder %s191, 1
                %s196 = sphi %s182, %s182
                %s197 = sphi %s176, %s176
              $region39: #{resnet_forward.24} parent=35 // loop_header_branch
                %194 = sbr.rel (%p192) target = $region43
              $region40: #{resnet_forward.24} parent=35 // loop_body
                %v198 = vld [vmem:[%s196] sm:$0xff]
                %199 = vst [vmem:[%s197] sm:$0xff] %v198
                %v200 = vld [vmem:[%s196 + $0x10] sm:$0xff]
                %201 = vst [vmem:[%s197 + $0x8] sm:$0xff] %v200
                %v202 = vld [vmem:[%s196 + $0x20] sm:$0xff]
                %203 = vst [vmem:[%s197 + $0x10] sm:$0xff] %v202
                %v204 = vld [vmem:[%s196 + $0x30] sm:$0xff]
                %205 = vst [vmem:[%s197 + $0x18] sm:$0xff] %v204
                %v206 = vld [vmem:[%s196 + $0x40] sm:$0xff]
                %207 = vst [vmem:[%s197 + $0x20] sm:$0xff] %v206
                %v208 = vld [vmem:[%s196 + $0x50] sm:$0xff]
                %209 = vst [vmem:[%s197 + $0x28] sm:$0xff] %v208
                %v210 = vld [vmem:[%s196 + $0x60] sm:$0xff]
                %211 = vst [vmem:[%s197 + $0x30] sm:$0xff] %v210
                %v212 = vld [vmem:[%s196 + $0x70] sm:$0xff]
                %213 = vst [vmem:[%s197 + $0x38] sm:$0xff] %v212
                %v214 = vld [vmem:[%s196 + $0x80] sm:$0xff]
                %215 = vst [vmem:[%s197 + $0x40] sm:$0xff] %v214
                %v216 = vld [vmem:[%s196 + $0x90] sm:$0xff]
                %217 = vst [vmem:[%s197 + $0x48] sm:$0xff] %v216
                %v218 = vld [vmem:[%s196 + $0xa0] sm:$0xff]
                %219 = vst [vmem:[%s197 + $0x50] sm:$0xff] %v218
                %v220 = vld [vmem:[%s196 + $0xb0] sm:$0xff]
                %221 = vst [vmem:[%s197 + $0x58] sm:$0xff] %v220
                %v222 = vld [vmem:[%s196 + $0xc0] sm:$0xff]
                %223 = vst [vmem:[%s197 + $0x60] sm:$0xff] %v222
                %v224 = vld [vmem:[%s196 + $0xd0] sm:$0xff]
                %225 = vst [vmem:[%s197 + $0x68] sm:$0xff] %v224
                %v226 = vld [vmem:[%s196 + $0xe0] sm:$0xff]
                %227 = vst [vmem:[%s197 + $0x70] sm:$0xff] %v226
                %v228 = vld [vmem:[%s196 + $0xf0] sm:$0xff]
                %229 = vst [vmem:[%s197 + $0x78] sm:$0xff] %v228
                %v230 = vld [vmem:[%s196 + $0x100] sm:$0xff]
                %231 = vst [vmem:[%s197 + $0x80] sm:$0xff] %v230
                %v232 = vld [vmem:[%s196 + $0x110] sm:$0xff]
                %233 = vst [vmem:[%s197 + $0x88] sm:$0xff] %v232
                %v234 = vld [vmem:[%s196 + $0x120] sm:$0xff]
                %235 = vst [vmem:[%s197 + $0x90] sm:$0xff] %v234
                %v236 = vld [vmem:[%s196 + $0x130] sm:$0xff]
                %237 = vst [vmem:[%s197 + $0x98] sm:$0xff] %v236
                %v238 = vld [vmem:[%s196 + $0x140] sm:$0xff]
                %239 = vst [vmem:[%s197 + $0xa0] sm:$0xff] %v238
                %v240 = vld [vmem:[%s196 + $0x150] sm:$0xff]
                %241 = vst [vmem:[%s197 + $0xa8] sm:$0xff] %v240
                %v242 = vld [vmem:[%s196 + $0x160] sm:$0xff]
                %243 = vst [vmem:[%s197 + $0xb0] sm:$0xff] %v242
                %v244 = vld [vmem:[%s196 + $0x170] sm:$0xff]
                %245 = vst [vmem:[%s197 + $0xb8] sm:$0xff] %v244
                %v246 = vld [vmem:[%s196 + $0x180] sm:$0xff]
                %247 = vst [vmem:[%s197 + $0xc0] sm:$0xff] %v246
                %v248 = vld [vmem:[%s196 + $0x190] sm:$0xff]
                %249 = vst [vmem:[%s197 + $0xc8] sm:$0xff] %v248
                %v250 = vld [vmem:[%s196 + $0x1a0] sm:$0xff]
                %251 = vst [vmem:[%s197 + $0xd0] sm:$0xff] %v250
                %v252 = vld [vmem:[%s196 + $0x1b0] sm:$0xff]
                %253 = vst [vmem:[%s197 + $0xd8] sm:$0xff] %v252
                %v254 = vld [vmem:[%s196 + $0x1c0] sm:$0xff]
                %255 = vst [vmem:[%s197 + $0xe0] sm:$0xff] %v254
                %v256 = vld [vmem:[%s196 + $0x1d0] sm:$0xff]
                %257 = vst [vmem:[%s197 + $0xe8] sm:$0xff] %v256
                %v258 = vld [vmem:[%s196 + $0x1e0] sm:$0xff]
                %259 = vst [vmem:[%s197 + $0xf0] sm:$0xff] %v258
                %v260 = vld [vmem:[%s196 + $0x1f0] sm:$0xff]
                %261 = vst [vmem:[%s197 + $0xf8] sm:$0xff] %v260
              $region41: #{resnet_forward.24} parent=35 // loop_footer
                %s195 = sadd.s32 1, %s191
              $region42: #{resnet_forward.24} parent=35 // loop_footer_branch
                %190 = sbr.rel target = $region38
              $region43: #{resnet_forward.24} parent=35 // loop_exit
                _
            $region36: #{resnet_forward.24} parent=27 // pred_fallthru
              _
          $region28: #{resnet_forward.24} parent=23 // pred_fallthru
            _
          %338 = vnop
        $region24: #{resnet_forward.24} parent=19 // pred_fallthru
          _
        // Predicated region
        $region59: #{resnet_forward.24} parent=19 // pred_check
          %p339 = pneg %p104
        $region60: #{resnet_forward.24} parent=19 // pred_check_branch
          %341 = sbr.rel (%p339) target = $region62
        $region61: #{resnet_forward.24} parent=19 // pred_region
          %s342 = smul.u32 2, %s17
          %p343 = scmp.lt.s32.totalorder %s342, 3
          %s344 = scalar_select %p343, %s342, 3
          %s345 = scalar_lea.vmem %s2, %s344
          %s346 = smul.u32 2, %s17
        $region62: #{resnet_forward.24} parent=19 // pred_fallthru
          _
      $region20: #{resnet_forward.24} parent=5 // pred_fallthru
        _
      %p347 = scmp.le.s32.totalorder 1, %s9
      %p348 = scmp.lt.s32.totalorder %s9, 3
      %p349 = pnand %p347, %p348
      %p350 = pneg %p349
      // Predicated region
      $region63: #{resnet_forward.24} parent=5 // pred_check
        _
      $region64: #{resnet_forward.24} parent=5 // pred_check_branch
        %352 = sbr.rel (%p349) target = $region66
      $region65: #{resnet_forward.24} parent=5 // pred_region
        %s353 = ssub.s32 %s9, 1
        %s354 = sand.u32 %s71, 1
        %s355 = sand.u32 %s71, 1
        %s356 = smul.addr %s355, 256
        %s357 = scalar_lea.vmem [#allocation3], %s356
        // Predicated region
        $region67: #{resnet_forward.24} parent=65 // pred_check
          %p358 = pneg %p84
        $region68: #{resnet_forward.24} parent=65 // pred_check_branch
          %360 = sbr.rel (%p358) target = $region70
        $region69: #{resnet_forward.24} parent=65 // pred_region
          _
        $region70: #{resnet_forward.24} parent=65 // pred_fallthru
          _
        %s361 = smul.u32 2, %s21
        %p362 = scmp.lt.s32.totalorder %s19, 0
        %s363 = scalar_select %p362, %s19, 0
        %p364 = scmp.lt.s32.totalorder %s361, 1
        %s365 = scalar_select %p364, %s361, 1
        %s366 = smul.addr %s363, 2
        %s367 = sadd.s32 %s365, %s366
        %s368 = smul.addr %s367, 4
        %s369 = scalar_lea.vmem %s0, %s368
        %p370 = pneg %p56
        %p371 = pneg %p53
        %s372 = sand.u32 %s71, 1
        %s373 = sand.u32 %s71, 1
        %s374 = smul.addr %s373, 256
        %s375 = scalar_lea.vmem [#allocation3], %s374
        %p376 = pneg %p84
        %p377 = pneg %p81
        %s378 = smul.u32 2, %s20
        %p379 = scmp.lt.s32.totalorder %s378, 3
        %s380 = scalar_select %p379, %s378, 3
        %s381 = scalar_lea.vmem %s2, %s380
        %p382 = pneg %p110
        %p383 = pneg %p107
        %p384 = pneg %p138
        %p385 = pneg %p135
        %s386 = smul.u32 2, %s20
        %p387 = scmp.lt.s32.totalorder %s19, 0
        %s388 = scalar_select %p387, %s19, 0
        %p389 = scmp.lt.s32.totalorder %s386, 3
        %s390 = scalar_select %p389, %s386, 3
        %s391 = smul.addr %s388, 4
        %s392 = sadd.s32 %s390, %s391
        %s393 = smul.addr %s392, 4
        %s394 = scalar_lea.vmem %s3, %s393
        %s395 = smul.u32 2, %s21
        %p396 = scmp.lt.s32.totalorder %s19, 0
        %s397 = scalar_select %p396, %s19, 0
        %p398 = scmp.lt.s32.totalorder %s395, 1
        %s399 = scalar_select %p398, %s395, 1
        %s400 = smul.addr %s397, 2
        %s401 = sadd.s32 %s399, %s400
        %s402 = smul.addr %s401, 4
        %s403 = scalar_lea.vmem %s0, %s402
        %s404 = smul.u32 2, %s21
        %s405 = smul.u32 32, %s21
        %s406 = smul.u32 2, %s20
        %s407 = smul.u32 2, %s20
        %p408 = scmp.lt.s32.totalorder %s407, 3
        %s409 = scalar_select %p408, %s407, 3
        %s410 = scalar_lea.vmem %s2, %s409
        %s411 = smul.u32 2, %s20
        %s412 = smul.u32 2, %s20
        %p413 = scmp.lt.s32.totalorder %s19, 0
        %s414 = scalar_select %p413, %s19, 0
        %p415 = scmp.lt.s32.totalorder %s412, 3
        %s416 = scalar_select %p415, %s412, 3
        %s417 = smul.addr %s414, 4
        %s418 = sadd.s32 %s416, %s417
        %s419 = smul.addr %s418, 4
        %s420 = scalar_lea.vmem %s3, %s419
        %s421 = smul.u32 2, %s20
        %p422 = scmp.eq.s32.totalorder %s21, 0
        // Predicated region
        $region71: #{resnet_forward.24} parent=65 // pred_check
          %p423 = pneg %p422
        $region72: #{resnet_forward.24} parent=65 // pred_check_branch
          %425 = sbr.rel (%p423) target = $region74
        $region73: #{resnet_forward.24} parent=65 // pred_region
          %426 = vst [vmem:[#allocation2] sm:$0xff] 0.0
          %427 = vst [vmem:[#allocation2 + $0x8] sm:$0xff] 0.0
        $region74: #{resnet_forward.24} parent=65 // pred_fallthru
          _
        %v428 = vld [vmem:[#allocation2] sm:$0xff]
        %v429 = vld [vmem:[#allocation2 + $0x8] sm:$0xff]
        %v430 = vld [vmem:[%s403] sm:$0xff]
        %v431 = vld [vmem:[%s357] sm:$0xff]
        %v432 = vld [vmem:[%s357 + $0x8] sm:$0xff]
        %v433 = vld [vmem:[%s357 + $0x10] sm:$0xff]
        %v434 = vld [vmem:[%s357 + $0x18] sm:$0xff]
        %v435 = vld [vmem:[%s357 + $0x20] sm:$0xff]
        %v436 = vld [vmem:[%s357 + $0x28] sm:$0xff]
        %v437 = vld [vmem:[%s357 + $0x30] sm:$0xff]
        %v438 = vld [vmem:[%s357 + $0x38] sm:$0xff]
        %v439 = vld [vmem:[%s357 + $0x40] sm:$0xff]
        %v440 = vld [vmem:[%s357 + $0x48] sm:$0xff]
        %v441 = vld [vmem:[%s357 + $0x50] sm:$0xff]
        %v442 = vld [vmem:[%s357 + $0x58] sm:$0xff]
        %v443 = vld [vmem:[%s357 + $0x60] sm:$0xff]
        %v444 = vld [vmem:[%s357 + $0x68] sm:$0xff]
        %v445 = vld [vmem:[%s357 + $0x70] sm:$0xff]
        %v446 = vld [vmem:[%s357 + $0x78] sm:$0xff]
        %v447 = vld [vmem:[%s357 + $0x80] sm:$0xff]
        %v448 = vld [vmem:[%s357 + $0x88] sm:$0xff]
        %v449 = vld [vmem:[%s357 + $0x90] sm:$0xff]
        %v450 = vld [vmem:[%s357 + $0x98] sm:$0xff]
        %v451 = vld [vmem:[%s357 + $0xa0] sm:$0xff]
        %v452 = vld [vmem:[%s357 + $0xa8] sm:$0xff]
        %v453 = vld [vmem:[%s357 + $0xb0] sm:$0xff]
        %v454 = vld [vmem:[%s357 + $0xb8] sm:$0xff]
        %v455 = vld [vmem:[%s357 + $0xc0] sm:$0xff]
        %v456 = vld [vmem:[%s357 + $0xc8] sm:$0xff]
        %v457 = vld [vmem:[%s357 + $0xd0] sm:$0xff]
        %v458 = vld [vmem:[%s357 + $0xd8] sm:$0xff]
        %v459 = vld [vmem:[%s357 + $0xe0] sm:$0xff]
        %v460 = vld [vmem:[%s357 + $0xe8] sm:$0xff]
        %v461 = vld [vmem:[%s357 + $0xf0] sm:$0xff]
        %v462 = vld [vmem:[%s357 + $0xf8] sm:$0xff]
        %v464 = vunpack.c.l.b16 %v430
        %v465 = vunpack.c.h.b16 %v430
        %v466 = vpack.c.b16 %v464, %v464
        %v467 = vpack.c.b16 %v465, %v465
        %v502 = vunpack.c.l.b16 %v431
        %v503 = vunpack.c.h.b16 %v431
        %v504 = vunpack.c.l.b16 %v432
        %v505 = vunpack.c.h.b16 %v432
        %v506 = vunpack.c.l.b16 %v433
        %v507 = vunpack.c.h.b16 %v433
        %v508 = vunpack.c.l.b16 %v434
        %v509 = vunpack.c.h.b16 %v434
        %v510 = vunpack.c.l.b16 %v435
        %v511 = vunpack.c.h.b16 %v435
        %v512 = vunpack.c.l.b16 %v436
        %v513 = vunpack.c.h.b16 %v436
        %v514 = vunpack.c.l.b16 %v437
        %v515 = vunpack.c.h.b16 %v437
        %v516 = vunpack.c.l.b16 %v438
        %v517 = vunpack.c.h.b16 %v438
        %v518 = vunpack.c.l.b16 %v439
        %v519 = vunpack.c.h.b16 %v439
        %v520 = vunpack.c.l.b16 %v440
        %v521 = vunpack.c.h.b16 %v440
        %v522 = vunpack.c.l.b16 %v441
        %v523 = vunpack.c.h.b16 %v441
        %v524 = vunpack.c.l.b16 %v442
        %v525 = vunpack.c.h.b16 %v442
        %v526 = vunpack.c.l.b16 %v443
        %v527 = vunpack.c.h.b16 %v443
        %v528 = vunpack.c.l.b16 %v444
        %v529 = vunpack.c.h.b16 %v444
        %v530 = vunpack.c.l.b16 %v445
        %v531 = vunpack.c.h.b16 %v445
        %v532 = vunpack.c.l.b16 %v446
        %v533 = vunpack.c.h.b16 %v446
        %v534 = vunpack.c.l.b16 %v447
        %v535 = vunpack.c.h.b16 %v447
        %v536 = vunpack.c.l.b16 %v448
        %v537 = vunpack.c.h.b16 %v448
        %v538 = vunpack.c.l.b16 %v449
        %v539 = vunpack.c.h.b16 %v449
        %v540 = vunpack.c.l.b16 %v450
        %v541 = vunpack.c.h.b16 %v450
        %v542 = vunpack.c.l.b16 %v451
        %v543 = vunpack.c.h.b16 %v451
        %v544 = vunpack.c.l.b16 %v452
        %v545 = vunpack.c.h.b16 %v452
        %v546 = vunpack.c.l.b16 %v453
        %v547 = vunpack.c.h.b16 %v453
        %v548 = vunpack.c.l.b16 %v454
        %v549 = vunpack.c.h.b16 %v454
        %v550 = vunpack.c.l.b16 %v455
        %v551 = vunpack.c.h.b16 %v455
        %v552 = vunpack.c.l.b16 %v456
        %v553 = vunpack.c.h.b16 %v456
        %v554 = vunpack.c.l.b16 %v457
        %v555 = vunpack.c.h.b16 %v457
        %v556 = vunpack.c.l.b16 %v458
        %v557 = vunpack.c.h.b16 %v458
        %v558 = vunpack.c.l.b16 %v459
        %v559 = vunpack.c.h.b16 %v459
        %v560 = vunpack.c.l.b16 %v460
        %v561 = vunpack.c.h.b16 %v460
        %v562 = vunpack.c.l.b16 %v461
        %v563 = vunpack.c.h.b16 %v461
        %v564 = vunpack.c.l.b16 %v462
        %v565 = vunpack.c.h.b16 %v462
        %v566 = vpack.c.b16 %v504, %v502
        %v567 = vpack.c.b16 %v505, %v503
        %v568 = vpack.c.b16 %v508, %v506
        %v569 = vpack.c.b16 %v509, %v507
        %v570 = vpack.c.b16 %v512, %v510
        %v571 = vpack.c.b16 %v513, %v511
        %v572 = vpack.c.b16 %v516, %v514
        %v573 = vpack.c.b16 %v517, %v515
        %v574 = vpack.c.b16 %v520, %v518
        %v575 = vpack.c.b16 %v521, %v519
        %v576 = vpack.c.b16 %v524, %v522
        %v577 = vpack.c.b16 %v525, %v523
        %v578 = vpack.c.b16 %v528, %v526
        %v579 = vpack.c.b16 %v529, %v527
        %v580 = vpack.c.b16 %v532, %v530
        %v581 = vpack.c.b16 %v533, %v531
        %v582 = vpack.c.b16 %v536, %v534
        %v583 = vpack.c.b16 %v537, %v535
        %v584 = vpack.c.b16 %v540, %v538
        %v585 = vpack.c.b16 %v541, %v539
        %v586 = vpack.c.b16 %v544, %v542
        %v587 = vpack.c.b16 %v545, %v543
        %v588 = vpack.c.b16 %v548, %v546
        %v589 = vpack.c.b16 %v549, %v547
        %v590 = vpack.c.b16 %v552, %v550
        %v591 = vpack.c.b16 %v553, %v551
        %v592 = vpack.c.b16 %v556, %v554
        %v593 = vpack.c.b16 %v557, %v555
        %v594 = vpack.c.b16 %v560, %v558
        %v595 = vpack.c.b16 %v561, %v559
        %v596 = vpack.c.b16 %v564, %v562
        %v597 = vpack.c.b16 %v565, %v563
        %630 = vmatprep.subr.bf16.mxu0 %v567
        %631 = vmatpush1.bf16.msra.mxu0 %v566
        %632 = vmatprep.subr.bf16.mxu0 %v569
        %633 = vmatpush1.bf16.msra.mxu0 %v568
        %634 = vmatprep.subr.bf16.mxu0 %v571
        %635 = vmatpush1.bf16.msra.mxu0 %v570
        %636 = vmatprep.subr.bf16.mxu0 %v573
        %637 = vmatpush1.bf16.msra.mxu0 %v572
        %638 = vmatprep.subr.bf16.mxu0 %v575
        %639 = vmatpush1.bf16.msra.mxu0 %v574
        %640 = vmatprep.subr.bf16.mxu0 %v577
        %641 = vmatpush1.bf16.msra.mxu0 %v576
        %642 = vmatprep.subr.bf16.mxu0 %v579
        %643 = vmatpush1.bf16.msra.mxu0 %v578
        %644 = vmatprep.subr.bf16.mxu0 %v581
        %645 = vmatpush1.bf16.msra.mxu0 %v580
        %646 = vmatprep.subr.bf16.mxu0 %v583
        %647 = vmatpush1.bf16.msra.mxu0 %v582
        %648 = vmatprep.subr.bf16.mxu0 %v585
        %649 = vmatpush1.bf16.msra.mxu0 %v584
        %650 = vmatprep.subr.bf16.mxu0 %v587
        %651 = vmatpush1.bf16.msra.mxu0 %v586
        %652 = vmatprep.subr.bf16.mxu0 %v589
        %653 = vmatpush1.bf16.msra.mxu0 %v588
        %654 = vmatprep.subr.bf16.mxu0 %v591
        %655 = vmatpush1.bf16.msra.mxu0 %v590
        %656 = vmatprep.subr.bf16.mxu0 %v593
        %657 = vmatpush1.bf16.msra.mxu0 %v592
        %658 = vmatprep.subr.bf16.mxu0 %v595
        %659 = vmatpush1.bf16.msra.mxu0 %v594
        %660 = vmatprep.subr.bf16.mxu0 %v597
        %661 = vmatpush1.bf16.msra.mxu0 %v596
        %662 = vmatprep.mubr.bf16.mxu0 %v467
        %663 = vmatmul.mubr.bf16.gmra.mrb[0].mxu0 %v466
        %v664 = vpop.f32.mrb[0].mxu0
        %v665 = vadd.f32 0.0, %v664
        %v666 = vpop.f32.mrb[0].mxu0
        %v667 = vadd.f32 0.0, %v666
        %v668 = vpop.f32.mrb[0].mxu0
        %v669 = vpop.f32.mrb[0].mxu0
        %670 = vdwg.mxu0
        %v671 = vadd.f32 %v428, %v665
        %v672 = vadd.f32 %v429, %v667
        %673 = vst [vmem:[#allocation2] sm:$0xff] %v671
        %674 = vst [vmem:[#allocation2 + $0x8] sm:$0xff] %v672
        // Predicated region
        $region75: #{resnet_forward.24} parent=65 // pred_check
          %p675 = pneg %p422
        $region76: #{resnet_forward.24} parent=65 // pred_check_branch
          %677 = sbr.rel (%p675) target = $region78
        $region77: #{resnet_forward.24} parent=65 // pred_region
          %v678 = vld [vmem:[#allocation2] sm:$0xff]
          %v679 = vld [vmem:[#allocation2 + $0x8] sm:$0xff]
          %v680 = vld [vmem:[%s410] sm:$0x3]
          %v682 = vlaneseq
          %v683 = vshrl.u32 %v682, 7
          %v684 = vsub.s32 0, %v683
          %v685 = vrot.slane %v680, %v684
          %v686 = vlaneseq
          %v687 = vshrl.u32 %v686, 7
          %v688 = vsub.s32 1, %v687
          %v689 = vrot.slane %v680, %v688
          %v692 = vadd.f32 %v678, %v685
          %v693 = vadd.f32 %v679, %v689
          %v694 = vpack.c.bf16 %v692, %v692
          %v695 = vpack.c.bf16 %v693, %v693
          %v698 = vunpack.c.l.b16 %v694
          %v699 = vunpack.c.l.b16 %v695
          %v700 = vpack.c.b16 %v699, %v698
          %702 = vst [vmem:[%s420] sm:$0xff] %v700
        $region78: #{resnet_forward.24} parent=65 // pred_fallthru
          _
        %s703 = smul.u32 2, %s20
        %p704 = scmp.lt.s32.totalorder %s19, 0
        %s705 = scalar_select %p704, %s19, 0
        %p706 = scmp.lt.s32.totalorder %s703, 3
        %s707 = scalar_select %p706, %s703, 3
        %s708 = smul.addr %s705, 4
        %s709 = sadd.s32 %s707, %s708
        %s710 = smul.addr %s709, 4
        %s711 = scalar_lea.vmem %s3, %s710
        // Predicated region
        $region79: #{resnet_forward.24} parent=65 // pred_check
          %p712 = pneg %p135
        $region80: #{resnet_forward.24} parent=65 // pred_check_branch
          %714 = sbr.rel (%p712) target = $region82
        $region81: #{resnet_forward.24} parent=65 // pred_region
          %s715 = smul.u32 2, %s20
        $region82: #{resnet_forward.24} parent=65 // pred_fallthru
          _
      $region66: #{resnet_forward.24} parent=5 // pred_fallthru
        _
      %p716 = scmp.le.s32.totalorder 2, %s9
      // Predicated region
      $region83: #{resnet_forward.24} parent=5 // pred_check
        %p717 = pneg %p716
      $region84: #{resnet_forward.24} parent=5 // pred_check_branch
        %719 = sbr.rel (%p717) target = $region86
      $region85: #{resnet_forward.24} parent=5 // pred_region
        %s720 = ssub.s32 %s9, 2
        // Predicated region
        $region87: #{resnet_forward.24} parent=85 // pred_check
          %p721 = pneg %p141
        $region88: #{resnet_forward.24} parent=85 // pred_check_branch
          %723 = sbr.rel (%p721) target = $region90
        $region89: #{resnet_forward.24} parent=85 // pred_region
          %s724 = smul.u32 2, %s23
          %p725 = scmp.lt.s32.totalorder %s22, 0
          %s726 = scalar_select %p725, %s22, 0
          %p727 = scmp.lt.s32.totalorder %s724, 3
          %s728 = scalar_select %p727, %s724, 3
          %s729 = smul.addr %s726, 4
          %s730 = sadd.s32 %s728, %s729
          %s731 = smul.addr %s730, 4
          %s732 = scalar_lea.vmem %s3, %s731
        $region90: #{resnet_forward.24} parent=85 // pred_fallthru
          _
      $region86: #{resnet_forward.24} parent=5 // pred_fallthru
        _
    $region6: #{resnet_forward.24} parent=1 // loop_footer
      %s13 = sadd.s32 1, %s9
    $region7: #{resnet_forward.24} parent=1 // loop_footer_branch
      %8 = sbr.rel target = $region3
    $region8: #{resnet_forward.24} parent=1 // loop_exit
      _

// kernel: resnet_forward.25
$region0: #{resnet_forward.25}
  #allocation0 [shape = 'u32[]', space=smem, size = 0x4, offset = 0x4, fixed_abs, tag = 'smem constant byte address 0x4 - core index']
  #allocation1 [shape = 'u32[144,128]{1,0:T(1,128)}', space=vmem, size = 0x12000, scoped, tag = 'internal scratch']
  #allocation2 [shape = 'f32[8,256]{1,0:T(8,128)}', space=vmem, size = 0x2000, scoped, tag = 'scratch operand']
  %s0 = inlined_call_operand.vmem [shape: bf16[8,4608], index: 0, kind: input, shape index: {}]
  %s1 = inlined_call_operand.vmem [shape: bf16[4608,512], index: 1, kind: input, shape index: {}]
  %s2 = inlined_call_operand.vmem [shape: f32[1,512], index: 2, kind: input, shape index: {}]
  %s3 = inlined_call_operand.vmem [shape: bf16[8,512], index: 3, kind: input, shape index: {}]
  %s4 = inlined_call_operand.vmem [shape: bf16[8,512], index: 4, kind: output, shape index: {}]
  %s5 = sld [smem:[#allocation0]]
  $region95: #{resnet_forward.25} parent=0
    _
  %s7 = ssub.s32 1, %s5
  %s8 = scalar_select 0, %s7, %s5
  $region1: #{resnet_forward.25} parent=0
    #allocation3 [shape = 'u8[524288]{0}', space=vmem, size = 0x80000, scoped, tag = 'input window, operand 1']
    loop: start=0, step=1, limit=20
    $region2: #{resnet_forward.25} parent=1 // loop_pre_header
      _
    $region3: #{resnet_forward.25} parent=1 // loop_header
      %s10 = sphi 0, %s14
      %p11 = scmp.ge.s32.totalorder %s10, 20
      %s17 = sphi 0, %s36
      %s18 = sphi 0, %s32
      %s19 = sphi 0, %s28
      %s20 = sphi 0, %s17
      %s21 = sphi 0, %s18
      %s22 = sphi 0, %s19
      %s23 = sphi 0, %s20
      %s24 = sphi 0, %s21
      %s25 = sphi 0, %s22
      %s41 = sphi 0, %s43
      %s44 = sphi 0, %s41
      %s45 = sphi 0, %s44
      %s61 = sphi 0, %s45
      %s69 = sphi 0, %s71
      %s72 = sphi 0, %s69
      %s73 = sphi 0, %s72
      %s89 = sphi 0, %s73
      %s95 = sphi 0, %s97
      %s98 = sphi 0, %s95
      %s99 = sphi 0, %s98
      %s115 = sphi 0, %s99
      %s123 = sphi 0, %s125
      %s126 = sphi 0, %s123
      %s127 = sphi 0, %s126
      %s143 = sphi 0, %s127
      %s151 = sphi 0, %s153
      %s154 = sphi 0, %s151
      %s155 = sphi 0, %s154
      %s171 = sphi 0, %s155
    $region4: #{resnet_forward.25} parent=1 // loop_header_branch
      %13 = sbr.rel (%p11) target = $region8
    $region5: #{resnet_forward.25} parent=1 // loop_body
      %s15 = ssub.s32 %s10, 1
      %s16 = ssub.s32 %s10, 2
      %s26 = sadd.s32 1, %s19
      %p27 = scmp.ge.s32.totalorder %s26, 9
      %s28 = scalar_select %p27, 0, %s26
      %s29 = sadd.s32 1, %s18
      %s30 = scalar_select %p27, %s29, %s18
      %p31 = scmp.ge.s32.totalorder %s30, 2
      %s32 = scalar_select %p31, 0, %s30
      %s33 = sadd.s32 1, %s17
      %s34 = scalar_select %p31, %s33, %s17
      %p35 = scmp.ge.s32.totalorder %s34, 1
      %s36 = scalar_select %p35, 0, %s34
      %s37 = ssub.s32 %s17, %s36
      %s38 = ssub.s32 %s19, %s28
      %s39 = sor.u32 %s37, %s38
      %p40 = scmp.eq.s32.totalorder %s39, 0
      %s42 = sadd.s32 %s41, 1
      %s43 = scalar_select %p40, %s41, %s42
      %p46 = pneg %p40
      %p47 = scmp.eq.s32.totalorder %s10, 17
      %p48 = por %p46, %p47
      %p49 = scmp.ne.s32.totalorder %s41, %s44
      %p50 = scmp.eq.s32.totalorder %s10, 0
      %p51 = por %p49, %p50
      %p52 = scmp.ne.s32.totalorder %s41, %s44
      %p53 = scmp.eq.s32.totalorder %s15, 17
      %p54 = por %p52, %p53
      %p55 = scmp.ne.s32.totalorder %s44, %s45
      %p56 = scmp.eq.s32.totalorder %s15, 0
      %p57 = por %p55, %p56
      %p58 = scmp.ne.s32.totalorder %s44, %s45
      %p59 = scmp.eq.s32.totalorder %s16, 17
      %p60 = por %p58, %p59
      %p62 = scmp.ne.s32.totalorder %s45, %s61
      %p63 = scmp.eq.s32.totalorder %s16, 0
      %p64 = por %p62, %p63
      %s65 = ssub.s32 %s19, %s28
      %s66 = ssub.s32 %s18, %s32
      %s67 = sor.u32 %s65, %s66
      %p68 = scmp.eq.s32.totalorder %s67, 0
      %s70 = sadd.s32 %s69, 1
      %s71 = scalar_select %p68, %s69, %s70
      %p74 = pneg %p68
      %p75 = scmp.eq.s32.totalorder %s10, 17
      %p76 = por %p74, %p75
      %p77 = scmp.ne.s32.totalorder %s69, %s72
      %p78 = scmp.eq.s32.totalorder %s10, 0
      %p79 = por %p77, %p78
      %p80 = scmp.ne.s32.totalorder %s69, %s72
      %p81 = scmp.eq.s32.totalorder %s15, 17
      %p82 = por %p80, %p81
      %p83 = scmp.ne.s32.totalorder %s72, %s73
      %p84 = scmp.eq.s32.totalorder %s15, 0
      %p85 = por %p83, %p84
      %p86 = scmp.ne.s32.totalorder %s72, %s73
      %p87 = scmp.eq.s32.totalorder %s16, 17
      %p88 = por %p86, %p87
      %p90 = scmp.ne.s32.totalorder %s73, %s89
      %p91 = scmp.eq.s32.totalorder %s16, 0
      %p92 = por %p90, %p91
      %s93 = ssub.s32 %s18, %s32
      %p94 = scmp.eq.s32.totalorder %s93, 0
      %s96 = sadd.s32 %s95, 1
      %s97 = scalar_select %p94, %s95, %s96
      %p100 = pneg %p94
      %p101 = scmp.eq.s32.totalorder %s10, 17
      %p102 = por %p100, %p101
      %p103 = scmp.ne.s32.totalorder %s95, %s98
      %p104 = scmp.eq.s32.totalorder %s10, 0
      %p105 = por %p103, %p104
      %p106 = scmp.ne.s32.totalorder %s95, %s98
      %p107 = scmp.eq.s32.totalorder %s15, 17
      %p108 = por %p106, %p107
      %p109 = scmp.ne.s32.totalorder %s98, %s99
      %p110 = scmp.eq.s32.totalorder %s15, 0
      %p111 = por %p109, %p110
      %p112 = scmp.ne.s32.totalorder %s98, %s99
      %p113 = scmp.eq.s32.totalorder %s16, 17
      %p114 = por %p112, %p113
      %p116 = scmp.ne.s32.totalorder %s99, %s115
      %p117 = scmp.eq.s32.totalorder %s16, 0
      %p118 = por %p116, %p117
      %s119 = ssub.s32 %s17, %s36
      %s120 = ssub.s32 %s18, %s32
      %s121 = sor.u32 %s119, %s120
      %p122 = scmp.eq.s32.totalorder %s121, 0
      %s124 = sadd.s32 %s123, 1
      %s125 = scalar_select %p122, %s123, %s124
      %p128 = pneg %p122
      %p129 = scmp.eq.s32.totalorder %s10, 17
      %p130 = por %p128, %p129
      %p131 = scmp.ne.s32.totalorder %s123, %s126
      %p132 = scmp.eq.s32.totalorder %s10, 0
      %p133 = por %p131, %p132
      %p134 = scmp.ne.s32.totalorder %s123, %s126
      %p135 = scmp.eq.s32.totalorder %s15, 17
      %p136 = por %p134, %p135
      %p137 = scmp.ne.s32.totalorder %s126, %s127
      %p138 = scmp.eq.s32.totalorder %s15, 0
      %p139 = por %p137, %p138
      %p140 = scmp.ne.s32.totalorder %s126, %s127
      %p141 = scmp.eq.s32.totalorder %s16, 17
      %p142 = por %p140, %p141
      %p144 = scmp.ne.s32.totalorder %s127, %s143
      %p145 = scmp.eq.s32.totalorder %s16, 0
      %p146 = por %p144, %p145
      %s147 = ssub.s32 %s17, %s36
      %s148 = ssub.s32 %s18, %s32
      %s149 = sor.u32 %s147, %s148
      %p150 = scmp.eq.s32.totalorder %s149, 0
      %s152 = sadd.s32 %s151, 1
      %s153 = scalar_select %p150, %s151, %s152
      %p156 = pneg %p150
      %p157 = scmp.eq.s32.totalorder %s10, 17
      %p158 = por %p156, %p157
      %p159 = scmp.ne.s32.totalorder %s151, %s154
      %p160 = scmp.eq.s32.totalorder %s10, 0
      %p161 = por %p159, %p160
      %p162 = scmp.ne.s32.totalorder %s151, %s154
      %p163 = scmp.eq.s32.totalorder %s15, 17
      %p164 = por %p162, %p163
      %p165 = scmp.ne.s32.totalorder %s154, %s155
      %p166 = scmp.eq.s32.totalorder %s15, 0
      %p167 = por %p165, %p166
      %p168 = scmp.ne.s32.totalorder %s154, %s155
      %p169 = scmp.eq.s32.totalorder %s16, 17
      %p170 = por %p168, %p169
      %p172 = scmp.ne.s32.totalorder %s155, %s171
      %p173 = scmp.eq.s32.totalorder %s16, 0
      %p174 = por %p172, %p173
      %p175 = scmp.le.s32.totalorder 1, %s10
      %p176 = scmp.lt.s32.totalorder %s10, 19
      %p177 = pnand %p175, %p176
      %p178 = pneg %p177
      // Predicated region
      $region9: #{resnet_forward.25} parent=5 // pred_check
        _
      $region10: #{resnet_forward.25} parent=5 // pred_check_branch
        %180 = sbr.rel (%p177) target = $region12
      $region11: #{resnet_forward.25} parent=5 // pred_region
        %s181 = ssub.s32 %s10, 1
      $region12: #{resnet_forward.25} parent=5 // pred_fallthru
        _
      %p182 = scmp.lt.s32.totalorder %s10, 18
      // Predicated region
      $region13: #{resnet_forward.25} parent=5 // pred_check
        %p183 = pneg %p182
      $region14: #{resnet_forward.25} parent=5 // pred_check_branch
        %185 = sbr.rel (%p183) target = $region16
      $region15: #{resnet_forward.25} parent=5 // pred_region
        // Predicated region
        $region17: #{resnet_forward.25} parent=15 // pred_check
          %p186 = pneg %p51
        $region18: #{resnet_forward.25} parent=15 // pred_check_branch
          %188 = sbr.rel (%p186) target = $region20
        $region19: #{resnet_forward.25} parent=15 // pred_region
          %s189 = smul.u32 4, %s19
          %p190 = scmp.lt.s32.totalorder %s17, 0
          %s191 = scalar_select %p190, %s17, 0
          %p192 = scmp.lt.s32.totalorder %s189, 35
          %s193 = scalar_select %p192, %s189, 35
          %s194 = smul.addr %s191, 36
          %s195 = sadd.s32 %s193, %s194
          %s196 = smul.addr %s195, 4
          %s197 = scalar_lea.vmem %s0, %s196
          %s198 = smul.u32 4, %s19
        $region20: #{resnet_forward.25} parent=15 // pred_fallthru
          _
        // Predicated region
        $region21: #{resnet_forward.25} parent=15 // pred_check
          %p199 = pneg %p79
        $region22: #{resnet_forward.25} parent=15 // pred_check_branch
          %201 = sbr.rel (%p199) target = $region24
        $region23: #{resnet_forward.25} parent=15 // pred_region
          %s202 = sand.u32 %s69, 1
          %s203 = sand.u32 %s69, 1
          %s204 = smul.addr %s203, 512
          %s205 = scalar_lea.vmem [#allocation3], %s204
          %s206 = smul.u32 64, %s19
          %s207 = smul.u32 2, %s18
          %s208 = smul.addr %s206, 4
          %s209 = sadd.s32 %s207, %s208
          %s210 = smul.addr %s209, 4
          %s211 = scalar_lea.vmem %s1, %s210
          // Predicated region
          $region25: #{resnet_forward.25} parent=23 // pred_check
            _
          $region26: #{resnet_forward.25} parent=23 // pred_check_branch
            %213 = sbr.rel (0) target = $region28
          $region27: #{resnet_forward.25} parent=23 // pred_region
            // Predicated region
            $region29: #{resnet_forward.25} parent=27 // pred_check
              _
            $region30: #{resnet_forward.25} parent=27 // pred_check_branch
              %215 = sbr.rel (0) target = $region32
            $region31: #{resnet_forward.25} parent=27 // pred_region
              // Predicated region
              $region44: #{resnet_forward.25} parent=31 // pred_check
                _
              $region45: #{resnet_forward.25} parent=31 // pred_check_branch
                %356 = sbr.rel (0) target = $region47
              $region46: #{resnet_forward.25} parent=31 // pred_region
                loop: start=0, step=1, limit=1
                $region48: #{resnet_forward.25} parent=46 // loop_pre_header
                  _
                $region49: #{resnet_forward.25} parent=46 // loop_header
                  %s358 = sphi 0, %s362
                  %p359 = scmp.ge.s32.totalorder %s358, 1
                  %s363 = sphi %s211, %s211
                  %s364 = sphi %s205, %s205
                $region50: #{resnet_forward.25} parent=46 // loop_header_branch
                  %361 = sbr.rel (%p359) target = $region54
                $region51: #{resnet_forward.25} parent=46 // loop_body
                  %v365 = vld [vmem:[%s363] sm:$0xff]
                  %366 = vst [vmem:[%s364] sm:$0xff] %v365
                  %v367 = vld [vmem:[%s363 + $0x10] sm:$0xff]
                  %368 = vst [vmem:[%s364 + $0x8] sm:$0xff] %v367
                  %v369 = vld [vmem:[%s363 + $0x20] sm:$0xff]
                  %370 = vst [vmem:[%s364 + $0x10] sm:$0xff] %v369
                  %v371 = vld [vmem:[%s363 + $0x30] sm:$0xff]
                  %372 = vst [vmem:[%s364 + $0x18] sm:$0xff] %v371
                  %v373 = vld [vmem:[%s363 + $0x40] sm:$0xff]
                  %374 = vst [vmem:[%s364 + $0x20] sm:$0xff] %v373
                  %v375 = vld [vmem:[%s363 + $0x50] sm:$0xff]
                  %376 = vst [vmem:[%s364 + $0x28] sm:$0xff] %v375
                  %v377 = vld [vmem:[%s363 + $0x60] sm:$0xff]
                  %378 = vst [vmem:[%s364 + $0x30] sm:$0xff] %v377
                  %v379 = vld [vmem:[%s363 + $0x70] sm:$0xff]
                  %380 = vst [vmem:[%s364 + $0x38] sm:$0xff] %v379
                  %v381 = vld [vmem:[%s363 + $0x80] sm:$0xff]
                  %382 = vst [vmem:[%s364 + $0x40] sm:$0xff] %v381
                  %v383 = vld [vmem:[%s363 + $0x90] sm:$0xff]
                  %384 = vst [vmem:[%s364 + $0x48] sm:$0xff] %v383
                  %v385 = vld [vmem:[%s363 + $0xa0] sm:$0xff]
                  %386 = vst [vmem:[%s364 + $0x50] sm:$0xff] %v385
                  %v387 = vld [vmem:[%s363 + $0xb0] sm:$0xff]
                  %388 = vst [vmem:[%s364 + $0x58] sm:$0xff] %v387
                  %v389 = vld [vmem:[%s363 + $0xc0] sm:$0xff]
                  %390 = vst [vmem:[%s364 + $0x60] sm:$0xff] %v389
                  %v391 = vld [vmem:[%s363 + $0xd0] sm:$0xff]
                  %392 = vst [vmem:[%s364 + $0x68] sm:$0xff] %v391
                  %v393 = vld [vmem:[%s363 + $0xe0] sm:$0xff]
                  %394 = vst [vmem:[%s364 + $0x70] sm:$0xff] %v393
                  %v395 = vld [vmem:[%s363 + $0xf0] sm:$0xff]
                  %396 = vst [vmem:[%s364 + $0x78] sm:$0xff] %v395
                  %v397 = vld [vmem:[%s363 + $0x100] sm:$0xff]
                  %398 = vst [vmem:[%s364 + $0x80] sm:$0xff] %v397
                  %v399 = vld [vmem:[%s363 + $0x110] sm:$0xff]
                  %400 = vst [vmem:[%s364 + $0x88] sm:$0xff] %v399
                  %v401 = vld [vmem:[%s363 + $0x120] sm:$0xff]
                  %402 = vst [vmem:[%s364 + $0x90] sm:$0xff] %v401
                  %v403 = vld [vmem:[%s363 + $0x130] sm:$0xff]
                  %404 = vst [vmem:[%s364 + $0x98] sm:$0xff] %v403
                  %v405 = vld [vmem:[%s363 + $0x140] sm:$0xff]
                  %406 = vst [vmem:[%s364 + $0xa0] sm:$0xff] %v405
                  %v407 = vld [vmem:[%s363 + $0x150] sm:$0xff]
                  %408 = vst [vmem:[%s364 + $0xa8] sm:$0xff] %v407
                  %v409 = vld [vmem:[%s363 + $0x160] sm:$0xff]
                  %410 = vst [vmem:[%s364 + $0xb0] sm:$0xff] %v409
                  %v411 = vld [vmem:[%s363 + $0x170] sm:$0xff]
                  %412 = vst [vmem:[%s364 + $0xb8] sm:$0xff] %v411
                  %v413 = vld [vmem:[%s363 + $0x180] sm:$0xff]
                  %414 = vst [vmem:[%s364 + $0xc0] sm:$0xff] %v413
                  %v415 = vld [vmem:[%s363 + $0x190] sm:$0xff]
                  %416 = vst [vmem:[%s364 + $0xc8] sm:$0xff] %v415
                  %v417 = vld [vmem:[%s363 + $0x1a0] sm:$0xff]
                  %418 = vst [vmem:[%s364 + $0xd0] sm:$0xff] %v417
                  %v419 = vld [vmem:[%s363 + $0x1b0] sm:$0xff]
                  %420 = vst [vmem:[%s364 + $0xd8] sm:$0xff] %v419
                  %v421 = vld [vmem:[%s363 + $0x1c0] sm:$0xff]
                  %422 = vst [vmem:[%s364 + $0xe0] sm:$0xff] %v421
                  %v423 = vld [vmem:[%s363 + $0x1d0] sm:$0xff]
                  %424 = vst [vmem:[%s364 + $0xe8] sm:$0xff] %v423
                  %v425 = vld [vmem:[%s363 + $0x1e0] sm:$0xff]
                  %426 = vst [vmem:[%s364 + $0xf0] sm:$0xff] %v425
                  %v427 = vld [vmem:[%s363 + $0x1f0] sm:$0xff]
                  %428 = vst [vmem:[%s364 + $0xf8] sm:$0xff] %v427
                  %v429 = vld [vmem:[%s363 + $0x200] sm:$0xff]
                  %430 = vst [vmem:[%s364 + $0x100] sm:$0xff] %v429
                  %v431 = vld [vmem:[%s363 + $0x210] sm:$0xff]
                  %432 = vst [vmem:[%s364 + $0x108] sm:$0xff] %v431
                  %v433 = vld [vmem:[%s363 + $0x220] sm:$0xff]
                  %434 = vst [vmem:[%s364 + $0x110] sm:$0xff] %v433
                  %v435 = vld [vmem:[%s363 + $0x230] sm:$0xff]
                  %436 = vst [vmem:[%s364 + $0x118] sm:$0xff] %v435
                  %v437 = vld [vmem:[%s363 + $0x240] sm:$0xff]
                  %438 = vst [vmem:[%s364 + $0x120] sm:$0xff] %v437
                  %v439 = vld [vmem:[%s363 + $0x250] sm:$0xff]
                  %440 = vst [vmem:[%s364 + $0x128] sm:$0xff] %v439
                  %v441 = vld [vmem:[%s363 + $0x260] sm:$0xff]
                  %442 = vst [vmem:[%s364 + $0x130] sm:$0xff] %v441
                  %v443 = vld [vmem:[%s363 + $0x270] sm:$0xff]
                  %444 = vst [vmem:[%s364 + $0x138] sm:$0xff] %v443
                  %v445 = vld [vmem:[%s363 + $0x280] sm:$0xff]
                  %446 = vst [vmem:[%s364 + $0x140] sm:$0xff] %v445
                  %v447 = vld [vmem:[%s363 + $0x290] sm:$0xff]
                  %448 = vst [vmem:[%s364 + $0x148] sm:$0xff] %v447
                  %v449 = vld [vmem:[%s363 + $0x2a0] sm:$0xff]
                  %450 = vst [vmem:[%s364 + $0x150] sm:$0xff] %v449
                  %v451 = vld [vmem:[%s363 + $0x2b0] sm:$0xff]
                  %452 = vst [vmem:[%s364 + $0x158] sm:$0xff] %v451
                  %v453 = vld [vmem:[%s363 + $0x2c0] sm:$0xff]
                  %454 = vst [vmem:[%s364 + $0x160] sm:$0xff] %v453
                  %v455 = vld [vmem:[%s363 + $0x2d0] sm:$0xff]
                  %456 = vst [vmem:[%s364 + $0x168] sm:$0xff] %v455
                  %v457 = vld [vmem:[%s363 + $0x2e0] sm:$0xff]
                  %458 = vst [vmem:[%s364 + $0x170] sm:$0xff] %v457
                  %v459 = vld [vmem:[%s363 + $0x2f0] sm:$0xff]
                  %460 = vst [vmem:[%s364 + $0x178] sm:$0xff] %v459
                  %v461 = vld [vmem:[%s363 + $0x300] sm:$0xff]
                  %462 = vst [vmem:[%s364 + $0x180] sm:$0xff] %v461
                  %v463 = vld [vmem:[%s363 + $0x310] sm:$0xff]
                  %464 = vst [vmem:[%s364 + $0x188] sm:$0xff] %v463
                  %v465 = vld [vmem:[%s363 + $0x320] sm:$0xff]
                  %466 = vst [vmem:[%s364 + $0x190] sm:$0xff] %v465
                  %v467 = vld [vmem:[%s363 + $0x330] sm:$0xff]
                  %468 = vst [vmem:[%s364 + $0x198] sm:$0xff] %v467
                  %v469 = vld [vmem:[%s363 + $0x340] sm:$0xff]
                  %470 = vst [vmem:[%s364 + $0x1a0] sm:$0xff] %v469
                  %v471 = vld [vmem:[%s363 + $0x350] sm:$0xff]
                  %472 = vst [vmem:[%s364 + $0x1a8] sm:$0xff] %v471
                  %v473 = vld [vmem:[%s363 + $0x360] sm:$0xff]
                  %474 = vst [vmem:[%s364 + $0x1b0] sm:$0xff] %v473
                  %v475 = vld [vmem:[%s363 + $0x370] sm:$0xff]
                  %476 = vst [vmem:[%s364 + $0x1b8] sm:$0xff] %v475
                  %v477 = vld [vmem:[%s363 + $0x380] sm:$0xff]
                  %478 = vst [vmem:[%s364 + $0x1c0] sm:$0xff] %v477
                  %v479 = vld [vmem:[%s363 + $0x390] sm:$0xff]
                  %480 = vst [vmem:[%s364 + $0x1c8] sm:$0xff] %v479
                  %v481 = vld [vmem:[%s363 + $0x3a0] sm:$0xff]
                  %482 = vst [vmem:[%s364 + $0x1d0] sm:$0xff] %v481
                  %v483 = vld [vmem:[%s363 + $0x3b0] sm:$0xff]
                  %484 = vst [vmem:[%s364 + $0x1d8] sm:$0xff] %v483
                  %v485 = vld [vmem:[%s363 + $0x3c0] sm:$0xff]
                  %486 = vst [vmem:[%s364 + $0x1e0] sm:$0xff] %v485
                  %v487 = vld [vmem:[%s363 + $0x3d0] sm:$0xff]
                  %488 = vst [vmem:[%s364 + $0x1e8] sm:$0xff] %v487
                  %v489 = vld [vmem:[%s363 + $0x3e0] sm:$0xff]
                  %490 = vst [vmem:[%s364 + $0x1f0] sm:$0xff] %v489
                  %v491 = vld [vmem:[%s363 + $0x3f0] sm:$0xff]
                  %492 = vst [vmem:[%s364 + $0x1f8] sm:$0xff] %v491
                $region52: #{resnet_forward.25} parent=46 // loop_footer
                  %s362 = sadd.s32 1, %s358
                $region53: #{resnet_forward.25} parent=46 // loop_footer_branch
                  %357 = sbr.rel target = $region49
                $region54: #{resnet_forward.25} parent=46 // loop_exit
                  _
              $region47: #{resnet_forward.25} parent=31 // pred_fallthru
                _
              // Predicated region
              $region55: #{resnet_forward.25} parent=31 // pred_check
                _
              $region56: #{resnet_forward.25} parent=31 // pred_check_branch
                %494 = sbr.rel target = $region58
              $region57: #{resnet_forward.25} parent=31 // pred_region
                _
              $region58: #{resnet_forward.25} parent=31 // pred_fallthru
                _
            $region32: #{resnet_forward.25} parent=27 // pred_fallthru
              _
            // Predicated region
            $region33: #{resnet_forward.25} parent=27 // pred_check
              _
            $region34: #{resnet_forward.25} parent=27 // pred_check_branch
              %217 = sbr.rel target = $region36
            $region35: #{resnet_forward.25} parent=27 // pred_region
              loop: start=0, step=1, limit=1
              $region37: #{resnet_forward.25} parent=35 // loop_pre_header
                _
              $region38: #{resnet_forward.25} parent=35 // loop_header
                %s220 = sphi 0, %s224
                %p221 = scmp.ge.s32.totalorder %s220, 1
                %s225 = sphi %s211, %s211
                %s226 = sphi %s205, %s205
              $region39: #{resnet_forward.25} parent=35 // loop_header_branch
                %223 = sbr.rel (%p221) target = $region43
              $region40: #{resnet_forward.25} parent=35 // loop_body
                %v227 = vld [vmem:[%s225] sm:$0xff]
                %228 = vst [vmem:[%s226] sm:$0xff] %v227
                %v229 = vld [vmem:[%s225 + $0x10] sm:$0xff]
                %230 = vst [vmem:[%s226 + $0x8] sm:$0xff] %v229
                %v231 = vld [vmem:[%s225 + $0x20] sm:$0xff]
                %232 = vst [vmem:[%s226 + $0x10] sm:$0xff] %v231
                %v233 = vld [vmem:[%s225 + $0x30] sm:$0xff]
                %234 = vst [vmem:[%s226 + $0x18] sm:$0xff] %v233
                %v235 = vld [vmem:[%s225 + $0x40] sm:$0xff]
                %236 = vst [vmem:[%s226 + $0x20] sm:$0xff] %v235
                %v237 = vld [vmem:[%s225 + $0x50] sm:$0xff]
                %238 = vst [vmem:[%s226 + $0x28] sm:$0xff] %v237
                %v239 = vld [vmem:[%s225 + $0x60] sm:$0xff]
                %240 = vst [vmem:[%s226 + $0x30] sm:$0xff] %v239
                %v241 = vld [vmem:[%s225 + $0x70] sm:$0xff]
                %242 = vst [vmem:[%s226 + $0x38] sm:$0xff] %v241
                %v243 = vld [vmem:[%s225 + $0x80] sm:$0xff]
                %244 = vst [vmem:[%s226 + $0x40] sm:$0xff] %v243
                %v245 = vld [vmem:[%s225 + $0x90] sm:$0xff]
                %246 = vst [vmem:[%s226 + $0x48] sm:$0xff] %v245
                %v247 = vld [vmem:[%s225 + $0xa0] sm:$0xff]
                %248 = vst [vmem:[%s226 + $0x50] sm:$0xff] %v247
                %v249 = vld [vmem:[%s225 + $0xb0] sm:$0xff]
                %250 = vst [vmem:[%s226 + $0x58] sm:$0xff] %v249
                %v251 = vld [vmem:[%s225 + $0xc0] sm:$0xff]
                %252 = vst [vmem:[%s226 + $0x60] sm:$0xff] %v251
                %v253 = vld [vmem:[%s225 + $0xd0] sm:$0xff]
                %254 = vst [vmem:[%s226 + $0x68] sm:$0xff] %v253
                %v255 = vld [vmem:[%s225 + $0xe0] sm:$0xff]
                %256 = vst [vmem:[%s226 + $0x70] sm:$0xff] %v255
                %v257 = vld [vmem:[%s225 + $0xf0] sm:$0xff]
                %258 = vst [vmem:[%s226 + $0x78] sm:$0xff] %v257
                %v259 = vld [vmem:[%s225 + $0x100] sm:$0xff]
                %260 = vst [vmem:[%s226 + $0x80] sm:$0xff] %v259
                %v261 = vld [vmem:[%s225 + $0x110] sm:$0xff]
                %262 = vst [vmem:[%s226 + $0x88] sm:$0xff] %v261
                %v263 = vld [vmem:[%s225 + $0x120] sm:$0xff]
                %264 = vst [vmem:[%s226 + $0x90] sm:$0xff] %v263
                %v265 = vld [vmem:[%s225 + $0x130] sm:$0xff]
                %266 = vst [vmem:[%s226 + $0x98] sm:$0xff] %v265
                %v267 = vld [vmem:[%s225 + $0x140] sm:$0xff]
                %268 = vst [vmem:[%s226 + $0xa0] sm:$0xff] %v267
                %v269 = vld [vmem:[%s225 + $0x150] sm:$0xff]
                %270 = vst [vmem:[%s226 + $0xa8] sm:$0xff] %v269
                %v271 = vld [vmem:[%s225 + $0x160] sm:$0xff]
                %272 = vst [vmem:[%s226 + $0xb0] sm:$0xff] %v271
                %v273 = vld [vmem:[%s225 + $0x170] sm:$0xff]
                %274 = vst [vmem:[%s226 + $0xb8] sm:$0xff] %v273
                %v275 = vld [vmem:[%s225 + $0x180] sm:$0xff]
                %276 = vst [vmem:[%s226 + $0xc0] sm:$0xff] %v275
                %v277 = vld [vmem:[%s225 + $0x190] sm:$0xff]
                %278 = vst [vmem:[%s226 + $0xc8] sm:$0xff] %v277
                %v279 = vld [vmem:[%s225 + $0x1a0] sm:$0xff]
                %280 = vst [vmem:[%s226 + $0xd0] sm:$0xff] %v279
                %v281 = vld [vmem:[%s225 + $0x1b0] sm:$0xff]
                %282 = vst [vmem:[%s226 + $0xd8] sm:$0xff] %v281
                %v283 = vld [vmem:[%s225 + $0x1c0] sm:$0xff]
                %284 = vst [vmem:[%s226 + $0xe0] sm:$0xff] %v283
                %v285 = vld [vmem:[%s225 + $0x1d0] sm:$0xff]
                %286 = vst [vmem:[%s226 + $0xe8] sm:$0xff] %v285
                %v287 = vld [vmem:[%s225 + $0x1e0] sm:$0xff]
                %288 = vst [vmem:[%s226 + $0xf0] sm:$0xff] %v287
                %v289 = vld [vmem:[%s225 + $0x1f0] sm:$0xff]
                %290 = vst [vmem:[%s226 + $0xf8] sm:$0xff] %v289
                %v291 = vld [vmem:[%s225 + $0x200] sm:$0xff]
                %292 = vst [vmem:[%s226 + $0x100] sm:$0xff] %v291
                %v293 = vld [vmem:[%s225 + $0x210] sm:$0xff]
                %294 = vst [vmem:[%s226 + $0x108] sm:$0xff] %v293
                %v295 = vld [vmem:[%s225 + $0x220] sm:$0xff]
                %296 = vst [vmem:[%s226 + $0x110] sm:$0xff] %v295
                %v297 = vld [vmem:[%s225 + $0x230] sm:$0xff]
                %298 = vst [vmem:[%s226 + $0x118] sm:$0xff] %v297
                %v299 = vld [vmem:[%s225 + $0x240] sm:$0xff]
                %300 = vst [vmem:[%s226 + $0x120] sm:$0xff] %v299
                %v301 = vld [vmem:[%s225 + $0x250] sm:$0xff]
                %302 = vst [vmem:[%s226 + $0x128] sm:$0xff] %v301
                %v303 = vld [vmem:[%s225 + $0x260] sm:$0xff]
                %304 = vst [vmem:[%s226 + $0x130] sm:$0xff] %v303
                %v305 = vld [vmem:[%s225 + $0x270] sm:$0xff]
                %306 = vst [vmem:[%s226 + $0x138] sm:$0xff] %v305
                %v307 = vld [vmem:[%s225 + $0x280] sm:$0xff]
                %308 = vst [vmem:[%s226 + $0x140] sm:$0xff] %v307
                %v309 = vld [vmem:[%s225 + $0x290] sm:$0xff]
                %310 = vst [vmem:[%s226 + $0x148] sm:$0xff] %v309
                %v311 = vld [vmem:[%s225 + $0x2a0] sm:$0xff]
                %312 = vst [vmem:[%s226 + $0x150] sm:$0xff] %v311
                %v313 = vld [vmem:[%s225 + $0x2b0] sm:$0xff]
                %314 = vst [vmem:[%s226 + $0x158] sm:$0xff] %v313
                %v315 = vld [vmem:[%s225 + $0x2c0] sm:$0xff]
                %316 = vst [vmem:[%s226 + $0x160] sm:$0xff] %v315
                %v317 = vld [vmem:[%s225 + $0x2d0] sm:$0xff]
                %318 = vst [vmem:[%s226 + $0x168] sm:$0xff] %v317
                %v319 = vld [vmem:[%s225 + $0x2e0] sm:$0xff]
                %320 = vst [vmem:[%s226 + $0x170] sm:$0xff] %v319
                %v321 = vld [vmem:[%s225 + $0x2f0] sm:$0xff]
                %322 = vst [vmem:[%s226 + $0x178] sm:$0xff] %v321
                %v323 = vld [vmem:[%s225 + $0x300] sm:$0xff]
                %324 = vst [vmem:[%s226 + $0x180] sm:$0xff] %v323
                %v325 = vld [vmem:[%s225 + $0x310] sm:$0xff]
                %326 = vst [vmem:[%s226 + $0x188] sm:$0xff] %v325
                %v327 = vld [vmem:[%s225 + $0x320] sm:$0xff]
                %328 = vst [vmem:[%s226 + $0x190] sm:$0xff] %v327
                %v329 = vld [vmem:[%s225 + $0x330] sm:$0xff]
                %330 = vst [vmem:[%s226 + $0x198] sm:$0xff] %v329
                %v331 = vld [vmem:[%s225 + $0x340] sm:$0xff]
                %332 = vst [vmem:[%s226 + $0x1a0] sm:$0xff] %v331
                %v333 = vld [vmem:[%s225 + $0x350] sm:$0xff]
                %334 = vst [vmem:[%s226 + $0x1a8] sm:$0xff] %v333
                %v335 = vld [vmem:[%s225 + $0x360] sm:$0xff]
                %336 = vst [vmem:[%s226 + $0x1b0] sm:$0xff] %v335
                %v337 = vld [vmem:[%s225 + $0x370] sm:$0xff]
                %338 = vst [vmem:[%s226 + $0x1b8] sm:$0xff] %v337
                %v339 = vld [vmem:[%s225 + $0x380] sm:$0xff]
                %340 = vst [vmem:[%s226 + $0x1c0] sm:$0xff] %v339
                %v341 = vld [vmem:[%s225 + $0x390] sm:$0xff]
                %342 = vst [vmem:[%s226 + $0x1c8] sm:$0xff] %v341
                %v343 = vld [vmem:[%s225 + $0x3a0] sm:$0xff]
                %344 = vst [vmem:[%s226 + $0x1d0] sm:$0xff] %v343
                %v345 = vld [vmem:[%s225 + $0x3b0] sm:$0xff]
                %346 = vst [vmem:[%s226 + $0x1d8] sm:$0xff] %v345
                %v347 = vld [vmem:[%s225 + $0x3c0] sm:$0xff]
                %348 = vst [vmem:[%s226 + $0x1e0] sm:$0xff] %v347
                %v349 = vld [vmem:[%s225 + $0x3d0] sm:$0xff]
                %350 = vst [vmem:[%s226 + $0x1e8] sm:$0xff] %v349
                %v351 = vld [vmem:[%s225 + $0x3e0] sm:$0xff]
                %352 = vst [vmem:[%s226 + $0x1f0] sm:$0xff] %v351
                %v353 = vld [vmem:[%s225 + $0x3f0] sm:$0xff]
                %354 = vst [vmem:[%s226 + $0x1f8] sm:$0xff] %v353
              $region41: #{resnet_forward.25} parent=35 // loop_footer
                %s224 = sadd.s32 1, %s220
              $region42: #{resnet_forward.25} parent=35 // loop_footer_branch
                %219 = sbr.rel target = $region38
              $region43: #{resnet_forward.25} parent=35 // loop_exit
                _
            $region36: #{resnet_forward.25} parent=27 // pred_fallthru
              _
          $region28: #{resnet_forward.25} parent=23 // pred_fallthru
            _
          %495 = vnop
        $region24: #{resnet_forward.25} parent=15 // pred_fallthru
          _
        // Predicated region
        $region59: #{resnet_forward.25} parent=15 // pred_check
          %p496 = pneg %p105
        $region60: #{resnet_forward.25} parent=15 // pred_check_branch
          %498 = sbr.rel (%p496) target = $region62
        $region61: #{resnet_forward.25} parent=15 // pred_region
          %s499 = smul.u32 2, %s18
          %p500 = scmp.lt.s32.totalorder %s499, 3
          %s501 = scalar_select %p500, %s499, 3
          %s502 = scalar_lea.vmem %s2, %s501
          %s503 = smul.u32 2, %s18
        $region62: #{resnet_forward.25} parent=15 // pred_fallthru
          _
        // Predicated region
        $region63: #{resnet_forward.25} parent=15 // pred_check
          %p504 = pneg %p133
        $region64: #{resnet_forward.25} parent=15 // pred_check_branch
          %506 = sbr.rel (%p504) target = $region66
        $region65: #{resnet_forward.25} parent=15 // pred_region
          %s507 = smul.u32 2, %s18
          %p508 = scmp.lt.s32.totalorder %s17, 0
          %s509 = scalar_select %p508, %s17, 0
          %p510 = scmp.lt.s32.totalorder %s507, 3
          %s511 = scalar_select %p510, %s507, 3
          %s512 = smul.addr %s509, 4
          %s513 = sadd.s32 %s511, %s512
          %s514 = smul.addr %s513, 4
          %s515 = scalar_lea.vmem %s3, %s514
          %s516 = smul.u32 2, %s18
        $region66: #{resnet_forward.25} parent=15 // pred_fallthru
          _
      $region16: #{resnet_forward.25} parent=5 // pred_fallthru
        _
      %p517 = scmp.le.s32.totalorder 1, %s10
      %p518 = scmp.lt.s32.totalorder %s10, 19
      %p519 = pnand %p517, %p518
      %p520 = pneg %p519
      // Predicated region
      $region67: #{resnet_forward.25} parent=5 // pred_check
        _
      $region68: #{resnet_forward.25} parent=5 // pred_check_branch
        %522 = sbr.rel (%p519) target = $region70
      $region69: #{resnet_forward.25} parent=5 // pred_region
        %s523 = ssub.s32 %s10, 1
        %s524 = sand.u32 %s72, 1
        %s525 = sand.u32 %s72, 1
        %s526 = smul.addr %s525, 512
        %s527 = scalar_lea.vmem [#allocation3], %s526
        // Predicated region
        $region71: #{resnet_forward.25} parent=69 // pred_check
          %p528 = pneg %p85
        $region72: #{resnet_forward.25} parent=69 // pred_check_branch
          %530 = sbr.rel (%p528) target = $region74
        $region73: #{resnet_forward.25} parent=69 // pred_region
          _
        $region74: #{resnet_forward.25} parent=69 // pred_fallthru
          _
        %s531 = smul.u32 4, %s22
        %p532 = scmp.lt.s32.totalorder %s20, 0
        %s533 = scalar_select %p532, %s20, 0
        %p534 = scmp.lt.s32.totalorder %s531, 35
        %s535 = scalar_select %p534, %s531, 35
        %s536 = smul.addr %s533, 36
        %s537 = sadd.s32 %s535, %s536
        %s538 = smul.addr %s537, 4
        %s539 = scalar_lea.vmem %s0, %s538
        %p540 = pneg %p57
        %p541 = pneg %p54
        %s542 = sand.u32 %s72, 1
        %s543 = sand.u32 %s72, 1
        %s544 = smul.addr %s543, 512
        %s545 = scalar_lea.vmem [#allocation3], %s544
        %p546 = pneg %p85
        %p547 = pneg %p82
        %s548 = smul.u32 2, %s21
        %p549 = scmp.lt.s32.totalorder %s548, 3
        %s550 = scalar_select %p549, %s548, 3
        %s551 = scalar_lea.vmem %s2, %s550
        %p552 = pneg %p111
        %p553 = pneg %p108
        %s554 = smul.u32 2, %s21
        %p555 = scmp.lt.s32.totalorder %s20, 0
        %s556 = scalar_select %p555, %s20, 0
        %p557 = scmp.lt.s32.totalorder %s554, 3
        %s558 = scalar_select %p557, %s554, 3
        %s559 = smul.addr %s556, 4
        %s560 = sadd.s32 %s558, %s559
        %s561 = smul.addr %s560, 4
        %s562 = scalar_lea.vmem %s3, %s561
        %p563 = pneg %p139
        %p564 = pneg %p136
        %p565 = pneg %p167
        %p566 = pneg %p164
        %s567 = smul.u32 2, %s21
        %p568 = scmp.lt.s32.totalorder %s20, 0
        %s569 = scalar_select %p568, %s20, 0
        %p570 = scmp.lt.s32.totalorder %s567, 3
        %s571 = scalar_select %p570, %s567, 3
        %s572 = smul.addr %s569, 4
        %s573 = sadd.s32 %s571, %s572
        %s574 = smul.addr %s573, 4
        %s575 = scalar_lea.vmem %s4, %s574
        %s576 = smul.u32 4, %s22
        %p577 = scmp.lt.s32.totalorder %s20, 0
        %s578 = scalar_select %p577, %s20, 0
        %p579 = scmp.lt.s32.totalorder %s576, 35
        %s580 = scalar_select %p579, %s576, 35
        %s581 = smul.addr %s578, 36
        %s582 = sadd.s32 %s580, %s581
        %s583 = smul.addr %s582, 4
        %s584 = scalar_lea.vmem %s0, %s583
        %s585 = smul.u32 4, %s22
        %s586 = smul.u32 64, %s22
        %s587 = smul.u32 2, %s21
        %s588 = smul.u32 2, %s21
        %p589 = scmp.lt.s32.totalorder %s588, 3
        %s590 = scalar_select %p589, %s588, 3
        %s591 = scalar_lea.vmem %s2, %s590
        %s592 = smul.u32 2, %s21
        %s593 = smul.u32 2, %s21
        %p594 = scmp.lt.s32.totalorder %s20, 0
        %s595 = scalar_select %p594, %s20, 0
        %p596 = scmp.lt.s32.totalorder %s593, 3
        %s597 = scalar_select %p596, %s593, 3
        %s598 = smul.addr %s595, 4
        %s599 = sadd.s32 %s597, %s598
        %s600 = smul.addr %s599, 4
        %s601 = scalar_lea.vmem %s3, %s600
        %s602 = smul.u32 2, %s21
        %s603 = smul.u32 2, %s21
        %p604 = scmp.lt.s32.totalorder %s20, 0
        %s605 = scalar_select %p604, %s20, 0
        %p606 = scmp.lt.s32.totalorder %s603, 3
        %s607 = scalar_select %p606, %s603, 3
        %s608 = smul.addr %s605, 4
        %s609 = sadd.s32 %s607, %s608
        %s610 = smul.addr %s609, 4
        %s611 = scalar_lea.vmem %s4, %s610
        %s612 = smul.u32 2, %s21
        %p613 = scmp.eq.s32.totalorder %s22, 0
        // Predicated region
        $region75: #{resnet_forward.25} parent=69 // pred_check
          %p614 = pneg %p613
        $region76: #{resnet_forward.25} parent=69 // pred_check_branch
          %616 = sbr.rel (%p614) target = $region78
        $region77: #{resnet_forward.25} parent=69 // pred_region
          %617 = vst [vmem:[#allocation2] sm:$0xff] 0.0
          %618 = vst [vmem:[#allocation2 + $0x8] sm:$0xff] 0.0
        $region78: #{resnet_forward.25} parent=69 // pred_fallthru
          _
        %v619 = vld [vmem:[#allocation2] sm:$0xff]
        %v620 = vld [vmem:[#allocation2 + $0x8] sm:$0xff]
        %v621 = vld [vmem:[%s584] sm:$0xff]
        %v622 = vld [vmem:[%s584 + $0x8] sm:$0xff]
        %v623 = vld [vmem:[%s527] sm:$0xff]
        %v624 = vld [vmem:[%s527 + $0x8] sm:$0xff]
        %v625 = vld [vmem:[%s527 + $0x10] sm:$0xff]
        %v626 = vld [vmem:[%s527 + $0x18] sm:$0xff]
        %v627 = vld [vmem:[%s527 + $0x20] sm:$0xff]
        %v628 = vld [vmem:[%s527 + $0x28] sm:$0xff]
        %v629 = vld [vmem:[%s527 + $0x30] sm:$0xff]
        %v630 = vld [vmem:[%s527 + $0x38] sm:$0xff]
        %v631 = vld [vmem:[%s527 + $0x40] sm:$0xff]
        %v632 = vld [vmem:[%s527 + $0x48] sm:$0xff]
        %v633 = vld [vmem:[%s527 + $0x50] sm:$0xff]
        %v634 = vld [vmem:[%s527 + $0x58] sm:$0xff]
        %v635 = vld [vmem:[%s527 + $0x60] sm:$0xff]
        %v636 = vld [vmem:[%s527 + $0x68] sm:$0xff]
        %v637 = vld [vmem:[%s527 + $0x70] sm:$0xff]
        %v638 = vld [vmem:[%s527 + $0x78] sm:$0xff]
        %v639 = vld [vmem:[%s527 + $0x80] sm:$0xff]
        %v640 = vld [vmem:[%s527 + $0x88] sm:$0xff]
        %v641 = vld [vmem:[%s527 + $0x90] sm:$0xff]
        %v642 = vld [vmem:[%s527 + $0x98] sm:$0xff]
        %v643 = vld [vmem:[%s527 + $0xa0] sm:$0xff]
        %v644 = vld [vmem:[%s527 + $0xa8] sm:$0xff]
        %v645 = vld [vmem:[%s527 + $0xb0] sm:$0xff]
        %v646 = vld [vmem:[%s527 + $0xb8] sm:$0xff]
        %v647 = vld [vmem:[%s527 + $0xc0] sm:$0xff]
        %v648 = vld [vmem:[%s527 + $0xc8] sm:$0xff]
        %v649 = vld [vmem:[%s527 + $0xd0] sm:$0xff]
        %v650 = vld [vmem:[%s527 + $0xd8] sm:$0xff]
        %v651 = vld [vmem:[%s527 + $0xe0] sm:$0xff]
        %v652 = vld [vmem:[%s527 + $0xe8] sm:$0xff]
        %v653 = vld [vmem:[%s527 + $0xf0] sm:$0xff]
        %v654 = vld [vmem:[%s527 + $0xf8] sm:$0xff]
        %v655 = vld [vmem:[%s527 + $0x100] sm:$0xff]
        %v656 = vld [vmem:[%s527 + $0x108] sm:$0xff]
        %v657 = vld [vmem:[%s527 + $0x110] sm:$0xff]
        %v658 = vld [vmem:[%s527 + $0x118] sm:$0xff]
        %v659 = vld [vmem:[%s527 + $0x120] sm:$0xff]
        %v660 = vld [vmem:[%s527 + $0x128] sm:$0xff]
        %v661 = vld [vmem:[%s527 + $0x130] sm:$0xff]
        %v662 = vld [vmem:[%s527 + $0x138] sm:$0xff]
        %v663 = vld [vmem:[%s527 + $0x140] sm:$0xff]
        %v664 = vld [vmem:[%s527 + $0x148] sm:$0xff]
        %v665 = vld [vmem:[%s527 + $0x150] sm:$0xff]
        %v666 = vld [vmem:[%s527 + $0x158] sm:$0xff]
        %v667 = vld [vmem:[%s527 + $0x160] sm:$0xff]
        %v668 = vld [vmem:[%s527 + $0x168] sm:$0xff]
        %v669 = vld [vmem:[%s527 + $0x170] sm:$0xff]
        %v670 = vld [vmem:[%s527 + $0x178] sm:$0xff]
        %v671 = vld [vmem:[%s527 + $0x180] sm:$0xff]
        %v672 = vld [vmem:[%s527 + $0x188] sm:$0xff]
        %v673 = vld [vmem:[%s527 + $0x190] sm:$0xff]
        %v674 = vld [vmem:[%s527 + $0x198] sm:$0xff]
        %v675 = vld [vmem:[%s527 + $0x1a0] sm:$0xff]
        %v676 = vld [vmem:[%s527 + $0x1a8] sm:$0xff]
        %v677 = vld [vmem:[%s527 + $0x1b0] sm:$0xff]
        %v678 = vld [vmem:[%s527 + $0x1b8] sm:$0xff]
        %v679 = vld [vmem:[%s527 + $0x1c0] sm:$0xff]
        %v680 = vld [vmem:[%s527 + $0x1c8] sm:$0xff]
        %v681 = vld [vmem:[%s527 + $0x1d0] sm:$0xff]
        %v682 = vld [vmem:[%s527 + $0x1d8] sm:$0xff]
        %v683 = vld [vmem:[%s527 + $0x1e0] sm:$0xff]
        %v684 = vld [vmem:[%s527 + $0x1e8] sm:$0xff]
        %v685 = vld [vmem:[%s527 + $0x1f0] sm:$0xff]
        %v686 = vld [vmem:[%s527 + $0x1f8] sm:$0xff]
        %v689 = vunpack.c.l.b16 %v621
        %v690 = vunpack.c.h.b16 %v621
        %v691 = vunpack.c.l.b16 %v622
        %v692 = vunpack.c.h.b16 %v622
        %v693 = vpack.c.b16 %v689, %v689
        %v694 = vpack.c.b16 %v690, %v690
        %v695 = vpack.c.b16 %v691, %v691
        %v696 = vpack.c.b16 %v692, %v692
        %v765 = vunpack.c.l.b16 %v623
        %v766 = vunpack.c.h.b16 %v623
        %v767 = vunpack.c.l.b16 %v624
        %v768 = vunpack.c.h.b16 %v624
        %v769 = vunpack.c.l.b16 %v625
        %v770 = vunpack.c.h.b16 %v625
        %v771 = vunpack.c.l.b16 %v626
        %v772 = vunpack.c.h.b16 %v626
        %v773 = vunpack.c.l.b16 %v627
        %v774 = vunpack.c.h.b16 %v627
        %v775 = vunpack.c.l.b16 %v628
        %v776 = vunpack.c.h.b16 %v628
        %v777 = vunpack.c.l.b16 %v629
        %v778 = vunpack.c.h.b16 %v629
        %v779 = vunpack.c.l.b16 %v630
        %v780 = vunpack.c.h.b16 %v630
        %v781 = vunpack.c.l.b16 %v631
        %v782 = vunpack.c.h.b16 %v631
        %v783 = vunpack.c.l.b16 %v632
        %v784 = vunpack.c.h.b16 %v632
        %v785 = vunpack.c.l.b16 %v633
        %v786 = vunpack.c.h.b16 %v633
        %v787 = vunpack.c.l.b16 %v634
        %v788 = vunpack.c.h.b16 %v634
        %v789 = vunpack.c.l.b16 %v635
        %v790 = vunpack.c.h.b16 %v635
        %v791 = vunpack.c.l.b16 %v636
        %v792 = vunpack.c.h.b16 %v636
        %v793 = vunpack.c.l.b16 %v637
        %v794 = vunpack.c.h.b16 %v637
        %v795 = vunpack.c.l.b16 %v638
        %v796 = vunpack.c.h.b16 %v638
        %v797 = vunpack.c.l.b16 %v639
        %v798 = vunpack.c.h.b16 %v639
        %v799 = vunpack.c.l.b16 %v640
        %v800 = vunpack.c.h.b16 %v640
        %v801 = vunpack.c.l.b16 %v641
        %v802 = vunpack.c.h.b16 %v641
        %v803 = vunpack.c.l.b16 %v642
        %v804 = vunpack.c.h.b16 %v642
        %v805 = vunpack.c.l.b16 %v643
        %v806 = vunpack.c.h.b16 %v643
        %v807 = vunpack.c.l.b16 %v644
        %v808 = vunpack.c.h.b16 %v644
        %v809 = vunpack.c.l.b16 %v645
        %v810 = vunpack.c.h.b16 %v645
        %v811 = vunpack.c.l.b16 %v646
        %v812 = vunpack.c.h.b16 %v646
        %v813 = vunpack.c.l.b16 %v647
        %v814 = vunpack.c.h.b16 %v647
        %v815 = vunpack.c.l.b16 %v648
        %v816 = vunpack.c.h.b16 %v648
        %v817 = vunpack.c.l.b16 %v649
        %v818 = vunpack.c.h.b16 %v649
        %v819 = vunpack.c.l.b16 %v650
        %v820 = vunpack.c.h.b16 %v650
        %v821 = vunpack.c.l.b16 %v651
        %v822 = vunpack.c.h.b16 %v651
        %v823 = vunpack.c.l.b16 %v652
        %v824 = vunpack.c.h.b16 %v652
        %v825 = vunpack.c.l.b16 %v653
        %v826 = vunpack.c.h.b16 %v653
        %v827 = vunpack.c.l.b16 %v654
        %v828 = vunpack.c.h.b16 %v654
        %v829 = vunpack.c.l.b16 %v655
        %v830 = vunpack.c.h.b16 %v655
        %v831 = vunpack.c.l.b16 %v656
        %v832 = vunpack.c.h.b16 %v656
        %v833 = vunpack.c.l.b16 %v657
        %v834 = vunpack.c.h.b16 %v657
        %v835 = vunpack.c.l.b16 %v658
        %v836 = vunpack.c.h.b16 %v658
        %v837 = vunpack.c.l.b16 %v659
        %v838 = vunpack.c.h.b16 %v659
        %v839 = vunpack.c.l.b16 %v660
        %v840 = vunpack.c.h.b16 %v660
        %v841 = vunpack.c.l.b16 %v661
        %v842 = vunpack.c.h.b16 %v661
        %v843 = vunpack.c.l.b16 %v662
        %v844 = vunpack.c.h.b16 %v662
        %v845 = vunpack.c.l.b16 %v663
        %v846 = vunpack.c.h.b16 %v663
        %v847 = vunpack.c.l.b16 %v664
        %v848 = vunpack.c.h.b16 %v664
        %v849 = vunpack.c.l.b16 %v665
        %v850 = vunpack.c.h.b16 %v665
        %v851 = vunpack.c.l.b16 %v666
        %v852 = vunpack.c.h.b16 %v666
        %v853 = vunpack.c.l.b16 %v667
        %v854 = vunpack.c.h.b16 %v667
        %v855 = vunpack.c.l.b16 %v668
        %v856 = vunpack.c.h.b16 %v668
        %v857 = vunpack.c.l.b16 %v669
        %v858 = vunpack.c.h.b16 %v669
        %v859 = vunpack.c.l.b16 %v670
        %v860 = vunpack.c.h.b16 %v670
        %v861 = vunpack.c.l.b16 %v671
        %v862 = vunpack.c.h.b16 %v671
        %v863 = vunpack.c.l.b16 %v672
        %v864 = vunpack.c.h.b16 %v672
        %v865 = vunpack.c.l.b16 %v673
        %v866 = vunpack.c.h.b16 %v673
        %v867 = vunpack.c.l.b16 %v674
        %v868 = vunpack.c.h.b16 %v674
        %v869 = vunpack.c.l.b16 %v675
        %v870 = vunpack.c.h.b16 %v675
        %v871 = vunpack.c.l.b16 %v676
        %v872 = vunpack.c.h.b16 %v676
        %v873 = vunpack.c.l.b16 %v677
        %v874 = vunpack.c.h.b16 %v677
        %v875 = vunpack.c.l.b16 %v678
        %v876 = vunpack.c.h.b16 %v678
        %v877 = vunpack.c.l.b16 %v679
        %v878 = vunpack.c.h.b16 %v679
        %v879 = vunpack.c.l.b16 %v680
        %v880 = vunpack.c.h.b16 %v680
        %v881 = vunpack.c.l.b16 %v681
        %v882 = vunpack.c.h.b16 %v681
        %v883 = vunpack.c.l.b16 %v682
        %v884 = vunpack.c.h.b16 %v682
        %v885 = vunpack.c.l.b16 %v683
        %v886 = vunpack.c.h.b16 %v683
        %v887 = vunpack.c.l.b16 %v684
        %v888 = vunpack.c.h.b16 %v684
        %v889 = vunpack.c.l.b16 %v685
        %v890 = vunpack.c.h.b16 %v685
        %v891 = vunpack.c.l.b16 %v686
        %v892 = vunpack.c.h.b16 %v686
        %v893 = vpack.c.b16 %v767, %v765
        %v894 = vpack.c.b16 %v768, %v766
        %v895 = vpack.c.b16 %v771, %v769
        %v896 = vpack.c.b16 %v772, %v770
        %v897 = vpack.c.b16 %v775, %v773
        %v898 = vpack.c.b16 %v776, %v774
        %v899 = vpack.c.b16 %v779, %v777
        %v900 = vpack.c.b16 %v780, %v778
        %v901 = vpack.c.b16 %v783, %v781
        %v902 = vpack.c.b16 %v784, %v782
        %v903 = vpack.c.b16 %v787, %v785
        %v904 = vpack.c.b16 %v788, %v786
        %v905 = vpack.c.b16 %v791, %v789
        %v906 = vpack.c.b16 %v792, %v790
        %v907 = vpack.c.b16 %v795, %v793
        %v908 = vpack.c.b16 %v796, %v794
        %v909 = vpack.c.b16 %v799, %v797
        %v910 = vpack.c.b16 %v800, %v798
        %v911 = vpack.c.b16 %v803, %v801
        %v912 = vpack.c.b16 %v804, %v802
        %v913 = vpack.c.b16 %v807, %v805
        %v914 = vpack.c.b16 %v808, %v806
        %v915 = vpack.c.b16 %v811, %v809
        %v916 = vpack.c.b16 %v812, %v810
        %v917 = vpack.c.b16 %v815, %v813
        %v918 = vpack.c.b16 %v816, %v814
        %v919 = vpack.c.b16 %v819, %v817
        %v920 = vpack.c.b16 %v820, %v818
        %v921 = vpack.c.b16 %v823, %v821
        %v922 = vpack.c.b16 %v824, %v822
        %v923 = vpack.c.b16 %v827, %v825
        %v924 = vpack.c.b16 %v828, %v826
        %v925 = vpack.c.b16 %v831, %v829
        %v926 = vpack.c.b16 %v832, %v830
        %v927 = vpack.c.b16 %v835, %v833
        %v928 = vpack.c.b16 %v836, %v834
        %v929 = vpack.c.b16 %v839, %v837
        %v930 = vpack.c.b16 %v840, %v838
        %v931 = vpack.c.b16 %v843, %v841
        %v932 = vpack.c.b16 %v844, %v842
        %v933 = vpack.c.b16 %v847, %v845
        %v934 = vpack.c.b16 %v848, %v846
        %v935 = vpack.c.b16 %v851, %v849
        %v936 = vpack.c.b16 %v852, %v850
        %v937 = vpack.c.b16 %v855, %v853
        %v938 = vpack.c.b16 %v856, %v854
        %v939 = vpack.c.b16 %v859, %v857
        %v940 = vpack.c.b16 %v860, %v858
        %v941 = vpack.c.b16 %v863, %v861
        %v942 = vpack.c.b16 %v864, %v862
        %v943 = vpack.c.b16 %v867, %v865
        %v944 = vpack.c.b16 %v868, %v866
        %v945 = vpack.c.b16 %v871, %v869
        %v946 = vpack.c.b16 %v872, %v870
        %v947 = vpack.c.b16 %v875, %v873
        %v948 = vpack.c.b16 %v876, %v874
        %v949 = vpack.c.b16 %v879, %v877
        %v950 = vpack.c.b16 %v880, %v878
        %v951 = vpack.c.b16 %v883, %v881
        %v952 = vpack.c.b16 %v884, %v882
        %v953 = vpack.c.b16 %v887, %v885
        %v954 = vpack.c.b16 %v888, %v886
        %v955 = vpack.c.b16 %v891, %v889
        %v956 = vpack.c.b16 %v892, %v890
        %1021 = vmatprep.subr.bf16.mxu0 %v894
        %1022 = vmatpush1.bf16.msra.mxu0 %v893
        %1023 = vmatprep.subr.bf16.mxu0 %v896
        %1024 = vmatpush1.bf16.msra.mxu0 %v895
        %1025 = vmatprep.subr.bf16.mxu0 %v898
        %1026 = vmatpush1.bf16.msra.mxu0 %v897
        %1027 = vmatprep.subr.bf16.mxu0 %v900
        %1028 = vmatpush1.bf16.msra.mxu0 %v899
        %1029 = vmatprep.subr.bf16.mxu0 %v902
        %1030 = vmatpush1.bf16.msra.mxu0 %v901
        %1031 = vmatprep.subr.bf16.mxu0 %v904
        %1032 = vmatpush1.bf16.msra.mxu0 %v903
        %1033 = vmatprep.subr.bf16.mxu0 %v906
        %1034 = vmatpush1.bf16.msra.mxu0 %v905
        %1035 = vmatprep.subr.bf16.mxu0 %v908
        %1036 = vmatpush1.bf16.msra.mxu0 %v907
        %1037 = vmatprep.subr.bf16.mxu0 %v910
        %1038 = vmatpush1.bf16.msra.mxu0 %v909
        %1039 = vmatprep.subr.bf16.mxu0 %v912
        %1040 = vmatpush1.bf16.msra.mxu0 %v911
        %1041 = vmatprep.subr.bf16.mxu0 %v914
        %1042 = vmatpush1.bf16.msra.mxu0 %v913
        %1043 = vmatprep.subr.bf16.mxu0 %v916
        %1044 = vmatpush1.bf16.msra.mxu0 %v915
        %1045 = vmatprep.subr.bf16.mxu0 %v918
        %1046 = vmatpush1.bf16.msra.mxu0 %v917
        %1047 = vmatprep.subr.bf16.mxu0 %v920
        %1048 = vmatpush1.bf16.msra.mxu0 %v919
        %1049 = vmatprep.subr.bf16.mxu0 %v922
        %1050 = vmatpush1.bf16.msra.mxu0 %v921
        %1051 = vmatprep.subr.bf16.mxu0 %v924
        %1052 = vmatpush1.bf16.msra.mxu0 %v923
        %1053 = vmatprep.mubr.bf16.mxu0 %v694
        %1054 = vmatmul.mubr.bf16.gmra.mrb[0].mxu0 %v693
        %v1055 = vpop.f32.mrb[0].mxu0
        %v1056 = vadd.f32 0.0, %v1055
        %v1057 = vpop.f32.mrb[0].mxu0
        %v1058 = vadd.f32 0.0, %v1057
        %v1059 = vpop.f32.mrb[0].mxu0
        %v1060 = vpop.f32.mrb[0].mxu0
        %1061 = vdwg.mxu0
        %1062 = vmatprep.subr.bf16.mxu0 %v926
        %1063 = vmatpush1.bf16.msra.mxu0 %v925
        %1064 = vmatprep.subr.bf16.mxu0 %v928
        %1065 = vmatpush1.bf16.msra.mxu0 %v927
        %1066 = vmatprep.subr.bf16.mxu0 %v930
        %1067 = vmatpush1.bf16.msra.mxu0 %v929
        %1068 = vmatprep.subr.bf16.mxu0 %v932
        %1069 = vmatpush1.bf16.msra.mxu0 %v931
        %1070 = vmatprep.subr.bf16.mxu0 %v934
        %1071 = vmatpush1.bf16.msra.mxu0 %v933
        %1072 = vmatprep.subr.bf16.mxu0 %v936
        %1073 = vmatpush1.bf16.msra.mxu0 %v935
        %1074 = vmatprep.subr.bf16.mxu0 %v938
        %1075 = vmatpush1.bf16.msra.mxu0 %v937
        %1076 = vmatprep.subr.bf16.mxu0 %v940
        %1077 = vmatpush1.bf16.msra.mxu0 %v939
        %1078 = vmatprep.subr.bf16.mxu0 %v942
        %1079 = vmatpush1.bf16.msra.mxu0 %v941
        %1080 = vmatprep.subr.bf16.mxu0 %v944
        %1081 = vmatpush1.bf16.msra.mxu0 %v943
        %1082 = vmatprep.subr.bf16.mxu0 %v946
        %1083 = vmatpush1.bf16.msra.mxu0 %v945
        %1084 = vmatprep.subr.bf16.mxu0 %v948
        %1085 = vmatpush1.bf16.msra.mxu0 %v947
        %1086 = vmatprep.subr.bf16.mxu0 %v950
        %1087 = vmatpush1.bf16.msra.mxu0 %v949
        %1088 = vmatprep.subr.bf16.mxu0 %v952
        %1089 = vmatpush1.bf16.msra.mxu0 %v951
        %1090 = vmatprep.subr.bf16.mxu0 %v954
        %1091 = vmatpush1.bf16.msra.mxu0 %v953
        %1092 = vmatprep.subr.bf16.mxu0 %v956
        %1093 = vmatpush1.bf16.msra.mxu0 %v955
        %1094 = vmatprep.mubr.bf16.mxu0 %v696
        %1095 = vmatmul.mubr.bf16.gmra.mrb[0].mxu0 %v695
        %v1096 = vpop.f32.mrb[0].mxu0
        %v1097 = vadd.f32 %v1056, %v1096
        %v1098 = vpop.f32.mrb[0].mxu0
        %v1099 = vadd.f32 %v1058, %v1098
        %v1100 = vpop.f32.mrb[0].mxu0
        %v1101 = vpop.f32.mrb[0].mxu0
        %1102 = vdwg.mxu0
        %v1103 = vadd.f32 %v619, %v1097
        %v1104 = vadd.f32 %v620, %v1099
        %1105 = vst [vmem:[#allocation2] sm:$0xff] %v1103
        %1106 = vst [vmem:[#allocation2 + $0x8] sm:$0xff] %v1104
        %p1107 = scmp.eq.s32.totalorder %s22, 8
        // Predicated region
        $region79: #{resnet_forward.25} parent=69 // pred_check
          %p1108 = pneg %p1107
        $region80: #{resnet_forward.25} parent=69 // pred_check_branch
          %1110 = sbr.rel (%p1108) target = $region82
        $region81: #{resnet_forward.25} parent=69 // pred_region
          %v1111 = vld [vmem:[#allocation2] sm:$0xff]
          %v1112 = vld [vmem:[#allocation2 + $0x8] sm:$0xff]
          %v1113 = vld [vmem:[%s591] sm:$0x3]
          %v1115 = vlaneseq
          %v1116 = vshrl.u32 %v1115, 7
          %v1117 = vsub.s32 0, %v1116
          %v1118 = vrot.slane %v1113, %v1117
          %v1119 = vlaneseq
          %v1120 = vshrl.u32 %v1119, 7
          %v1121 = vsub.s32 1, %v1120
          %v1122 = vrot.slane %v1113, %v1121
          %v1125 = vadd.f32 %v1111, %v1118
          %v1126 = vadd.f32 %v1112, %v1122
          %v1127 = vld [vmem:[%s601] sm:$0xff]
          %v1128 = vunpack.c.l.bf16 %v1127
          %v1129 = vunpack.c.h.bf16 %v1127
          %v1130 = vadd.f32 %v1125, %v1128
          %v1131 = vadd.f32 %v1126, %v1129
          %v1132 = vmax.f32 %v1130, 0.0
          %v1133 = vmax.f32 %v1131, 0.0
          %v1134 = vpack.c.bf16 %v1132, %v1132
          %v1135 = vpack.c.bf16 %v1133, %v1133
          %v1138 = vunpack.c.l.b16 %v1134
          %v1139 = vunpack.c.l.b16 %v1135
          %v1140 = vpack.c.b16 %v1139, %v1138
          %1142 = vst [vmem:[%s611] sm:$0xff] %v1140
        $region82: #{resnet_forward.25} parent=69 // pred_fallthru
          _
        %s1143 = smul.u32 2, %s21
        %p1144 = scmp.lt.s32.totalorder %s20, 0
        %s1145 = scalar_select %p1144, %s20, 0
        %p1146 = scmp.lt.s32.totalorder %s1143, 3
        %s1147 = scalar_select %p1146, %s1143, 3
        %s1148 = smul.addr %s1145, 4
        %s1149 = sadd.s32 %s1147, %s1148
        %s1150 = smul.addr %s1149, 4
        %s1151 = scalar_lea.vmem %s4, %s1150
        // Predicated region
        $region83: #{resnet_forward.25} parent=69 // pred_check
          %p1152 = pneg %p164
        $region84: #{resnet_forward.25} parent=69 // pred_check_branch
          %1154 = sbr.rel (%p1152) target = $region86
        $region85: #{resnet_forward.25} parent=69 // pred_region
          %s1155 = smul.u32 2, %s21
        $region86: #{resnet_forward.25} parent=69 // pred_fallthru
          _
      $region70: #{resnet_forward.25} parent=5 // pred_fallthru
        _
      %p1156 = scmp.le.s32.totalorder 2, %s10
      // Predicated region
      $region87: #{resnet_forward.25} parent=5 // pred_check
        %p1157 = pneg %p1156
      $region88: #{resnet_forward.25} parent=5 // pred_check_branch
        %1159 = sbr.rel (%p1157) target = $region90
      $region89: #{resnet_forward.25} parent=5 // pred_region
        %s1160 = ssub.s32 %s10, 2
        // Predicated region
        $region91: #{resnet_forward.25} parent=89 // pred_check
          %p1161 = pneg %p170
        $region92: #{resnet_forward.25} parent=89 // pred_check_branch
          %1163 = sbr.rel (%p1161) target = $region94
        $region93: #{resnet_forward.25} parent=89 // pred_region
          %s1164 = smul.u32 2, %s24
          %p1165 = scmp.lt.s32.totalorder %s23, 0
          %s1166 = scalar_select %p1165, %s23, 0
          %p1167 = scmp.lt.s32.totalorder %s1164, 3
          %s1168 = scalar_select %p1167, %s1164, 3
          %s1169 = smul.addr %s1166, 4
          %s1170 = sadd.s32 %s1168, %s1169
          %s1171 = smul.addr %s1170, 4
          %s1172 = scalar_lea.vmem %s4, %s1171
        $region94: #{resnet_forward.25} parent=89 // pred_fallthru
          _
      $region90: #{resnet_forward.25} parent=5 // pred_fallthru
        _
    $region6: #{resnet_forward.25} parent=1 // loop_footer
      %s14 = sadd.s32 1, %s10
    $region7: #{resnet_forward.25} parent=1 // loop_footer_branch
      %9 = sbr.rel target = $region3
    $region8: #{resnet_forward.25} parent=1 // loop_exit
      _

// kernel: resnet_forward.26
$region0: #{resnet_forward.26}
  #allocation0 [shape = 'u32[]', space=smem, size = 0x4, offset = 0x4, fixed_abs, tag = 'smem constant byte address 0x4 - core index']
  #allocation1 [shape = 'u32[144,128]{1,0:T(1,128)}', space=vmem, size = 0x12000, scoped, tag = 'internal scratch']
  %s0 = inlined_call_operand.vmem [shape: bf16[2,1,512], index: 0, kind: input, shape index: {}]
  %s1 = inlined_call_operand.vmem [shape: f32[2,512], index: 1, kind: output, shape index: {}]
  %s2 = sld [smem:[#allocation0]]
  $region71: #{resnet_forward.26} parent=0
    _
  %s4 = ssub.s32 1, %s2
  %s5 = scalar_select 0, %s4, %s2
  $region1: #{resnet_forward.26} parent=0
    #allocation2 [shape = 'u8[2048]{0}', space=vmem, size = 0x800, scoped, tag = 'input window, operand 0']
    loop: start=0, step=1, limit=6
    $region2: #{resnet_forward.26} parent=1 // loop_pre_header
      _
    $region3: #{resnet_forward.26} parent=1 // loop_header
      %s7 = sphi 0, %s11
      %p8 = scmp.ge.s32.totalorder %s7, 6
      %s17 = sphi 0, %s19
      %s20 = sphi 0, %s17
      %s21 = sphi 0, %s20
      %s37 = sphi 0, %s21
      %s43 = sphi 0, %s45
      %s46 = sphi 0, %s43
      %s47 = sphi 0, %s46
      %s63 = sphi 0, %s47
    $region4: #{resnet_forward.26} parent=1 // loop_header_branch
      %10 = sbr.rel (%p8) target = $region8
    $region5: #{resnet_forward.26} parent=1 // loop_body
      %s12 = ssub.s32 %s7, 1
      %s13 = ssub.s32 %s7, 2
      %s14 = sadd.s32 %s7, 1
      %s15 = ssub.s32 %s7, %s14
      %p16 = scmp.eq.s32.totalorder %s15, 0
      %s18 = sadd.s32 %s17, 1
      %s19 = scalar_select %p16, %s17, %s18
      %p22 = pneg %p16
      %p23 = scmp.eq.s32.totalorder %s7, 3
      %p24 = por %p22, %p23
      %p25 = scmp.ne.s32.totalorder %s17, %s20
      %p26 = scmp.eq.s32.totalorder %s7, 0
      %p27 = por %p25, %p26
      %p28 = scmp.ne.s32.totalorder %s17, %s20
      %p29 = scmp.eq.s32.totalorder %s12, 3
      %p30 = por %p28, %p29
      %p31 = scmp.ne.s32.totalorder %s20, %s21
      %p32 = scmp.eq.s32.totalorder %s12, 0
      %p33 = por %p31, %p32
      %p34 = scmp.ne.s32.totalorder %s20, %s21
      %p35 = scmp.eq.s32.totalorder %s13, 3
      %p36 = por %p34, %p35
      %p38 = scmp.ne.s32.totalorder %s21, %s37
      %p39 = scmp.eq.s32.totalorder %s13, 0
      %p40 = por %p38, %p39
      %s41 = ssub.s32 %s7, %s14
      %p42 = scmp.eq.s32.totalorder %s41, 0
      %s44 = sadd.s32 %s43, 1
      %s45 = scalar_select %p42, %s43, %s44
      %p48 = pneg %p42
      %p49 = scmp.eq.s32.totalorder %s7, 3
      %p50 = por %p48, %p49
      %p51 = scmp.ne.s32.totalorder %s43, %s46
      %p52 = scmp.eq.s32.totalorder %s7, 0
      %p53 = por %p51, %p52
      %p54 = scmp.ne.s32.totalorder %s43, %s46
      %p55 = scmp.eq.s32.totalorder %s12, 3
      %p56 = por %p54, %p55
      %p57 = scmp.ne.s32.totalorder %s46, %s47
      %p58 = scmp.eq.s32.totalorder %s12, 0
      %p59 = por %p57, %p58
      %p60 = scmp.ne.s32.totalorder %s46, %s47
      %p61 = scmp.eq.s32.totalorder %s13, 3
      %p62 = por %p60, %p61
      %p64 = scmp.ne.s32.totalorder %s47, %s63
      %p65 = scmp.eq.s32.totalorder %s13, 0
      %p66 = por %p64, %p65
      %p67 = scmp.le.s32.totalorder 1, %s7
      %p68 = scmp.lt.s32.totalorder %s7, 5
      %p69 = pnand %p67, %p68
      %p70 = pneg %p69
      // Predicated region
      $region9: #{resnet_forward.26} parent=5 // pred_check
        _
      $region10: #{resnet_forward.26} parent=5 // pred_check_branch
        %72 = sbr.rel (%p69) target = $region12
      $region11: #{resnet_forward.26} parent=5 // pred_region
        %s73 = ssub.s32 %s7, 1
      $region12: #{resnet_forward.26} parent=5 // pred_fallthru
        _
      %p74 = scmp.lt.s32.totalorder %s7, 4
      // Predicated region
      $region13: #{resnet_forward.26} parent=5 // pred_check
        %p75 = pneg %p74
      $region14: #{resnet_forward.26} parent=5 // pred_check_branch
        %77 = sbr.rel (%p75) target = $region16
      $region15: #{resnet_forward.26} parent=5 // pred_region
        // Predicated region
        $region17: #{resnet_forward.26} parent=15 // pred_check
          %p78 = pneg %p27
        $region18: #{resnet_forward.26} parent=15 // pred_check_branch
          %80 = sbr.rel (%p78) target = $region20
        $region19: #{resnet_forward.26} parent=15 // pred_region
          %s81 = sand.u32 %s17, 1
          %s82 = sand.u32 %s17, 1
          %s83 = smul.addr %s82, 2
          %s84 = scalar_lea.vmem [#allocation2], %s83
          %s85 = scalar_lea.vmem %s0, %s7
          // Predicated region
          $region21: #{resnet_forward.26} parent=19 // pred_check
            _
          $region22: #{resnet_forward.26} parent=19 // pred_check_branch
            %87 = sbr.rel (0) target = $region24
          $region23: #{resnet_forward.26} parent=19 // pred_region
            // Predicated region
            $region25: #{resnet_forward.26} parent=23 // pred_check
              _
            $region26: #{resnet_forward.26} parent=23 // pred_check_branch
              %89 = sbr.rel target = $region28
            $region27: #{resnet_forward.26} parent=23 // pred_region
              // Predicated region
              $region40: #{resnet_forward.26} parent=27 // pred_check
                _
              $region41: #{resnet_forward.26} parent=27 // pred_check_branch
                %106 = sbr.rel (0) target = $region43
              $region42: #{resnet_forward.26} parent=27 // pred_region
                loop: start=0, step=1, limit=1
                $region44: #{resnet_forward.26} parent=42 // loop_pre_header
                  _
                $region45: #{resnet_forward.26} parent=42 // loop_header
                  %s109 = sphi 0, %s113
                  %p110 = scmp.ge.s32.totalorder %s109, 1
                  %s114 = sphi %s85, %s85
                  %s115 = sphi %s84, %s84
                $region46: #{resnet_forward.26} parent=42 // loop_header_branch
                  %112 = sbr.rel (%p110) target = $region50
                $region47: #{resnet_forward.26} parent=42 // loop_body
                  %v116 = vld [vmem:[%s114] sm:$0x1]
                  %117 = vst [vmem:[%s115] sm:$0x1] %v116
                  %v118 = vld [vmem:[%s114 + $0x4] sm:$0x1]
                  %119 = vst [vmem:[%s115 + $0x1] sm:$0x1] %v118
                $region48: #{resnet_forward.26} parent=42 // loop_footer
                  %s113 = sadd.s32 1, %s109
                $region49: #{resnet_forward.26} parent=42 // loop_footer_branch
                  %108 = sbr.rel target = $region45
                $region50: #{resnet_forward.26} parent=42 // loop_exit
                  _
              $region43: #{resnet_forward.26} parent=27 // pred_fallthru
                _
            $region28: #{resnet_forward.26} parent=23 // pred_fallthru
              _
            // Predicated region
            $region29: #{resnet_forward.26} parent=23 // pred_check
              _
            $region30: #{resnet_forward.26} parent=23 // pred_check_branch
              %91 = sbr.rel (0) target = $region32
            $region31: #{resnet_forward.26} parent=23 // pred_region
              loop: start=0, step=1, limit=1
              $region33: #{resnet_forward.26} parent=31 // loop_pre_header
                _
              $region34: #{resnet_forward.26} parent=31 // loop_header
                %s94 = sphi 0, %s98
                %p95 = scmp.ge.s32.totalorder %s94, 1
                %s99 = sphi %s85, %s85
                %s100 = sphi %s84, %s84
              $region35: #{resnet_forward.26} parent=31 // loop_header_branch
                %97 = sbr.rel (%p95) target = $region39
              $region36: #{resnet_forward.26} parent=31 // loop_body
                %v101 = vld [vmem:[%s99] sm:$0x1]
                %102 = vst [vmem:[%s100] sm:$0x1] %v101
                %v103 = vld [vmem:[%s99 + $0x4] sm:$0x1]
                %104 = vst [vmem:[%s100 + $0x1] sm:$0x1] %v103
              $region37: #{resnet_forward.26} parent=31 // loop_footer
                %s98 = sadd.s32 1, %s94
              $region38: #{resnet_forward.26} parent=31 // loop_footer_branch
                %93 = sbr.rel target = $region34
              $region39: #{resnet_forward.26} parent=31 // loop_exit
                _
            $region32: #{resnet_forward.26} parent=23 // pred_fallthru
              _
          $region24: #{resnet_forward.26} parent=19 // pred_fallthru
            _
          %120 = vnop
        $region20: #{resnet_forward.26} parent=15 // pred_fallthru
          _
      $region16: #{resnet_forward.26} parent=5 // pred_fallthru
        _
      %p121 = scmp.le.s32.totalorder 1, %s7
      %p122 = scmp.lt.s32.totalorder %s7, 5
      %p123 = pnand %p121, %p122
      %p124 = pneg %p123
      // Predicated region
      $region51: #{resnet_forward.26} parent=5 // pred_check
        _
      $region52: #{resnet_forward.26} parent=5 // pred_check_branch
        %126 = sbr.rel (%p123) target = $region54
      $region53: #{resnet_forward.26} parent=5 // pred_region
        %s127 = ssub.s32 %s7, 1
        %s128 = sand.u32 %s20, 1
        %s129 = sand.u32 %s20, 1
        %s130 = smul.addr %s129, 2
        %s131 = scalar_lea.vmem [#allocation2], %s130
        // Predicated region
        $region55: #{resnet_forward.26} parent=53 // pred_check
          %p132 = pneg %p33
        $region56: #{resnet_forward.26} parent=53 // pred_check_branch
          %134 = sbr.rel (%p132) target = $region58
        $region57: #{resnet_forward.26} parent=53 // pred_region
          _
        $region58: #{resnet_forward.26} parent=53 // pred_fallthru
          _
        %s135 = sand.u32 %s20, 1
        %s136 = sand.u32 %s20, 1
        %s137 = smul.addr %s136, 2
        %s138 = scalar_lea.vmem [#allocation2], %s137
        %p139 = pneg %p33
        %p140 = pneg %p30
        %p141 = pneg %p59
        %p142 = pneg %p56
        %p143 = scmp.lt.s32.totalorder %s12, 3
        %s144 = scalar_select %p143, %s12, 3
        %s145 = smul.addr %s144, 2
        %s146 = scalar_lea.vmem %s1, %s145
        %p147 = scmp.lt.s32.totalorder %s12, 3
        %s148 = scalar_select %p147, %s12, 3
        %s149 = smul.addr %s148, 2
        %s150 = scalar_lea.vmem %s1, %s149
        %v151 = vld [vmem:[%s131] sm:$0x1]
        %v152 = vld [vmem:[%s131 + $0x1] sm:$0x1]
        %v153 = vunpack.c.l.bf16 %v151
        %v154 = vunpack.c.l.bf16 %v152
        %v155 = vadd.f32 %v153, 0.0
        %v156 = vadd.f32 %v154, 0.0
        %v159 = vlaneseq
        %v160 = vshrl.u32 %v159, 7
        %v161 = vsub.s32 0, %v160
        %v162 = vrot.slane %v155, %v161
        %v163 = vlaneseq
        %v164 = vshrl.u32 %v163, 7
        %v165 = vsub.s32 0, %v164
        %v166 = vrot.slane %v156, %v165
        %vm167 = vcmask 1041409
        %v168 = vsel %vm167, %v166, %v162
        %170 = vst [vmem:[%s150] sm:$0x3] %v168
        %p171 = scmp.lt.s32.totalorder %s12, 3
        %s172 = scalar_select %p171, %s12, 3
        %s173 = smul.addr %s172, 2
        %s174 = scalar_lea.vmem %s1, %s173
        // Predicated region
        $region59: #{resnet_forward.26} parent=53 // pred_check
          %p175 = pneg %p56
        $region60: #{resnet_forward.26} parent=53 // pred_check_branch
          %177 = sbr.rel (%p175) target = $region62
        $region61: #{resnet_forward.26} parent=53 // pred_region
          _
        $region62: #{resnet_forward.26} parent=53 // pred_fallthru
          _
      $region54: #{resnet_forward.26} parent=5 // pred_fallthru
        _
      %p178 = scmp.le.s32.totalorder 2, %s7
      // Predicated region
      $region63: #{resnet_forward.26} parent=5 // pred_check
        %p179 = pneg %p178
      $region64: #{resnet_forward.26} parent=5 // pred_check_branch
        %181 = sbr.rel (%p179) target = $region66
      $region65: #{resnet_forward.26} parent=5 // pred_region
        %s182 = ssub.s32 %s7, 2
        // Predicated region
        $region67: #{resnet_forward.26} parent=65 // pred_check
          %p183 = pneg %p62
        $region68: #{resnet_forward.26} parent=65 // pred_check_branch
          %185 = sbr.rel (%p183) target = $region70
        $region69: #{resnet_forward.26} parent=65 // pred_region
          %p186 = scmp.lt.s32.totalorder %s13, 3
          %s187 = scalar_select %p186, %s13, 3
          %s188 = smul.addr %s187, 2
          %s189 = scalar_lea.vmem %s1, %s188
        $region70: #{resnet_forward.26} parent=65 // pred_fallthru
          _
      $region66: #{resnet_forward.26} parent=5 // pred_fallthru
        _
    $region6: #{resnet_forward.26} parent=1 // loop_footer
      %s11 = sadd.s32 1, %s7
    $region7: #{resnet_forward.26} parent=1 // loop_footer_branch
      %6 = sbr.rel target = $region3
    $region8: #{resnet_forward.26} parent=1 // loop_exit
      _

// kernel: resnet_forward.27
$region0: #{resnet_forward.27}
  #allocation0 [shape = 'u32[]', space=smem, size = 0x4, offset = 0x4, fixed_abs, tag = 'smem constant byte address 0x4 - core index']
  #allocation1 [shape = 'u32[144,128]{1,0:T(1,128)}', space=vmem, size = 0x12000, scoped, tag = 'internal scratch']
  #allocation2 [shape = 'f32[8,128]{1,0:T(8,128)}', space=vmem, size = 0x1000, scoped, tag = 'scratch operand']
  %s0 = inlined_call_operand.vmem [shape: bf16[8,512], index: 0, kind: input, shape index: {}]
  %s1 = inlined_call_operand.vmem [shape: bf16[512,128], index: 1, kind: input, shape index: {}]
  %s2 = inlined_call_operand.vmem [shape: f32[1,128], index: 2, kind: input, shape index: {}]
  %s3 = inlined_call_operand.vmem [shape: f32[8,128], index: 3, kind: output, shape index: {}]
  %s4 = sld [smem:[#allocation0]]
  $region30: #{resnet_forward.27} parent=0
    _
  %s6 = ssub.s32 1, %s4
  %s7 = scalar_select 0, %s6, %s4
  // Predicated region
  $region2: #{resnet_forward.27} parent=0 // pred_check
    _
  $region3: #{resnet_forward.27} parent=0 // pred_check_branch
    %9 = sbr.rel (0) target = $region5
  $region4: #{resnet_forward.27} parent=0 // pred_region
    _
  $region5: #{resnet_forward.27} parent=0 // pred_fallthru
    _
  // Predicated region
  $region6: #{resnet_forward.27} parent=0 // pred_check
    _
  $region7: #{resnet_forward.27} parent=0 // pred_check_branch
    %11 = sbr.rel (0) target = $region9
  $region8: #{resnet_forward.27} parent=0 // pred_region
    _
  $region9: #{resnet_forward.27} parent=0 // pred_fallthru
    _
  // Predicated region
  $region10: #{resnet_forward.27} parent=0 // pred_check
    _
  $region11: #{resnet_forward.27} parent=0 // pred_check_branch
    %13 = sbr.rel (0) target = $region13
  $region12: #{resnet_forward.27} parent=0 // pred_region
    _
  $region13: #{resnet_forward.27} parent=0 // pred_fallthru
    _
  %p15 = scmp.eq.s32.totalorder 0, 0
  // Predicated region
  $region14: #{resnet_forward.27} parent=0 // pred_check
    %p16 = pneg %p15
  $region15: #{resnet_forward.27} parent=0 // pred_check_branch
    %18 = sbr.rel (%p16) target = $region17
  $region16: #{resnet_forward.27} parent=0 // pred_region
    %19 = vst [vmem:[#allocation2] sm:$0xff] 0.0
  $region17: #{resnet_forward.27} parent=0 // pred_fallthru
    _
  %v20 = vld [vmem:[#allocation2] sm:$0xff]
  %v21 = vld [vmem:[%s0] sm:$0xff]
  %v22 = vld [vmem:[%s0 + $0x8] sm:$0xff]
  %v23 = vld [vmem:[%s1] sm:$0xf]
  %v24 = vld [vmem:[%s1 + $0x4] sm:$0xf]
  %v25 = vld [vmem:[%s1 + $0x8] sm:$0xf]
  %v26 = vld [vmem:[%s1 + $0xc] sm:$0xf]
  %v27 = vld [vmem:[%s1 + $0x10] sm:$0xf]
  %v28 = vld [vmem:[%s1 + $0x14] sm:$0xf]
  %v29 = vld [vmem:[%s1 + $0x18] sm:$0xf]
  %v30 = vld [vmem:[%s1 + $0x1c] sm:$0xf]
  %v31 = vld [vmem:[%s1 + $0x20] sm:$0xf]
  %v32 = vld [vmem:[%s1 + $0x24] sm:$0xf]
  %v33 = vld [vmem:[%s1 + $0x28] sm:$0xf]
  %v34 = vld [vmem:[%s1 + $0x2c] sm:$0xf]
  %v35 = vld [vmem:[%s1 + $0x30] sm:$0xf]
  %v36 = vld [vmem:[%s1 + $0x34] sm:$0xf]
  %v37 = vld [vmem:[%s1 + $0x38] sm:$0xf]
  %v38 = vld [vmem:[%s1 + $0x3c] sm:$0xf]
  %v39 = vld [vmem:[%s1 + $0x40] sm:$0xf]
  %v40 = vld [vmem:[%s1 + $0x44] sm:$0xf]
  %v41 = vld [vmem:[%s1 + $0x48] sm:$0xf]
  %v42 = vld [vmem:[%s1 + $0x4c] sm:$0xf]
  %v43 = vld [vmem:[%s1 + $0x50] sm:$0xf]
  %v44 = vld [vmem:[%s1 + $0x54] sm:$0xf]
  %v45 = vld [vmem:[%s1 + $0x58] sm:$0xf]
  %v46 = vld [vmem:[%s1 + $0x5c] sm:$0xf]
  %v47 = vld [vmem:[%s1 + $0x60] sm:$0xf]
  %v48 = vld [vmem:[%s1 + $0x64] sm:$0xf]
  %v49 = vld [vmem:[%s1 + $0x68] sm:$0xf]
  %v50 = vld [vmem:[%s1 + $0x6c] sm:$0xf]
  %v51 = vld [vmem:[%s1 + $0x70] sm:$0xf]
  %v52 = vld [vmem:[%s1 + $0x74] sm:$0xf]
  %v53 = vld [vmem:[%s1 + $0x78] sm:$0xf]
  %v54 = vld [vmem:[%s1 + $0x7c] sm:$0xf]
  %v55 = vld [vmem:[%s1 + $0x80] sm:$0xf]
  %v56 = vld [vmem:[%s1 + $0x84] sm:$0xf]
  %v57 = vld [vmem:[%s1 + $0x88] sm:$0xf]
  %v58 = vld [vmem:[%s1 + $0x8c] sm:$0xf]
  %v59 = vld [vmem:[%s1 + $0x90] sm:$0xf]
  %v60 = vld [vmem:[%s1 + $0x94] sm:$0xf]
  %v61 = vld [vmem:[%s1 + $0x98] sm:$0xf]
  %v62 = vld [vmem:[%s1 + $0x9c] sm:$0xf]
  %v63 = vld [vmem:[%s1 + $0xa0] sm:$0xf]
  %v64 = vld [vmem:[%s1 + $0xa4] sm:$0xf]
  %v65 = vld [vmem:[%s1 + $0xa8] sm:$0xf]
  %v66 = vld [vmem:[%s1 + $0xac] sm:$0xf]
  %v67 = vld [vmem:[%s1 + $0xb0] sm:$0xf]
  %v68 = vld [vmem:[%s1 + $0xb4] sm:$0xf]
  %v69 = vld [vmem:[%s1 + $0xb8] sm:$0xf]
  %v70 = vld [vmem:[%s1 + $0xbc] sm:$0xf]
  %v71 = vld [vmem:[%s1 + $0xc0] sm:$0xf]
  %v72 = vld [vmem:[%s1 + $0xc4] sm:$0xf]
  %v73 = vld [vmem:[%s1 + $0xc8] sm:$0xf]
  %v74 = vld [vmem:[%s1 + $0xcc] sm:$0xf]
  %v75 = vld [vmem:[%s1 + $0xd0] sm:$0xf]
  %v76 = vld [vmem:[%s1 + $0xd4] sm:$0xf]
  %v77 = vld [vmem:[%s1 + $0xd8] sm:$0xf]
  %v78 = vld [vmem:[%s1 + $0xdc] sm:$0xf]
  %v79 = vld [vmem:[%s1 + $0xe0] sm:$0xf]
  %v80 = vld [vmem:[%s1 + $0xe4] sm:$0xf]
  %v81 = vld [vmem:[%s1 + $0xe8] sm:$0xf]
  %v82 = vld [vmem:[%s1 + $0xec] sm:$0xf]
  %v83 = vld [vmem:[%s1 + $0xf0] sm:$0xf]
  %v84 = vld [vmem:[%s1 + $0xf4] sm:$0xf]
  %v85 = vld [vmem:[%s1 + $0xf8] sm:$0xf]
  %v86 = vld [vmem:[%s1 + $0xfc] sm:$0xf]
  %v89 = vunpack.c.l.b16 %v21
  %v90 = vunpack.c.h.b16 %v21
  %v91 = vunpack.c.l.b16 %v22
  %v92 = vunpack.c.h.b16 %v22
  %v93 = vpack.c.b16 %v89, %v89
  %v94 = vpack.c.b16 %v90, %v90
  %v95 = vpack.c.b16 %v91, %v91
  %v96 = vpack.c.b16 %v92, %v92
  %v165 = vunpack.c.l.b16 %v23
  %v166 = vunpack.c.l.b16 %v24
  %v167 = vunpack.c.l.b16 %v25
  %v168 = vunpack.c.l.b16 %v26
  %v169 = vunpack.c.l.b16 %v27
  %v170 = vunpack.c.l.b16 %v28
  %v171 = vunpack.c.l.b16 %v29
  %v172 = vunpack.c.l.b16 %v30
  %v173 = vunpack.c.l.b16 %v31
  %v174 = vunpack.c.l.b16 %v32
  %v175 = vunpack.c.l.b16 %v33
  %v176 = vunpack.c.l.b16 %v34
  %v177 = vunpack.c.l.b16 %v35
  %v178 = vunpack.c.l.b16 %v36
  %v179 = vunpack.c.l.b16 %v37
  %v180 = vunpack.c.l.b16 %v38
  %v181 = vunpack.c.l.b16 %v39
  %v182 = vunpack.c.l.b16 %v40
  %v183 = vunpack.c.l.b16 %v41
  %v184 = vunpack.c.l.b16 %v42
  %v185 = vunpack.c.l.b16 %v43
  %v186 = vunpack.c.l.b16 %v44
  %v187 = vunpack.c.l.b16 %v45
  %v188 = vunpack.c.l.b16 %v46
  %v189 = vunpack.c.l.b16 %v47
  %v190 = vunpack.c.l.b16 %v48
  %v191 = vunpack.c.l.b16 %v49
  %v192 = vunpack.c.l.b16 %v50
  %v193 = vunpack.c.l.b16 %v51
  %v194 = vunpack.c.l.b16 %v52
  %v195 = vunpack.c.l.b16 %v53
  %v196 = vunpack.c.l.b16 %v54
  %v197 = vunpack.c.l.b16 %v55
  %v198 = vunpack.c.l.b16 %v56
  %v199 = vunpack.c.l.b16 %v57
  %v200 = vunpack.c.l.b16 %v58
  %v201 = vunpack.c.l.b16 %v59
  %v202 = vunpack.c.l.b16 %v60
  %v203 = vunpack.c.l.b16 %v61
  %v204 = vunpack.c.l.b16 %v62
  %v205 = vunpack.c.l.b16 %v63
  %v206 = vunpack.c.l.b16 %v64
  %v207 = vunpack.c.l.b16 %v65
  %v208 = vunpack.c.l.b16 %v66
  %v209 = vunpack.c.l.b16 %v67
  %v210 = vunpack.c.l.b16 %v68
  %v211 = vunpack.c.l.b16 %v69
  %v212 = vunpack.c.l.b16 %v70
  %v213 = vunpack.c.l.b16 %v71
  %v214 = vunpack.c.l.b16 %v72
  %v215 = vunpack.c.l.b16 %v73
  %v216 = vunpack.c.l.b16 %v74
  %v217 = vunpack.c.l.b16 %v75
  %v218 = vunpack.c.l.b16 %v76
  %v219 = vunpack.c.l.b16 %v77
  %v220 = vunpack.c.l.b16 %v78
  %v221 = vunpack.c.l.b16 %v79
  %v222 = vunpack.c.l.b16 %v80
  %v223 = vunpack.c.l.b16 %v81
  %v224 = vunpack.c.l.b16 %v82
  %v225 = vunpack.c.l.b16 %v83
  %v226 = vunpack.c.l.b16 %v84
  %v227 = vunpack.c.l.b16 %v85
  %v228 = vunpack.c.l.b16 %v86
  %v229 = vpack.c.b16 %v166, %v165
  %v230 = vpack.c.b16 %v168, %v167
  %v231 = vpack.c.b16 %v170, %v169
  %v232 = vpack.c.b16 %v172, %v171
  %v233 = vpack.c.b16 %v174, %v173
  %v234 = vpack.c.b16 %v176, %v175
  %v235 = vpack.c.b16 %v178, %v177
  %v236 = vpack.c.b16 %v180, %v179
  %v237 = vpack.c.b16 %v182, %v181
  %v238 = vpack.c.b16 %v184, %v183
  %v239 = vpack.c.b16 %v186, %v185
  %v240 = vpack.c.b16 %v188, %v187
  %v241 = vpack.c.b16 %v190, %v189
  %v242 = vpack.c.b16 %v192, %v191
  %v243 = vpack.c.b16 %v194, %v193
  %v244 = vpack.c.b16 %v196, %v195
  %v245 = vpack.c.b16 %v198, %v197
  %v246 = vpack.c.b16 %v200, %v199
  %v247 = vpack.c.b16 %v202, %v201
  %v248 = vpack.c.b16 %v204, %v203
  %v249 = vpack.c.b16 %v206, %v205
  %v250 = vpack.c.b16 %v208, %v207
  %v251 = vpack.c.b16 %v210, %v209
  %v252 = vpack.c.b16 %v212, %v211
  %v253 = vpack.c.b16 %v214, %v213
  %v254 = vpack.c.b16 %v216, %v215
  %v255 = vpack.c.b16 %v218, %v217
  %v256 = vpack.c.b16 %v220, %v219
  %v257 = vpack.c.b16 %v222, %v221
  %v258 = vpack.c.b16 %v224, %v223
  %v259 = vpack.c.b16 %v226, %v225
  %v260 = vpack.c.b16 %v228, %v227
  %293 = vmatprep.subr.bf16.mxu0 0
  %294 = vmatpush1.bf16.msra.mxu0 %v229
  %295 = vmatprep.subr.bf16.mxu0 0
  %296 = vmatpush1.bf16.msra.mxu0 %v230
  %297 = vmatprep.subr.bf16.mxu0 0
  %298 = vmatpush1.bf16.msra.mxu0 %v231
  %299 = vmatprep.subr.bf16.mxu0 0
  %300 = vmatpush1.bf16.msra.mxu0 %v232
  %301 = vmatprep.subr.bf16.mxu0 0
  %302 = vmatpush1.bf16.msra.mxu0 %v233
  %303 = vmatprep.subr.bf16.mxu0 0
  %304 = vmatpush1.bf16.msra.mxu0 %v234
  %305 = vmatprep.subr.bf16.mxu0 0
  %306 = vmatpush1.bf16.msra.mxu0 %v235
  %307 = vmatprep.subr.bf16.mxu0 0
  %308 = vmatpush1.bf16.msra.mxu0 %v236
  %309 = vmatprep.subr.bf16.mxu0 0
  %310 = vmatpush1.bf16.msra.mxu0 %v237
  %311 = vmatprep.subr.bf16.mxu0 0
  %312 = vmatpush1.bf16.msra.mxu0 %v238
  %313 = vmatprep.subr.bf16.mxu0 0
  %314 = vmatpush1.bf16.msra.mxu0 %v239
  %315 = vmatprep.subr.bf16.mxu0 0
  %316 = vmatpush1.bf16.msra.mxu0 %v240
  %317 = vmatprep.subr.bf16.mxu0 0
  %318 = vmatpush1.bf16.msra.mxu0 %v241
  %319 = vmatprep.subr.bf16.mxu0 0
  %320 = vmatpush1.bf16.msra.mxu0 %v242
  %321 = vmatprep.subr.bf16.mxu0 0
  %322 = vmatpush1.bf16.msra.mxu0 %v243
  %323 = vmatprep.subr.bf16.mxu0 0
  %324 = vmatpush1.bf16.msra.mxu0 %v244
  %325 = vmatprep.mubr.bf16.mxu0 %v94
  %326 = vmatmul.mubr.bf16.gmra.mrb[0].mxu0 %v93
  %v327 = vpop.f32.mrb[0].mxu0
  %v328 = vadd.f32 0.0, %v327
  %v329 = vpop.f32.mrb[0].mxu0
  %v330 = vpop.f32.mrb[0].mxu0
  %v331 = vpop.f32.mrb[0].mxu0
  %332 = vdwg.mxu0
  %333 = vmatprep.subr.bf16.mxu0 0
  %334 = vmatpush1.bf16.msra.mxu0 %v245
  %335 = vmatprep.subr.bf16.mxu0 0
  %336 = vmatpush1.bf16.msra.mxu0 %v246
  %337 = vmatprep.subr.bf16.mxu0 0
  %338 = vmatpush1.bf16.msra.mxu0 %v247
  %339 = vmatprep.subr.bf16.mxu0 0
  %340 = vmatpush1.bf16.msra.mxu0 %v248
  %341 = vmatprep.subr.bf16.mxu0 0
  %342 = vmatpush1.bf16.msra.mxu0 %v249
  %343 = vmatprep.subr.bf16.mxu0 0
  %344 = vmatpush1.bf16.msra.mxu0 %v250
  %345 = vmatprep.subr.bf16.mxu0 0
  %346 = vmatpush1.bf16.msra.mxu0 %v251
  %347 = vmatprep.subr.bf16.mxu0 0
  %348 = vmatpush1.bf16.msra.mxu0 %v252
  %349 = vmatprep.subr.bf16.mxu0 0
  %350 = vmatpush1.bf16.msra.mxu0 %v253
  %351 = vmatprep.subr.bf16.mxu0 0
  %352 = vmatpush1.bf16.msra.mxu0 %v254
  %353 = vmatprep.subr.bf16.mxu0 0
  %354 = vmatpush1.bf16.msra.mxu0 %v255
  %355 = vmatprep.subr.bf16.mxu0 0
  %356 = vmatpush1.bf16.msra.mxu0 %v256
  %357 = vmatprep.subr.bf16.mxu0 0
  %358 = vmatpush1.bf16.msra.mxu0 %v257
  %359 = vmatprep.subr.bf16.mxu0 0
  %360 = vmatpush1.bf16.msra.mxu0 %v258
  %361 = vmatprep.subr.bf16.mxu0 0
  %362 = vmatpush1.bf16.msra.mxu0 %v259
  %363 = vmatprep.subr.bf16.mxu0 0
  %364 = vmatpush1.bf16.msra.mxu0 %v260
  %365 = vmatprep.mubr.bf16.mxu0 %v96
  %366 = vmatmul.mubr.bf16.gmra.mrb[0].mxu0 %v95
  %v367 = vpop.f32.mrb[0].mxu0
  %v368 = vadd.f32 %v328, %v367
  %v369 = vpop.f32.mrb[0].mxu0
  %v370 = vpop.f32.mrb[0].mxu0
  %v371 = vpop.f32.mrb[0].mxu0
  %372 = vdwg.mxu0
  %v373 = vadd.f32 %v20, %v368
  %374 = vst [vmem:[#allocation2] sm:$0xff] %v373
  // Predicated region
  $region18: #{resnet_forward.27} parent=0 // pred_check
    %p375 = pneg %p15
  $region19: #{resnet_forward.27} parent=0 // pred_check_branch
    %377 = sbr.rel (%p375) target = $region21
  $region20: #{resnet_forward.27} parent=0 // pred_region
    %v378 = vld [vmem:[#allocation2] sm:$0xff]
    %v379 = vld [vmem:[%s2] sm:$0x1]
    %v381 = vlaneseq
    %v382 = vshrl.u32 %v381, 7
    %v383 = vsub.s32 0, %v382
    %v384 = vrot.slane %v379, %v383
    %v386 = vadd.f32 %v378, %v384
    %387 = vst [vmem:[%s3] sm:$0xff] %v386
  $region21: #{resnet_forward.27} parent=0 // pred_fallthru
    _
  // Predicated region
  $region22: #{resnet_forward.27} parent=0 // pred_check
    _
  $region23: #{resnet_forward.27} parent=0 // pred_check_branch
    %389 = sbr.rel (0) target = $region25
  $region24: #{resnet_forward.27} parent=0 // pred_region
    _
  $region25: #{resnet_forward.27} parent=0 // pred_fallthru
    _
  // Predicated region
  $region26: #{resnet_forward.27} parent=0 // pred_check
    _
  $region27: #{resnet_forward.27} parent=0 // pred_check_branch
    %391 = sbr.rel (0) target = $region29
  $region28: #{resnet_forward.27} parent=0 // pred_region
    _
  $region29: #{resnet_forward.27} parent=0 // pred_fallthru
    _

</llo_original>
